<compile_context>
chip_gen: v6e
topology: v6e:2x2x1
jax: 0.10.0
libtpu: 0.0.40
codegen_flags: <defaults>
</compile_context>

<pallas_src>
import math

import jax
import jax.numpy as jnp
from jax.experimental import pallas as pl
from jax.experimental.pallas import tpu as pltpu


# ----------------------------------------------------------------------------
# Pallas kernel
# ----------------------------------------------------------------------------
def make_agent_kernel(n_ent, t_pad, feat_dim, emb, heads, n_actions, tb):
    head_dim = emb // heads
    f32 = jnp.float32
    tbt = tb * t_pad

    def dot(a, b):
        return jnp.dot(a, b, preferred_element_type=f32)

    def kernel(feats_ref, kmask_ref, task_ref, sel_ref,
               wf, bf,
               wqkv, bqkv,
               wo, bo,
               g1, be1,
               wff1, bff1, wff2, bff2,
               g2, be2,
               wqb, bqb,
               q_out, h_out):
        # ---- feat_embedding over all (row, token) pairs at once ----
        embs2 = dot(feats_ref[...], wf[...]) + bf[...]            # (tbt, emb)
        embs3 = embs2.reshape(tb, t_pad, emb)

        # ---- splice the precomputed task token into slot n_ent (blend, no concat) ----
        sel = sel_ref[...]                                        # (t_pad, emb), 1 at task slot
        x3 = embs3 * (1.0 - sel) + task_ref[...] * sel            # (tb, t_pad, emb)
        x2 = x3.reshape(tbt, emb)

        # ---- fused QKV (1/sqrt(head_dim) already folded into the Q slice) ----
        qkv = dot(x2, wqkv[...]) + bqkv[...]                      # (tbt, 3*emb)

        # additive key mask: 0 where visible, -1e9 where masked (pad token masked)
        bias = (kmask_ref[...] - 1.0) * 1e9                       # (tb, 1, t_pad)

        # ---- multi-head attention, TB-batched per head; per-head output folded
        #      directly into the matching W_o row slice (avoids concatenate) ----
        acc = jnp.zeros((tbt, emb), f32)
        for h in range(heads):
            lo = h * head_dim
            qh = qkv[:, lo:lo + head_dim].reshape(tb, t_pad, head_dim)
            kh = qkv[:, emb + lo:emb + lo + head_dim].reshape(tb, t_pad, head_dim)
            vh = qkv[:, 2 * emb + lo:2 * emb + lo + head_dim].reshape(tb, t_pad, head_dim)
            s = jax.lax.dot_general(qh, kh, (((2,), (2,)), ((0,), (0,))),
                                    preferred_element_type=f32)   # (tb, t, t)
            s = s + bias
            s = s - jnp.max(s, axis=-1, keepdims=True)
            p = jnp.exp(s)
            p = p * pl.reciprocal(jnp.sum(p, axis=-1, keepdims=True), approx=True)
            oh = jax.lax.dot_general(p, vh, (((2,), (1,)), ((0,), (0,))),
                                     preferred_element_type=f32)  # (tb, t, hd)
            acc = acc + dot(oh.reshape(tbt, head_dim), wo[lo:lo + head_dim, :])
        attn2 = acc + bo[...]                                      # (tbt, emb)

        # ---- residual + LayerNorm 1 ----
        y = x2 + attn2
        mu = jnp.mean(y, axis=-1, keepdims=True)
        var = jnp.mean((y - mu) ** 2, axis=-1, keepdims=True)
        y = (y - mu) * jax.lax.rsqrt(var + 1e-5) * g1[...] + be1[...]

        # ---- FFN + residual + LayerNorm 2 ----
        f = jnp.maximum(dot(y, wff1[...]) + bff1[...], 0.0)
        f = dot(f, wff2[...]) + bff2[...]
        z = y + f
        mu = jnp.mean(z, axis=-1, keepdims=True)
        var = jnp.mean((z - mu) ** 2, axis=-1, keepdims=True)
        z = (z - mu) * jax.lax.rsqrt(var + 1e-5) * g2[...] + be2[...]

        # ---- q head on the agent (first entity) token ----
        h_tok = z.reshape(tb, t_pad, emb)[:, 0, :]                # (tb, emb)
        q_out[...] = dot(h_tok, wqb[...]) + bqb[...]              # (tb, n_actions)
        h_out[...] = h_tok

    return kernel


# ----------------------------------------------------------------------------
# Parameter init (deterministic, synthetic)
# ----------------------------------------------------------------------------
def init_params(key, cfg):
    feat_dim = cfg["feat_dim"]
    emb = cfg["emb"]
    use_dim = cfg["use_dim"]
    ff = cfg["ff_hidden_mult"] * emb
    n_actions = cfg["n_actions"]
    task_dim = cfg["task_dim"]

    names_shapes = [
        ("w_feat", (feat_dim, emb)), ("b_feat", (1, emb)),
        ("w_u1", (use_dim, emb)), ("b_u1", (1, emb)),
        ("w_u2", (emb, emb)), ("b_u2", (1, emb)),
        ("w_q", (emb, emb)), ("b_q", (1, emb)),
        ("w_k", (emb, emb)), ("b_k", (1, emb)),
        ("w_v", (emb, emb)), ("b_v", (1, emb)),
        ("w_o", (emb, emb)), ("b_o", (1, emb)),
        ("ln1_g", (1, emb)), ("ln1_b", (1, emb)),
        ("w_ff1", (emb, ff)), ("b_ff1", (1, ff)),
        ("w_ff2", (ff, emb)), ("b_ff2", (1, emb)),
        ("ln2_g", (1, emb)), ("ln2_b", (1, emb)),
        ("w_qb", (emb, n_actions)), ("b_qb", (1, n_actions)),
        ("w_t2u", (task_dim, use_dim)),   # synthetic replacement for task2use dict
    ]
    params = {}
    keys = jax.random.split(key, len(names_shapes))
    for (name, shape), k in zip(names_shapes, keys):
        if name.startswith("b_") or name.endswith("_b"):
            params[name] = jnp.zeros(shape, jnp.float32)
        elif name.endswith("_g"):
            params[name] = jnp.ones(shape, jnp.float32)
        else:
            params[name] = (0.1 * jax.random.normal(k, shape)).astype(jnp.float32)
    return params


# ----------------------------------------------------------------------------
# Wrapper (glue in plain JAX, hot path in the Pallas kernel)
# ----------------------------------------------------------------------------
def transformer_agent_forward(params, inputs, hidden_state, cfg, tb=128):
    b, a, _ = inputs.shape
    n_ent = cfg["n_entities"]
    feat_dim = cfg["feat_dim"]
    task_dim = cfg["task_dim"]
    emb = cfg["emb"]
    heads = cfg["heads"]
    n_actions = cfg["n_actions"]
    head_dim = emb // heads
    f32 = jnp.float32

    del hidden_state  # viewed but unused in the reference forward

    B = b * a
    t_pad = ((n_ent + 1 + 7) // 8) * 8         # tokens = entities + task, padded to 8
    tb = max(8, ((min(tb, B) + 7) // 8) * 8)   # rows per grid step, multiple of 8
    n_blocks = -(-B // tb)
    B_pad = n_blocks * tb

    # ---- split the flat input ----
    task = inputs[:, :, -task_dim:]
    ent = inputs[:, :, :-task_dim].reshape(B, n_ent, feat_dim + 1)
    mask = ent[:, :, -1]                                   # (B, n_ent)
    feats = ent[:, :, :-1]                                 # (B, n_ent, feat_dim)

    # ---- glue hoisted out of the kernel (runs once per call in XLA) ----
    # task2use: original is a JSON string-keyed dict lookup; replaced by a fixed projection.
    # TODO(synk): string-keyed dict lookup has no Pallas equivalent.
    task0 = task[:, 0, :]                                  # (b, task_dim)
    use = jnp.dot(task0, params["w_t2u"])                  # (b, use_dim)
    # use_embedding (TaskEncoder): computed once per batch row, repeated per agent.
    t1 = jnp.maximum(jnp.dot(use, params["w_u1"]) + params["b_u1"], 0.0)
    task_emb = jnp.dot(t1, params["w_u2"]) + params["b_u2"]          # (b, emb)
    task_tok = jnp.repeat(task_emb[:, None, :], a, axis=1).reshape(B, 1, emb)
    task_pad = jnp.zeros((B_pad, 1, emb), f32).at[:B].set(task_tok)

    # entity features padded to the (B_pad, t_pad) token grid, flattened for 2D matmuls
    feats_pad = jnp.zeros((B_pad, t_pad, feat_dim), f32).at[:B, :n_ent, :].set(feats)
    feats_flat = feats_pad.reshape(B_pad * t_pad, feat_dim)

    # key mask: entities from obs, task token always visible, pad tokens masked
    kmask = jnp.zeros((B_pad, t_pad), f32)
    kmask = kmask.at[:, n_ent].set(1.0)
    kmask = kmask.at[:B, :n_ent].set(mask)
    kmask = kmask.reshape(B_pad, 1, t_pad)

    # selector used to splice the task token into token slot n_ent inside the kernel
    sel = jnp.zeros((t_pad, emb), f32).at[n_ent, :].set(1.0)

    # fused QKV weight with the attention scale folded into the Q slice
    scale = 1.0 / math.sqrt(head_dim)
    wqkv = jnp.concatenate([params["w_q"] * scale, params["w_k"], params["w_v"]], axis=1)
    bqkv = jnp.concatenate([params["b_q"] * scale, params["b_k"], params["b_v"]], axis=1)

    weights = [params["w_feat"], params["b_feat"],
               wqkv, bqkv,
               params["w_o"], params["b_o"],
               params["ln1_g"], params["ln1_b"],
               params["w_ff1"], params["b_ff1"],
               params["w_ff2"], params["b_ff2"],
               params["ln2_g"], params["ln2_b"],
               params["w_qb"], params["b_qb"]]

    kernel = make_agent_kernel(n_ent, t_pad, feat_dim, emb, heads, n_actions, tb)

    in_specs = [
        pl.BlockSpec((tb * t_pad, feat_dim), lambda i: (i, 0)),
        pl.BlockSpec((tb, 1, t_pad), lambda i: (i, 0, 0)),
        pl.BlockSpec((tb, 1, emb), lambda i: (i, 0, 0)),
        pl.BlockSpec((t_pad, emb), lambda i: (0, 0)),
    ] + [pl.BlockSpec(w.shape, lambda i: (0, 0)) for w in weights]

    out_specs = [
        pl.BlockSpec((tb, n_actions), lambda i: (i, 0)),
        pl.BlockSpec((tb, emb), lambda i: (i, 0)),
    ]

    q_pad, h_pad = pl.pallas_call(
        kernel,
        out_shape=(
            jax.ShapeDtypeStruct((B_pad, n_actions), f32),
            jax.ShapeDtypeStruct((B_pad, emb), f32),
        ),
        grid_spec=pltpu.PrefetchScalarGridSpec(
            num_scalar_prefetch=0,
            grid=(n_blocks,),
            in_specs=in_specs,
            out_specs=out_specs,
        ),
        compiler_params=pltpu.CompilerParams(
            dimension_semantics=("parallel",)),
    )(feats_flat, kmask, task_pad, sel, *weights)

    return q_pad[:B].reshape(b, a, n_actions), h_pad[:B].reshape(b, a, emb)


# ----------------------------------------------------------------------------
# Main
# ----------------------------------------------------------------------------
if __name__ == "__main__":
    cfg = dict(
        n_agents=3,
        n_entities=6,
        feat_dim=4,          # obs_entity_feats - 1, with obs_entity_feats = 5
        task_dim=4,          # task_feats
        use_dim=512,
        emb=32,
        heads=4,
        ff_hidden_mult=2,
        n_actions=7,
    )
    b = 2
    a = cfg["n_agents"]
    n_ent = cfg["n_entities"]
    feat_dim = cfg["feat_dim"]
    task_dim = cfg["task_dim"]
    emb = cfg["emb"]

    key = jax.random.PRNGKey(0)
    k_params, k_feat, k_mask = jax.random.split(key, 3)

    params = init_params(k_params, cfg)

    # build inputs: per-entity [features(feat_dim), mask(1)] flattened, then task
    ent_feats = jax.random.normal(k_feat, (b, a, n_ent, feat_dim), jnp.float32)
    ent_mask = (jax.random.uniform(k_mask, (b, a, n_ent, 1)) > 0.3).astype(jnp.float32)
    ent_mask = ent_mask.at[:, :, 0, :].set(1.0)                    # agent's own entity present
    ent_block = jnp.concatenate([ent_feats, ent_mask], axis=-1)    # (b, a, n_ent, feat_dim+1)
    ent_flat = ent_block.reshape(b, a, n_ent * (feat_dim + 1))

    # task one-hot, identical across agents within a batch (as original assumes)
    task = jax.nn.one_hot(jnp.arange(b) % task_dim, task_dim, dtype=jnp.float32)
    task = jnp.repeat(task[:, None, :], a, axis=1)                 # (b, a, task_dim)

    inputs = jnp.concatenate([ent_flat, task], axis=-1)            # (b, a, 34)
    hidden_state = jnp.zeros((b * a, emb), jnp.float32)

    q, h = transformer_agent_forward(params, inputs, hidden_state, cfg)
    jax.block_until_ready((q, h))
    assert q.shape == (b, a, cfg["n_actions"]) and h.shape == (b, a, emb)
    print("KERNEL_OK")
</pallas_src>

<mosaic_0001>
module attributes {stable_mosaic.version = 11 : i64} {
  func.func @kernel(%arg0: i32, %arg1: memref<64x4xf32, #tpu.memory_space<vmem>>, %arg2: memref<8x1x8xf32, #tpu.memory_space<vmem>>, %arg3: memref<8x1x32xf32, #tpu.memory_space<vmem>>, %arg4: memref<8x32xf32, #tpu.memory_space<vmem>>, %arg5: memref<4x32xf32, #tpu.memory_space<vmem>>, %arg6: memref<1x32xf32, #tpu.memory_space<vmem>>, %arg7: memref<32x96xf32, #tpu.memory_space<vmem>>, %arg8: memref<1x96xf32, #tpu.memory_space<vmem>>, %arg9: memref<32x32xf32, #tpu.memory_space<vmem>>, %arg10: memref<1x32xf32, #tpu.memory_space<vmem>>, %arg11: memref<1x32xf32, #tpu.memory_space<vmem>>, %arg12: memref<1x32xf32, #tpu.memory_space<vmem>>, %arg13: memref<32x64xf32, #tpu.memory_space<vmem>>, %arg14: memref<1x64xf32, #tpu.memory_space<vmem>>, %arg15: memref<64x32xf32, #tpu.memory_space<vmem>>, %arg16: memref<1x32xf32, #tpu.memory_space<vmem>>, %arg17: memref<1x32xf32, #tpu.memory_space<vmem>>, %arg18: memref<1x32xf32, #tpu.memory_space<vmem>>, %arg19: memref<32x7xf32, #tpu.memory_space<vmem>>, %arg20: memref<1x7xf32, #tpu.memory_space<vmem>>, %arg21: memref<8x7xf32, #tpu.memory_space<vmem>>, %arg22: memref<8x32xf32, #tpu.memory_space<vmem>>) attributes {dimension_semantics = [#tpu.dimension_semantics<parallel>], iteration_bounds = array<i64: 1>, scalar_prefetch = 0 : i64, scratch_operands = 0 : i64, tpu.core_type = #tpu.core_type<tc>, window_params = [{transform_indices = @transform_0, window_bounds = array<i64: 64, 4>}, {transform_indices = @transform_1, window_bounds = array<i64: 8, 1, 8>}, {transform_indices = @transform_2, window_bounds = array<i64: 8, 1, 32>}, {pipeline_mode = #tpu.pipeline_mode<synchronous>, transform_indices = @transform_3, window_bounds = array<i64: 8, 32>}, {pipeline_mode = #tpu.pipeline_mode<synchronous>, transform_indices = @transform_4, window_bounds = array<i64: 4, 32>}, {pipeline_mode = #tpu.pipeline_mode<synchronous>, transform_indices = @transform_5, window_bounds = array<i64: 1, 32>}, {pipeline_mode = #tpu.pipeline_mode<synchronous>, transform_indices = @transform_6, window_bounds = array<i64: 32, 96>}, {pipeline_mode = #tpu.pipeline_mode<synchronous>, transform_indices = @transform_7, window_bounds = array<i64: 1, 96>}, {pipeline_mode = #tpu.pipeline_mode<synchronous>, transform_indices = @transform_8, window_bounds = array<i64: 32, 32>}, {pipeline_mode = #tpu.pipeline_mode<synchronous>, transform_indices = @transform_9, window_bounds = array<i64: 1, 32>}, {pipeline_mode = #tpu.pipeline_mode<synchronous>, transform_indices = @transform_10, window_bounds = array<i64: 1, 32>}, {pipeline_mode = #tpu.pipeline_mode<synchronous>, transform_indices = @transform_11, window_bounds = array<i64: 1, 32>}, {pipeline_mode = #tpu.pipeline_mode<synchronous>, transform_indices = @transform_12, window_bounds = array<i64: 32, 64>}, {pipeline_mode = #tpu.pipeline_mode<synchronous>, transform_indices = @transform_13, window_bounds = array<i64: 1, 64>}, {pipeline_mode = #tpu.pipeline_mode<synchronous>, transform_indices = @transform_14, window_bounds = array<i64: 64, 32>}, {pipeline_mode = #tpu.pipeline_mode<synchronous>, transform_indices = @transform_15, window_bounds = array<i64: 1, 32>}, {pipeline_mode = #tpu.pipeline_mode<synchronous>, transform_indices = @transform_16, window_bounds = array<i64: 1, 32>}, {pipeline_mode = #tpu.pipeline_mode<synchronous>, transform_indices = @transform_17, window_bounds = array<i64: 1, 32>}, {pipeline_mode = #tpu.pipeline_mode<synchronous>, transform_indices = @transform_18, window_bounds = array<i64: 32, 7>}, {pipeline_mode = #tpu.pipeline_mode<synchronous>, transform_indices = @transform_19, window_bounds = array<i64: 1, 7>}, {transform_indices = @transform_20, window_bounds = array<i64: 8, 7>}, {transform_indices = @transform_21, window_bounds = array<i64: 8, 32>}]} {
    %c0 = arith.constant 0 : index
    %c0_0 = arith.constant 0 : index
    %0 = vector.load %arg1[%c0, %c0_0] : memref<64x4xf32, #tpu.memory_space<vmem>>, vector<64x4xf32>
    %c0_1 = arith.constant 0 : index
    %c0_2 = arith.constant 0 : index
    %1 = vector.load %arg5[%c0_1, %c0_2] : memref<4x32xf32, #tpu.memory_space<vmem>>, vector<4x32xf32>
    %cst = arith.constant dense<0.000000e+00> : vector<64x32xf32>
    %2 = tpu.matmul %0, %1, %cst {dimension_numbers = #tpu.dot_dimension_numbers<[1], [0], [0], [1], [0, 0, 1, 1], [], []>} : vector<64x4xf32>, vector<4x32xf32>, vector<64x32xf32> -> vector<64x32xf32>
    %c0_3 = arith.constant 0 : index
    %c0_4 = arith.constant 0 : index
    %3 = vector.load %arg6[%c0_3, %c0_4] : memref<1x32xf32, #tpu.memory_space<vmem>>, vector<1x32xf32>
    %4 = vector.broadcast %3 : vector<1x32xf32> to vector<64x32xf32>
    %5 = arith.addf %2, %4 : vector<64x32xf32>
    %6 = vector.shape_cast %5 : vector<64x32xf32> to vector<8x8x32xf32>
    %c0_5 = arith.constant 0 : index
    %c0_6 = arith.constant 0 : index
    %7 = vector.load %arg4[%c0_5, %c0_6] : memref<8x32xf32, #tpu.memory_space<vmem>>, vector<8x32xf32>
    %cst_7 = arith.constant 1.000000e+00 : f32
    %8 = vector.broadcast %cst_7 : f32 to vector<8x32xf32>
    %9 = arith.subf %8, %7 : vector<8x32xf32>
    %10 = vector.shape_cast %9 : vector<8x32xf32> to vector<1x8x32xf32>
    %11 = vector.broadcast %10 : vector<1x8x32xf32> to vector<8x8x32xf32>
    %12 = arith.mulf %6, %11 : vector<8x8x32xf32>
    %c0_8 = arith.constant 0 : index
    %c0_9 = arith.constant 0 : index
    %c0_10 = arith.constant 0 : index
    %13 = vector.load %arg3[%c0_8, %c0_9, %c0_10] : memref<8x1x32xf32, #tpu.memory_space<vmem>>, vector<8x1x32xf32>
    %14 = vector.shape_cast %7 : vector<8x32xf32> to vector<1x8x32xf32>
    %15 = vector.broadcast %13 : vector<8x1x32xf32> to vector<8x8x32xf32>
    %16 = vector.broadcast %14 : vector<1x8x32xf32> to vector<8x8x32xf32>
    %17 = arith.mulf %15, %16 : vector<8x8x32xf32>
    %18 = arith.addf %12, %17 : vector<8x8x32xf32>
    %19 = vector.shape_cast %18 : vector<8x8x32xf32> to vector<64x32xf32>
    %c0_11 = arith.constant 0 : index
    %c0_12 = arith.constant 0 : index
    %20 = vector.load %arg7[%c0_11, %c0_12] : memref<32x96xf32, #tpu.memory_space<vmem>>, vector<32x96xf32>
    %cst_13 = arith.constant dense<0.000000e+00> : vector<64x96xf32>
    %21 = tpu.matmul %19, %20, %cst_13 {dimension_numbers = #tpu.dot_dimension_numbers<[1], [0], [0], [1], [0, 0, 1, 1], [], []>} : vector<64x32xf32>, vector<32x96xf32>, vector<64x96xf32> -> vector<64x96xf32>
    %c0_14 = arith.constant 0 : index
    %c0_15 = arith.constant 0 : index
    %22 = vector.load %arg8[%c0_14, %c0_15] : memref<1x96xf32, #tpu.memory_space<vmem>>, vector<1x96xf32>
    %23 = vector.broadcast %22 : vector<1x96xf32> to vector<64x96xf32>
    %24 = arith.addf %21, %23 : vector<64x96xf32>
    %c0_16 = arith.constant 0 : index
    %c0_17 = arith.constant 0 : index
    %c0_18 = arith.constant 0 : index
    %25 = vector.load %arg2[%c0_16, %c0_17, %c0_18] : memref<8x1x8xf32, #tpu.memory_space<vmem>>, vector<8x1x8xf32>
    %cst_19 = arith.constant 1.000000e+00 : f32
    %26 = vector.broadcast %cst_19 : f32 to vector<8x1x8xf32>
    %27 = arith.subf %25, %26 : vector<8x1x8xf32>
    %cst_20 = arith.constant 1.000000e+09 : f32
    %28 = vector.broadcast %cst_20 : f32 to vector<8x1x8xf32>
    %29 = arith.mulf %27, %28 : vector<8x1x8xf32>
    %cst_21 = arith.constant 0.000000e+00 : f32
    %30 = vector.broadcast %cst_21 : f32 to vector<64x32xf32>
    %31 = vector.extract_strided_slice %24 {offsets = [0, 0], sizes = [64, 8], strides = [1, 1]} : vector<64x96xf32> to vector<64x8xf32>
    %32 = vector.shape_cast %31 : vector<64x8xf32> to vector<8x8x8xf32>
    %33 = vector.extract_strided_slice %24 {offsets = [0, 32], sizes = [64, 8], strides = [1, 1]} : vector<64x96xf32> to vector<64x8xf32>
    %34 = vector.shape_cast %33 : vector<64x8xf32> to vector<8x8x8xf32>
    %35 = vector.extract_strided_slice %24 {offsets = [0, 64], sizes = [64, 8], strides = [1, 1]} : vector<64x96xf32> to vector<64x8xf32>
    %36 = vector.shape_cast %35 : vector<64x8xf32> to vector<8x8x8xf32>
    %cst_22 = arith.constant dense<0.000000e+00> : vector<8x8x8xf32>
    %37 = tpu.matmul %32, %34, %cst_22 {dimension_numbers = #tpu.dot_dimension_numbers<[2], [2], [1], [1], [0, 0, 0, 1, 1, 1], [0], [0]>} : vector<8x8x8xf32>, vector<8x8x8xf32>, vector<8x8x8xf32> -> vector<8x8x8xf32>
    %38 = vector.broadcast %29 : vector<8x1x8xf32> to vector<8x8x8xf32>
    %39 = arith.addf %37, %38 : vector<8x8x8xf32>
    %cst_23 = arith.constant dense<0xFF800000> : vector<8x8xf32>
    %40 = vector.multi_reduction <maximumf>, %39, %cst_23 [2] : vector<8x8x8xf32> to vector<8x8xf32>
    %41 = vector.shape_cast %40 : vector<8x8xf32> to vector<8x8x1xf32>
    %42 = vector.broadcast %41 : vector<8x8x1xf32> to vector<8x8x8xf32>
    %43 = arith.subf %39, %42 : vector<8x8x8xf32>
    %44 = math.exp %43 : vector<8x8x8xf32>
    %cst_24 = arith.constant dense<0.000000e+00> : vector<8x8xf32>
    %45 = vector.multi_reduction <add>, %44, %cst_24 [2] : vector<8x8x8xf32> to vector<8x8xf32>
    %46 = vector.shape_cast %45 : vector<8x8xf32> to vector<8x8x1xf32>
    %47 = tpu.reciprocal %46 {approx = true} : vector<8x8x1xf32> -> vector<8x8x1xf32>
    %48 = vector.broadcast %47 : vector<8x8x1xf32> to vector<8x8x8xf32>
    %49 = arith.mulf %44, %48 : vector<8x8x8xf32>
    %cst_25 = arith.constant dense<0.000000e+00> : vector<8x8x8xf32>
    %50 = tpu.matmul %49, %36, %cst_25 {dimension_numbers = #tpu.dot_dimension_numbers<[2], [1], [1], [2], [0, 0, 0, 1, 1, 2], [0], [0]>} : vector<8x8x8xf32>, vector<8x8x8xf32>, vector<8x8x8xf32> -> vector<8x8x8xf32>
    %51 = vector.shape_cast %50 : vector<8x8x8xf32> to vector<64x8xf32>
    %c0_26 = arith.constant 0 : index
    %c0_27 = arith.constant 0 : index
    %52 = vector.load %arg9[%c0_26, %c0_27] : memref<32x32xf32, #tpu.memory_space<vmem>>, vector<8x32xf32>
    %cst_28 = arith.constant dense<0.000000e+00> : vector<64x32xf32>
    %53 = tpu.matmul %51, %52, %cst_28 {dimension_numbers = #tpu.dot_dimension_numbers<[1], [0], [0], [1], [0, 0, 1, 1], [], []>} : vector<64x8xf32>, vector<8x32xf32>, vector<64x32xf32> -> vector<64x32xf32>
    %54 = arith.addf %30, %53 : vector<64x32xf32>
    %55 = vector.extract_strided_slice %24 {offsets = [0, 8], sizes = [64, 8], strides = [1, 1]} : vector<64x96xf32> to vector<64x8xf32>
    %56 = vector.shape_cast %55 : vector<64x8xf32> to vector<8x8x8xf32>
    %57 = vector.extract_strided_slice %24 {offsets = [0, 40], sizes = [64, 8], strides = [1, 1]} : vector<64x96xf32> to vector<64x8xf32>
    %58 = vector.shape_cast %57 : vector<64x8xf32> to vector<8x8x8xf32>
    %59 = vector.extract_strided_slice %24 {offsets = [0, 72], sizes = [64, 8], strides = [1, 1]} : vector<64x96xf32> to vector<64x8xf32>
    %60 = vector.shape_cast %59 : vector<64x8xf32> to vector<8x8x8xf32>
    %cst_29 = arith.constant dense<0.000000e+00> : vector<8x8x8xf32>
    %61 = tpu.matmul %56, %58, %cst_29 {dimension_numbers = #tpu.dot_dimension_numbers<[2], [2], [1], [1], [0, 0, 0, 1, 1, 1], [0], [0]>} : vector<8x8x8xf32>, vector<8x8x8xf32>, vector<8x8x8xf32> -> vector<8x8x8xf32>
    %62 = vector.broadcast %29 : vector<8x1x8xf32> to vector<8x8x8xf32>
    %63 = arith.addf %61, %62 : vector<8x8x8xf32>
    %cst_30 = arith.constant dense<0xFF800000> : vector<8x8xf32>
    %64 = vector.multi_reduction <maximumf>, %63, %cst_30 [2] : vector<8x8x8xf32> to vector<8x8xf32>
    %65 = vector.shape_cast %64 : vector<8x8xf32> to vector<8x8x1xf32>
    %66 = vector.broadcast %65 : vector<8x8x1xf32> to vector<8x8x8xf32>
    %67 = arith.subf %63, %66 : vector<8x8x8xf32>
    %68 = math.exp %67 : vector<8x8x8xf32>
    %cst_31 = arith.constant dense<0.000000e+00> : vector<8x8xf32>
    %69 = vector.multi_reduction <add>, %68, %cst_31 [2] : vector<8x8x8xf32> to vector<8x8xf32>
    %70 = vector.shape_cast %69 : vector<8x8xf32> to vector<8x8x1xf32>
    %71 = tpu.reciprocal %70 {approx = true} : vector<8x8x1xf32> -> vector<8x8x1xf32>
    %72 = vector.broadcast %71 : vector<8x8x1xf32> to vector<8x8x8xf32>
    %73 = arith.mulf %68, %72 : vector<8x8x8xf32>
    %cst_32 = arith.constant dense<0.000000e+00> : vector<8x8x8xf32>
    %74 = tpu.matmul %73, %60, %cst_32 {dimension_numbers = #tpu.dot_dimension_numbers<[2], [1], [1], [2], [0, 0, 0, 1, 1, 2], [0], [0]>} : vector<8x8x8xf32>, vector<8x8x8xf32>, vector<8x8x8xf32> -> vector<8x8x8xf32>
    %75 = vector.shape_cast %74 : vector<8x8x8xf32> to vector<64x8xf32>
    %c8 = arith.constant 8 : index
    %c0_33 = arith.constant 0 : index
    %76 = vector.load %arg9[%c8, %c0_33] : memref<32x32xf32, #tpu.memory_space<vmem>>, vector<8x32xf32>
    %cst_34 = arith.constant dense<0.000000e+00> : vector<64x32xf32>
    %77 = tpu.matmul %75, %76, %cst_34 {dimension_numbers = #tpu.dot_dimension_numbers<[1], [0], [0], [1], [0, 0, 1, 1], [], []>} : vector<64x8xf32>, vector<8x32xf32>, vector<64x32xf32> -> vector<64x32xf32>
    %78 = arith.addf %54, %77 : vector<64x32xf32>
    %79 = vector.extract_strided_slice %24 {offsets = [0, 16], sizes = [64, 8], strides = [1, 1]} : vector<64x96xf32> to vector<64x8xf32>
    %80 = vector.shape_cast %79 : vector<64x8xf32> to vector<8x8x8xf32>
    %81 = vector.extract_strided_slice %24 {offsets = [0, 48], sizes = [64, 8], strides = [1, 1]} : vector<64x96xf32> to vector<64x8xf32>
    %82 = vector.shape_cast %81 : vector<64x8xf32> to vector<8x8x8xf32>
    %83 = vector.extract_strided_slice %24 {offsets = [0, 80], sizes = [64, 8], strides = [1, 1]} : vector<64x96xf32> to vector<64x8xf32>
    %84 = vector.shape_cast %83 : vector<64x8xf32> to vector<8x8x8xf32>
    %cst_35 = arith.constant dense<0.000000e+00> : vector<8x8x8xf32>
    %85 = tpu.matmul %80, %82, %cst_35 {dimension_numbers = #tpu.dot_dimension_numbers<[2], [2], [1], [1], [0, 0, 0, 1, 1, 1], [0], [0]>} : vector<8x8x8xf32>, vector<8x8x8xf32>, vector<8x8x8xf32> -> vector<8x8x8xf32>
    %86 = vector.broadcast %29 : vector<8x1x8xf32> to vector<8x8x8xf32>
    %87 = arith.addf %85, %86 : vector<8x8x8xf32>
    %cst_36 = arith.constant dense<0xFF800000> : vector<8x8xf32>
    %88 = vector.multi_reduction <maximumf>, %87, %cst_36 [2] : vector<8x8x8xf32> to vector<8x8xf32>
    %89 = vector.shape_cast %88 : vector<8x8xf32> to vector<8x8x1xf32>
    %90 = vector.broadcast %89 : vector<8x8x1xf32> to vector<8x8x8xf32>
    %91 = arith.subf %87, %90 : vector<8x8x8xf32>
    %92 = math.exp %91 : vector<8x8x8xf32>
    %cst_37 = arith.constant dense<0.000000e+00> : vector<8x8xf32>
    %93 = vector.multi_reduction <add>, %92, %cst_37 [2] : vector<8x8x8xf32> to vector<8x8xf32>
    %94 = vector.shape_cast %93 : vector<8x8xf32> to vector<8x8x1xf32>
    %95 = tpu.reciprocal %94 {approx = true} : vector<8x8x1xf32> -> vector<8x8x1xf32>
    %96 = vector.broadcast %95 : vector<8x8x1xf32> to vector<8x8x8xf32>
    %97 = arith.mulf %92, %96 : vector<8x8x8xf32>
    %cst_38 = arith.constant dense<0.000000e+00> : vector<8x8x8xf32>
    %98 = tpu.matmul %97, %84, %cst_38 {dimension_numbers = #tpu.dot_dimension_numbers<[2], [1], [1], [2], [0, 0, 0, 1, 1, 2], [0], [0]>} : vector<8x8x8xf32>, vector<8x8x8xf32>, vector<8x8x8xf32> -> vector<8x8x8xf32>
    %99 = vector.shape_cast %98 : vector<8x8x8xf32> to vector<64x8xf32>
    %c16 = arith.constant 16 : index
    %c0_39 = arith.constant 0 : index
    %100 = vector.load %arg9[%c16, %c0_39] : memref<32x32xf32, #tpu.memory_space<vmem>>, vector<8x32xf32>
    %cst_40 = arith.constant dense<0.000000e+00> : vector<64x32xf32>
    %101 = tpu.matmul %99, %100, %cst_40 {dimension_numbers = #tpu.dot_dimension_numbers<[1], [0], [0], [1], [0, 0, 1, 1], [], []>} : vector<64x8xf32>, vector<8x32xf32>, vector<64x32xf32> -> vector<64x32xf32>
    %102 = arith.addf %78, %101 : vector<64x32xf32>
    %103 = vector.extract_strided_slice %24 {offsets = [0, 24], sizes = [64, 8], strides = [1, 1]} : vector<64x96xf32> to vector<64x8xf32>
    %104 = vector.shape_cast %103 : vector<64x8xf32> to vector<8x8x8xf32>
    %105 = vector.extract_strided_slice %24 {offsets = [0, 56], sizes = [64, 8], strides = [1, 1]} : vector<64x96xf32> to vector<64x8xf32>
    %106 = vector.shape_cast %105 : vector<64x8xf32> to vector<8x8x8xf32>
    %107 = vector.extract_strided_slice %24 {offsets = [0, 88], sizes = [64, 8], strides = [1, 1]} : vector<64x96xf32> to vector<64x8xf32>
    %108 = vector.shape_cast %107 : vector<64x8xf32> to vector<8x8x8xf32>
    %cst_41 = arith.constant dense<0.000000e+00> : vector<8x8x8xf32>
    %109 = tpu.matmul %104, %106, %cst_41 {dimension_numbers = #tpu.dot_dimension_numbers<[2], [2], [1], [1], [0, 0, 0, 1, 1, 1], [0], [0]>} : vector<8x8x8xf32>, vector<8x8x8xf32>, vector<8x8x8xf32> -> vector<8x8x8xf32>
    %110 = vector.broadcast %29 : vector<8x1x8xf32> to vector<8x8x8xf32>
    %111 = arith.addf %109, %110 : vector<8x8x8xf32>
    %cst_42 = arith.constant dense<0xFF800000> : vector<8x8xf32>
    %112 = vector.multi_reduction <maximumf>, %111, %cst_42 [2] : vector<8x8x8xf32> to vector<8x8xf32>
    %113 = vector.shape_cast %112 : vector<8x8xf32> to vector<8x8x1xf32>
    %114 = vector.broadcast %113 : vector<8x8x1xf32> to vector<8x8x8xf32>
    %115 = arith.subf %111, %114 : vector<8x8x8xf32>
    %116 = math.exp %115 : vector<8x8x8xf32>
    %cst_43 = arith.constant dense<0.000000e+00> : vector<8x8xf32>
    %117 = vector.multi_reduction <add>, %116, %cst_43 [2] : vector<8x8x8xf32> to vector<8x8xf32>
    %118 = vector.shape_cast %117 : vector<8x8xf32> to vector<8x8x1xf32>
    %119 = tpu.reciprocal %118 {approx = true} : vector<8x8x1xf32> -> vector<8x8x1xf32>
    %120 = vector.broadcast %119 : vector<8x8x1xf32> to vector<8x8x8xf32>
    %121 = arith.mulf %116, %120 : vector<8x8x8xf32>
    %cst_44 = arith.constant dense<0.000000e+00> : vector<8x8x8xf32>
    %122 = tpu.matmul %121, %108, %cst_44 {dimension_numbers = #tpu.dot_dimension_numbers<[2], [1], [1], [2], [0, 0, 0, 1, 1, 2], [0], [0]>} : vector<8x8x8xf32>, vector<8x8x8xf32>, vector<8x8x8xf32> -> vector<8x8x8xf32>
    %123 = vector.shape_cast %122 : vector<8x8x8xf32> to vector<64x8xf32>
    %c24 = arith.constant 24 : index
    %c0_45 = arith.constant 0 : index
    %124 = vector.load %arg9[%c24, %c0_45] : memref<32x32xf32, #tpu.memory_space<vmem>>, vector<8x32xf32>
    %cst_46 = arith.constant dense<0.000000e+00> : vector<64x32xf32>
    %125 = tpu.matmul %123, %124, %cst_46 {dimension_numbers = #tpu.dot_dimension_numbers<[1], [0], [0], [1], [0, 0, 1, 1], [], []>} : vector<64x8xf32>, vector<8x32xf32>, vector<64x32xf32> -> vector<64x32xf32>
    %126 = arith.addf %102, %125 : vector<64x32xf32>
    %c0_47 = arith.constant 0 : index
    %c0_48 = arith.constant 0 : index
    %127 = vector.load %arg10[%c0_47, %c0_48] : memref<1x32xf32, #tpu.memory_space<vmem>>, vector<1x32xf32>
    %128 = vector.broadcast %127 : vector<1x32xf32> to vector<64x32xf32>
    %129 = arith.addf %126, %128 : vector<64x32xf32>
    %130 = arith.addf %19, %129 : vector<64x32xf32>
    %cst_49 = arith.constant dense<0.000000e+00> : vector<64xf32>
    %131 = vector.multi_reduction <add>, %130, %cst_49 [1] : vector<64x32xf32> to vector<64xf32>
    %132 = vector.shape_cast %131 : vector<64xf32> to vector<64x1xf32>
    %cst_50 = arith.constant 3.200000e+01 : f32
    %133 = vector.broadcast %cst_50 : f32 to vector<64x1xf32>
    %134 = arith.divf %132, %133 : vector<64x1xf32>
    %135 = vector.broadcast %134 : vector<64x1xf32> to vector<64x32xf32>
    %136 = arith.subf %130, %135 : vector<64x32xf32>
    %137 = arith.mulf %136, %136 : vector<64x32xf32>
    %cst_51 = arith.constant dense<0.000000e+00> : vector<64xf32>
    %138 = vector.multi_reduction <add>, %137, %cst_51 [1] : vector<64x32xf32> to vector<64xf32>
    %139 = vector.shape_cast %138 : vector<64xf32> to vector<64x1xf32>
    %cst_52 = arith.constant 3.200000e+01 : f32
    %140 = vector.broadcast %cst_52 : f32 to vector<64x1xf32>
    %141 = arith.divf %139, %140 : vector<64x1xf32>
    %142 = vector.broadcast %134 : vector<64x1xf32> to vector<64x32xf32>
    %143 = arith.subf %130, %142 : vector<64x32xf32>
    %cst_53 = arith.constant 9.99999974E-6 : f32
    %144 = vector.broadcast %cst_53 : f32 to vector<64x1xf32>
    %145 = arith.addf %141, %144 : vector<64x1xf32>
    %146 = math.rsqrt %145 : vector<64x1xf32>
    %147 = vector.broadcast %146 : vector<64x1xf32> to vector<64x32xf32>
    %148 = arith.mulf %143, %147 : vector<64x32xf32>
    %c0_54 = arith.constant 0 : index
    %c0_55 = arith.constant 0 : index
    %149 = vector.load %arg11[%c0_54, %c0_55] : memref<1x32xf32, #tpu.memory_space<vmem>>, vector<1x32xf32>
    %150 = vector.broadcast %149 : vector<1x32xf32> to vector<64x32xf32>
    %151 = arith.mulf %148, %150 : vector<64x32xf32>
    %c0_56 = arith.constant 0 : index
    %c0_57 = arith.constant 0 : index
    %152 = vector.load %arg12[%c0_56, %c0_57] : memref<1x32xf32, #tpu.memory_space<vmem>>, vector<1x32xf32>
    %153 = vector.broadcast %152 : vector<1x32xf32> to vector<64x32xf32>
    %154 = arith.addf %151, %153 : vector<64x32xf32>
    %c0_58 = arith.constant 0 : index
    %c0_59 = arith.constant 0 : index
    %155 = vector.load %arg13[%c0_58, %c0_59] : memref<32x64xf32, #tpu.memory_space<vmem>>, vector<32x64xf32>
    %cst_60 = arith.constant dense<0.000000e+00> : vector<64x64xf32>
    %156 = tpu.matmul %154, %155, %cst_60 {dimension_numbers = #tpu.dot_dimension_numbers<[1], [0], [0], [1], [0, 0, 1, 1], [], []>} : vector<64x32xf32>, vector<32x64xf32>, vector<64x64xf32> -> vector<64x64xf32>
    %c0_61 = arith.constant 0 : index
    %c0_62 = arith.constant 0 : index
    %157 = vector.load %arg14[%c0_61, %c0_62] : memref<1x64xf32, #tpu.memory_space<vmem>>, vector<1x64xf32>
    %158 = vector.broadcast %157 : vector<1x64xf32> to vector<64x64xf32>
    %159 = arith.addf %156, %158 : vector<64x64xf32>
    %cst_63 = arith.constant 0.000000e+00 : f32
    %160 = vector.broadcast %cst_63 : f32 to vector<64x64xf32>
    %161 = arith.maximumf %159, %160 : vector<64x64xf32>
    %c0_64 = arith.constant 0 : index
    %c0_65 = arith.constant 0 : index
    %162 = vector.load %arg15[%c0_64, %c0_65] : memref<64x32xf32, #tpu.memory_space<vmem>>, vector<64x32xf32>
    %cst_66 = arith.constant dense<0.000000e+00> : vector<64x32xf32>
    %163 = tpu.matmul %161, %162, %cst_66 {dimension_numbers = #tpu.dot_dimension_numbers<[1], [0], [0], [1], [0, 0, 1, 1], [], []>} : vector<64x64xf32>, vector<64x32xf32>, vector<64x32xf32> -> vector<64x32xf32>
    %c0_67 = arith.constant 0 : index
    %c0_68 = arith.constant 0 : index
    %164 = vector.load %arg16[%c0_67, %c0_68] : memref<1x32xf32, #tpu.memory_space<vmem>>, vector<1x32xf32>
    %165 = vector.broadcast %164 : vector<1x32xf32> to vector<64x32xf32>
    %166 = arith.addf %163, %165 : vector<64x32xf32>
    %167 = arith.addf %154, %166 : vector<64x32xf32>
    %cst_69 = arith.constant dense<0.000000e+00> : vector<64xf32>
    %168 = vector.multi_reduction <add>, %167, %cst_69 [1] : vector<64x32xf32> to vector<64xf32>
    %169 = vector.shape_cast %168 : vector<64xf32> to vector<64x1xf32>
    %cst_70 = arith.constant 3.200000e+01 : f32
    %170 = vector.broadcast %cst_70 : f32 to vector<64x1xf32>
    %171 = arith.divf %169, %170 : vector<64x1xf32>
    %172 = vector.broadcast %171 : vector<64x1xf32> to vector<64x32xf32>
    %173 = arith.subf %167, %172 : vector<64x32xf32>
    %174 = arith.mulf %173, %173 : vector<64x32xf32>
    %cst_71 = arith.constant dense<0.000000e+00> : vector<64xf32>
    %175 = vector.multi_reduction <add>, %174, %cst_71 [1] : vector<64x32xf32> to vector<64xf32>
    %176 = vector.shape_cast %175 : vector<64xf32> to vector<64x1xf32>
    %cst_72 = arith.constant 3.200000e+01 : f32
    %177 = vector.broadcast %cst_72 : f32 to vector<64x1xf32>
    %178 = arith.divf %176, %177 : vector<64x1xf32>
    %179 = vector.broadcast %171 : vector<64x1xf32> to vector<64x32xf32>
    %180 = arith.subf %167, %179 : vector<64x32xf32>
    %cst_73 = arith.constant 9.99999974E-6 : f32
    %181 = vector.broadcast %cst_73 : f32 to vector<64x1xf32>
    %182 = arith.addf %178, %181 : vector<64x1xf32>
    %183 = math.rsqrt %182 : vector<64x1xf32>
    %184 = vector.broadcast %183 : vector<64x1xf32> to vector<64x32xf32>
    %185 = arith.mulf %180, %184 : vector<64x32xf32>
    %c0_74 = arith.constant 0 : index
    %c0_75 = arith.constant 0 : index
    %186 = vector.load %arg17[%c0_74, %c0_75] : memref<1x32xf32, #tpu.memory_space<vmem>>, vector<1x32xf32>
    %187 = vector.broadcast %186 : vector<1x32xf32> to vector<64x32xf32>
    %188 = arith.mulf %185, %187 : vector<64x32xf32>
    %c0_76 = arith.constant 0 : index
    %c0_77 = arith.constant 0 : index
    %189 = vector.load %arg18[%c0_76, %c0_77] : memref<1x32xf32, #tpu.memory_space<vmem>>, vector<1x32xf32>
    %190 = vector.broadcast %189 : vector<1x32xf32> to vector<64x32xf32>
    %191 = arith.addf %188, %190 : vector<64x32xf32>
    %192 = vector.shape_cast %191 : vector<64x32xf32> to vector<8x8x32xf32>
    %193 = vector.extract_strided_slice %192 {offsets = [0, 0, 0], sizes = [8, 1, 32], strides = [1, 1, 1]} : vector<8x8x32xf32> to vector<8x1x32xf32>
    %194 = vector.shape_cast %193 : vector<8x1x32xf32> to vector<8x32xf32>
    %c0_78 = arith.constant 0 : index
    %c0_79 = arith.constant 0 : index
    %195 = vector.load %arg19[%c0_78, %c0_79] : memref<32x7xf32, #tpu.memory_space<vmem>>, vector<32x7xf32>
    %cst_80 = arith.constant dense<0.000000e+00> : vector<8x7xf32>
    %196 = tpu.matmul %194, %195, %cst_80 {dimension_numbers = #tpu.dot_dimension_numbers<[1], [0], [0], [1], [0, 0, 1, 1], [], []>} : vector<8x32xf32>, vector<32x7xf32>, vector<8x7xf32> -> vector<8x7xf32>
    %c0_81 = arith.constant 0 : index
    %c0_82 = arith.constant 0 : index
    %197 = vector.load %arg20[%c0_81, %c0_82] : memref<1x7xf32, #tpu.memory_space<vmem>>, vector<1x7xf32>
    %198 = vector.broadcast %197 : vector<1x7xf32> to vector<8x7xf32>
    %199 = arith.addf %196, %198 : vector<8x7xf32>
    %c0_83 = arith.constant 0 : index
    %c0_84 = arith.constant 0 : index
    %200 = vector.load %arg21[%c0_83, %c0_84] : memref<8x7xf32, #tpu.memory_space<vmem>>, vector<8x7xf32>
    tpu.vector_store %arg21[%c0_83, %c0_84], %199 {strides = array<i32>} : memref<8x7xf32, #tpu.memory_space<vmem>>, vector<8x7xf32>,
    %c0_85 = arith.constant 0 : index
    %c0_86 = arith.constant 0 : index
    %201 = vector.load %arg22[%c0_85, %c0_86] : memref<8x32xf32, #tpu.memory_space<vmem>>, vector<8x32xf32>
    tpu.vector_store %arg22[%c0_85, %c0_86], %194 {strides = array<i32>} : memref<8x32xf32, #tpu.memory_space<vmem>>, vector<8x32xf32>,
    return
  }
  func.func @transform_0(%arg0: i32) -> (i32, i32) {
    %c0_i32 = arith.constant 0 : i32
    %c0_i32_0 = arith.constant 0 : i32
    return %arg0, %c0_i32 : i32, i32
  }
  func.func @transform_1(%arg0: i32) -> (i32, i32, i32) {
    %c0_i32 = arith.constant 0 : i32
    %c0_i32_0 = arith.constant 0 : i32
    %c0_i32_1 = arith.constant 0 : i32
    return %arg0, %c0_i32, %c0_i32_0 : i32, i32, i32
  }
  func.func @transform_2(%arg0: i32) -> (i32, i32, i32) {
    %c0_i32 = arith.constant 0 : i32
    %c0_i32_0 = arith.constant 0 : i32
    %c0_i32_1 = arith.constant 0 : i32
    return %arg0, %c0_i32, %c0_i32_0 : i32, i32, i32
  }
  func.func @transform_3(%arg0: i32) -> (i32, i32) {
    %c0_i32 = arith.constant 0 : i32
    %c0_i32_0 = arith.constant 0 : i32
    %c0_i32_1 = arith.constant 0 : i32
    return %c0_i32, %c0_i32_0 : i32, i32
  }
  func.func @transform_4(%arg0: i32) -> (i32, i32) {
    %c0_i32 = arith.constant 0 : i32
    %c0_i32_0 = arith.constant 0 : i32
    %c0_i32_1 = arith.constant 0 : i32
    return %c0_i32, %c0_i32_0 : i32, i32
  }
  func.func @transform_5(%arg0: i32) -> (i32, i32) {
    %c0_i32 = arith.constant 0 : i32
    %c0_i32_0 = arith.constant 0 : i32
    %c0_i32_1 = arith.constant 0 : i32
    return %c0_i32, %c0_i32_0 : i32, i32
  }
  func.func @transform_6(%arg0: i32) -> (i32, i32) {
    %c0_i32 = arith.constant 0 : i32
    %c0_i32_0 = arith.constant 0 : i32
    %c0_i32_1 = arith.constant 0 : i32
    return %c0_i32, %c0_i32_0 : i32, i32
  }
  func.func @transform_7(%arg0: i32) -> (i32, i32) {
    %c0_i32 = arith.constant 0 : i32
    %c0_i32_0 = arith.constant 0 : i32
    %c0_i32_1 = arith.constant 0 : i32
    return %c0_i32, %c0_i32_0 : i32, i32
  }
  func.func @transform_8(%arg0: i32) -> (i32, i32) {
    %c0_i32 = arith.constant 0 : i32
    %c0_i32_0 = arith.constant 0 : i32
    %c0_i32_1 = arith.constant 0 : i32
    return %c0_i32, %c0_i32_0 : i32, i32
  }
  func.func @transform_9(%arg0: i32) -> (i32, i32) {
    %c0_i32 = arith.constant 0 : i32
    %c0_i32_0 = arith.constant 0 : i32
    %c0_i32_1 = arith.constant 0 : i32
    return %c0_i32, %c0_i32_0 : i32, i32
  }
  func.func @transform_10(%arg0: i32) -> (i32, i32) {
    %c0_i32 = arith.constant 0 : i32
    %c0_i32_0 = arith.constant 0 : i32
    %c0_i32_1 = arith.constant 0 : i32
    return %c0_i32, %c0_i32_0 : i32, i32
  }
  func.func @transform_11(%arg0: i32) -> (i32, i32) {
    %c0_i32 = arith.constant 0 : i32
    %c0_i32_0 = arith.constant 0 : i32
    %c0_i32_1 = arith.constant 0 : i32
    return %c0_i32, %c0_i32_0 : i32, i32
  }
  func.func @transform_12(%arg0: i32) -> (i32, i32) {
    %c0_i32 = arith.constant 0 : i32
    %c0_i32_0 = arith.constant 0 : i32
    %c0_i32_1 = arith.constant 0 : i32
    return %c0_i32, %c0_i32_0 : i32, i32
  }
  func.func @transform_13(%arg0: i32) -> (i32, i32) {
    %c0_i32 = arith.constant 0 : i32
    %c0_i32_0 = arith.constant 0 : i32
    %c0_i32_1 = arith.constant 0 : i32
    return %c0_i32, %c0_i32_0 : i32, i32
  }
  func.func @transform_14(%arg0: i32) -> (i32, i32) {
    %c0_i32 = arith.constant 0 : i32
    %c0_i32_0 = arith.constant 0 : i32
    %c0_i32_1 = arith.constant 0 : i32
    return %c0_i32, %c0_i32_0 : i32, i32
  }
  func.func @transform_15(%arg0: i32) -> (i32, i32) {
    %c0_i32 = arith.constant 0 : i32
    %c0_i32_0 = arith.constant 0 : i32
    %c0_i32_1 = arith.constant 0 : i32
    return %c0_i32, %c0_i32_0 : i32, i32
  }
  func.func @transform_16(%arg0: i32) -> (i32, i32) {
    %c0_i32 = arith.constant 0 : i32
    %c0_i32_0 = arith.constant 0 : i32
    %c0_i32_1 = arith.constant 0 : i32
    return %c0_i32, %c0_i32_0 : i32, i32
  }
  func.func @transform_17(%arg0: i32) -> (i32, i32) {
    %c0_i32 = arith.constant 0 : i32
    %c0_i32_0 = arith.constant 0 : i32
    %c0_i32_1 = arith.constant 0 : i32
    return %c0_i32, %c0_i32_0 : i32, i32
  }
  func.func @transform_18(%arg0: i32) -> (i32, i32) {
    %c0_i32 = arith.constant 0 : i32
    %c0_i32_0 = arith.constant 0 : i32
    %c0_i32_1 = arith.constant 0 : i32
    return %c0_i32, %c0_i32_0 : i32, i32
  }
  func.func @transform_19(%arg0: i32) -> (i32, i32) {
    %c0_i32 = arith.constant 0 : i32
    %c0_i32_0 = arith.constant 0 : i32
    %c0_i32_1 = arith.constant 0 : i32
    return %c0_i32, %c0_i32_0 : i32, i32
  }
  func.func @transform_20(%arg0: i32) -> (i32, i32) {
    %c0_i32 = arith.constant 0 : i32
    %c0_i32_0 = arith.constant 0 : i32
    return %arg0, %c0_i32 : i32, i32
  }
  func.func @transform_21(%arg0: i32) -> (i32, i32) {
    %c0_i32 = arith.constant 0 : i32
    %c0_i32_0 = arith.constant 0 : i32
    return %arg0, %c0_i32 : i32, i32
  }
}

</mosaic_0001>

<llo_original>
// kernel: tpu_custom_call.1
$region0: #{tpu_custom_call.1}
  #allocation0 [shape = 'u32[]', space=smem, size = 0x4, offset = 0x4, fixed_abs, tag = 'smem constant byte address 0x4 - core index']
  #allocation1 [shape = 'u32[144,128]{1,0:T(1,128)}', space=vmem, size = 0x12000, scoped, tag = 'internal scratch']
  %s0 = inlined_call_operand.vmem [shape: f32[64,4], index: 0, kind: input, shape index: {}]
  %s1 = inlined_call_operand.vmem [shape: f32[8,1,8], index: 1, kind: input, shape index: {}]
  %s2 = inlined_call_operand.vmem [shape: f32[8,1,32], index: 2, kind: input, shape index: {}]
  %s3 = inlined_call_operand.vmem [shape: f32[8,32], index: 3, kind: input, shape index: {}]
  %s4 = inlined_call_operand.vmem [shape: f32[4,32], index: 4, kind: input, shape index: {}]
  %s5 = inlined_call_operand.vmem [shape: f32[1,32], index: 5, kind: input, shape index: {}]
  %s6 = inlined_call_operand.vmem [shape: f32[32,96], index: 6, kind: input, shape index: {}]
  %s7 = inlined_call_operand.vmem [shape: f32[1,96], index: 7, kind: input, shape index: {}]
  %s8 = inlined_call_operand.vmem [shape: f32[32,32], index: 8, kind: input, shape index: {}]
  %s9 = inlined_call_operand.vmem [shape: f32[1,32], index: 9, kind: input, shape index: {}]
  %s10 = inlined_call_operand.vmem [shape: f32[1,32], index: 10, kind: input, shape index: {}]
  %s11 = inlined_call_operand.vmem [shape: f32[1,32], index: 11, kind: input, shape index: {}]
  %s12 = inlined_call_operand.vmem [shape: f32[32,64], index: 12, kind: input, shape index: {}]
  %s13 = inlined_call_operand.vmem [shape: f32[1,64], index: 13, kind: input, shape index: {}]
  %s14 = inlined_call_operand.vmem [shape: f32[64,32], index: 14, kind: input, shape index: {}]
  %s15 = inlined_call_operand.vmem [shape: f32[1,32], index: 15, kind: input, shape index: {}]
  %s16 = inlined_call_operand.vmem [shape: f32[1,32], index: 16, kind: input, shape index: {}]
  %s17 = inlined_call_operand.vmem [shape: f32[1,32], index: 17, kind: input, shape index: {}]
  %s18 = inlined_call_operand.vmem [shape: f32[32,7], index: 18, kind: input, shape index: {}]
  %s19 = inlined_call_operand.vmem [shape: f32[1,7], index: 19, kind: input, shape index: {}]
  %s20 = inlined_call_operand.hbm [shape: f32[8,7], index: 20, kind: output, shape index: {0}]
  %s21 = inlined_call_operand.hbm [shape: f32[8,32], index: 21, kind: output, shape index: {1}]
  %22 = xla_tuple %s20, %s21
  %s23 = sld [smem:[#allocation0]]
  $region98: #{tpu_custom_call.1} parent=0
    _
  %s25 = ssub.s32 1, %s23
  %s26 = scalar_select 0, %s25, %s23
  $region1: #{tpu_custom_call.1} parent=0
    #allocation2 [shape = 'u8[4096]{0}', space=vmem, size = 0x1000, scoped, tag = 'output window, operand 0, single buffered']
    #allocation3 [shape = 's32[1]{0}', space=sflag, size = 0x4, scoped, tag = 'scoped memory for tpu_custom_call.1']
    #allocation4 [shape = 'u8[4096]{0}', space=vmem, size = 0x1000, scoped, tag = 'output window, operand 1, single buffered']
    #allocation5 [shape = 's32[1]{0}', space=sflag, size = 0x4, scoped, tag = 'scoped memory for tpu_custom_call.1']
    %27 = vsyncpa [#allocation3], 0
    %28 = vsyncpa [#allocation5], 0
    // Predicated region
    $region2: #{tpu_custom_call.1} parent=1 // pred_check
      _
    $region3: #{tpu_custom_call.1} parent=1 // pred_check_branch
      %30 = sbr.rel (0) target = $region5
    $region4: #{tpu_custom_call.1} parent=1 // pred_region
      _
    $region5: #{tpu_custom_call.1} parent=1 // pred_fallthru
      _
    // Predicated region
    $region6: #{tpu_custom_call.1} parent=1 // pred_check
      _
    $region7: #{tpu_custom_call.1} parent=1 // pred_check_branch
      %32 = sbr.rel (0) target = $region9
    $region8: #{tpu_custom_call.1} parent=1 // pred_region
      _
    $region9: #{tpu_custom_call.1} parent=1 // pred_fallthru
      _
    // Predicated region
    $region10: #{tpu_custom_call.1} parent=1 // pred_check
      _
    $region11: #{tpu_custom_call.1} parent=1 // pred_check_branch
      %34 = sbr.rel (0) target = $region13
    $region12: #{tpu_custom_call.1} parent=1 // pred_region
      _
    $region13: #{tpu_custom_call.1} parent=1 // pred_fallthru
      _
    // Predicated region
    $region14: #{tpu_custom_call.1} parent=1 // pred_check
      _
    $region15: #{tpu_custom_call.1} parent=1 // pred_check_branch
      %36 = sbr.rel (0) target = $region17
    $region16: #{tpu_custom_call.1} parent=1 // pred_region
      _
    $region17: #{tpu_custom_call.1} parent=1 // pred_fallthru
      _
    // Predicated region
    $region18: #{tpu_custom_call.1} parent=1 // pred_check
      _
    $region19: #{tpu_custom_call.1} parent=1 // pred_check_branch
      %38 = sbr.rel (0) target = $region21
    $region20: #{tpu_custom_call.1} parent=1 // pred_region
      _
    $region21: #{tpu_custom_call.1} parent=1 // pred_fallthru
      _
    // Predicated region
    $region22: #{tpu_custom_call.1} parent=1 // pred_check
      _
    $region23: #{tpu_custom_call.1} parent=1 // pred_check_branch
      %40 = sbr.rel (0) target = $region25
    $region24: #{tpu_custom_call.1} parent=1 // pred_region
      _
    $region25: #{tpu_custom_call.1} parent=1 // pred_fallthru
      _
    // Predicated region
    $region26: #{tpu_custom_call.1} parent=1 // pred_check
      _
    $region27: #{tpu_custom_call.1} parent=1 // pred_check_branch
      %42 = sbr.rel (0) target = $region29
    $region28: #{tpu_custom_call.1} parent=1 // pred_region
      _
    $region29: #{tpu_custom_call.1} parent=1 // pred_fallthru
      _
    // Predicated region
    $region30: #{tpu_custom_call.1} parent=1 // pred_check
      _
    $region31: #{tpu_custom_call.1} parent=1 // pred_check_branch
      %44 = sbr.rel (0) target = $region33
    $region32: #{tpu_custom_call.1} parent=1 // pred_region
      _
    $region33: #{tpu_custom_call.1} parent=1 // pred_fallthru
      _
    // Predicated region
    $region34: #{tpu_custom_call.1} parent=1 // pred_check
      _
    $region35: #{tpu_custom_call.1} parent=1 // pred_check_branch
      %46 = sbr.rel (0) target = $region37
    $region36: #{tpu_custom_call.1} parent=1 // pred_region
      _
    $region37: #{tpu_custom_call.1} parent=1 // pred_fallthru
      _
    // Predicated region
    $region38: #{tpu_custom_call.1} parent=1 // pred_check
      _
    $region39: #{tpu_custom_call.1} parent=1 // pred_check_branch
      %48 = sbr.rel (0) target = $region41
    $region40: #{tpu_custom_call.1} parent=1 // pred_region
      _
    $region41: #{tpu_custom_call.1} parent=1 // pred_fallthru
      _
    // Predicated region
    $region42: #{tpu_custom_call.1} parent=1 // pred_check
      _
    $region43: #{tpu_custom_call.1} parent=1 // pred_check_branch
      %50 = sbr.rel (0) target = $region45
    $region44: #{tpu_custom_call.1} parent=1 // pred_region
      _
    $region45: #{tpu_custom_call.1} parent=1 // pred_fallthru
      _
    // Predicated region
    $region46: #{tpu_custom_call.1} parent=1 // pred_check
      _
    $region47: #{tpu_custom_call.1} parent=1 // pred_check_branch
      %52 = sbr.rel (0) target = $region49
    $region48: #{tpu_custom_call.1} parent=1 // pred_region
      _
    $region49: #{tpu_custom_call.1} parent=1 // pred_fallthru
      _
    // Predicated region
    $region50: #{tpu_custom_call.1} parent=1 // pred_check
      _
    $region51: #{tpu_custom_call.1} parent=1 // pred_check_branch
      %54 = sbr.rel (0) target = $region53
    $region52: #{tpu_custom_call.1} parent=1 // pred_region
      _
    $region53: #{tpu_custom_call.1} parent=1 // pred_fallthru
      _
    // Predicated region
    $region54: #{tpu_custom_call.1} parent=1 // pred_check
      _
    $region55: #{tpu_custom_call.1} parent=1 // pred_check_branch
      %56 = sbr.rel (0) target = $region57
    $region56: #{tpu_custom_call.1} parent=1 // pred_region
      _
    $region57: #{tpu_custom_call.1} parent=1 // pred_fallthru
      _
    // Predicated region
    $region58: #{tpu_custom_call.1} parent=1 // pred_check
      _
    $region59: #{tpu_custom_call.1} parent=1 // pred_check_branch
      %58 = sbr.rel (0) target = $region61
    $region60: #{tpu_custom_call.1} parent=1 // pred_region
      _
    $region61: #{tpu_custom_call.1} parent=1 // pred_fallthru
      _
    // Predicated region
    $region62: #{tpu_custom_call.1} parent=1 // pred_check
      _
    $region63: #{tpu_custom_call.1} parent=1 // pred_check_branch
      %60 = sbr.rel (0) target = $region65
    $region64: #{tpu_custom_call.1} parent=1 // pred_region
      _
    $region65: #{tpu_custom_call.1} parent=1 // pred_fallthru
      _
    // Predicated region
    $region66: #{tpu_custom_call.1} parent=1 // pred_check
      _
    $region67: #{tpu_custom_call.1} parent=1 // pred_check_branch
      %62 = sbr.rel (0) target = $region69
    $region68: #{tpu_custom_call.1} parent=1 // pred_region
      _
    $region69: #{tpu_custom_call.1} parent=1 // pred_fallthru
      _
    // Predicated region
    $region70: #{tpu_custom_call.1} parent=1 // pred_check
      _
    $region71: #{tpu_custom_call.1} parent=1 // pred_check_branch
      %64 = sbr.rel (0) target = $region73
    $region72: #{tpu_custom_call.1} parent=1 // pred_region
      _
    $region73: #{tpu_custom_call.1} parent=1 // pred_fallthru
      _
    // Predicated region
    $region74: #{tpu_custom_call.1} parent=1 // pred_check
      _
    $region75: #{tpu_custom_call.1} parent=1 // pred_check_branch
      %66 = sbr.rel (0) target = $region77
    $region76: #{tpu_custom_call.1} parent=1 // pred_region
      _
    $region77: #{tpu_custom_call.1} parent=1 // pred_fallthru
      _
    // Predicated region
    $region78: #{tpu_custom_call.1} parent=1 // pred_check
      _
    $region79: #{tpu_custom_call.1} parent=1 // pred_check_branch
      %68 = sbr.rel (0) target = $region81
    $region80: #{tpu_custom_call.1} parent=1 // pred_region
      _
    $region81: #{tpu_custom_call.1} parent=1 // pred_fallthru
      _
    %v69 = vld [vmem:[%s0] sm:$0xff]
    %v70 = vld [vmem:[%s0 + $0x8] sm:$0xff]
    %v71 = vld [vmem:[%s0 + $0x10] sm:$0xff]
    %v72 = vld [vmem:[%s0 + $0x18] sm:$0xff]
    %v73 = vld [vmem:[%s0 + $0x20] sm:$0xff]
    %v74 = vld [vmem:[%s0 + $0x28] sm:$0xff]
    %v75 = vld [vmem:[%s0 + $0x30] sm:$0xff]
    %v76 = vld [vmem:[%s0 + $0x38] sm:$0xff]
    %v77 = vld [vmem:[%s4] sm:$0xf]
    %v78 = vld [vmem:[%s5] sm:$0x1]
    %v80 = vlaneseq
    %v81 = vshrl.u32 %v80, 7
    %v82 = vsub.s32 0, %v81
    %v83 = vrot.slane %v78, %v82
    %vm85 = vcmask 31744
    %v87 = vsel %vm85, %v69, 0
    %v90 = vsel %vm85, %v70, 0
    %v93 = vsel %vm85, %v71, 0
    %v96 = vsel %vm85, %v72, 0
    %v99 = vsel %vm85, %v73, 0
    %v102 = vsel %vm85, %v74, 0
    %v105 = vsel %vm85, %v75, 0
    %v108 = vsel %vm85, %v76, 0
    %vm110 = vcmask 1043456
    %v112 = vsel %vm110, %v77, 0
    %114 = vmatprep.subr.mxu0 0.0
    %115 = vmatpush1.msra.mxu0 0.0
    %116 = vmatprep.subr.mxu0 0.0
    %117 = vmatpush1.msra.mxu0 0.0
    %118 = vmatprep.subr.mxu0 0.0
    %119 = vmatpush1.msra.mxu0 0.0
    %120 = vmatprep.subr.mxu0 0.0
    %121 = vmatpush1.msra.mxu0 0.0
    %122 = vmatprep.subr.mxu0 0.0
    %123 = vmatpush1.msra.mxu0 0.0
    %124 = vmatprep.subr.mxu0 0.0
    %125 = vmatpush1.msra.mxu0 0.0
    %126 = vmatprep.subr.mxu0 0.0
    %127 = vmatpush1.msra.mxu0 0.0
    %128 = vmatprep.subr.mxu0 0.0
    %129 = vmatpush1.msra.mxu0 0.0
    %130 = vmatprep.subr.mxu0 0.0
    %131 = vmatpush1.msra.mxu0 0.0
    %132 = vmatprep.subr.mxu0 0.0
    %133 = vmatpush1.msra.mxu0 0.0
    %134 = vmatprep.subr.mxu0 0.0
    %135 = vmatpush1.msra.mxu0 0.0
    %136 = vmatprep.subr.mxu0 0.0
    %137 = vmatpush1.msra.mxu0 0.0
    %138 = vmatprep.subr.mxu0 0.0
    %139 = vmatpush1.msra.mxu0 0.0
    %140 = vmatprep.subr.mxu0 0.0
    %141 = vmatpush1.msra.mxu0 0.0
    %142 = vmatprep.subr.mxu0 0.0
    %143 = vmatpush1.msra.mxu0 0.0
    %144 = vmatprep.subr.mxu0 0.0
    %145 = vmatpush1.msra.mxu0 %v112
    %146 = vmatprep.subr.mxu0 0.0
    %147 = vmatpush2.msra.mxu0 0.0
    %148 = vmatprep.subr.mxu0 0.0
    %149 = vmatpush2.msra.mxu0 0.0
    %150 = vmatprep.subr.mxu0 0.0
    %151 = vmatpush2.msra.mxu0 0.0
    %152 = vmatprep.subr.mxu0 0.0
    %153 = vmatpush2.msra.mxu0 0.0
    %154 = vmatprep.subr.mxu0 0.0
    %155 = vmatpush2.msra.mxu0 0.0
    %156 = vmatprep.subr.mxu0 0.0
    %157 = vmatpush2.msra.mxu0 0.0
    %158 = vmatprep.subr.mxu0 0.0
    %159 = vmatpush2.msra.mxu0 0.0
    %160 = vmatprep.subr.mxu0 0.0
    %161 = vmatpush2.msra.mxu0 0.0
    %162 = vmatprep.subr.mxu0 0.0
    %163 = vmatpush2.msra.mxu0 0.0
    %164 = vmatprep.subr.mxu0 0.0
    %165 = vmatpush2.msra.mxu0 0.0
    %166 = vmatprep.subr.mxu0 0.0
    %167 = vmatpush2.msra.mxu0 0.0
    %168 = vmatprep.subr.mxu0 0.0
    %169 = vmatpush2.msra.mxu0 0.0
    %170 = vmatprep.subr.mxu0 0.0
    %171 = vmatpush2.msra.mxu0 0.0
    %172 = vmatprep.subr.mxu0 0.0
    %173 = vmatpush2.msra.mxu0 0.0
    %174 = vmatprep.subr.mxu0 0.0
    %175 = vmatpush2.msra.mxu0 0.0
    %176 = vmatprep.subr.mxu0 0.0
    %177 = vmatpush2.msra.mxu0 0.0
    %178 = vmatprep.mubr.f32.mxu0 0.0
    %179 = vmatmul.mubr.f32.gmra.mxu0 %v87
    %v180 = vpop.f32.mrf.mxu0
    %v181 = vadd.f32 %v83, %v180
    %v182 = vpop.f32.mrf.mxu0
    %183 = vmatprep.mubr.f32.mxu0 0.0
    %184 = vmatmul.mubr.f32.gmra.mxu0 %v90
    %v185 = vpop.f32.mrf.mxu0
    %v186 = vadd.f32 %v83, %v185
    %v187 = vpop.f32.mrf.mxu0
    %188 = vmatprep.mubr.f32.mxu0 0.0
    %189 = vmatmul.mubr.f32.gmra.mxu0 %v93
    %v190 = vpop.f32.mrf.mxu0
    %v191 = vadd.f32 %v83, %v190
    %v192 = vpop.f32.mrf.mxu0
    %193 = vmatprep.mubr.f32.mxu0 0.0
    %194 = vmatmul.mubr.f32.gmra.mxu0 %v96
    %v195 = vpop.f32.mrf.mxu0
    %v196 = vadd.f32 %v83, %v195
    %v197 = vpop.f32.mrf.mxu0
    %198 = vmatprep.mubr.f32.mxu0 0.0
    %199 = vmatmul.mubr.f32.gmra.mxu0 %v99
    %v200 = vpop.f32.mrf.mxu0
    %v201 = vadd.f32 %v83, %v200
    %v202 = vpop.f32.mrf.mxu0
    %203 = vmatprep.mubr.f32.mxu0 0.0
    %204 = vmatmul.mubr.f32.gmra.mxu0 %v102
    %v205 = vpop.f32.mrf.mxu0
    %v206 = vadd.f32 %v83, %v205
    %v207 = vpop.f32.mrf.mxu0
    %208 = vmatprep.mubr.f32.mxu0 0.0
    %209 = vmatmul.mubr.f32.gmra.mxu0 %v105
    %v210 = vpop.f32.mrf.mxu0
    %v211 = vadd.f32 %v83, %v210
    %v212 = vpop.f32.mrf.mxu0
    %213 = vmatprep.mubr.f32.mxu0 0.0
    %214 = vmatmul.mubr.f32.gmra.mxu0 %v108
    %v215 = vpop.f32.mrf.mxu0
    %v216 = vadd.f32 %v83, %v215
    %v217 = vpop.f32.mrf.mxu0
    %218 = vdwg.mxu0
    %v219 = vld [vmem:[%s3] sm:$0xff]
    %v220 = vsub.f32 1.0, %v219
    %v221 = vmul.f32 %v181, %v220
    %v222 = vmul.f32 %v186, %v220
    %v223 = vmul.f32 %v191, %v220
    %v224 = vmul.f32 %v196, %v220
    %v225 = vmul.f32 %v201, %v220
    %v226 = vmul.f32 %v206, %v220
    %v227 = vmul.f32 %v211, %v220
    %v228 = vmul.f32 %v216, %v220
    %v229 = vld [vmem:[%s2] sm:$0x1]
    %v230 = vld [vmem:[%s2 + $0x1] sm:$0x1]
    %v231 = vld [vmem:[%s2 + $0x2] sm:$0x1]
    %v232 = vld [vmem:[%s2 + $0x3] sm:$0x1]
    %v233 = vld [vmem:[%s2 + $0x4] sm:$0x1]
    %v234 = vld [vmem:[%s2 + $0x5] sm:$0x1]
    %v235 = vld [vmem:[%s2 + $0x6] sm:$0x1]
    %v236 = vld [vmem:[%s2 + $0x7] sm:$0x1]
    %v245 = vlaneseq
    %v246 = vshrl.u32 %v245, 7
    %v247 = vsub.s32 0, %v246
    %v248 = vrot.slane %v229, %v247
    %v249 = vlaneseq
    %v250 = vshrl.u32 %v249, 7
    %v251 = vsub.s32 0, %v250
    %v252 = vrot.slane %v230, %v251
    %v253 = vlaneseq
    %v254 = vshrl.u32 %v253, 7
    %v255 = vsub.s32 0, %v254
    %v256 = vrot.slane %v231, %v255
    %v257 = vlaneseq
    %v258 = vshrl.u32 %v257, 7
    %v259 = vsub.s32 0, %v258
    %v260 = vrot.slane %v232, %v259
    %v261 = vlaneseq
    %v262 = vshrl.u32 %v261, 7
    %v263 = vsub.s32 0, %v262
    %v264 = vrot.slane %v233, %v263
    %v265 = vlaneseq
    %v266 = vshrl.u32 %v265, 7
    %v267 = vsub.s32 0, %v266
    %v268 = vrot.slane %v234, %v267
    %v269 = vlaneseq
    %v270 = vshrl.u32 %v269, 7
    %v271 = vsub.s32 0, %v270
    %v272 = vrot.slane %v235, %v271
    %v273 = vlaneseq
    %v274 = vshrl.u32 %v273, 7
    %v275 = vsub.s32 0, %v274
    %v276 = vrot.slane %v236, %v275
    %v285 = vmul.f32 %v248, %v219
    %v286 = vmul.f32 %v252, %v219
    %v287 = vmul.f32 %v256, %v219
    %v288 = vmul.f32 %v260, %v219
    %v289 = vmul.f32 %v264, %v219
    %v290 = vmul.f32 %v268, %v219
    %v291 = vmul.f32 %v272, %v219
    %v292 = vmul.f32 %v276, %v219
    %v293 = vadd.f32 %v221, %v285
    %v294 = vadd.f32 %v222, %v286
    %v295 = vadd.f32 %v223, %v287
    %v296 = vadd.f32 %v224, %v288
    %v297 = vadd.f32 %v225, %v289
    %v298 = vadd.f32 %v226, %v290
    %v299 = vadd.f32 %v227, %v291
    %v300 = vadd.f32 %v228, %v292
    %v301 = vld [vmem:[%s6] sm:$0xff]
    %v302 = vld [vmem:[%s6 + $0x8] sm:$0xff]
    %v303 = vld [vmem:[%s6 + $0x10] sm:$0xff]
    %v304 = vld [vmem:[%s6 + $0x18] sm:$0xff]
    %v305 = vld [vmem:[%s7] sm:$0x1]
    %v307 = vlaneseq
    %v308 = vshrl.u32 %v307, 7
    %v309 = vsub.s32 0, %v308
    %v310 = vrot.slane %v305, %v309
    %vm312 = vcmask 261120
    %v314 = vsel %vm312, %v293, 0
    %v317 = vsel %vm312, %v294, 0
    %v320 = vsel %vm312, %v295, 0
    %v323 = vsel %vm312, %v296, 0
    %v326 = vsel %vm312, %v297, 0
    %v329 = vsel %vm312, %v298, 0
    %v332 = vsel %vm312, %v299, 0
    %v335 = vsel %vm312, %v300, 0
    %337 = vmatprep.subr.mxu0 0.0
    %338 = vmatpush1.msra.mxu0 0.0
    %339 = vmatprep.subr.mxu0 0.0
    %340 = vmatpush1.msra.mxu0 0.0
    %341 = vmatprep.subr.mxu0 0.0
    %342 = vmatpush1.msra.mxu0 0.0
    %343 = vmatprep.subr.mxu0 0.0
    %344 = vmatpush1.msra.mxu0 0.0
    %345 = vmatprep.subr.mxu0 0.0
    %346 = vmatpush1.msra.mxu0 0.0
    %347 = vmatprep.subr.mxu0 0.0
    %348 = vmatpush1.msra.mxu0 0.0
    %349 = vmatprep.subr.mxu0 0.0
    %350 = vmatpush1.msra.mxu0 0.0
    %351 = vmatprep.subr.mxu0 0.0
    %352 = vmatpush1.msra.mxu0 0.0
    %353 = vmatprep.subr.mxu0 0.0
    %354 = vmatpush1.msra.mxu0 0.0
    %355 = vmatprep.subr.mxu0 0.0
    %356 = vmatpush1.msra.mxu0 0.0
    %357 = vmatprep.subr.mxu0 0.0
    %358 = vmatpush1.msra.mxu0 0.0
    %359 = vmatprep.subr.mxu0 0.0
    %360 = vmatpush1.msra.mxu0 0.0
    %361 = vmatprep.subr.mxu0 0.0
    %362 = vmatpush1.msra.mxu0 %v304
    %363 = vmatprep.subr.mxu0 0.0
    %364 = vmatpush1.msra.mxu0 %v303
    %365 = vmatprep.subr.mxu0 0.0
    %366 = vmatpush1.msra.mxu0 %v302
    %367 = vmatprep.subr.mxu0 0.0
    %368 = vmatpush1.msra.mxu0 %v301
    %369 = vmatprep.subr.mxu0 0.0
    %370 = vmatpush2.msra.mxu0 0.0
    %371 = vmatprep.subr.mxu0 0.0
    %372 = vmatpush2.msra.mxu0 0.0
    %373 = vmatprep.subr.mxu0 0.0
    %374 = vmatpush2.msra.mxu0 0.0
    %375 = vmatprep.subr.mxu0 0.0
    %376 = vmatpush2.msra.mxu0 0.0
    %377 = vmatprep.subr.mxu0 0.0
    %378 = vmatpush2.msra.mxu0 0.0
    %379 = vmatprep.subr.mxu0 0.0
    %380 = vmatpush2.msra.mxu0 0.0
    %381 = vmatprep.subr.mxu0 0.0
    %382 = vmatpush2.msra.mxu0 0.0
    %383 = vmatprep.subr.mxu0 0.0
    %384 = vmatpush2.msra.mxu0 0.0
    %385 = vmatprep.subr.mxu0 0.0
    %386 = vmatpush2.msra.mxu0 0.0
    %387 = vmatprep.subr.mxu0 0.0
    %388 = vmatpush2.msra.mxu0 0.0
    %389 = vmatprep.subr.mxu0 0.0
    %390 = vmatpush2.msra.mxu0 0.0
    %391 = vmatprep.subr.mxu0 0.0
    %392 = vmatpush2.msra.mxu0 0.0
    %393 = vmatprep.subr.mxu0 0.0
    %394 = vmatpush2.msra.mxu0 0.0
    %395 = vmatprep.subr.mxu0 0.0
    %396 = vmatpush2.msra.mxu0 0.0
    %397 = vmatprep.subr.mxu0 0.0
    %398 = vmatpush2.msra.mxu0 0.0
    %399 = vmatprep.subr.mxu0 0.0
    %400 = vmatpush2.msra.mxu0 0.0
    %401 = vmatprep.mubr.f32.mxu0 0.0
    %402 = vmatmul.mubr.f32.gmra.mxu0 %v314
    %v403 = vpop.f32.mrf.mxu0
    %v404 = vadd.f32 %v310, %v403
    %v405 = vpop.f32.mrf.mxu0
    %406 = vmatprep.mubr.f32.mxu0 0.0
    %407 = vmatmul.mubr.f32.gmra.mxu0 %v317
    %v408 = vpop.f32.mrf.mxu0
    %v409 = vadd.f32 %v310, %v408
    %v410 = vpop.f32.mrf.mxu0
    %411 = vmatprep.mubr.f32.mxu0 0.0
    %412 = vmatmul.mubr.f32.gmra.mxu0 %v320
    %v413 = vpop.f32.mrf.mxu0
    %v414 = vadd.f32 %v310, %v413
    %v415 = vpop.f32.mrf.mxu0
    %416 = vmatprep.mubr.f32.mxu0 0.0
    %417 = vmatmul.mubr.f32.gmra.mxu0 %v323
    %v418 = vpop.f32.mrf.mxu0
    %v419 = vadd.f32 %v310, %v418
    %v420 = vpop.f32.mrf.mxu0
    %421 = vmatprep.mubr.f32.mxu0 0.0
    %422 = vmatmul.mubr.f32.gmra.mxu0 %v326
    %v423 = vpop.f32.mrf.mxu0
    %v424 = vadd.f32 %v310, %v423
    %v425 = vpop.f32.mrf.mxu0
    %426 = vmatprep.mubr.f32.mxu0 0.0
    %427 = vmatmul.mubr.f32.gmra.mxu0 %v329
    %v428 = vpop.f32.mrf.mxu0
    %v429 = vadd.f32 %v310, %v428
    %v430 = vpop.f32.mrf.mxu0
    %431 = vmatprep.mubr.f32.mxu0 0.0
    %432 = vmatmul.mubr.f32.gmra.mxu0 %v332
    %v433 = vpop.f32.mrf.mxu0
    %v434 = vadd.f32 %v310, %v433
    %v435 = vpop.f32.mrf.mxu0
    %436 = vmatprep.mubr.f32.mxu0 0.0
    %437 = vmatmul.mubr.f32.gmra.mxu0 %v335
    %v438 = vpop.f32.mrf.mxu0
    %v439 = vadd.f32 %v310, %v438
    %v440 = vpop.f32.mrf.mxu0
    %441 = vdwg.mxu0
    %v442 = vld [vmem:[%s1] sm:$0x1]
    %v443 = vld [vmem:[%s1 + $0x1] sm:$0x1]
    %v444 = vld [vmem:[%s1 + $0x2] sm:$0x1]
    %v445 = vld [vmem:[%s1 + $0x3] sm:$0x1]
    %v446 = vld [vmem:[%s1 + $0x4] sm:$0x1]
    %v447 = vld [vmem:[%s1 + $0x5] sm:$0x1]
    %v448 = vld [vmem:[%s1 + $0x6] sm:$0x1]
    %v449 = vld [vmem:[%s1 + $0x7] sm:$0x1]
    %v450 = vsub.f32 %v442, 1.0
    %v451 = vsub.f32 %v443, 1.0
    %v452 = vsub.f32 %v444, 1.0
    %v453 = vsub.f32 %v445, 1.0
    %v454 = vsub.f32 %v446, 1.0
    %v455 = vsub.f32 %v447, 1.0
    %v456 = vsub.f32 %v448, 1.0
    %v457 = vsub.f32 %v449, 1.0
    %v458 = vmul.f32 %v450, 1e+09
    %v459 = vmul.f32 %v451, 1e+09
    %v460 = vmul.f32 %v452, 1e+09
    %v461 = vmul.f32 %v453, 1e+09
    %v462 = vmul.f32 %v454, 1e+09
    %v463 = vmul.f32 %v455, 1e+09
    %v464 = vmul.f32 %v456, 1e+09
    %v465 = vmul.f32 %v457, 1e+09
    %v474 = vlaneseq
    %v475 = vshrl.u32 %v474, 7
    %v476 = vsub.s32 0, %v475
    %v477 = vrot.slane %v458, %v476
    %v478 = vlaneseq
    %v479 = vshrl.u32 %v478, 7
    %v480 = vsub.s32 0, %v479
    %v481 = vrot.slane %v459, %v480
    %v482 = vlaneseq
    %v483 = vshrl.u32 %v482, 7
    %v484 = vsub.s32 0, %v483
    %v485 = vrot.slane %v460, %v484
    %v486 = vlaneseq
    %v487 = vshrl.u32 %v486, 7
    %v488 = vsub.s32 0, %v487
    %v489 = vrot.slane %v461, %v488
    %v490 = vlaneseq
    %v491 = vshrl.u32 %v490, 7
    %v492 = vsub.s32 0, %v491
    %v493 = vrot.slane %v462, %v492
    %v494 = vlaneseq
    %v495 = vshrl.u32 %v494, 7
    %v496 = vsub.s32 0, %v495
    %v497 = vrot.slane %v463, %v496
    %v498 = vlaneseq
    %v499 = vshrl.u32 %v498, 7
    %v500 = vsub.s32 0, %v499
    %v501 = vrot.slane %v464, %v500
    %v502 = vlaneseq
    %v503 = vshrl.u32 %v502, 7
    %v504 = vsub.s32 0, %v503
    %v505 = vrot.slane %v465, %v504
    %515 = vrot.lane.b32.xlu0 %v404, 96
    %v516 = vpop.permute.xlu0 %515
    %vm517 = vcmask 64512
    %v518 = vsel %vm517, %v404, 0
    %v520 = vsel %vm517, %v516, 0
    %522 = vmatprep.subr.mxu0 0.0
    %523 = vmatpush1.xpose.msra.mxu0 0.0
    %524 = vmatprep.subr.mxu0 0.0
    %525 = vmatpush1.xpose.msra.mxu0 0.0
    %526 = vmatprep.subr.mxu0 0.0
    %527 = vmatpush1.xpose.msra.mxu0 0.0
    %528 = vmatprep.subr.mxu0 0.0
    %529 = vmatpush1.xpose.msra.mxu0 0.0
    %530 = vmatprep.subr.mxu0 0.0
    %531 = vmatpush1.xpose.msra.mxu0 0.0
    %532 = vmatprep.subr.mxu0 0.0
    %533 = vmatpush1.xpose.msra.mxu0 0.0
    %534 = vmatprep.subr.mxu0 0.0
    %535 = vmatpush1.xpose.msra.mxu0 0.0
    %536 = vmatprep.subr.mxu0 0.0
    %537 = vmatpush1.xpose.msra.mxu0 0.0
    %538 = vmatprep.subr.mxu0 0.0
    %539 = vmatpush1.xpose.msra.mxu0 0.0
    %540 = vmatprep.subr.mxu0 0.0
    %541 = vmatpush1.xpose.msra.mxu0 0.0
    %542 = vmatprep.subr.mxu0 0.0
    %543 = vmatpush1.xpose.msra.mxu0 0.0
    %544 = vmatprep.subr.mxu0 0.0
    %545 = vmatpush1.xpose.msra.mxu0 0.0
    %546 = vmatprep.subr.mxu0 0.0
    %547 = vmatpush1.xpose.msra.mxu0 0.0
    %548 = vmatprep.subr.mxu0 0.0
    %549 = vmatpush1.xpose.msra.mxu0 0.0
    %550 = vmatprep.subr.mxu0 0.0
    %551 = vmatpush1.xpose.msra.mxu0 0.0
    %552 = vmatprep.subr.mxu0 0.0
    %553 = vmatpush1.xpose.msra.mxu0 %v520
    %554 = vmatprep.subr.mxu0 0.0
    %555 = vmatpush2.xpose.msra.mxu0 0.0
    %556 = vmatprep.subr.mxu0 0.0
    %557 = vmatpush2.xpose.msra.mxu0 0.0
    %558 = vmatprep.subr.mxu0 0.0
    %559 = vmatpush2.xpose.msra.mxu0 0.0
    %560 = vmatprep.subr.mxu0 0.0
    %561 = vmatpush2.xpose.msra.mxu0 0.0
    %562 = vmatprep.subr.mxu0 0.0
    %563 = vmatpush2.xpose.msra.mxu0 0.0
    %564 = vmatprep.subr.mxu0 0.0
    %565 = vmatpush2.xpose.msra.mxu0 0.0
    %566 = vmatprep.subr.mxu0 0.0
    %567 = vmatpush2.xpose.msra.mxu0 0.0
    %568 = vmatprep.subr.mxu0 0.0
    %569 = vmatpush2.xpose.msra.mxu0 0.0
    %570 = vmatprep.subr.mxu0 0.0
    %571 = vmatpush2.xpose.msra.mxu0 0.0
    %572 = vmatprep.subr.mxu0 0.0
    %573 = vmatpush2.xpose.msra.mxu0 0.0
    %574 = vmatprep.subr.mxu0 0.0
    %575 = vmatpush2.xpose.msra.mxu0 0.0
    %576 = vmatprep.subr.mxu0 0.0
    %577 = vmatpush2.xpose.msra.mxu0 0.0
    %578 = vmatprep.subr.mxu0 0.0
    %579 = vmatpush2.xpose.msra.mxu0 0.0
    %580 = vmatprep.subr.mxu0 0.0
    %581 = vmatpush2.xpose.msra.mxu0 0.0
    %582 = vmatprep.subr.mxu0 0.0
    %583 = vmatpush2.xpose.msra.mxu0 0.0
    %584 = vmatprep.subr.mxu0 0.0
    %585 = vmatpush2.xpose.msra.mxu0 0.0
    %586 = vmatprep.mubr.f32.mxu0 0.0
    %587 = vmatmul.mubr.f32.gmra.mxu0 %v518
    %v588 = vpop.f32.mrf.mxu0
    %v589 = vadd.f32 %v477, %v588
    %v590 = vpop.f32.mrf.mxu0
    %591 = vdwg.mxu0
    %593 = vrot.lane.b32.xlu0 %v409, 96
    %v594 = vpop.permute.xlu0 %593
    %v595 = vsel %vm517, %v409, 0
    %v597 = vsel %vm517, %v594, 0
    %599 = vmatprep.subr.mxu0 0.0
    %600 = vmatpush1.xpose.msra.mxu0 0.0
    %601 = vmatprep.subr.mxu0 0.0
    %602 = vmatpush1.xpose.msra.mxu0 0.0
    %603 = vmatprep.subr.mxu0 0.0
    %604 = vmatpush1.xpose.msra.mxu0 0.0
    %605 = vmatprep.subr.mxu0 0.0
    %606 = vmatpush1.xpose.msra.mxu0 0.0
    %607 = vmatprep.subr.mxu0 0.0
    %608 = vmatpush1.xpose.msra.mxu0 0.0
    %609 = vmatprep.subr.mxu0 0.0
    %610 = vmatpush1.xpose.msra.mxu0 0.0
    %611 = vmatprep.subr.mxu0 0.0
    %612 = vmatpush1.xpose.msra.mxu0 0.0
    %613 = vmatprep.subr.mxu0 0.0
    %614 = vmatpush1.xpose.msra.mxu0 0.0
    %615 = vmatprep.subr.mxu0 0.0
    %616 = vmatpush1.xpose.msra.mxu0 0.0
    %617 = vmatprep.subr.mxu0 0.0
    %618 = vmatpush1.xpose.msra.mxu0 0.0
    %619 = vmatprep.subr.mxu0 0.0
    %620 = vmatpush1.xpose.msra.mxu0 0.0
    %621 = vmatprep.subr.mxu0 0.0
    %622 = vmatpush1.xpose.msra.mxu0 0.0
    %623 = vmatprep.subr.mxu0 0.0
    %624 = vmatpush1.xpose.msra.mxu0 0.0
    %625 = vmatprep.subr.mxu0 0.0
    %626 = vmatpush1.xpose.msra.mxu0 0.0
    %627 = vmatprep.subr.mxu0 0.0
    %628 = vmatpush1.xpose.msra.mxu0 0.0
    %629 = vmatprep.subr.mxu0 0.0
    %630 = vmatpush1.xpose.msra.mxu0 %v597
    %631 = vmatprep.subr.mxu0 0.0
    %632 = vmatpush2.xpose.msra.mxu0 0.0
    %633 = vmatprep.subr.mxu0 0.0
    %634 = vmatpush2.xpose.msra.mxu0 0.0
    %635 = vmatprep.subr.mxu0 0.0
    %636 = vmatpush2.xpose.msra.mxu0 0.0
    %637 = vmatprep.subr.mxu0 0.0
    %638 = vmatpush2.xpose.msra.mxu0 0.0
    %639 = vmatprep.subr.mxu0 0.0
    %640 = vmatpush2.xpose.msra.mxu0 0.0
    %641 = vmatprep.subr.mxu0 0.0
    %642 = vmatpush2.xpose.msra.mxu0 0.0
    %643 = vmatprep.subr.mxu0 0.0
    %644 = vmatpush2.xpose.msra.mxu0 0.0
    %645 = vmatprep.subr.mxu0 0.0
    %646 = vmatpush2.xpose.msra.mxu0 0.0
    %647 = vmatprep.subr.mxu0 0.0
    %648 = vmatpush2.xpose.msra.mxu0 0.0
    %649 = vmatprep.subr.mxu0 0.0
    %650 = vmatpush2.xpose.msra.mxu0 0.0
    %651 = vmatprep.subr.mxu0 0.0
    %652 = vmatpush2.xpose.msra.mxu0 0.0
    %653 = vmatprep.subr.mxu0 0.0
    %654 = vmatpush2.xpose.msra.mxu0 0.0
    %655 = vmatprep.subr.mxu0 0.0
    %656 = vmatpush2.xpose.msra.mxu0 0.0
    %657 = vmatprep.subr.mxu0 0.0
    %658 = vmatpush2.xpose.msra.mxu0 0.0
    %659 = vmatprep.subr.mxu0 0.0
    %660 = vmatpush2.xpose.msra.mxu0 0.0
    %661 = vmatprep.subr.mxu0 0.0
    %662 = vmatpush2.xpose.msra.mxu0 0.0
    %663 = vmatprep.mubr.f32.mxu0 0.0
    %664 = vmatmul.mubr.f32.gmra.mxu0 %v595
    %v665 = vpop.f32.mrf.mxu0
    %v666 = vadd.f32 %v481, %v665
    %v667 = vpop.f32.mrf.mxu0
    %668 = vdwg.mxu0
    %670 = vrot.lane.b32.xlu0 %v414, 96
    %v671 = vpop.permute.xlu0 %670
    %v672 = vsel %vm517, %v414, 0
    %v674 = vsel %vm517, %v671, 0
    %676 = vmatprep.subr.mxu0 0.0
    %677 = vmatpush1.xpose.msra.mxu0 0.0
    %678 = vmatprep.subr.mxu0 0.0
    %679 = vmatpush1.xpose.msra.mxu0 0.0
    %680 = vmatprep.subr.mxu0 0.0
    %681 = vmatpush1.xpose.msra.mxu0 0.0
    %682 = vmatprep.subr.mxu0 0.0
    %683 = vmatpush1.xpose.msra.mxu0 0.0
    %684 = vmatprep.subr.mxu0 0.0
    %685 = vmatpush1.xpose.msra.mxu0 0.0
    %686 = vmatprep.subr.mxu0 0.0
    %687 = vmatpush1.xpose.msra.mxu0 0.0
    %688 = vmatprep.subr.mxu0 0.0
    %689 = vmatpush1.xpose.msra.mxu0 0.0
    %690 = vmatprep.subr.mxu0 0.0
    %691 = vmatpush1.xpose.msra.mxu0 0.0
    %692 = vmatprep.subr.mxu0 0.0
    %693 = vmatpush1.xpose.msra.mxu0 0.0
    %694 = vmatprep.subr.mxu0 0.0
    %695 = vmatpush1.xpose.msra.mxu0 0.0
    %696 = vmatprep.subr.mxu0 0.0
    %697 = vmatpush1.xpose.msra.mxu0 0.0
    %698 = vmatprep.subr.mxu0 0.0
    %699 = vmatpush1.xpose.msra.mxu0 0.0
    %700 = vmatprep.subr.mxu0 0.0
    %701 = vmatpush1.xpose.msra.mxu0 0.0
    %702 = vmatprep.subr.mxu0 0.0
    %703 = vmatpush1.xpose.msra.mxu0 0.0
    %704 = vmatprep.subr.mxu0 0.0
    %705 = vmatpush1.xpose.msra.mxu0 0.0
    %706 = vmatprep.subr.mxu0 0.0
    %707 = vmatpush1.xpose.msra.mxu0 %v674
    %708 = vmatprep.subr.mxu0 0.0
    %709 = vmatpush2.xpose.msra.mxu0 0.0
    %710 = vmatprep.subr.mxu0 0.0
    %711 = vmatpush2.xpose.msra.mxu0 0.0
    %712 = vmatprep.subr.mxu0 0.0
    %713 = vmatpush2.xpose.msra.mxu0 0.0
    %714 = vmatprep.subr.mxu0 0.0
    %715 = vmatpush2.xpose.msra.mxu0 0.0
    %716 = vmatprep.subr.mxu0 0.0
    %717 = vmatpush2.xpose.msra.mxu0 0.0
    %718 = vmatprep.subr.mxu0 0.0
    %719 = vmatpush2.xpose.msra.mxu0 0.0
    %720 = vmatprep.subr.mxu0 0.0
    %721 = vmatpush2.xpose.msra.mxu0 0.0
    %722 = vmatprep.subr.mxu0 0.0
    %723 = vmatpush2.xpose.msra.mxu0 0.0
    %724 = vmatprep.subr.mxu0 0.0
    %725 = vmatpush2.xpose.msra.mxu0 0.0
    %726 = vmatprep.subr.mxu0 0.0
    %727 = vmatpush2.xpose.msra.mxu0 0.0
    %728 = vmatprep.subr.mxu0 0.0
    %729 = vmatpush2.xpose.msra.mxu0 0.0
    %730 = vmatprep.subr.mxu0 0.0
    %731 = vmatpush2.xpose.msra.mxu0 0.0
    %732 = vmatprep.subr.mxu0 0.0
    %733 = vmatpush2.xpose.msra.mxu0 0.0
    %734 = vmatprep.subr.mxu0 0.0
    %735 = vmatpush2.xpose.msra.mxu0 0.0
    %736 = vmatprep.subr.mxu0 0.0
    %737 = vmatpush2.xpose.msra.mxu0 0.0
    %738 = vmatprep.subr.mxu0 0.0
    %739 = vmatpush2.xpose.msra.mxu0 0.0
    %740 = vmatprep.mubr.f32.mxu0 0.0
    %741 = vmatmul.mubr.f32.gmra.mxu0 %v672
    %v742 = vpop.f32.mrf.mxu0
    %v743 = vadd.f32 %v485, %v742
    %v744 = vpop.f32.mrf.mxu0
    %745 = vdwg.mxu0
    %747 = vrot.lane.b32.xlu0 %v419, 96
    %v748 = vpop.permute.xlu0 %747
    %v749 = vsel %vm517, %v419, 0
    %v751 = vsel %vm517, %v748, 0
    %753 = vmatprep.subr.mxu0 0.0
    %754 = vmatpush1.xpose.msra.mxu0 0.0
    %755 = vmatprep.subr.mxu0 0.0
    %756 = vmatpush1.xpose.msra.mxu0 0.0
    %757 = vmatprep.subr.mxu0 0.0
    %758 = vmatpush1.xpose.msra.mxu0 0.0
    %759 = vmatprep.subr.mxu0 0.0
    %760 = vmatpush1.xpose.msra.mxu0 0.0
    %761 = vmatprep.subr.mxu0 0.0
    %762 = vmatpush1.xpose.msra.mxu0 0.0
    %763 = vmatprep.subr.mxu0 0.0
    %764 = vmatpush1.xpose.msra.mxu0 0.0
    %765 = vmatprep.subr.mxu0 0.0
    %766 = vmatpush1.xpose.msra.mxu0 0.0
    %767 = vmatprep.subr.mxu0 0.0
    %768 = vmatpush1.xpose.msra.mxu0 0.0
    %769 = vmatprep.subr.mxu0 0.0
    %770 = vmatpush1.xpose.msra.mxu0 0.0
    %771 = vmatprep.subr.mxu0 0.0
    %772 = vmatpush1.xpose.msra.mxu0 0.0
    %773 = vmatprep.subr.mxu0 0.0
    %774 = vmatpush1.xpose.msra.mxu0 0.0
    %775 = vmatprep.subr.mxu0 0.0
    %776 = vmatpush1.xpose.msra.mxu0 0.0
    %777 = vmatprep.subr.mxu0 0.0
    %778 = vmatpush1.xpose.msra.mxu0 0.0
    %779 = vmatprep.subr.mxu0 0.0
    %780 = vmatpush1.xpose.msra.mxu0 0.0
    %781 = vmatprep.subr.mxu0 0.0
    %782 = vmatpush1.xpose.msra.mxu0 0.0
    %783 = vmatprep.subr.mxu0 0.0
    %784 = vmatpush1.xpose.msra.mxu0 %v751
    %785 = vmatprep.subr.mxu0 0.0
    %786 = vmatpush2.xpose.msra.mxu0 0.0
    %787 = vmatprep.subr.mxu0 0.0
    %788 = vmatpush2.xpose.msra.mxu0 0.0
    %789 = vmatprep.subr.mxu0 0.0
    %790 = vmatpush2.xpose.msra.mxu0 0.0
    %791 = vmatprep.subr.mxu0 0.0
    %792 = vmatpush2.xpose.msra.mxu0 0.0
    %793 = vmatprep.subr.mxu0 0.0
    %794 = vmatpush2.xpose.msra.mxu0 0.0
    %795 = vmatprep.subr.mxu0 0.0
    %796 = vmatpush2.xpose.msra.mxu0 0.0
    %797 = vmatprep.subr.mxu0 0.0
    %798 = vmatpush2.xpose.msra.mxu0 0.0
    %799 = vmatprep.subr.mxu0 0.0
    %800 = vmatpush2.xpose.msra.mxu0 0.0
    %801 = vmatprep.subr.mxu0 0.0
    %802 = vmatpush2.xpose.msra.mxu0 0.0
    %803 = vmatprep.subr.mxu0 0.0
    %804 = vmatpush2.xpose.msra.mxu0 0.0
    %805 = vmatprep.subr.mxu0 0.0
    %806 = vmatpush2.xpose.msra.mxu0 0.0
    %807 = vmatprep.subr.mxu0 0.0
    %808 = vmatpush2.xpose.msra.mxu0 0.0
    %809 = vmatprep.subr.mxu0 0.0
    %810 = vmatpush2.xpose.msra.mxu0 0.0
    %811 = vmatprep.subr.mxu0 0.0
    %812 = vmatpush2.xpose.msra.mxu0 0.0
    %813 = vmatprep.subr.mxu0 0.0
    %814 = vmatpush2.xpose.msra.mxu0 0.0
    %815 = vmatprep.subr.mxu0 0.0
    %816 = vmatpush2.xpose.msra.mxu0 0.0
    %817 = vmatprep.mubr.f32.mxu0 0.0
    %818 = vmatmul.mubr.f32.gmra.mxu0 %v749
    %v819 = vpop.f32.mrf.mxu0
    %v820 = vadd.f32 %v489, %v819
    %v821 = vpop.f32.mrf.mxu0
    %822 = vdwg.mxu0
    %824 = vrot.lane.b32.xlu0 %v424, 96
    %v825 = vpop.permute.xlu0 %824
    %v826 = vsel %vm517, %v424, 0
    %v828 = vsel %vm517, %v825, 0
    %830 = vmatprep.subr.mxu0 0.0
    %831 = vmatpush1.xpose.msra.mxu0 0.0
    %832 = vmatprep.subr.mxu0 0.0
    %833 = vmatpush1.xpose.msra.mxu0 0.0
    %834 = vmatprep.subr.mxu0 0.0
    %835 = vmatpush1.xpose.msra.mxu0 0.0
    %836 = vmatprep.subr.mxu0 0.0
    %837 = vmatpush1.xpose.msra.mxu0 0.0
    %838 = vmatprep.subr.mxu0 0.0
    %839 = vmatpush1.xpose.msra.mxu0 0.0
    %840 = vmatprep.subr.mxu0 0.0
    %841 = vmatpush1.xpose.msra.mxu0 0.0
    %842 = vmatprep.subr.mxu0 0.0
    %843 = vmatpush1.xpose.msra.mxu0 0.0
    %844 = vmatprep.subr.mxu0 0.0
    %845 = vmatpush1.xpose.msra.mxu0 0.0
    %846 = vmatprep.subr.mxu0 0.0
    %847 = vmatpush1.xpose.msra.mxu0 0.0
    %848 = vmatprep.subr.mxu0 0.0
    %849 = vmatpush1.xpose.msra.mxu0 0.0
    %850 = vmatprep.subr.mxu0 0.0
    %851 = vmatpush1.xpose.msra.mxu0 0.0
    %852 = vmatprep.subr.mxu0 0.0
    %853 = vmatpush1.xpose.msra.mxu0 0.0
    %854 = vmatprep.subr.mxu0 0.0
    %855 = vmatpush1.xpose.msra.mxu0 0.0
    %856 = vmatprep.subr.mxu0 0.0
    %857 = vmatpush1.xpose.msra.mxu0 0.0
    %858 = vmatprep.subr.mxu0 0.0
    %859 = vmatpush1.xpose.msra.mxu0 0.0
    %860 = vmatprep.subr.mxu0 0.0
    %861 = vmatpush1.xpose.msra.mxu0 %v828
    %862 = vmatprep.subr.mxu0 0.0
    %863 = vmatpush2.xpose.msra.mxu0 0.0
    %864 = vmatprep.subr.mxu0 0.0
    %865 = vmatpush2.xpose.msra.mxu0 0.0
    %866 = vmatprep.subr.mxu0 0.0
    %867 = vmatpush2.xpose.msra.mxu0 0.0
    %868 = vmatprep.subr.mxu0 0.0
    %869 = vmatpush2.xpose.msra.mxu0 0.0
    %870 = vmatprep.subr.mxu0 0.0
    %871 = vmatpush2.xpose.msra.mxu0 0.0
    %872 = vmatprep.subr.mxu0 0.0
    %873 = vmatpush2.xpose.msra.mxu0 0.0
    %874 = vmatprep.subr.mxu0 0.0
    %875 = vmatpush2.xpose.msra.mxu0 0.0
    %876 = vmatprep.subr.mxu0 0.0
    %877 = vmatpush2.xpose.msra.mxu0 0.0
    %878 = vmatprep.subr.mxu0 0.0
    %879 = vmatpush2.xpose.msra.mxu0 0.0
    %880 = vmatprep.subr.mxu0 0.0
    %881 = vmatpush2.xpose.msra.mxu0 0.0
    %882 = vmatprep.subr.mxu0 0.0
    %883 = vmatpush2.xpose.msra.mxu0 0.0
    %884 = vmatprep.subr.mxu0 0.0
    %885 = vmatpush2.xpose.msra.mxu0 0.0
    %886 = vmatprep.subr.mxu0 0.0
    %887 = vmatpush2.xpose.msra.mxu0 0.0
    %888 = vmatprep.subr.mxu0 0.0
    %889 = vmatpush2.xpose.msra.mxu0 0.0
    %890 = vmatprep.subr.mxu0 0.0
    %891 = vmatpush2.xpose.msra.mxu0 0.0
    %892 = vmatprep.subr.mxu0 0.0
    %893 = vmatpush2.xpose.msra.mxu0 0.0
    %894 = vmatprep.mubr.f32.mxu0 0.0
    %895 = vmatmul.mubr.f32.gmra.mxu0 %v826
    %v896 = vpop.f32.mrf.mxu0
    %v897 = vadd.f32 %v493, %v896
    %v898 = vpop.f32.mrf.mxu0
    %899 = vdwg.mxu0
    %901 = vrot.lane.b32.xlu0 %v429, 96
    %v902 = vpop.permute.xlu0 %901
    %v903 = vsel %vm517, %v429, 0
    %v905 = vsel %vm517, %v902, 0
    %907 = vmatprep.subr.mxu0 0.0
    %908 = vmatpush1.xpose.msra.mxu0 0.0
    %909 = vmatprep.subr.mxu0 0.0
    %910 = vmatpush1.xpose.msra.mxu0 0.0
    %911 = vmatprep.subr.mxu0 0.0
    %912 = vmatpush1.xpose.msra.mxu0 0.0
    %913 = vmatprep.subr.mxu0 0.0
    %914 = vmatpush1.xpose.msra.mxu0 0.0
    %915 = vmatprep.subr.mxu0 0.0
    %916 = vmatpush1.xpose.msra.mxu0 0.0
    %917 = vmatprep.subr.mxu0 0.0
    %918 = vmatpush1.xpose.msra.mxu0 0.0
    %919 = vmatprep.subr.mxu0 0.0
    %920 = vmatpush1.xpose.msra.mxu0 0.0
    %921 = vmatprep.subr.mxu0 0.0
    %922 = vmatpush1.xpose.msra.mxu0 0.0
    %923 = vmatprep.subr.mxu0 0.0
    %924 = vmatpush1.xpose.msra.mxu0 0.0
    %925 = vmatprep.subr.mxu0 0.0
    %926 = vmatpush1.xpose.msra.mxu0 0.0
    %927 = vmatprep.subr.mxu0 0.0
    %928 = vmatpush1.xpose.msra.mxu0 0.0
    %929 = vmatprep.subr.mxu0 0.0
    %930 = vmatpush1.xpose.msra.mxu0 0.0
    %931 = vmatprep.subr.mxu0 0.0
    %932 = vmatpush1.xpose.msra.mxu0 0.0
    %933 = vmatprep.subr.mxu0 0.0
    %934 = vmatpush1.xpose.msra.mxu0 0.0
    %935 = vmatprep.subr.mxu0 0.0
    %936 = vmatpush1.xpose.msra.mxu0 0.0
    %937 = vmatprep.subr.mxu0 0.0
    %938 = vmatpush1.xpose.msra.mxu0 %v905
    %939 = vmatprep.subr.mxu0 0.0
    %940 = vmatpush2.xpose.msra.mxu0 0.0
    %941 = vmatprep.subr.mxu0 0.0
    %942 = vmatpush2.xpose.msra.mxu0 0.0
    %943 = vmatprep.subr.mxu0 0.0
    %944 = vmatpush2.xpose.msra.mxu0 0.0
    %945 = vmatprep.subr.mxu0 0.0
    %946 = vmatpush2.xpose.msra.mxu0 0.0
    %947 = vmatprep.subr.mxu0 0.0
    %948 = vmatpush2.xpose.msra.mxu0 0.0
    %949 = vmatprep.subr.mxu0 0.0
    %950 = vmatpush2.xpose.msra.mxu0 0.0
    %951 = vmatprep.subr.mxu0 0.0
    %952 = vmatpush2.xpose.msra.mxu0 0.0
    %953 = vmatprep.subr.mxu0 0.0
    %954 = vmatpush2.xpose.msra.mxu0 0.0
    %955 = vmatprep.subr.mxu0 0.0
    %956 = vmatpush2.xpose.msra.mxu0 0.0
    %957 = vmatprep.subr.mxu0 0.0
    %958 = vmatpush2.xpose.msra.mxu0 0.0
    %959 = vmatprep.subr.mxu0 0.0
    %960 = vmatpush2.xpose.msra.mxu0 0.0
    %961 = vmatprep.subr.mxu0 0.0
    %962 = vmatpush2.xpose.msra.mxu0 0.0
    %963 = vmatprep.subr.mxu0 0.0
    %964 = vmatpush2.xpose.msra.mxu0 0.0
    %965 = vmatprep.subr.mxu0 0.0
    %966 = vmatpush2.xpose.msra.mxu0 0.0
    %967 = vmatprep.subr.mxu0 0.0
    %968 = vmatpush2.xpose.msra.mxu0 0.0
    %969 = vmatprep.subr.mxu0 0.0
    %970 = vmatpush2.xpose.msra.mxu0 0.0
    %971 = vmatprep.mubr.f32.mxu0 0.0
    %972 = vmatmul.mubr.f32.gmra.mxu0 %v903
    %v973 = vpop.f32.mrf.mxu0
    %v974 = vadd.f32 %v497, %v973
    %v975 = vpop.f32.mrf.mxu0
    %976 = vdwg.mxu0
    %978 = vrot.lane.b32.xlu0 %v434, 96
    %v979 = vpop.permute.xlu0 %978
    %v980 = vsel %vm517, %v434, 0
    %v982 = vsel %vm517, %v979, 0
    %984 = vmatprep.subr.mxu0 0.0
    %985 = vmatpush1.xpose.msra.mxu0 0.0
    %986 = vmatprep.subr.mxu0 0.0
    %987 = vmatpush1.xpose.msra.mxu0 0.0
    %988 = vmatprep.subr.mxu0 0.0
    %989 = vmatpush1.xpose.msra.mxu0 0.0
    %990 = vmatprep.subr.mxu0 0.0
    %991 = vmatpush1.xpose.msra.mxu0 0.0
    %992 = vmatprep.subr.mxu0 0.0
    %993 = vmatpush1.xpose.msra.mxu0 0.0
    %994 = vmatprep.subr.mxu0 0.0
    %995 = vmatpush1.xpose.msra.mxu0 0.0
    %996 = vmatprep.subr.mxu0 0.0
    %997 = vmatpush1.xpose.msra.mxu0 0.0
    %998 = vmatprep.subr.mxu0 0.0
    %999 = vmatpush1.xpose.msra.mxu0 0.0
    %1000 = vmatprep.subr.mxu0 0.0
    %1001 = vmatpush1.xpose.msra.mxu0 0.0
    %1002 = vmatprep.subr.mxu0 0.0
    %1003 = vmatpush1.xpose.msra.mxu0 0.0
    %1004 = vmatprep.subr.mxu0 0.0
    %1005 = vmatpush1.xpose.msra.mxu0 0.0
    %1006 = vmatprep.subr.mxu0 0.0
    %1007 = vmatpush1.xpose.msra.mxu0 0.0
    %1008 = vmatprep.subr.mxu0 0.0
    %1009 = vmatpush1.xpose.msra.mxu0 0.0
    %1010 = vmatprep.subr.mxu0 0.0
    %1011 = vmatpush1.xpose.msra.mxu0 0.0
    %1012 = vmatprep.subr.mxu0 0.0
    %1013 = vmatpush1.xpose.msra.mxu0 0.0
    %1014 = vmatprep.subr.mxu0 0.0
    %1015 = vmatpush1.xpose.msra.mxu0 %v982
    %1016 = vmatprep.subr.mxu0 0.0
    %1017 = vmatpush2.xpose.msra.mxu0 0.0
    %1018 = vmatprep.subr.mxu0 0.0
    %1019 = vmatpush2.xpose.msra.mxu0 0.0
    %1020 = vmatprep.subr.mxu0 0.0
    %1021 = vmatpush2.xpose.msra.mxu0 0.0
    %1022 = vmatprep.subr.mxu0 0.0
    %1023 = vmatpush2.xpose.msra.mxu0 0.0
    %1024 = vmatprep.subr.mxu0 0.0
    %1025 = vmatpush2.xpose.msra.mxu0 0.0
    %1026 = vmatprep.subr.mxu0 0.0
    %1027 = vmatpush2.xpose.msra.mxu0 0.0
    %1028 = vmatprep.subr.mxu0 0.0
    %1029 = vmatpush2.xpose.msra.mxu0 0.0
    %1030 = vmatprep.subr.mxu0 0.0
    %1031 = vmatpush2.xpose.msra.mxu0 0.0
    %1032 = vmatprep.subr.mxu0 0.0
    %1033 = vmatpush2.xpose.msra.mxu0 0.0
    %1034 = vmatprep.subr.mxu0 0.0
    %1035 = vmatpush2.xpose.msra.mxu0 0.0
    %1036 = vmatprep.subr.mxu0 0.0
    %1037 = vmatpush2.xpose.msra.mxu0 0.0
    %1038 = vmatprep.subr.mxu0 0.0
    %1039 = vmatpush2.xpose.msra.mxu0 0.0
    %1040 = vmatprep.subr.mxu0 0.0
    %1041 = vmatpush2.xpose.msra.mxu0 0.0
    %1042 = vmatprep.subr.mxu0 0.0
    %1043 = vmatpush2.xpose.msra.mxu0 0.0
    %1044 = vmatprep.subr.mxu0 0.0
    %1045 = vmatpush2.xpose.msra.mxu0 0.0
    %1046 = vmatprep.subr.mxu0 0.0
    %1047 = vmatpush2.xpose.msra.mxu0 0.0
    %1048 = vmatprep.mubr.f32.mxu0 0.0
    %1049 = vmatmul.mubr.f32.gmra.mxu0 %v980
    %v1050 = vpop.f32.mrf.mxu0
    %v1051 = vadd.f32 %v501, %v1050
    %v1052 = vpop.f32.mrf.mxu0
    %1053 = vdwg.mxu0
    %1055 = vrot.lane.b32.xlu0 %v439, 96
    %v1056 = vpop.permute.xlu0 %1055
    %v1057 = vsel %vm517, %v439, 0
    %v1059 = vsel %vm517, %v1056, 0
    %1061 = vmatprep.subr.mxu0 0.0
    %1062 = vmatpush1.xpose.msra.mxu0 0.0
    %1063 = vmatprep.subr.mxu0 0.0
    %1064 = vmatpush1.xpose.msra.mxu0 0.0
    %1065 = vmatprep.subr.mxu0 0.0
    %1066 = vmatpush1.xpose.msra.mxu0 0.0
    %1067 = vmatprep.subr.mxu0 0.0
    %1068 = vmatpush1.xpose.msra.mxu0 0.0
    %1069 = vmatprep.subr.mxu0 0.0
    %1070 = vmatpush1.xpose.msra.mxu0 0.0
    %1071 = vmatprep.subr.mxu0 0.0
    %1072 = vmatpush1.xpose.msra.mxu0 0.0
    %1073 = vmatprep.subr.mxu0 0.0
    %1074 = vmatpush1.xpose.msra.mxu0 0.0
    %1075 = vmatprep.subr.mxu0 0.0
    %1076 = vmatpush1.xpose.msra.mxu0 0.0
    %1077 = vmatprep.subr.mxu0 0.0
    %1078 = vmatpush1.xpose.msra.mxu0 0.0
    %1079 = vmatprep.subr.mxu0 0.0
    %1080 = vmatpush1.xpose.msra.mxu0 0.0
    %1081 = vmatprep.subr.mxu0 0.0
    %1082 = vmatpush1.xpose.msra.mxu0 0.0
    %1083 = vmatprep.subr.mxu0 0.0
    %1084 = vmatpush1.xpose.msra.mxu0 0.0
    %1085 = vmatprep.subr.mxu0 0.0
    %1086 = vmatpush1.xpose.msra.mxu0 0.0
    %1087 = vmatprep.subr.mxu0 0.0
    %1088 = vmatpush1.xpose.msra.mxu0 0.0
    %1089 = vmatprep.subr.mxu0 0.0
    %1090 = vmatpush1.xpose.msra.mxu0 0.0
    %1091 = vmatprep.subr.mxu0 0.0
    %1092 = vmatpush1.xpose.msra.mxu0 %v1059
    %1093 = vmatprep.subr.mxu0 0.0
    %1094 = vmatpush2.xpose.msra.mxu0 0.0
    %1095 = vmatprep.subr.mxu0 0.0
    %1096 = vmatpush2.xpose.msra.mxu0 0.0
    %1097 = vmatprep.subr.mxu0 0.0
    %1098 = vmatpush2.xpose.msra.mxu0 0.0
    %1099 = vmatprep.subr.mxu0 0.0
    %1100 = vmatpush2.xpose.msra.mxu0 0.0
    %1101 = vmatprep.subr.mxu0 0.0
    %1102 = vmatpush2.xpose.msra.mxu0 0.0
    %1103 = vmatprep.subr.mxu0 0.0
    %1104 = vmatpush2.xpose.msra.mxu0 0.0
    %1105 = vmatprep.subr.mxu0 0.0
    %1106 = vmatpush2.xpose.msra.mxu0 0.0
    %1107 = vmatprep.subr.mxu0 0.0
    %1108 = vmatpush2.xpose.msra.mxu0 0.0
    %1109 = vmatprep.subr.mxu0 0.0
    %1110 = vmatpush2.xpose.msra.mxu0 0.0
    %1111 = vmatprep.subr.mxu0 0.0
    %1112 = vmatpush2.xpose.msra.mxu0 0.0
    %1113 = vmatprep.subr.mxu0 0.0
    %1114 = vmatpush2.xpose.msra.mxu0 0.0
    %1115 = vmatprep.subr.mxu0 0.0
    %1116 = vmatpush2.xpose.msra.mxu0 0.0
    %1117 = vmatprep.subr.mxu0 0.0
    %1118 = vmatpush2.xpose.msra.mxu0 0.0
    %1119 = vmatprep.subr.mxu0 0.0
    %1120 = vmatpush2.xpose.msra.mxu0 0.0
    %1121 = vmatprep.subr.mxu0 0.0
    %1122 = vmatpush2.xpose.msra.mxu0 0.0
    %1123 = vmatprep.subr.mxu0 0.0
    %1124 = vmatpush2.xpose.msra.mxu0 0.0
    %1125 = vmatprep.mubr.f32.mxu0 0.0
    %1126 = vmatmul.mubr.f32.gmra.mxu0 %v1057
    %v1127 = vpop.f32.mrf.mxu0
    %v1128 = vadd.f32 %v505, %v1127
    %v1129 = vpop.f32.mrf.mxu0
    %1130 = vdwg.mxu0
    %v1131 = vsel %vm517, %v589, -inf
    %1132 = vmax.xlane.f32.xlu0 %v1131
    %v1133 = vpop.xlane.xlu0 %1132
    %v1134 = vsel %vm517, %v666, -inf
    %1135 = vmax.xlane.f32.xlu0 %v1134
    %v1136 = vpop.xlane.xlu0 %1135
    %v1137 = vsel %vm517, %v743, -inf
    %1138 = vmax.xlane.f32.xlu0 %v1137
    %v1139 = vpop.xlane.xlu0 %1138
    %v1140 = vsel %vm517, %v820, -inf
    %1141 = vmax.xlane.f32.xlu0 %v1140
    %v1142 = vpop.xlane.xlu0 %1141
    %v1143 = vsel %vm517, %v897, -inf
    %1144 = vmax.xlane.f32.xlu0 %v1143
    %v1145 = vpop.xlane.xlu0 %1144
    %v1146 = vsel %vm517, %v974, -inf
    %1147 = vmax.xlane.f32.xlu0 %v1146
    %v1148 = vpop.xlane.xlu0 %1147
    %v1149 = vsel %vm517, %v1051, -inf
    %1150 = vmax.xlane.f32.xlu0 %v1149
    %v1151 = vpop.xlane.xlu0 %1150
    %v1152 = vsel %vm517, %v1128, -inf
    %1153 = vmax.xlane.f32.xlu0 %v1152
    %v1154 = vpop.xlane.xlu0 %1153
    %v1155 = vsub.f32 %v589, %v1133
    %v1156 = vsub.f32 %v666, %v1136
    %v1157 = vsub.f32 %v743, %v1139
    %v1158 = vsub.f32 %v820, %v1142
    %v1159 = vsub.f32 %v897, %v1145
    %v1160 = vsub.f32 %v974, %v1148
    %v1161 = vsub.f32 %v1051, %v1151
    %v1162 = vsub.f32 %v1128, %v1154
    %v1163 = vmul.f32 %v1155, 1.442695
    %v1164 = vpow.pop %v1163
    %v1165 = vmul.f32 %v1156, 1.442695
    %v1166 = vpow.pop %v1165
    %v1167 = vmul.f32 %v1157, 1.442695
    %v1168 = vpow.pop %v1167
    %v1169 = vmul.f32 %v1158, 1.442695
    %v1170 = vpow.pop %v1169
    %v1171 = vmul.f32 %v1159, 1.442695
    %v1172 = vpow.pop %v1171
    %v1173 = vmul.f32 %v1160, 1.442695
    %v1174 = vpow.pop %v1173
    %v1175 = vmul.f32 %v1161, 1.442695
    %v1176 = vpow.pop %v1175
    %v1177 = vmul.f32 %v1162, 1.442695
    %v1178 = vpow.pop %v1177
    %v1179 = vsel %vm517, %v1164, 0.0
    %1180 = vadd.xlane.f32.xlu0 %v1179
    %v1181 = vpop.xlane.xlu0 %1180
    %v1182 = vsel %vm517, %v1166, 0.0
    %1183 = vadd.xlane.f32.xlu0 %v1182
    %v1184 = vpop.xlane.xlu0 %1183
    %v1185 = vsel %vm517, %v1168, 0.0
    %1186 = vadd.xlane.f32.xlu0 %v1185
    %v1187 = vpop.xlane.xlu0 %1186
    %v1188 = vsel %vm517, %v1170, 0.0
    %1189 = vadd.xlane.f32.xlu0 %v1188
    %v1190 = vpop.xlane.xlu0 %1189
    %v1191 = vsel %vm517, %v1172, 0.0
    %1192 = vadd.xlane.f32.xlu0 %v1191
    %v1193 = vpop.xlane.xlu0 %1192
    %v1194 = vsel %vm517, %v1174, 0.0
    %1195 = vadd.xlane.f32.xlu0 %v1194
    %v1196 = vpop.xlane.xlu0 %1195
    %v1197 = vsel %vm517, %v1176, 0.0
    %1198 = vadd.xlane.f32.xlu0 %v1197
    %v1199 = vpop.xlane.xlu0 %1198
    %v1200 = vsel %vm517, %v1178, 0.0
    %1201 = vadd.xlane.f32.xlu0 %v1200
    %v1202 = vpop.xlane.xlu0 %1201
    %v1203 = vrcp.pop %v1181
    %v1204 = vrcp.pop %v1184
    %v1205 = vrcp.pop %v1187
    %v1206 = vrcp.pop %v1190
    %v1207 = vrcp.pop %v1193
    %v1208 = vrcp.pop %v1196
    %v1209 = vrcp.pop %v1199
    %v1210 = vrcp.pop %v1202
    %v1211 = vmul.f32 %v1164, %v1203
    %v1212 = vmul.f32 %v1166, %v1204
    %v1213 = vmul.f32 %v1168, %v1205
    %v1214 = vmul.f32 %v1170, %v1206
    %v1215 = vmul.f32 %v1172, %v1207
    %v1216 = vmul.f32 %v1174, %v1208
    %v1217 = vmul.f32 %v1176, %v1209
    %v1218 = vmul.f32 %v1178, %v1210
    %1219 = vrot.lane.b32.xlu0 %v404, 64
    %v1220 = vpop.permute.xlu0 %1219
    %v1223 = vsel %vm517, %v1211, 0
    %1225 = vmatprep.subr.mxu0 0.0
    %1226 = vmatpush1.msra.mxu0 0.0
    %1227 = vmatprep.subr.mxu0 0.0
    %1228 = vmatpush1.msra.mxu0 0.0
    %1229 = vmatprep.subr.mxu0 0.0
    %1230 = vmatpush1.msra.mxu0 0.0
    %1231 = vmatprep.subr.mxu0 0.0
    %1232 = vmatpush1.msra.mxu0 0.0
    %1233 = vmatprep.subr.mxu0 0.0
    %1234 = vmatpush1.msra.mxu0 0.0
    %1235 = vmatprep.subr.mxu0 0.0
    %1236 = vmatpush1.msra.mxu0 0.0
    %1237 = vmatprep.subr.mxu0 0.0
    %1238 = vmatpush1.msra.mxu0 0.0
    %1239 = vmatprep.subr.mxu0 0.0
    %1240 = vmatpush1.msra.mxu0 0.0
    %1241 = vmatprep.subr.mxu0 0.0
    %1242 = vmatpush1.msra.mxu0 0.0
    %1243 = vmatprep.subr.mxu0 0.0
    %1244 = vmatpush1.msra.mxu0 0.0
    %1245 = vmatprep.subr.mxu0 0.0
    %1246 = vmatpush1.msra.mxu0 0.0
    %1247 = vmatprep.subr.mxu0 0.0
    %1248 = vmatpush1.msra.mxu0 0.0
    %1249 = vmatprep.subr.mxu0 0.0
    %1250 = vmatpush1.msra.mxu0 0.0
    %1251 = vmatprep.subr.mxu0 0.0
    %1252 = vmatpush1.msra.mxu0 0.0
    %1253 = vmatprep.subr.mxu0 0.0
    %1254 = vmatpush1.msra.mxu0 0.0
    %1255 = vmatprep.subr.mxu0 0.0
    %1256 = vmatpush1.msra.mxu0 %v1220
    %1257 = vmatprep.subr.mxu0 0.0
    %1258 = vmatpush2.msra.mxu0 0.0
    %1259 = vmatprep.subr.mxu0 0.0
    %1260 = vmatpush2.msra.mxu0 0.0
    %1261 = vmatprep.subr.mxu0 0.0
    %1262 = vmatpush2.msra.mxu0 0.0
    %1263 = vmatprep.subr.mxu0 0.0
    %1264 = vmatpush2.msra.mxu0 0.0
    %1265 = vmatprep.subr.mxu0 0.0
    %1266 = vmatpush2.msra.mxu0 0.0
    %1267 = vmatprep.subr.mxu0 0.0
    %1268 = vmatpush2.msra.mxu0 0.0
    %1269 = vmatprep.subr.mxu0 0.0
    %1270 = vmatpush2.msra.mxu0 0.0
    %1271 = vmatprep.subr.mxu0 0.0
    %1272 = vmatpush2.msra.mxu0 0.0
    %1273 = vmatprep.subr.mxu0 0.0
    %1274 = vmatpush2.msra.mxu0 0.0
    %1275 = vmatprep.subr.mxu0 0.0
    %1276 = vmatpush2.msra.mxu0 0.0
    %1277 = vmatprep.subr.mxu0 0.0
    %1278 = vmatpush2.msra.mxu0 0.0
    %1279 = vmatprep.subr.mxu0 0.0
    %1280 = vmatpush2.msra.mxu0 0.0
    %1281 = vmatprep.subr.mxu0 0.0
    %1282 = vmatpush2.msra.mxu0 0.0
    %1283 = vmatprep.subr.mxu0 0.0
    %1284 = vmatpush2.msra.mxu0 0.0
    %1285 = vmatprep.subr.mxu0 0.0
    %1286 = vmatpush2.msra.mxu0 0.0
    %1287 = vmatprep.subr.mxu0 0.0
    %1288 = vmatpush2.msra.mxu0 0.0
    %1289 = vmatprep.mubr.f32.mxu0 0.0
    %1290 = vmatmul.mubr.f32.gmra.mxu0 %v1223
    %v1291 = vpop.f32.mrf.mxu0
    %v1292 = vadd.f32 0.0, %v1291
    %v1293 = vpop.f32.mrf.mxu0
    %1294 = vdwg.mxu0
    %1295 = vrot.lane.b32.xlu0 %v409, 64
    %v1296 = vpop.permute.xlu0 %1295
    %v1299 = vsel %vm517, %v1212, 0
    %1301 = vmatprep.subr.mxu0 0.0
    %1302 = vmatpush1.msra.mxu0 0.0
    %1303 = vmatprep.subr.mxu0 0.0
    %1304 = vmatpush1.msra.mxu0 0.0
    %1305 = vmatprep.subr.mxu0 0.0
    %1306 = vmatpush1.msra.mxu0 0.0
    %1307 = vmatprep.subr.mxu0 0.0
    %1308 = vmatpush1.msra.mxu0 0.0
    %1309 = vmatprep.subr.mxu0 0.0
    %1310 = vmatpush1.msra.mxu0 0.0
    %1311 = vmatprep.subr.mxu0 0.0
    %1312 = vmatpush1.msra.mxu0 0.0
    %1313 = vmatprep.subr.mxu0 0.0
    %1314 = vmatpush1.msra.mxu0 0.0
    %1315 = vmatprep.subr.mxu0 0.0
    %1316 = vmatpush1.msra.mxu0 0.0
    %1317 = vmatprep.subr.mxu0 0.0
    %1318 = vmatpush1.msra.mxu0 0.0
    %1319 = vmatprep.subr.mxu0 0.0
    %1320 = vmatpush1.msra.mxu0 0.0
    %1321 = vmatprep.subr.mxu0 0.0
    %1322 = vmatpush1.msra.mxu0 0.0
    %1323 = vmatprep.subr.mxu0 0.0
    %1324 = vmatpush1.msra.mxu0 0.0
    %1325 = vmatprep.subr.mxu0 0.0
    %1326 = vmatpush1.msra.mxu0 0.0
    %1327 = vmatprep.subr.mxu0 0.0
    %1328 = vmatpush1.msra.mxu0 0.0
    %1329 = vmatprep.subr.mxu0 0.0
    %1330 = vmatpush1.msra.mxu0 0.0
    %1331 = vmatprep.subr.mxu0 0.0
    %1332 = vmatpush1.msra.mxu0 %v1296
    %1333 = vmatprep.subr.mxu0 0.0
    %1334 = vmatpush2.msra.mxu0 0.0
    %1335 = vmatprep.subr.mxu0 0.0
    %1336 = vmatpush2.msra.mxu0 0.0
    %1337 = vmatprep.subr.mxu0 0.0
    %1338 = vmatpush2.msra.mxu0 0.0
    %1339 = vmatprep.subr.mxu0 0.0
    %1340 = vmatpush2.msra.mxu0 0.0
    %1341 = vmatprep.subr.mxu0 0.0
    %1342 = vmatpush2.msra.mxu0 0.0
    %1343 = vmatprep.subr.mxu0 0.0
    %1344 = vmatpush2.msra.mxu0 0.0
    %1345 = vmatprep.subr.mxu0 0.0
    %1346 = vmatpush2.msra.mxu0 0.0
    %1347 = vmatprep.subr.mxu0 0.0
    %1348 = vmatpush2.msra.mxu0 0.0
    %1349 = vmatprep.subr.mxu0 0.0
    %1350 = vmatpush2.msra.mxu0 0.0
    %1351 = vmatprep.subr.mxu0 0.0
    %1352 = vmatpush2.msra.mxu0 0.0
    %1353 = vmatprep.subr.mxu0 0.0
    %1354 = vmatpush2.msra.mxu0 0.0
    %1355 = vmatprep.subr.mxu0 0.0
    %1356 = vmatpush2.msra.mxu0 0.0
    %1357 = vmatprep.subr.mxu0 0.0
    %1358 = vmatpush2.msra.mxu0 0.0
    %1359 = vmatprep.subr.mxu0 0.0
    %1360 = vmatpush2.msra.mxu0 0.0
    %1361 = vmatprep.subr.mxu0 0.0
    %1362 = vmatpush2.msra.mxu0 0.0
    %1363 = vmatprep.subr.mxu0 0.0
    %1364 = vmatpush2.msra.mxu0 0.0
    %1365 = vmatprep.mubr.f32.mxu0 0.0
    %1366 = vmatmul.mubr.f32.gmra.mxu0 %v1299
    %v1367 = vpop.f32.mrf.mxu0
    %v1368 = vadd.f32 0.0, %v1367
    %v1369 = vpop.f32.mrf.mxu0
    %1370 = vdwg.mxu0
    %1371 = vrot.lane.b32.xlu0 %v414, 64
    %v1372 = vpop.permute.xlu0 %1371
    %v1375 = vsel %vm517, %v1213, 0
    %1377 = vmatprep.subr.mxu0 0.0
    %1378 = vmatpush1.msra.mxu0 0.0
    %1379 = vmatprep.subr.mxu0 0.0
    %1380 = vmatpush1.msra.mxu0 0.0
    %1381 = vmatprep.subr.mxu0 0.0
    %1382 = vmatpush1.msra.mxu0 0.0
    %1383 = vmatprep.subr.mxu0 0.0
    %1384 = vmatpush1.msra.mxu0 0.0
    %1385 = vmatprep.subr.mxu0 0.0
    %1386 = vmatpush1.msra.mxu0 0.0
    %1387 = vmatprep.subr.mxu0 0.0
    %1388 = vmatpush1.msra.mxu0 0.0
    %1389 = vmatprep.subr.mxu0 0.0
    %1390 = vmatpush1.msra.mxu0 0.0
    %1391 = vmatprep.subr.mxu0 0.0
    %1392 = vmatpush1.msra.mxu0 0.0
    %1393 = vmatprep.subr.mxu0 0.0
    %1394 = vmatpush1.msra.mxu0 0.0
    %1395 = vmatprep.subr.mxu0 0.0
    %1396 = vmatpush1.msra.mxu0 0.0
    %1397 = vmatprep.subr.mxu0 0.0
    %1398 = vmatpush1.msra.mxu0 0.0
    %1399 = vmatprep.subr.mxu0 0.0
    %1400 = vmatpush1.msra.mxu0 0.0
    %1401 = vmatprep.subr.mxu0 0.0
    %1402 = vmatpush1.msra.mxu0 0.0
    %1403 = vmatprep.subr.mxu0 0.0
    %1404 = vmatpush1.msra.mxu0 0.0
    %1405 = vmatprep.subr.mxu0 0.0
    %1406 = vmatpush1.msra.mxu0 0.0
    %1407 = vmatprep.subr.mxu0 0.0
    %1408 = vmatpush1.msra.mxu0 %v1372
    %1409 = vmatprep.subr.mxu0 0.0
    %1410 = vmatpush2.msra.mxu0 0.0
    %1411 = vmatprep.subr.mxu0 0.0
    %1412 = vmatpush2.msra.mxu0 0.0
    %1413 = vmatprep.subr.mxu0 0.0
    %1414 = vmatpush2.msra.mxu0 0.0
    %1415 = vmatprep.subr.mxu0 0.0
    %1416 = vmatpush2.msra.mxu0 0.0
    %1417 = vmatprep.subr.mxu0 0.0
    %1418 = vmatpush2.msra.mxu0 0.0
    %1419 = vmatprep.subr.mxu0 0.0
    %1420 = vmatpush2.msra.mxu0 0.0
    %1421 = vmatprep.subr.mxu0 0.0
    %1422 = vmatpush2.msra.mxu0 0.0
    %1423 = vmatprep.subr.mxu0 0.0
    %1424 = vmatpush2.msra.mxu0 0.0
    %1425 = vmatprep.subr.mxu0 0.0
    %1426 = vmatpush2.msra.mxu0 0.0
    %1427 = vmatprep.subr.mxu0 0.0
    %1428 = vmatpush2.msra.mxu0 0.0
    %1429 = vmatprep.subr.mxu0 0.0
    %1430 = vmatpush2.msra.mxu0 0.0
    %1431 = vmatprep.subr.mxu0 0.0
    %1432 = vmatpush2.msra.mxu0 0.0
    %1433 = vmatprep.subr.mxu0 0.0
    %1434 = vmatpush2.msra.mxu0 0.0
    %1435 = vmatprep.subr.mxu0 0.0
    %1436 = vmatpush2.msra.mxu0 0.0
    %1437 = vmatprep.subr.mxu0 0.0
    %1438 = vmatpush2.msra.mxu0 0.0
    %1439 = vmatprep.subr.mxu0 0.0
    %1440 = vmatpush2.msra.mxu0 0.0
    %1441 = vmatprep.mubr.f32.mxu0 0.0
    %1442 = vmatmul.mubr.f32.gmra.mxu0 %v1375
    %v1443 = vpop.f32.mrf.mxu0
    %v1444 = vadd.f32 0.0, %v1443
    %v1445 = vpop.f32.mrf.mxu0
    %1446 = vdwg.mxu0
    %1447 = vrot.lane.b32.xlu0 %v419, 64
    %v1448 = vpop.permute.xlu0 %1447
    %v1451 = vsel %vm517, %v1214, 0
    %1453 = vmatprep.subr.mxu0 0.0
    %1454 = vmatpush1.msra.mxu0 0.0
    %1455 = vmatprep.subr.mxu0 0.0
    %1456 = vmatpush1.msra.mxu0 0.0
    %1457 = vmatprep.subr.mxu0 0.0
    %1458 = vmatpush1.msra.mxu0 0.0
    %1459 = vmatprep.subr.mxu0 0.0
    %1460 = vmatpush1.msra.mxu0 0.0
    %1461 = vmatprep.subr.mxu0 0.0
    %1462 = vmatpush1.msra.mxu0 0.0
    %1463 = vmatprep.subr.mxu0 0.0
    %1464 = vmatpush1.msra.mxu0 0.0
    %1465 = vmatprep.subr.mxu0 0.0
    %1466 = vmatpush1.msra.mxu0 0.0
    %1467 = vmatprep.subr.mxu0 0.0
    %1468 = vmatpush1.msra.mxu0 0.0
    %1469 = vmatprep.subr.mxu0 0.0
    %1470 = vmatpush1.msra.mxu0 0.0
    %1471 = vmatprep.subr.mxu0 0.0
    %1472 = vmatpush1.msra.mxu0 0.0
    %1473 = vmatprep.subr.mxu0 0.0
    %1474 = vmatpush1.msra.mxu0 0.0
    %1475 = vmatprep.subr.mxu0 0.0
    %1476 = vmatpush1.msra.mxu0 0.0
    %1477 = vmatprep.subr.mxu0 0.0
    %1478 = vmatpush1.msra.mxu0 0.0
    %1479 = vmatprep.subr.mxu0 0.0
    %1480 = vmatpush1.msra.mxu0 0.0
    %1481 = vmatprep.subr.mxu0 0.0
    %1482 = vmatpush1.msra.mxu0 0.0
    %1483 = vmatprep.subr.mxu0 0.0
    %1484 = vmatpush1.msra.mxu0 %v1448
    %1485 = vmatprep.subr.mxu0 0.0
    %1486 = vmatpush2.msra.mxu0 0.0
    %1487 = vmatprep.subr.mxu0 0.0
    %1488 = vmatpush2.msra.mxu0 0.0
    %1489 = vmatprep.subr.mxu0 0.0
    %1490 = vmatpush2.msra.mxu0 0.0
    %1491 = vmatprep.subr.mxu0 0.0
    %1492 = vmatpush2.msra.mxu0 0.0
    %1493 = vmatprep.subr.mxu0 0.0
    %1494 = vmatpush2.msra.mxu0 0.0
    %1495 = vmatprep.subr.mxu0 0.0
    %1496 = vmatpush2.msra.mxu0 0.0
    %1497 = vmatprep.subr.mxu0 0.0
    %1498 = vmatpush2.msra.mxu0 0.0
    %1499 = vmatprep.subr.mxu0 0.0
    %1500 = vmatpush2.msra.mxu0 0.0
    %1501 = vmatprep.subr.mxu0 0.0
    %1502 = vmatpush2.msra.mxu0 0.0
    %1503 = vmatprep.subr.mxu0 0.0
    %1504 = vmatpush2.msra.mxu0 0.0
    %1505 = vmatprep.subr.mxu0 0.0
    %1506 = vmatpush2.msra.mxu0 0.0
    %1507 = vmatprep.subr.mxu0 0.0
    %1508 = vmatpush2.msra.mxu0 0.0
    %1509 = vmatprep.subr.mxu0 0.0
    %1510 = vmatpush2.msra.mxu0 0.0
    %1511 = vmatprep.subr.mxu0 0.0
    %1512 = vmatpush2.msra.mxu0 0.0
    %1513 = vmatprep.subr.mxu0 0.0
    %1514 = vmatpush2.msra.mxu0 0.0
    %1515 = vmatprep.subr.mxu0 0.0
    %1516 = vmatpush2.msra.mxu0 0.0
    %1517 = vmatprep.mubr.f32.mxu0 0.0
    %1518 = vmatmul.mubr.f32.gmra.mxu0 %v1451
    %v1519 = vpop.f32.mrf.mxu0
    %v1520 = vadd.f32 0.0, %v1519
    %v1521 = vpop.f32.mrf.mxu0
    %1522 = vdwg.mxu0
    %1523 = vrot.lane.b32.xlu0 %v424, 64
    %v1524 = vpop.permute.xlu0 %1523
    %v1527 = vsel %vm517, %v1215, 0
    %1529 = vmatprep.subr.mxu0 0.0
    %1530 = vmatpush1.msra.mxu0 0.0
    %1531 = vmatprep.subr.mxu0 0.0
    %1532 = vmatpush1.msra.mxu0 0.0
    %1533 = vmatprep.subr.mxu0 0.0
    %1534 = vmatpush1.msra.mxu0 0.0
    %1535 = vmatprep.subr.mxu0 0.0
    %1536 = vmatpush1.msra.mxu0 0.0
    %1537 = vmatprep.subr.mxu0 0.0
    %1538 = vmatpush1.msra.mxu0 0.0
    %1539 = vmatprep.subr.mxu0 0.0
    %1540 = vmatpush1.msra.mxu0 0.0
    %1541 = vmatprep.subr.mxu0 0.0
    %1542 = vmatpush1.msra.mxu0 0.0
    %1543 = vmatprep.subr.mxu0 0.0
    %1544 = vmatpush1.msra.mxu0 0.0
    %1545 = vmatprep.subr.mxu0 0.0
    %1546 = vmatpush1.msra.mxu0 0.0
    %1547 = vmatprep.subr.mxu0 0.0
    %1548 = vmatpush1.msra.mxu0 0.0
    %1549 = vmatprep.subr.mxu0 0.0
    %1550 = vmatpush1.msra.mxu0 0.0
    %1551 = vmatprep.subr.mxu0 0.0
    %1552 = vmatpush1.msra.mxu0 0.0
    %1553 = vmatprep.subr.mxu0 0.0
    %1554 = vmatpush1.msra.mxu0 0.0
    %1555 = vmatprep.subr.mxu0 0.0
    %1556 = vmatpush1.msra.mxu0 0.0
    %1557 = vmatprep.subr.mxu0 0.0
    %1558 = vmatpush1.msra.mxu0 0.0
    %1559 = vmatprep.subr.mxu0 0.0
    %1560 = vmatpush1.msra.mxu0 %v1524
    %1561 = vmatprep.subr.mxu0 0.0
    %1562 = vmatpush2.msra.mxu0 0.0
    %1563 = vmatprep.subr.mxu0 0.0
    %1564 = vmatpush2.msra.mxu0 0.0
    %1565 = vmatprep.subr.mxu0 0.0
    %1566 = vmatpush2.msra.mxu0 0.0
    %1567 = vmatprep.subr.mxu0 0.0
    %1568 = vmatpush2.msra.mxu0 0.0
    %1569 = vmatprep.subr.mxu0 0.0
    %1570 = vmatpush2.msra.mxu0 0.0
    %1571 = vmatprep.subr.mxu0 0.0
    %1572 = vmatpush2.msra.mxu0 0.0
    %1573 = vmatprep.subr.mxu0 0.0
    %1574 = vmatpush2.msra.mxu0 0.0
    %1575 = vmatprep.subr.mxu0 0.0
    %1576 = vmatpush2.msra.mxu0 0.0
    %1577 = vmatprep.subr.mxu0 0.0
    %1578 = vmatpush2.msra.mxu0 0.0
    %1579 = vmatprep.subr.mxu0 0.0
    %1580 = vmatpush2.msra.mxu0 0.0
    %1581 = vmatprep.subr.mxu0 0.0
    %1582 = vmatpush2.msra.mxu0 0.0
    %1583 = vmatprep.subr.mxu0 0.0
    %1584 = vmatpush2.msra.mxu0 0.0
    %1585 = vmatprep.subr.mxu0 0.0
    %1586 = vmatpush2.msra.mxu0 0.0
    %1587 = vmatprep.subr.mxu0 0.0
    %1588 = vmatpush2.msra.mxu0 0.0
    %1589 = vmatprep.subr.mxu0 0.0
    %1590 = vmatpush2.msra.mxu0 0.0
    %1591 = vmatprep.subr.mxu0 0.0
    %1592 = vmatpush2.msra.mxu0 0.0
    %1593 = vmatprep.mubr.f32.mxu0 0.0
    %1594 = vmatmul.mubr.f32.gmra.mxu0 %v1527
    %v1595 = vpop.f32.mrf.mxu0
    %v1596 = vadd.f32 0.0, %v1595
    %v1597 = vpop.f32.mrf.mxu0
    %1598 = vdwg.mxu0
    %1599 = vrot.lane.b32.xlu0 %v429, 64
    %v1600 = vpop.permute.xlu0 %1599
    %v1603 = vsel %vm517, %v1216, 0
    %1605 = vmatprep.subr.mxu0 0.0
    %1606 = vmatpush1.msra.mxu0 0.0
    %1607 = vmatprep.subr.mxu0 0.0
    %1608 = vmatpush1.msra.mxu0 0.0
    %1609 = vmatprep.subr.mxu0 0.0
    %1610 = vmatpush1.msra.mxu0 0.0
    %1611 = vmatprep.subr.mxu0 0.0
    %1612 = vmatpush1.msra.mxu0 0.0
    %1613 = vmatprep.subr.mxu0 0.0
    %1614 = vmatpush1.msra.mxu0 0.0
    %1615 = vmatprep.subr.mxu0 0.0
    %1616 = vmatpush1.msra.mxu0 0.0
    %1617 = vmatprep.subr.mxu0 0.0
    %1618 = vmatpush1.msra.mxu0 0.0
    %1619 = vmatprep.subr.mxu0 0.0
    %1620 = vmatpush1.msra.mxu0 0.0
    %1621 = vmatprep.subr.mxu0 0.0
    %1622 = vmatpush1.msra.mxu0 0.0
    %1623 = vmatprep.subr.mxu0 0.0
    %1624 = vmatpush1.msra.mxu0 0.0
    %1625 = vmatprep.subr.mxu0 0.0
    %1626 = vmatpush1.msra.mxu0 0.0
    %1627 = vmatprep.subr.mxu0 0.0
    %1628 = vmatpush1.msra.mxu0 0.0
    %1629 = vmatprep.subr.mxu0 0.0
    %1630 = vmatpush1.msra.mxu0 0.0
    %1631 = vmatprep.subr.mxu0 0.0
    %1632 = vmatpush1.msra.mxu0 0.0
    %1633 = vmatprep.subr.mxu0 0.0
    %1634 = vmatpush1.msra.mxu0 0.0
    %1635 = vmatprep.subr.mxu0 0.0
    %1636 = vmatpush1.msra.mxu0 %v1600
    %1637 = vmatprep.subr.mxu0 0.0
    %1638 = vmatpush2.msra.mxu0 0.0
    %1639 = vmatprep.subr.mxu0 0.0
    %1640 = vmatpush2.msra.mxu0 0.0
    %1641 = vmatprep.subr.mxu0 0.0
    %1642 = vmatpush2.msra.mxu0 0.0
    %1643 = vmatprep.subr.mxu0 0.0
    %1644 = vmatpush2.msra.mxu0 0.0
    %1645 = vmatprep.subr.mxu0 0.0
    %1646 = vmatpush2.msra.mxu0 0.0
    %1647 = vmatprep.subr.mxu0 0.0
    %1648 = vmatpush2.msra.mxu0 0.0
    %1649 = vmatprep.subr.mxu0 0.0
    %1650 = vmatpush2.msra.mxu0 0.0
    %1651 = vmatprep.subr.mxu0 0.0
    %1652 = vmatpush2.msra.mxu0 0.0
    %1653 = vmatprep.subr.mxu0 0.0
    %1654 = vmatpush2.msra.mxu0 0.0
    %1655 = vmatprep.subr.mxu0 0.0
    %1656 = vmatpush2.msra.mxu0 0.0
    %1657 = vmatprep.subr.mxu0 0.0
    %1658 = vmatpush2.msra.mxu0 0.0
    %1659 = vmatprep.subr.mxu0 0.0
    %1660 = vmatpush2.msra.mxu0 0.0
    %1661 = vmatprep.subr.mxu0 0.0
    %1662 = vmatpush2.msra.mxu0 0.0
    %1663 = vmatprep.subr.mxu0 0.0
    %1664 = vmatpush2.msra.mxu0 0.0
    %1665 = vmatprep.subr.mxu0 0.0
    %1666 = vmatpush2.msra.mxu0 0.0
    %1667 = vmatprep.subr.mxu0 0.0
    %1668 = vmatpush2.msra.mxu0 0.0
    %1669 = vmatprep.mubr.f32.mxu0 0.0
    %1670 = vmatmul.mubr.f32.gmra.mxu0 %v1603
    %v1671 = vpop.f32.mrf.mxu0
    %v1672 = vadd.f32 0.0, %v1671
    %v1673 = vpop.f32.mrf.mxu0
    %1674 = vdwg.mxu0
    %1675 = vrot.lane.b32.xlu0 %v434, 64
    %v1676 = vpop.permute.xlu0 %1675
    %v1679 = vsel %vm517, %v1217, 0
    %1681 = vmatprep.subr.mxu0 0.0
    %1682 = vmatpush1.msra.mxu0 0.0
    %1683 = vmatprep.subr.mxu0 0.0
    %1684 = vmatpush1.msra.mxu0 0.0
    %1685 = vmatprep.subr.mxu0 0.0
    %1686 = vmatpush1.msra.mxu0 0.0
    %1687 = vmatprep.subr.mxu0 0.0
    %1688 = vmatpush1.msra.mxu0 0.0
    %1689 = vmatprep.subr.mxu0 0.0
    %1690 = vmatpush1.msra.mxu0 0.0
    %1691 = vmatprep.subr.mxu0 0.0
    %1692 = vmatpush1.msra.mxu0 0.0
    %1693 = vmatprep.subr.mxu0 0.0
    %1694 = vmatpush1.msra.mxu0 0.0
    %1695 = vmatprep.subr.mxu0 0.0
    %1696 = vmatpush1.msra.mxu0 0.0
    %1697 = vmatprep.subr.mxu0 0.0
    %1698 = vmatpush1.msra.mxu0 0.0
    %1699 = vmatprep.subr.mxu0 0.0
    %1700 = vmatpush1.msra.mxu0 0.0
    %1701 = vmatprep.subr.mxu0 0.0
    %1702 = vmatpush1.msra.mxu0 0.0
    %1703 = vmatprep.subr.mxu0 0.0
    %1704 = vmatpush1.msra.mxu0 0.0
    %1705 = vmatprep.subr.mxu0 0.0
    %1706 = vmatpush1.msra.mxu0 0.0
    %1707 = vmatprep.subr.mxu0 0.0
    %1708 = vmatpush1.msra.mxu0 0.0
    %1709 = vmatprep.subr.mxu0 0.0
    %1710 = vmatpush1.msra.mxu0 0.0
    %1711 = vmatprep.subr.mxu0 0.0
    %1712 = vmatpush1.msra.mxu0 %v1676
    %1713 = vmatprep.subr.mxu0 0.0
    %1714 = vmatpush2.msra.mxu0 0.0
    %1715 = vmatprep.subr.mxu0 0.0
    %1716 = vmatpush2.msra.mxu0 0.0
    %1717 = vmatprep.subr.mxu0 0.0
    %1718 = vmatpush2.msra.mxu0 0.0
    %1719 = vmatprep.subr.mxu0 0.0
    %1720 = vmatpush2.msra.mxu0 0.0
    %1721 = vmatprep.subr.mxu0 0.0
    %1722 = vmatpush2.msra.mxu0 0.0
    %1723 = vmatprep.subr.mxu0 0.0
    %1724 = vmatpush2.msra.mxu0 0.0
    %1725 = vmatprep.subr.mxu0 0.0
    %1726 = vmatpush2.msra.mxu0 0.0
    %1727 = vmatprep.subr.mxu0 0.0
    %1728 = vmatpush2.msra.mxu0 0.0
    %1729 = vmatprep.subr.mxu0 0.0
    %1730 = vmatpush2.msra.mxu0 0.0
    %1731 = vmatprep.subr.mxu0 0.0
    %1732 = vmatpush2.msra.mxu0 0.0
    %1733 = vmatprep.subr.mxu0 0.0
    %1734 = vmatpush2.msra.mxu0 0.0
    %1735 = vmatprep.subr.mxu0 0.0
    %1736 = vmatpush2.msra.mxu0 0.0
    %1737 = vmatprep.subr.mxu0 0.0
    %1738 = vmatpush2.msra.mxu0 0.0
    %1739 = vmatprep.subr.mxu0 0.0
    %1740 = vmatpush2.msra.mxu0 0.0
    %1741 = vmatprep.subr.mxu0 0.0
    %1742 = vmatpush2.msra.mxu0 0.0
    %1743 = vmatprep.subr.mxu0 0.0
    %1744 = vmatpush2.msra.mxu0 0.0
    %1745 = vmatprep.mubr.f32.mxu0 0.0
    %1746 = vmatmul.mubr.f32.gmra.mxu0 %v1679
    %v1747 = vpop.f32.mrf.mxu0
    %v1748 = vadd.f32 0.0, %v1747
    %v1749 = vpop.f32.mrf.mxu0
    %1750 = vdwg.mxu0
    %1751 = vrot.lane.b32.xlu0 %v439, 64
    %v1752 = vpop.permute.xlu0 %1751
    %v1755 = vsel %vm517, %v1218, 0
    %1757 = vmatprep.subr.mxu0 0.0
    %1758 = vmatpush1.msra.mxu0 0.0
    %1759 = vmatprep.subr.mxu0 0.0
    %1760 = vmatpush1.msra.mxu0 0.0
    %1761 = vmatprep.subr.mxu0 0.0
    %1762 = vmatpush1.msra.mxu0 0.0
    %1763 = vmatprep.subr.mxu0 0.0
    %1764 = vmatpush1.msra.mxu0 0.0
    %1765 = vmatprep.subr.mxu0 0.0
    %1766 = vmatpush1.msra.mxu0 0.0
    %1767 = vmatprep.subr.mxu0 0.0
    %1768 = vmatpush1.msra.mxu0 0.0
    %1769 = vmatprep.subr.mxu0 0.0
    %1770 = vmatpush1.msra.mxu0 0.0
    %1771 = vmatprep.subr.mxu0 0.0
    %1772 = vmatpush1.msra.mxu0 0.0
    %1773 = vmatprep.subr.mxu0 0.0
    %1774 = vmatpush1.msra.mxu0 0.0
    %1775 = vmatprep.subr.mxu0 0.0
    %1776 = vmatpush1.msra.mxu0 0.0
    %1777 = vmatprep.subr.mxu0 0.0
    %1778 = vmatpush1.msra.mxu0 0.0
    %1779 = vmatprep.subr.mxu0 0.0
    %1780 = vmatpush1.msra.mxu0 0.0
    %1781 = vmatprep.subr.mxu0 0.0
    %1782 = vmatpush1.msra.mxu0 0.0
    %1783 = vmatprep.subr.mxu0 0.0
    %1784 = vmatpush1.msra.mxu0 0.0
    %1785 = vmatprep.subr.mxu0 0.0
    %1786 = vmatpush1.msra.mxu0 0.0
    %1787 = vmatprep.subr.mxu0 0.0
    %1788 = vmatpush1.msra.mxu0 %v1752
    %1789 = vmatprep.subr.mxu0 0.0
    %1790 = vmatpush2.msra.mxu0 0.0
    %1791 = vmatprep.subr.mxu0 0.0
    %1792 = vmatpush2.msra.mxu0 0.0
    %1793 = vmatprep.subr.mxu0 0.0
    %1794 = vmatpush2.msra.mxu0 0.0
    %1795 = vmatprep.subr.mxu0 0.0
    %1796 = vmatpush2.msra.mxu0 0.0
    %1797 = vmatprep.subr.mxu0 0.0
    %1798 = vmatpush2.msra.mxu0 0.0
    %1799 = vmatprep.subr.mxu0 0.0
    %1800 = vmatpush2.msra.mxu0 0.0
    %1801 = vmatprep.subr.mxu0 0.0
    %1802 = vmatpush2.msra.mxu0 0.0
    %1803 = vmatprep.subr.mxu0 0.0
    %1804 = vmatpush2.msra.mxu0 0.0
    %1805 = vmatprep.subr.mxu0 0.0
    %1806 = vmatpush2.msra.mxu0 0.0
    %1807 = vmatprep.subr.mxu0 0.0
    %1808 = vmatpush2.msra.mxu0 0.0
    %1809 = vmatprep.subr.mxu0 0.0
    %1810 = vmatpush2.msra.mxu0 0.0
    %1811 = vmatprep.subr.mxu0 0.0
    %1812 = vmatpush2.msra.mxu0 0.0
    %1813 = vmatprep.subr.mxu0 0.0
    %1814 = vmatpush2.msra.mxu0 0.0
    %1815 = vmatprep.subr.mxu0 0.0
    %1816 = vmatpush2.msra.mxu0 0.0
    %1817 = vmatprep.subr.mxu0 0.0
    %1818 = vmatpush2.msra.mxu0 0.0
    %1819 = vmatprep.subr.mxu0 0.0
    %1820 = vmatpush2.msra.mxu0 0.0
    %1821 = vmatprep.mubr.f32.mxu0 0.0
    %1822 = vmatmul.mubr.f32.gmra.mxu0 %v1755
    %v1823 = vpop.f32.mrf.mxu0
    %v1824 = vadd.f32 0.0, %v1823
    %v1825 = vpop.f32.mrf.mxu0
    %1826 = vdwg.mxu0
    %v1827 = vld [vmem:[%s8] sm:$0xff]
    %1828 = vrot.lane.b32.xlu0 %v404, 120
    %v1829 = vpop.permute.xlu0 %1828
    %1830 = vrot.lane.b32.xlu0 %v404, 88
    %v1831 = vpop.permute.xlu0 %1830
    %v1832 = vsel %vm517, %v1829, 0
    %v1834 = vsel %vm517, %v1831, 0
    %1836 = vmatprep.subr.mxu0 0.0
    %1837 = vmatpush1.xpose.msra.mxu0 0.0
    %1838 = vmatprep.subr.mxu0 0.0
    %1839 = vmatpush1.xpose.msra.mxu0 0.0
    %1840 = vmatprep.subr.mxu0 0.0
    %1841 = vmatpush1.xpose.msra.mxu0 0.0
    %1842 = vmatprep.subr.mxu0 0.0
    %1843 = vmatpush1.xpose.msra.mxu0 0.0
    %1844 = vmatprep.subr.mxu0 0.0
    %1845 = vmatpush1.xpose.msra.mxu0 0.0
    %1846 = vmatprep.subr.mxu0 0.0
    %1847 = vmatpush1.xpose.msra.mxu0 0.0
    %1848 = vmatprep.subr.mxu0 0.0
    %1849 = vmatpush1.xpose.msra.mxu0 0.0
    %1850 = vmatprep.subr.mxu0 0.0
    %1851 = vmatpush1.xpose.msra.mxu0 0.0
    %1852 = vmatprep.subr.mxu0 0.0
    %1853 = vmatpush1.xpose.msra.mxu0 0.0
    %1854 = vmatprep.subr.mxu0 0.0
    %1855 = vmatpush1.xpose.msra.mxu0 0.0
    %1856 = vmatprep.subr.mxu0 0.0
    %1857 = vmatpush1.xpose.msra.mxu0 0.0
    %1858 = vmatprep.subr.mxu0 0.0
    %1859 = vmatpush1.xpose.msra.mxu0 0.0
    %1860 = vmatprep.subr.mxu0 0.0
    %1861 = vmatpush1.xpose.msra.mxu0 0.0
    %1862 = vmatprep.subr.mxu0 0.0
    %1863 = vmatpush1.xpose.msra.mxu0 0.0
    %1864 = vmatprep.subr.mxu0 0.0
    %1865 = vmatpush1.xpose.msra.mxu0 0.0
    %1866 = vmatprep.subr.mxu0 0.0
    %1867 = vmatpush1.xpose.msra.mxu0 %v1834
    %1868 = vmatprep.subr.mxu0 0.0
    %1869 = vmatpush2.xpose.msra.mxu0 0.0
    %1870 = vmatprep.subr.mxu0 0.0
    %1871 = vmatpush2.xpose.msra.mxu0 0.0
    %1872 = vmatprep.subr.mxu0 0.0
    %1873 = vmatpush2.xpose.msra.mxu0 0.0
    %1874 = vmatprep.subr.mxu0 0.0
    %1875 = vmatpush2.xpose.msra.mxu0 0.0
    %1876 = vmatprep.subr.mxu0 0.0
    %1877 = vmatpush2.xpose.msra.mxu0 0.0
    %1878 = vmatprep.subr.mxu0 0.0
    %1879 = vmatpush2.xpose.msra.mxu0 0.0
    %1880 = vmatprep.subr.mxu0 0.0
    %1881 = vmatpush2.xpose.msra.mxu0 0.0
    %1882 = vmatprep.subr.mxu0 0.0
    %1883 = vmatpush2.xpose.msra.mxu0 0.0
    %1884 = vmatprep.subr.mxu0 0.0
    %1885 = vmatpush2.xpose.msra.mxu0 0.0
    %1886 = vmatprep.subr.mxu0 0.0
    %1887 = vmatpush2.xpose.msra.mxu0 0.0
    %1888 = vmatprep.subr.mxu0 0.0
    %1889 = vmatpush2.xpose.msra.mxu0 0.0
    %1890 = vmatprep.subr.mxu0 0.0
    %1891 = vmatpush2.xpose.msra.mxu0 0.0
    %1892 = vmatprep.subr.mxu0 0.0
    %1893 = vmatpush2.xpose.msra.mxu0 0.0
    %1894 = vmatprep.subr.mxu0 0.0
    %1895 = vmatpush2.xpose.msra.mxu0 0.0
    %1896 = vmatprep.subr.mxu0 0.0
    %1897 = vmatpush2.xpose.msra.mxu0 0.0
    %1898 = vmatprep.subr.mxu0 0.0
    %1899 = vmatpush2.xpose.msra.mxu0 0.0
    %1900 = vmatprep.mubr.f32.mxu0 0.0
    %1901 = vmatmul.mubr.f32.gmra.mxu0 %v1832
    %v1902 = vpop.f32.mrf.mxu0
    %v1903 = vadd.f32 %v477, %v1902
    %v1904 = vpop.f32.mrf.mxu0
    %1905 = vdwg.mxu0
    %1906 = vrot.lane.b32.xlu0 %v409, 120
    %v1907 = vpop.permute.xlu0 %1906
    %1908 = vrot.lane.b32.xlu0 %v409, 88
    %v1909 = vpop.permute.xlu0 %1908
    %v1910 = vsel %vm517, %v1907, 0
    %v1912 = vsel %vm517, %v1909, 0
    %1914 = vmatprep.subr.mxu0 0.0
    %1915 = vmatpush1.xpose.msra.mxu0 0.0
    %1916 = vmatprep.subr.mxu0 0.0
    %1917 = vmatpush1.xpose.msra.mxu0 0.0
    %1918 = vmatprep.subr.mxu0 0.0
    %1919 = vmatpush1.xpose.msra.mxu0 0.0
    %1920 = vmatprep.subr.mxu0 0.0
    %1921 = vmatpush1.xpose.msra.mxu0 0.0
    %1922 = vmatprep.subr.mxu0 0.0
    %1923 = vmatpush1.xpose.msra.mxu0 0.0
    %1924 = vmatprep.subr.mxu0 0.0
    %1925 = vmatpush1.xpose.msra.mxu0 0.0
    %1926 = vmatprep.subr.mxu0 0.0
    %1927 = vmatpush1.xpose.msra.mxu0 0.0
    %1928 = vmatprep.subr.mxu0 0.0
    %1929 = vmatpush1.xpose.msra.mxu0 0.0
    %1930 = vmatprep.subr.mxu0 0.0
    %1931 = vmatpush1.xpose.msra.mxu0 0.0
    %1932 = vmatprep.subr.mxu0 0.0
    %1933 = vmatpush1.xpose.msra.mxu0 0.0
    %1934 = vmatprep.subr.mxu0 0.0
    %1935 = vmatpush1.xpose.msra.mxu0 0.0
    %1936 = vmatprep.subr.mxu0 0.0
    %1937 = vmatpush1.xpose.msra.mxu0 0.0
    %1938 = vmatprep.subr.mxu0 0.0
    %1939 = vmatpush1.xpose.msra.mxu0 0.0
    %1940 = vmatprep.subr.mxu0 0.0
    %1941 = vmatpush1.xpose.msra.mxu0 0.0
    %1942 = vmatprep.subr.mxu0 0.0
    %1943 = vmatpush1.xpose.msra.mxu0 0.0
    %1944 = vmatprep.subr.mxu0 0.0
    %1945 = vmatpush1.xpose.msra.mxu0 %v1912
    %1946 = vmatprep.subr.mxu0 0.0
    %1947 = vmatpush2.xpose.msra.mxu0 0.0
    %1948 = vmatprep.subr.mxu0 0.0
    %1949 = vmatpush2.xpose.msra.mxu0 0.0
    %1950 = vmatprep.subr.mxu0 0.0
    %1951 = vmatpush2.xpose.msra.mxu0 0.0
    %1952 = vmatprep.subr.mxu0 0.0
    %1953 = vmatpush2.xpose.msra.mxu0 0.0
    %1954 = vmatprep.subr.mxu0 0.0
    %1955 = vmatpush2.xpose.msra.mxu0 0.0
    %1956 = vmatprep.subr.mxu0 0.0
    %1957 = vmatpush2.xpose.msra.mxu0 0.0
    %1958 = vmatprep.subr.mxu0 0.0
    %1959 = vmatpush2.xpose.msra.mxu0 0.0
    %1960 = vmatprep.subr.mxu0 0.0
    %1961 = vmatpush2.xpose.msra.mxu0 0.0
    %1962 = vmatprep.subr.mxu0 0.0
    %1963 = vmatpush2.xpose.msra.mxu0 0.0
    %1964 = vmatprep.subr.mxu0 0.0
    %1965 = vmatpush2.xpose.msra.mxu0 0.0
    %1966 = vmatprep.subr.mxu0 0.0
    %1967 = vmatpush2.xpose.msra.mxu0 0.0
    %1968 = vmatprep.subr.mxu0 0.0
    %1969 = vmatpush2.xpose.msra.mxu0 0.0
    %1970 = vmatprep.subr.mxu0 0.0
    %1971 = vmatpush2.xpose.msra.mxu0 0.0
    %1972 = vmatprep.subr.mxu0 0.0
    %1973 = vmatpush2.xpose.msra.mxu0 0.0
    %1974 = vmatprep.subr.mxu0 0.0
    %1975 = vmatpush2.xpose.msra.mxu0 0.0
    %1976 = vmatprep.subr.mxu0 0.0
    %1977 = vmatpush2.xpose.msra.mxu0 0.0
    %1978 = vmatprep.mubr.f32.mxu0 0.0
    %1979 = vmatmul.mubr.f32.gmra.mxu0 %v1910
    %v1980 = vpop.f32.mrf.mxu0
    %v1981 = vadd.f32 %v481, %v1980
    %v1982 = vpop.f32.mrf.mxu0
    %1983 = vdwg.mxu0
    %1984 = vrot.lane.b32.xlu0 %v414, 120
    %v1985 = vpop.permute.xlu0 %1984
    %1986 = vrot.lane.b32.xlu0 %v414, 88
    %v1987 = vpop.permute.xlu0 %1986
    %v1988 = vsel %vm517, %v1985, 0
    %v1990 = vsel %vm517, %v1987, 0
    %1992 = vmatprep.subr.mxu0 0.0
    %1993 = vmatpush1.xpose.msra.mxu0 0.0
    %1994 = vmatprep.subr.mxu0 0.0
    %1995 = vmatpush1.xpose.msra.mxu0 0.0
    %1996 = vmatprep.subr.mxu0 0.0
    %1997 = vmatpush1.xpose.msra.mxu0 0.0
    %1998 = vmatprep.subr.mxu0 0.0
    %1999 = vmatpush1.xpose.msra.mxu0 0.0
    %2000 = vmatprep.subr.mxu0 0.0
    %2001 = vmatpush1.xpose.msra.mxu0 0.0
    %2002 = vmatprep.subr.mxu0 0.0
    %2003 = vmatpush1.xpose.msra.mxu0 0.0
    %2004 = vmatprep.subr.mxu0 0.0
    %2005 = vmatpush1.xpose.msra.mxu0 0.0
    %2006 = vmatprep.subr.mxu0 0.0
    %2007 = vmatpush1.xpose.msra.mxu0 0.0
    %2008 = vmatprep.subr.mxu0 0.0
    %2009 = vmatpush1.xpose.msra.mxu0 0.0
    %2010 = vmatprep.subr.mxu0 0.0
    %2011 = vmatpush1.xpose.msra.mxu0 0.0
    %2012 = vmatprep.subr.mxu0 0.0
    %2013 = vmatpush1.xpose.msra.mxu0 0.0
    %2014 = vmatprep.subr.mxu0 0.0
    %2015 = vmatpush1.xpose.msra.mxu0 0.0
    %2016 = vmatprep.subr.mxu0 0.0
    %2017 = vmatpush1.xpose.msra.mxu0 0.0
    %2018 = vmatprep.subr.mxu0 0.0
    %2019 = vmatpush1.xpose.msra.mxu0 0.0
    %2020 = vmatprep.subr.mxu0 0.0
    %2021 = vmatpush1.xpose.msra.mxu0 0.0
    %2022 = vmatprep.subr.mxu0 0.0
    %2023 = vmatpush1.xpose.msra.mxu0 %v1990
    %2024 = vmatprep.subr.mxu0 0.0
    %2025 = vmatpush2.xpose.msra.mxu0 0.0
    %2026 = vmatprep.subr.mxu0 0.0
    %2027 = vmatpush2.xpose.msra.mxu0 0.0
    %2028 = vmatprep.subr.mxu0 0.0
    %2029 = vmatpush2.xpose.msra.mxu0 0.0
    %2030 = vmatprep.subr.mxu0 0.0
    %2031 = vmatpush2.xpose.msra.mxu0 0.0
    %2032 = vmatprep.subr.mxu0 0.0
    %2033 = vmatpush2.xpose.msra.mxu0 0.0
    %2034 = vmatprep.subr.mxu0 0.0
    %2035 = vmatpush2.xpose.msra.mxu0 0.0
    %2036 = vmatprep.subr.mxu0 0.0
    %2037 = vmatpush2.xpose.msra.mxu0 0.0
    %2038 = vmatprep.subr.mxu0 0.0
    %2039 = vmatpush2.xpose.msra.mxu0 0.0
    %2040 = vmatprep.subr.mxu0 0.0
    %2041 = vmatpush2.xpose.msra.mxu0 0.0
    %2042 = vmatprep.subr.mxu0 0.0
    %2043 = vmatpush2.xpose.msra.mxu0 0.0
    %2044 = vmatprep.subr.mxu0 0.0
    %2045 = vmatpush2.xpose.msra.mxu0 0.0
    %2046 = vmatprep.subr.mxu0 0.0
    %2047 = vmatpush2.xpose.msra.mxu0 0.0
    %2048 = vmatprep.subr.mxu0 0.0
    %2049 = vmatpush2.xpose.msra.mxu0 0.0
    %2050 = vmatprep.subr.mxu0 0.0
    %2051 = vmatpush2.xpose.msra.mxu0 0.0
    %2052 = vmatprep.subr.mxu0 0.0
    %2053 = vmatpush2.xpose.msra.mxu0 0.0
    %2054 = vmatprep.subr.mxu0 0.0
    %2055 = vmatpush2.xpose.msra.mxu0 0.0
    %2056 = vmatprep.mubr.f32.mxu0 0.0
    %2057 = vmatmul.mubr.f32.gmra.mxu0 %v1988
    %v2058 = vpop.f32.mrf.mxu0
    %v2059 = vadd.f32 %v485, %v2058
    %v2060 = vpop.f32.mrf.mxu0
    %2061 = vdwg.mxu0
    %2062 = vrot.lane.b32.xlu0 %v419, 120
    %v2063 = vpop.permute.xlu0 %2062
    %2064 = vrot.lane.b32.xlu0 %v419, 88
    %v2065 = vpop.permute.xlu0 %2064
    %v2066 = vsel %vm517, %v2063, 0
    %v2068 = vsel %vm517, %v2065, 0
    %2070 = vmatprep.subr.mxu0 0.0
    %2071 = vmatpush1.xpose.msra.mxu0 0.0
    %2072 = vmatprep.subr.mxu0 0.0
    %2073 = vmatpush1.xpose.msra.mxu0 0.0
    %2074 = vmatprep.subr.mxu0 0.0
    %2075 = vmatpush1.xpose.msra.mxu0 0.0
    %2076 = vmatprep.subr.mxu0 0.0
    %2077 = vmatpush1.xpose.msra.mxu0 0.0
    %2078 = vmatprep.subr.mxu0 0.0
    %2079 = vmatpush1.xpose.msra.mxu0 0.0
    %2080 = vmatprep.subr.mxu0 0.0
    %2081 = vmatpush1.xpose.msra.mxu0 0.0
    %2082 = vmatprep.subr.mxu0 0.0
    %2083 = vmatpush1.xpose.msra.mxu0 0.0
    %2084 = vmatprep.subr.mxu0 0.0
    %2085 = vmatpush1.xpose.msra.mxu0 0.0
    %2086 = vmatprep.subr.mxu0 0.0
    %2087 = vmatpush1.xpose.msra.mxu0 0.0
    %2088 = vmatprep.subr.mxu0 0.0
    %2089 = vmatpush1.xpose.msra.mxu0 0.0
    %2090 = vmatprep.subr.mxu0 0.0
    %2091 = vmatpush1.xpose.msra.mxu0 0.0
    %2092 = vmatprep.subr.mxu0 0.0
    %2093 = vmatpush1.xpose.msra.mxu0 0.0
    %2094 = vmatprep.subr.mxu0 0.0
    %2095 = vmatpush1.xpose.msra.mxu0 0.0
    %2096 = vmatprep.subr.mxu0 0.0
    %2097 = vmatpush1.xpose.msra.mxu0 0.0
    %2098 = vmatprep.subr.mxu0 0.0
    %2099 = vmatpush1.xpose.msra.mxu0 0.0
    %2100 = vmatprep.subr.mxu0 0.0
    %2101 = vmatpush1.xpose.msra.mxu0 %v2068
    %2102 = vmatprep.subr.mxu0 0.0
    %2103 = vmatpush2.xpose.msra.mxu0 0.0
    %2104 = vmatprep.subr.mxu0 0.0
    %2105 = vmatpush2.xpose.msra.mxu0 0.0
    %2106 = vmatprep.subr.mxu0 0.0
    %2107 = vmatpush2.xpose.msra.mxu0 0.0
    %2108 = vmatprep.subr.mxu0 0.0
    %2109 = vmatpush2.xpose.msra.mxu0 0.0
    %2110 = vmatprep.subr.mxu0 0.0
    %2111 = vmatpush2.xpose.msra.mxu0 0.0
    %2112 = vmatprep.subr.mxu0 0.0
    %2113 = vmatpush2.xpose.msra.mxu0 0.0
    %2114 = vmatprep.subr.mxu0 0.0
    %2115 = vmatpush2.xpose.msra.mxu0 0.0
    %2116 = vmatprep.subr.mxu0 0.0
    %2117 = vmatpush2.xpose.msra.mxu0 0.0
    %2118 = vmatprep.subr.mxu0 0.0
    %2119 = vmatpush2.xpose.msra.mxu0 0.0
    %2120 = vmatprep.subr.mxu0 0.0
    %2121 = vmatpush2.xpose.msra.mxu0 0.0
    %2122 = vmatprep.subr.mxu0 0.0
    %2123 = vmatpush2.xpose.msra.mxu0 0.0
    %2124 = vmatprep.subr.mxu0 0.0
    %2125 = vmatpush2.xpose.msra.mxu0 0.0
    %2126 = vmatprep.subr.mxu0 0.0
    %2127 = vmatpush2.xpose.msra.mxu0 0.0
    %2128 = vmatprep.subr.mxu0 0.0
    %2129 = vmatpush2.xpose.msra.mxu0 0.0
    %2130 = vmatprep.subr.mxu0 0.0
    %2131 = vmatpush2.xpose.msra.mxu0 0.0
    %2132 = vmatprep.subr.mxu0 0.0
    %2133 = vmatpush2.xpose.msra.mxu0 0.0
    %2134 = vmatprep.mubr.f32.mxu0 0.0
    %2135 = vmatmul.mubr.f32.gmra.mxu0 %v2066
    %v2136 = vpop.f32.mrf.mxu0
    %v2137 = vadd.f32 %v489, %v2136
    %v2138 = vpop.f32.mrf.mxu0
    %2139 = vdwg.mxu0
    %2140 = vrot.lane.b32.xlu0 %v424, 120
    %v2141 = vpop.permute.xlu0 %2140
    %2142 = vrot.lane.b32.xlu0 %v424, 88
    %v2143 = vpop.permute.xlu0 %2142
    %v2144 = vsel %vm517, %v2141, 0
    %v2146 = vsel %vm517, %v2143, 0
    %2148 = vmatprep.subr.mxu0 0.0
    %2149 = vmatpush1.xpose.msra.mxu0 0.0
    %2150 = vmatprep.subr.mxu0 0.0
    %2151 = vmatpush1.xpose.msra.mxu0 0.0
    %2152 = vmatprep.subr.mxu0 0.0
    %2153 = vmatpush1.xpose.msra.mxu0 0.0
    %2154 = vmatprep.subr.mxu0 0.0
    %2155 = vmatpush1.xpose.msra.mxu0 0.0
    %2156 = vmatprep.subr.mxu0 0.0
    %2157 = vmatpush1.xpose.msra.mxu0 0.0
    %2158 = vmatprep.subr.mxu0 0.0
    %2159 = vmatpush1.xpose.msra.mxu0 0.0
    %2160 = vmatprep.subr.mxu0 0.0
    %2161 = vmatpush1.xpose.msra.mxu0 0.0
    %2162 = vmatprep.subr.mxu0 0.0
    %2163 = vmatpush1.xpose.msra.mxu0 0.0
    %2164 = vmatprep.subr.mxu0 0.0
    %2165 = vmatpush1.xpose.msra.mxu0 0.0
    %2166 = vmatprep.subr.mxu0 0.0
    %2167 = vmatpush1.xpose.msra.mxu0 0.0
    %2168 = vmatprep.subr.mxu0 0.0
    %2169 = vmatpush1.xpose.msra.mxu0 0.0
    %2170 = vmatprep.subr.mxu0 0.0
    %2171 = vmatpush1.xpose.msra.mxu0 0.0
    %2172 = vmatprep.subr.mxu0 0.0
    %2173 = vmatpush1.xpose.msra.mxu0 0.0
    %2174 = vmatprep.subr.mxu0 0.0
    %2175 = vmatpush1.xpose.msra.mxu0 0.0
    %2176 = vmatprep.subr.mxu0 0.0
    %2177 = vmatpush1.xpose.msra.mxu0 0.0
    %2178 = vmatprep.subr.mxu0 0.0
    %2179 = vmatpush1.xpose.msra.mxu0 %v2146
    %2180 = vmatprep.subr.mxu0 0.0
    %2181 = vmatpush2.xpose.msra.mxu0 0.0
    %2182 = vmatprep.subr.mxu0 0.0
    %2183 = vmatpush2.xpose.msra.mxu0 0.0
    %2184 = vmatprep.subr.mxu0 0.0
    %2185 = vmatpush2.xpose.msra.mxu0 0.0
    %2186 = vmatprep.subr.mxu0 0.0
    %2187 = vmatpush2.xpose.msra.mxu0 0.0
    %2188 = vmatprep.subr.mxu0 0.0
    %2189 = vmatpush2.xpose.msra.mxu0 0.0
    %2190 = vmatprep.subr.mxu0 0.0
    %2191 = vmatpush2.xpose.msra.mxu0 0.0
    %2192 = vmatprep.subr.mxu0 0.0
    %2193 = vmatpush2.xpose.msra.mxu0 0.0
    %2194 = vmatprep.subr.mxu0 0.0
    %2195 = vmatpush2.xpose.msra.mxu0 0.0
    %2196 = vmatprep.subr.mxu0 0.0
    %2197 = vmatpush2.xpose.msra.mxu0 0.0
    %2198 = vmatprep.subr.mxu0 0.0
    %2199 = vmatpush2.xpose.msra.mxu0 0.0
    %2200 = vmatprep.subr.mxu0 0.0
    %2201 = vmatpush2.xpose.msra.mxu0 0.0
    %2202 = vmatprep.subr.mxu0 0.0
    %2203 = vmatpush2.xpose.msra.mxu0 0.0
    %2204 = vmatprep.subr.mxu0 0.0
    %2205 = vmatpush2.xpose.msra.mxu0 0.0
    %2206 = vmatprep.subr.mxu0 0.0
    %2207 = vmatpush2.xpose.msra.mxu0 0.0
    %2208 = vmatprep.subr.mxu0 0.0
    %2209 = vmatpush2.xpose.msra.mxu0 0.0
    %2210 = vmatprep.subr.mxu0 0.0
    %2211 = vmatpush2.xpose.msra.mxu0 0.0
    %2212 = vmatprep.mubr.f32.mxu0 0.0
    %2213 = vmatmul.mubr.f32.gmra.mxu0 %v2144
    %v2214 = vpop.f32.mrf.mxu0
    %v2215 = vadd.f32 %v493, %v2214
    %v2216 = vpop.f32.mrf.mxu0
    %2217 = vdwg.mxu0
    %2218 = vrot.lane.b32.xlu0 %v429, 120
    %v2219 = vpop.permute.xlu0 %2218
    %2220 = vrot.lane.b32.xlu0 %v429, 88
    %v2221 = vpop.permute.xlu0 %2220
    %v2222 = vsel %vm517, %v2219, 0
    %v2224 = vsel %vm517, %v2221, 0
    %2226 = vmatprep.subr.mxu0 0.0
    %2227 = vmatpush1.xpose.msra.mxu0 0.0
    %2228 = vmatprep.subr.mxu0 0.0
    %2229 = vmatpush1.xpose.msra.mxu0 0.0
    %2230 = vmatprep.subr.mxu0 0.0
    %2231 = vmatpush1.xpose.msra.mxu0 0.0
    %2232 = vmatprep.subr.mxu0 0.0
    %2233 = vmatpush1.xpose.msra.mxu0 0.0
    %2234 = vmatprep.subr.mxu0 0.0
    %2235 = vmatpush1.xpose.msra.mxu0 0.0
    %2236 = vmatprep.subr.mxu0 0.0
    %2237 = vmatpush1.xpose.msra.mxu0 0.0
    %2238 = vmatprep.subr.mxu0 0.0
    %2239 = vmatpush1.xpose.msra.mxu0 0.0
    %2240 = vmatprep.subr.mxu0 0.0
    %2241 = vmatpush1.xpose.msra.mxu0 0.0
    %2242 = vmatprep.subr.mxu0 0.0
    %2243 = vmatpush1.xpose.msra.mxu0 0.0
    %2244 = vmatprep.subr.mxu0 0.0
    %2245 = vmatpush1.xpose.msra.mxu0 0.0
    %2246 = vmatprep.subr.mxu0 0.0
    %2247 = vmatpush1.xpose.msra.mxu0 0.0
    %2248 = vmatprep.subr.mxu0 0.0
    %2249 = vmatpush1.xpose.msra.mxu0 0.0
    %2250 = vmatprep.subr.mxu0 0.0
    %2251 = vmatpush1.xpose.msra.mxu0 0.0
    %2252 = vmatprep.subr.mxu0 0.0
    %2253 = vmatpush1.xpose.msra.mxu0 0.0
    %2254 = vmatprep.subr.mxu0 0.0
    %2255 = vmatpush1.xpose.msra.mxu0 0.0
    %2256 = vmatprep.subr.mxu0 0.0
    %2257 = vmatpush1.xpose.msra.mxu0 %v2224
    %2258 = vmatprep.subr.mxu0 0.0
    %2259 = vmatpush2.xpose.msra.mxu0 0.0
    %2260 = vmatprep.subr.mxu0 0.0
    %2261 = vmatpush2.xpose.msra.mxu0 0.0
    %2262 = vmatprep.subr.mxu0 0.0
    %2263 = vmatpush2.xpose.msra.mxu0 0.0
    %2264 = vmatprep.subr.mxu0 0.0
    %2265 = vmatpush2.xpose.msra.mxu0 0.0
    %2266 = vmatprep.subr.mxu0 0.0
    %2267 = vmatpush2.xpose.msra.mxu0 0.0
    %2268 = vmatprep.subr.mxu0 0.0
    %2269 = vmatpush2.xpose.msra.mxu0 0.0
    %2270 = vmatprep.subr.mxu0 0.0
    %2271 = vmatpush2.xpose.msra.mxu0 0.0
    %2272 = vmatprep.subr.mxu0 0.0
    %2273 = vmatpush2.xpose.msra.mxu0 0.0
    %2274 = vmatprep.subr.mxu0 0.0
    %2275 = vmatpush2.xpose.msra.mxu0 0.0
    %2276 = vmatprep.subr.mxu0 0.0
    %2277 = vmatpush2.xpose.msra.mxu0 0.0
    %2278 = vmatprep.subr.mxu0 0.0
    %2279 = vmatpush2.xpose.msra.mxu0 0.0
    %2280 = vmatprep.subr.mxu0 0.0
    %2281 = vmatpush2.xpose.msra.mxu0 0.0
    %2282 = vmatprep.subr.mxu0 0.0
    %2283 = vmatpush2.xpose.msra.mxu0 0.0
    %2284 = vmatprep.subr.mxu0 0.0
    %2285 = vmatpush2.xpose.msra.mxu0 0.0
    %2286 = vmatprep.subr.mxu0 0.0
    %2287 = vmatpush2.xpose.msra.mxu0 0.0
    %2288 = vmatprep.subr.mxu0 0.0
    %2289 = vmatpush2.xpose.msra.mxu0 0.0
    %2290 = vmatprep.mubr.f32.mxu0 0.0
    %2291 = vmatmul.mubr.f32.gmra.mxu0 %v2222
    %v2292 = vpop.f32.mrf.mxu0
    %v2293 = vadd.f32 %v497, %v2292
    %v2294 = vpop.f32.mrf.mxu0
    %2295 = vdwg.mxu0
    %2296 = vrot.lane.b32.xlu0 %v434, 120
    %v2297 = vpop.permute.xlu0 %2296
    %2298 = vrot.lane.b32.xlu0 %v434, 88
    %v2299 = vpop.permute.xlu0 %2298
    %v2300 = vsel %vm517, %v2297, 0
    %v2302 = vsel %vm517, %v2299, 0
    %2304 = vmatprep.subr.mxu0 0.0
    %2305 = vmatpush1.xpose.msra.mxu0 0.0
    %2306 = vmatprep.subr.mxu0 0.0
    %2307 = vmatpush1.xpose.msra.mxu0 0.0
    %2308 = vmatprep.subr.mxu0 0.0
    %2309 = vmatpush1.xpose.msra.mxu0 0.0
    %2310 = vmatprep.subr.mxu0 0.0
    %2311 = vmatpush1.xpose.msra.mxu0 0.0
    %2312 = vmatprep.subr.mxu0 0.0
    %2313 = vmatpush1.xpose.msra.mxu0 0.0
    %2314 = vmatprep.subr.mxu0 0.0
    %2315 = vmatpush1.xpose.msra.mxu0 0.0
    %2316 = vmatprep.subr.mxu0 0.0
    %2317 = vmatpush1.xpose.msra.mxu0 0.0
    %2318 = vmatprep.subr.mxu0 0.0
    %2319 = vmatpush1.xpose.msra.mxu0 0.0
    %2320 = vmatprep.subr.mxu0 0.0
    %2321 = vmatpush1.xpose.msra.mxu0 0.0
    %2322 = vmatprep.subr.mxu0 0.0
    %2323 = vmatpush1.xpose.msra.mxu0 0.0
    %2324 = vmatprep.subr.mxu0 0.0
    %2325 = vmatpush1.xpose.msra.mxu0 0.0
    %2326 = vmatprep.subr.mxu0 0.0
    %2327 = vmatpush1.xpose.msra.mxu0 0.0
    %2328 = vmatprep.subr.mxu0 0.0
    %2329 = vmatpush1.xpose.msra.mxu0 0.0
    %2330 = vmatprep.subr.mxu0 0.0
    %2331 = vmatpush1.xpose.msra.mxu0 0.0
    %2332 = vmatprep.subr.mxu0 0.0
    %2333 = vmatpush1.xpose.msra.mxu0 0.0
    %2334 = vmatprep.subr.mxu0 0.0
    %2335 = vmatpush1.xpose.msra.mxu0 %v2302
    %2336 = vmatprep.subr.mxu0 0.0
    %2337 = vmatpush2.xpose.msra.mxu0 0.0
    %2338 = vmatprep.subr.mxu0 0.0
    %2339 = vmatpush2.xpose.msra.mxu0 0.0
    %2340 = vmatprep.subr.mxu0 0.0
    %2341 = vmatpush2.xpose.msra.mxu0 0.0
    %2342 = vmatprep.subr.mxu0 0.0
    %2343 = vmatpush2.xpose.msra.mxu0 0.0
    %2344 = vmatprep.subr.mxu0 0.0
    %2345 = vmatpush2.xpose.msra.mxu0 0.0
    %2346 = vmatprep.subr.mxu0 0.0
    %2347 = vmatpush2.xpose.msra.mxu0 0.0
    %2348 = vmatprep.subr.mxu0 0.0
    %2349 = vmatpush2.xpose.msra.mxu0 0.0
    %2350 = vmatprep.subr.mxu0 0.0
    %2351 = vmatpush2.xpose.msra.mxu0 0.0
    %2352 = vmatprep.subr.mxu0 0.0
    %2353 = vmatpush2.xpose.msra.mxu0 0.0
    %2354 = vmatprep.subr.mxu0 0.0
    %2355 = vmatpush2.xpose.msra.mxu0 0.0
    %2356 = vmatprep.subr.mxu0 0.0
    %2357 = vmatpush2.xpose.msra.mxu0 0.0
    %2358 = vmatprep.subr.mxu0 0.0
    %2359 = vmatpush2.xpose.msra.mxu0 0.0
    %2360 = vmatprep.subr.mxu0 0.0
    %2361 = vmatpush2.xpose.msra.mxu0 0.0
    %2362 = vmatprep.subr.mxu0 0.0
    %2363 = vmatpush2.xpose.msra.mxu0 0.0
    %2364 = vmatprep.subr.mxu0 0.0
    %2365 = vmatpush2.xpose.msra.mxu0 0.0
    %2366 = vmatprep.subr.mxu0 0.0
    %2367 = vmatpush2.xpose.msra.mxu0 0.0
    %2368 = vmatprep.mubr.f32.mxu0 0.0
    %2369 = vmatmul.mubr.f32.gmra.mxu0 %v2300
    %v2370 = vpop.f32.mrf.mxu0
    %v2371 = vadd.f32 %v501, %v2370
    %v2372 = vpop.f32.mrf.mxu0
    %2373 = vdwg.mxu0
    %2374 = vrot.lane.b32.xlu0 %v439, 120
    %v2375 = vpop.permute.xlu0 %2374
    %2376 = vrot.lane.b32.xlu0 %v439, 88
    %v2377 = vpop.permute.xlu0 %2376
    %v2378 = vsel %vm517, %v2375, 0
    %v2380 = vsel %vm517, %v2377, 0
    %2382 = vmatprep.subr.mxu0 0.0
    %2383 = vmatpush1.xpose.msra.mxu0 0.0
    %2384 = vmatprep.subr.mxu0 0.0
    %2385 = vmatpush1.xpose.msra.mxu0 0.0
    %2386 = vmatprep.subr.mxu0 0.0
    %2387 = vmatpush1.xpose.msra.mxu0 0.0
    %2388 = vmatprep.subr.mxu0 0.0
    %2389 = vmatpush1.xpose.msra.mxu0 0.0
    %2390 = vmatprep.subr.mxu0 0.0
    %2391 = vmatpush1.xpose.msra.mxu0 0.0
    %2392 = vmatprep.subr.mxu0 0.0
    %2393 = vmatpush1.xpose.msra.mxu0 0.0
    %2394 = vmatprep.subr.mxu0 0.0
    %2395 = vmatpush1.xpose.msra.mxu0 0.0
    %2396 = vmatprep.subr.mxu0 0.0
    %2397 = vmatpush1.xpose.msra.mxu0 0.0
    %2398 = vmatprep.subr.mxu0 0.0
    %2399 = vmatpush1.xpose.msra.mxu0 0.0
    %2400 = vmatprep.subr.mxu0 0.0
    %2401 = vmatpush1.xpose.msra.mxu0 0.0
    %2402 = vmatprep.subr.mxu0 0.0
    %2403 = vmatpush1.xpose.msra.mxu0 0.0
    %2404 = vmatprep.subr.mxu0 0.0
    %2405 = vmatpush1.xpose.msra.mxu0 0.0
    %2406 = vmatprep.subr.mxu0 0.0
    %2407 = vmatpush1.xpose.msra.mxu0 0.0
    %2408 = vmatprep.subr.mxu0 0.0
    %2409 = vmatpush1.xpose.msra.mxu0 0.0
    %2410 = vmatprep.subr.mxu0 0.0
    %2411 = vmatpush1.xpose.msra.mxu0 0.0
    %2412 = vmatprep.subr.mxu0 0.0
    %2413 = vmatpush1.xpose.msra.mxu0 %v2380
    %2414 = vmatprep.subr.mxu0 0.0
    %2415 = vmatpush2.xpose.msra.mxu0 0.0
    %2416 = vmatprep.subr.mxu0 0.0
    %2417 = vmatpush2.xpose.msra.mxu0 0.0
    %2418 = vmatprep.subr.mxu0 0.0
    %2419 = vmatpush2.xpose.msra.mxu0 0.0
    %2420 = vmatprep.subr.mxu0 0.0
    %2421 = vmatpush2.xpose.msra.mxu0 0.0
    %2422 = vmatprep.subr.mxu0 0.0
    %2423 = vmatpush2.xpose.msra.mxu0 0.0
    %2424 = vmatprep.subr.mxu0 0.0
    %2425 = vmatpush2.xpose.msra.mxu0 0.0
    %2426 = vmatprep.subr.mxu0 0.0
    %2427 = vmatpush2.xpose.msra.mxu0 0.0
    %2428 = vmatprep.subr.mxu0 0.0
    %2429 = vmatpush2.xpose.msra.mxu0 0.0
    %2430 = vmatprep.subr.mxu0 0.0
    %2431 = vmatpush2.xpose.msra.mxu0 0.0
    %2432 = vmatprep.subr.mxu0 0.0
    %2433 = vmatpush2.xpose.msra.mxu0 0.0
    %2434 = vmatprep.subr.mxu0 0.0
    %2435 = vmatpush2.xpose.msra.mxu0 0.0
    %2436 = vmatprep.subr.mxu0 0.0
    %2437 = vmatpush2.xpose.msra.mxu0 0.0
    %2438 = vmatprep.subr.mxu0 0.0
    %2439 = vmatpush2.xpose.msra.mxu0 0.0
    %2440 = vmatprep.subr.mxu0 0.0
    %2441 = vmatpush2.xpose.msra.mxu0 0.0
    %2442 = vmatprep.subr.mxu0 0.0
    %2443 = vmatpush2.xpose.msra.mxu0 0.0
    %2444 = vmatprep.subr.mxu0 0.0
    %2445 = vmatpush2.xpose.msra.mxu0 0.0
    %2446 = vmatprep.mubr.f32.mxu0 0.0
    %2447 = vmatmul.mubr.f32.gmra.mxu0 %v2378
    %v2448 = vpop.f32.mrf.mxu0
    %v2449 = vadd.f32 %v505, %v2448
    %v2450 = vpop.f32.mrf.mxu0
    %2451 = vdwg.mxu0
    %v2452 = vsel %vm517, %v1903, -inf
    %2453 = vmax.xlane.f32.xlu0 %v2452
    %v2454 = vpop.xlane.xlu0 %2453
    %v2455 = vsel %vm517, %v1981, -inf
    %2456 = vmax.xlane.f32.xlu0 %v2455
    %v2457 = vpop.xlane.xlu0 %2456
    %v2458 = vsel %vm517, %v2059, -inf
    %2459 = vmax.xlane.f32.xlu0 %v2458
    %v2460 = vpop.xlane.xlu0 %2459
    %v2461 = vsel %vm517, %v2137, -inf
    %2462 = vmax.xlane.f32.xlu0 %v2461
    %v2463 = vpop.xlane.xlu0 %2462
    %v2464 = vsel %vm517, %v2215, -inf
    %2465 = vmax.xlane.f32.xlu0 %v2464
    %v2466 = vpop.xlane.xlu0 %2465
    %v2467 = vsel %vm517, %v2293, -inf
    %2468 = vmax.xlane.f32.xlu0 %v2467
    %v2469 = vpop.xlane.xlu0 %2468
    %v2470 = vsel %vm517, %v2371, -inf
    %2471 = vmax.xlane.f32.xlu0 %v2470
    %v2472 = vpop.xlane.xlu0 %2471
    %v2473 = vsel %vm517, %v2449, -inf
    %2474 = vmax.xlane.f32.xlu0 %v2473
    %v2475 = vpop.xlane.xlu0 %2474
    %v2476 = vsub.f32 %v1903, %v2454
    %v2477 = vsub.f32 %v1981, %v2457
    %v2478 = vsub.f32 %v2059, %v2460
    %v2479 = vsub.f32 %v2137, %v2463
    %v2480 = vsub.f32 %v2215, %v2466
    %v2481 = vsub.f32 %v2293, %v2469
    %v2482 = vsub.f32 %v2371, %v2472
    %v2483 = vsub.f32 %v2449, %v2475
    %v2484 = vmul.f32 %v2476, 1.442695
    %v2485 = vpow.pop %v2484
    %v2486 = vmul.f32 %v2477, 1.442695
    %v2487 = vpow.pop %v2486
    %v2488 = vmul.f32 %v2478, 1.442695
    %v2489 = vpow.pop %v2488
    %v2490 = vmul.f32 %v2479, 1.442695
    %v2491 = vpow.pop %v2490
    %v2492 = vmul.f32 %v2480, 1.442695
    %v2493 = vpow.pop %v2492
    %v2494 = vmul.f32 %v2481, 1.442695
    %v2495 = vpow.pop %v2494
    %v2496 = vmul.f32 %v2482, 1.442695
    %v2497 = vpow.pop %v2496
    %v2498 = vmul.f32 %v2483, 1.442695
    %v2499 = vpow.pop %v2498
    %v2500 = vsel %vm517, %v2485, 0.0
    %2501 = vadd.xlane.f32.xlu0 %v2500
    %v2502 = vpop.xlane.xlu0 %2501
    %v2503 = vsel %vm517, %v2487, 0.0
    %2504 = vadd.xlane.f32.xlu0 %v2503
    %v2505 = vpop.xlane.xlu0 %2504
    %v2506 = vsel %vm517, %v2489, 0.0
    %2507 = vadd.xlane.f32.xlu0 %v2506
    %v2508 = vpop.xlane.xlu0 %2507
    %v2509 = vsel %vm517, %v2491, 0.0
    %2510 = vadd.xlane.f32.xlu0 %v2509
    %v2511 = vpop.xlane.xlu0 %2510
    %v2512 = vsel %vm517, %v2493, 0.0
    %2513 = vadd.xlane.f32.xlu0 %v2512
    %v2514 = vpop.xlane.xlu0 %2513
    %v2515 = vsel %vm517, %v2495, 0.0
    %2516 = vadd.xlane.f32.xlu0 %v2515
    %v2517 = vpop.xlane.xlu0 %2516
    %v2518 = vsel %vm517, %v2497, 0.0
    %2519 = vadd.xlane.f32.xlu0 %v2518
    %v2520 = vpop.xlane.xlu0 %2519
    %v2521 = vsel %vm517, %v2499, 0.0
    %2522 = vadd.xlane.f32.xlu0 %v2521
    %v2523 = vpop.xlane.xlu0 %2522
    %v2524 = vrcp.pop %v2502
    %v2525 = vrcp.pop %v2505
    %v2526 = vrcp.pop %v2508
    %v2527 = vrcp.pop %v2511
    %v2528 = vrcp.pop %v2514
    %v2529 = vrcp.pop %v2517
    %v2530 = vrcp.pop %v2520
    %v2531 = vrcp.pop %v2523
    %v2532 = vmul.f32 %v2485, %v2524
    %v2533 = vmul.f32 %v2487, %v2525
    %v2534 = vmul.f32 %v2489, %v2526
    %v2535 = vmul.f32 %v2491, %v2527
    %v2536 = vmul.f32 %v2493, %v2528
    %v2537 = vmul.f32 %v2495, %v2529
    %v2538 = vmul.f32 %v2497, %v2530
    %v2539 = vmul.f32 %v2499, %v2531
    %2540 = vrot.lane.b32.xlu0 %v404, 56
    %v2541 = vpop.permute.xlu0 %2540
    %v2544 = vsel %vm517, %v2532, 0
    %2546 = vmatprep.subr.mxu0 0.0
    %2547 = vmatpush1.msra.mxu0 0.0
    %2548 = vmatprep.subr.mxu0 0.0
    %2549 = vmatpush1.msra.mxu0 0.0
    %2550 = vmatprep.subr.mxu0 0.0
    %2551 = vmatpush1.msra.mxu0 0.0
    %2552 = vmatprep.subr.mxu0 0.0
    %2553 = vmatpush1.msra.mxu0 0.0
    %2554 = vmatprep.subr.mxu0 0.0
    %2555 = vmatpush1.msra.mxu0 0.0
    %2556 = vmatprep.subr.mxu0 0.0
    %2557 = vmatpush1.msra.mxu0 0.0
    %2558 = vmatprep.subr.mxu0 0.0
    %2559 = vmatpush1.msra.mxu0 0.0
    %2560 = vmatprep.subr.mxu0 0.0
    %2561 = vmatpush1.msra.mxu0 0.0
    %2562 = vmatprep.subr.mxu0 0.0
    %2563 = vmatpush1.msra.mxu0 0.0
    %2564 = vmatprep.subr.mxu0 0.0
    %2565 = vmatpush1.msra.mxu0 0.0
    %2566 = vmatprep.subr.mxu0 0.0
    %2567 = vmatpush1.msra.mxu0 0.0
    %2568 = vmatprep.subr.mxu0 0.0
    %2569 = vmatpush1.msra.mxu0 0.0
    %2570 = vmatprep.subr.mxu0 0.0
    %2571 = vmatpush1.msra.mxu0 0.0
    %2572 = vmatprep.subr.mxu0 0.0
    %2573 = vmatpush1.msra.mxu0 0.0
    %2574 = vmatprep.subr.mxu0 0.0
    %2575 = vmatpush1.msra.mxu0 0.0
    %2576 = vmatprep.subr.mxu0 0.0
    %2577 = vmatpush1.msra.mxu0 %v2541
    %2578 = vmatprep.subr.mxu0 0.0
    %2579 = vmatpush2.msra.mxu0 0.0
    %2580 = vmatprep.subr.mxu0 0.0
    %2581 = vmatpush2.msra.mxu0 0.0
    %2582 = vmatprep.subr.mxu0 0.0
    %2583 = vmatpush2.msra.mxu0 0.0
    %2584 = vmatprep.subr.mxu0 0.0
    %2585 = vmatpush2.msra.mxu0 0.0
    %2586 = vmatprep.subr.mxu0 0.0
    %2587 = vmatpush2.msra.mxu0 0.0
    %2588 = vmatprep.subr.mxu0 0.0
    %2589 = vmatpush2.msra.mxu0 0.0
    %2590 = vmatprep.subr.mxu0 0.0
    %2591 = vmatpush2.msra.mxu0 0.0
    %2592 = vmatprep.subr.mxu0 0.0
    %2593 = vmatpush2.msra.mxu0 0.0
    %2594 = vmatprep.subr.mxu0 0.0
    %2595 = vmatpush2.msra.mxu0 0.0
    %2596 = vmatprep.subr.mxu0 0.0
    %2597 = vmatpush2.msra.mxu0 0.0
    %2598 = vmatprep.subr.mxu0 0.0
    %2599 = vmatpush2.msra.mxu0 0.0
    %2600 = vmatprep.subr.mxu0 0.0
    %2601 = vmatpush2.msra.mxu0 0.0
    %2602 = vmatprep.subr.mxu0 0.0
    %2603 = vmatpush2.msra.mxu0 0.0
    %2604 = vmatprep.subr.mxu0 0.0
    %2605 = vmatpush2.msra.mxu0 0.0
    %2606 = vmatprep.subr.mxu0 0.0
    %2607 = vmatpush2.msra.mxu0 0.0
    %2608 = vmatprep.subr.mxu0 0.0
    %2609 = vmatpush2.msra.mxu0 0.0
    %2610 = vmatprep.mubr.f32.mxu0 0.0
    %2611 = vmatmul.mubr.f32.gmra.mxu0 %v2544
    %v2612 = vpop.f32.mrf.mxu0
    %v2613 = vadd.f32 0.0, %v2612
    %v2614 = vpop.f32.mrf.mxu0
    %2615 = vdwg.mxu0
    %2616 = vrot.lane.b32.xlu0 %v409, 56
    %v2617 = vpop.permute.xlu0 %2616
    %v2620 = vsel %vm517, %v2533, 0
    %2622 = vmatprep.subr.mxu0 0.0
    %2623 = vmatpush1.msra.mxu0 0.0
    %2624 = vmatprep.subr.mxu0 0.0
    %2625 = vmatpush1.msra.mxu0 0.0
    %2626 = vmatprep.subr.mxu0 0.0
    %2627 = vmatpush1.msra.mxu0 0.0
    %2628 = vmatprep.subr.mxu0 0.0
    %2629 = vmatpush1.msra.mxu0 0.0
    %2630 = vmatprep.subr.mxu0 0.0
    %2631 = vmatpush1.msra.mxu0 0.0
    %2632 = vmatprep.subr.mxu0 0.0
    %2633 = vmatpush1.msra.mxu0 0.0
    %2634 = vmatprep.subr.mxu0 0.0
    %2635 = vmatpush1.msra.mxu0 0.0
    %2636 = vmatprep.subr.mxu0 0.0
    %2637 = vmatpush1.msra.mxu0 0.0
    %2638 = vmatprep.subr.mxu0 0.0
    %2639 = vmatpush1.msra.mxu0 0.0
    %2640 = vmatprep.subr.mxu0 0.0
    %2641 = vmatpush1.msra.mxu0 0.0
    %2642 = vmatprep.subr.mxu0 0.0
    %2643 = vmatpush1.msra.mxu0 0.0
    %2644 = vmatprep.subr.mxu0 0.0
    %2645 = vmatpush1.msra.mxu0 0.0
    %2646 = vmatprep.subr.mxu0 0.0
    %2647 = vmatpush1.msra.mxu0 0.0
    %2648 = vmatprep.subr.mxu0 0.0
    %2649 = vmatpush1.msra.mxu0 0.0
    %2650 = vmatprep.subr.mxu0 0.0
    %2651 = vmatpush1.msra.mxu0 0.0
    %2652 = vmatprep.subr.mxu0 0.0
    %2653 = vmatpush1.msra.mxu0 %v2617
    %2654 = vmatprep.subr.mxu0 0.0
    %2655 = vmatpush2.msra.mxu0 0.0
    %2656 = vmatprep.subr.mxu0 0.0
    %2657 = vmatpush2.msra.mxu0 0.0
    %2658 = vmatprep.subr.mxu0 0.0
    %2659 = vmatpush2.msra.mxu0 0.0
    %2660 = vmatprep.subr.mxu0 0.0
    %2661 = vmatpush2.msra.mxu0 0.0
    %2662 = vmatprep.subr.mxu0 0.0
    %2663 = vmatpush2.msra.mxu0 0.0
    %2664 = vmatprep.subr.mxu0 0.0
    %2665 = vmatpush2.msra.mxu0 0.0
    %2666 = vmatprep.subr.mxu0 0.0
    %2667 = vmatpush2.msra.mxu0 0.0
    %2668 = vmatprep.subr.mxu0 0.0
    %2669 = vmatpush2.msra.mxu0 0.0
    %2670 = vmatprep.subr.mxu0 0.0
    %2671 = vmatpush2.msra.mxu0 0.0
    %2672 = vmatprep.subr.mxu0 0.0
    %2673 = vmatpush2.msra.mxu0 0.0
    %2674 = vmatprep.subr.mxu0 0.0
    %2675 = vmatpush2.msra.mxu0 0.0
    %2676 = vmatprep.subr.mxu0 0.0
    %2677 = vmatpush2.msra.mxu0 0.0
    %2678 = vmatprep.subr.mxu0 0.0
    %2679 = vmatpush2.msra.mxu0 0.0
    %2680 = vmatprep.subr.mxu0 0.0
    %2681 = vmatpush2.msra.mxu0 0.0
    %2682 = vmatprep.subr.mxu0 0.0
    %2683 = vmatpush2.msra.mxu0 0.0
    %2684 = vmatprep.subr.mxu0 0.0
    %2685 = vmatpush2.msra.mxu0 0.0
    %2686 = vmatprep.mubr.f32.mxu0 0.0
    %2687 = vmatmul.mubr.f32.gmra.mxu0 %v2620
    %v2688 = vpop.f32.mrf.mxu0
    %v2689 = vadd.f32 0.0, %v2688
    %v2690 = vpop.f32.mrf.mxu0
    %2691 = vdwg.mxu0
    %2692 = vrot.lane.b32.xlu0 %v414, 56
    %v2693 = vpop.permute.xlu0 %2692
    %v2696 = vsel %vm517, %v2534, 0
    %2698 = vmatprep.subr.mxu0 0.0
    %2699 = vmatpush1.msra.mxu0 0.0
    %2700 = vmatprep.subr.mxu0 0.0
    %2701 = vmatpush1.msra.mxu0 0.0
    %2702 = vmatprep.subr.mxu0 0.0
    %2703 = vmatpush1.msra.mxu0 0.0
    %2704 = vmatprep.subr.mxu0 0.0
    %2705 = vmatpush1.msra.mxu0 0.0
    %2706 = vmatprep.subr.mxu0 0.0
    %2707 = vmatpush1.msra.mxu0 0.0
    %2708 = vmatprep.subr.mxu0 0.0
    %2709 = vmatpush1.msra.mxu0 0.0
    %2710 = vmatprep.subr.mxu0 0.0
    %2711 = vmatpush1.msra.mxu0 0.0
    %2712 = vmatprep.subr.mxu0 0.0
    %2713 = vmatpush1.msra.mxu0 0.0
    %2714 = vmatprep.subr.mxu0 0.0
    %2715 = vmatpush1.msra.mxu0 0.0
    %2716 = vmatprep.subr.mxu0 0.0
    %2717 = vmatpush1.msra.mxu0 0.0
    %2718 = vmatprep.subr.mxu0 0.0
    %2719 = vmatpush1.msra.mxu0 0.0
    %2720 = vmatprep.subr.mxu0 0.0
    %2721 = vmatpush1.msra.mxu0 0.0
    %2722 = vmatprep.subr.mxu0 0.0
    %2723 = vmatpush1.msra.mxu0 0.0
    %2724 = vmatprep.subr.mxu0 0.0
    %2725 = vmatpush1.msra.mxu0 0.0
    %2726 = vmatprep.subr.mxu0 0.0
    %2727 = vmatpush1.msra.mxu0 0.0
    %2728 = vmatprep.subr.mxu0 0.0
    %2729 = vmatpush1.msra.mxu0 %v2693
    %2730 = vmatprep.subr.mxu0 0.0
    %2731 = vmatpush2.msra.mxu0 0.0
    %2732 = vmatprep.subr.mxu0 0.0
    %2733 = vmatpush2.msra.mxu0 0.0
    %2734 = vmatprep.subr.mxu0 0.0
    %2735 = vmatpush2.msra.mxu0 0.0
    %2736 = vmatprep.subr.mxu0 0.0
    %2737 = vmatpush2.msra.mxu0 0.0
    %2738 = vmatprep.subr.mxu0 0.0
    %2739 = vmatpush2.msra.mxu0 0.0
    %2740 = vmatprep.subr.mxu0 0.0
    %2741 = vmatpush2.msra.mxu0 0.0
    %2742 = vmatprep.subr.mxu0 0.0
    %2743 = vmatpush2.msra.mxu0 0.0
    %2744 = vmatprep.subr.mxu0 0.0
    %2745 = vmatpush2.msra.mxu0 0.0
    %2746 = vmatprep.subr.mxu0 0.0
    %2747 = vmatpush2.msra.mxu0 0.0
    %2748 = vmatprep.subr.mxu0 0.0
    %2749 = vmatpush2.msra.mxu0 0.0
    %2750 = vmatprep.subr.mxu0 0.0
    %2751 = vmatpush2.msra.mxu0 0.0
    %2752 = vmatprep.subr.mxu0 0.0
    %2753 = vmatpush2.msra.mxu0 0.0
    %2754 = vmatprep.subr.mxu0 0.0
    %2755 = vmatpush2.msra.mxu0 0.0
    %2756 = vmatprep.subr.mxu0 0.0
    %2757 = vmatpush2.msra.mxu0 0.0
    %2758 = vmatprep.subr.mxu0 0.0
    %2759 = vmatpush2.msra.mxu0 0.0
    %2760 = vmatprep.subr.mxu0 0.0
    %2761 = vmatpush2.msra.mxu0 0.0
    %2762 = vmatprep.mubr.f32.mxu0 0.0
    %2763 = vmatmul.mubr.f32.gmra.mxu0 %v2696
    %v2764 = vpop.f32.mrf.mxu0
    %v2765 = vadd.f32 0.0, %v2764
    %v2766 = vpop.f32.mrf.mxu0
    %2767 = vdwg.mxu0
    %2768 = vrot.lane.b32.xlu0 %v419, 56
    %v2769 = vpop.permute.xlu0 %2768
    %v2772 = vsel %vm517, %v2535, 0
    %2774 = vmatprep.subr.mxu0 0.0
    %2775 = vmatpush1.msra.mxu0 0.0
    %2776 = vmatprep.subr.mxu0 0.0
    %2777 = vmatpush1.msra.mxu0 0.0
    %2778 = vmatprep.subr.mxu0 0.0
    %2779 = vmatpush1.msra.mxu0 0.0
    %2780 = vmatprep.subr.mxu0 0.0
    %2781 = vmatpush1.msra.mxu0 0.0
    %2782 = vmatprep.subr.mxu0 0.0
    %2783 = vmatpush1.msra.mxu0 0.0
    %2784 = vmatprep.subr.mxu0 0.0
    %2785 = vmatpush1.msra.mxu0 0.0
    %2786 = vmatprep.subr.mxu0 0.0
    %2787 = vmatpush1.msra.mxu0 0.0
    %2788 = vmatprep.subr.mxu0 0.0
    %2789 = vmatpush1.msra.mxu0 0.0
    %2790 = vmatprep.subr.mxu0 0.0
    %2791 = vmatpush1.msra.mxu0 0.0
    %2792 = vmatprep.subr.mxu0 0.0
    %2793 = vmatpush1.msra.mxu0 0.0
    %2794 = vmatprep.subr.mxu0 0.0
    %2795 = vmatpush1.msra.mxu0 0.0
    %2796 = vmatprep.subr.mxu0 0.0
    %2797 = vmatpush1.msra.mxu0 0.0
    %2798 = vmatprep.subr.mxu0 0.0
    %2799 = vmatpush1.msra.mxu0 0.0
    %2800 = vmatprep.subr.mxu0 0.0
    %2801 = vmatpush1.msra.mxu0 0.0
    %2802 = vmatprep.subr.mxu0 0.0
    %2803 = vmatpush1.msra.mxu0 0.0
    %2804 = vmatprep.subr.mxu0 0.0
    %2805 = vmatpush1.msra.mxu0 %v2769
    %2806 = vmatprep.subr.mxu0 0.0
    %2807 = vmatpush2.msra.mxu0 0.0
    %2808 = vmatprep.subr.mxu0 0.0
    %2809 = vmatpush2.msra.mxu0 0.0
    %2810 = vmatprep.subr.mxu0 0.0
    %2811 = vmatpush2.msra.mxu0 0.0
    %2812 = vmatprep.subr.mxu0 0.0
    %2813 = vmatpush2.msra.mxu0 0.0
    %2814 = vmatprep.subr.mxu0 0.0
    %2815 = vmatpush2.msra.mxu0 0.0
    %2816 = vmatprep.subr.mxu0 0.0
    %2817 = vmatpush2.msra.mxu0 0.0
    %2818 = vmatprep.subr.mxu0 0.0
    %2819 = vmatpush2.msra.mxu0 0.0
    %2820 = vmatprep.subr.mxu0 0.0
    %2821 = vmatpush2.msra.mxu0 0.0
    %2822 = vmatprep.subr.mxu0 0.0
    %2823 = vmatpush2.msra.mxu0 0.0
    %2824 = vmatprep.subr.mxu0 0.0
    %2825 = vmatpush2.msra.mxu0 0.0
    %2826 = vmatprep.subr.mxu0 0.0
    %2827 = vmatpush2.msra.mxu0 0.0
    %2828 = vmatprep.subr.mxu0 0.0
    %2829 = vmatpush2.msra.mxu0 0.0
    %2830 = vmatprep.subr.mxu0 0.0
    %2831 = vmatpush2.msra.mxu0 0.0
    %2832 = vmatprep.subr.mxu0 0.0
    %2833 = vmatpush2.msra.mxu0 0.0
    %2834 = vmatprep.subr.mxu0 0.0
    %2835 = vmatpush2.msra.mxu0 0.0
    %2836 = vmatprep.subr.mxu0 0.0
    %2837 = vmatpush2.msra.mxu0 0.0
    %2838 = vmatprep.mubr.f32.mxu0 0.0
    %2839 = vmatmul.mubr.f32.gmra.mxu0 %v2772
    %v2840 = vpop.f32.mrf.mxu0
    %v2841 = vadd.f32 0.0, %v2840
    %v2842 = vpop.f32.mrf.mxu0
    %2843 = vdwg.mxu0
    %2844 = vrot.lane.b32.xlu0 %v424, 56
    %v2845 = vpop.permute.xlu0 %2844
    %v2848 = vsel %vm517, %v2536, 0
    %2850 = vmatprep.subr.mxu0 0.0
    %2851 = vmatpush1.msra.mxu0 0.0
    %2852 = vmatprep.subr.mxu0 0.0
    %2853 = vmatpush1.msra.mxu0 0.0
    %2854 = vmatprep.subr.mxu0 0.0
    %2855 = vmatpush1.msra.mxu0 0.0
    %2856 = vmatprep.subr.mxu0 0.0
    %2857 = vmatpush1.msra.mxu0 0.0
    %2858 = vmatprep.subr.mxu0 0.0
    %2859 = vmatpush1.msra.mxu0 0.0
    %2860 = vmatprep.subr.mxu0 0.0
    %2861 = vmatpush1.msra.mxu0 0.0
    %2862 = vmatprep.subr.mxu0 0.0
    %2863 = vmatpush1.msra.mxu0 0.0
    %2864 = vmatprep.subr.mxu0 0.0
    %2865 = vmatpush1.msra.mxu0 0.0
    %2866 = vmatprep.subr.mxu0 0.0
    %2867 = vmatpush1.msra.mxu0 0.0
    %2868 = vmatprep.subr.mxu0 0.0
    %2869 = vmatpush1.msra.mxu0 0.0
    %2870 = vmatprep.subr.mxu0 0.0
    %2871 = vmatpush1.msra.mxu0 0.0
    %2872 = vmatprep.subr.mxu0 0.0
    %2873 = vmatpush1.msra.mxu0 0.0
    %2874 = vmatprep.subr.mxu0 0.0
    %2875 = vmatpush1.msra.mxu0 0.0
    %2876 = vmatprep.subr.mxu0 0.0
    %2877 = vmatpush1.msra.mxu0 0.0
    %2878 = vmatprep.subr.mxu0 0.0
    %2879 = vmatpush1.msra.mxu0 0.0
    %2880 = vmatprep.subr.mxu0 0.0
    %2881 = vmatpush1.msra.mxu0 %v2845
    %2882 = vmatprep.subr.mxu0 0.0
    %2883 = vmatpush2.msra.mxu0 0.0
    %2884 = vmatprep.subr.mxu0 0.0
    %2885 = vmatpush2.msra.mxu0 0.0
    %2886 = vmatprep.subr.mxu0 0.0
    %2887 = vmatpush2.msra.mxu0 0.0
    %2888 = vmatprep.subr.mxu0 0.0
    %2889 = vmatpush2.msra.mxu0 0.0
    %2890 = vmatprep.subr.mxu0 0.0
    %2891 = vmatpush2.msra.mxu0 0.0
    %2892 = vmatprep.subr.mxu0 0.0
    %2893 = vmatpush2.msra.mxu0 0.0
    %2894 = vmatprep.subr.mxu0 0.0
    %2895 = vmatpush2.msra.mxu0 0.0
    %2896 = vmatprep.subr.mxu0 0.0
    %2897 = vmatpush2.msra.mxu0 0.0
    %2898 = vmatprep.subr.mxu0 0.0
    %2899 = vmatpush2.msra.mxu0 0.0
    %2900 = vmatprep.subr.mxu0 0.0
    %2901 = vmatpush2.msra.mxu0 0.0
    %2902 = vmatprep.subr.mxu0 0.0
    %2903 = vmatpush2.msra.mxu0 0.0
    %2904 = vmatprep.subr.mxu0 0.0
    %2905 = vmatpush2.msra.mxu0 0.0
    %2906 = vmatprep.subr.mxu0 0.0
    %2907 = vmatpush2.msra.mxu0 0.0
    %2908 = vmatprep.subr.mxu0 0.0
    %2909 = vmatpush2.msra.mxu0 0.0
    %2910 = vmatprep.subr.mxu0 0.0
    %2911 = vmatpush2.msra.mxu0 0.0
    %2912 = vmatprep.subr.mxu0 0.0
    %2913 = vmatpush2.msra.mxu0 0.0
    %2914 = vmatprep.mubr.f32.mxu0 0.0
    %2915 = vmatmul.mubr.f32.gmra.mxu0 %v2848
    %v2916 = vpop.f32.mrf.mxu0
    %v2917 = vadd.f32 0.0, %v2916
    %v2918 = vpop.f32.mrf.mxu0
    %2919 = vdwg.mxu0
    %2920 = vrot.lane.b32.xlu0 %v429, 56
    %v2921 = vpop.permute.xlu0 %2920
    %v2924 = vsel %vm517, %v2537, 0
    %2926 = vmatprep.subr.mxu0 0.0
    %2927 = vmatpush1.msra.mxu0 0.0
    %2928 = vmatprep.subr.mxu0 0.0
    %2929 = vmatpush1.msra.mxu0 0.0
    %2930 = vmatprep.subr.mxu0 0.0
    %2931 = vmatpush1.msra.mxu0 0.0
    %2932 = vmatprep.subr.mxu0 0.0
    %2933 = vmatpush1.msra.mxu0 0.0
    %2934 = vmatprep.subr.mxu0 0.0
    %2935 = vmatpush1.msra.mxu0 0.0
    %2936 = vmatprep.subr.mxu0 0.0
    %2937 = vmatpush1.msra.mxu0 0.0
    %2938 = vmatprep.subr.mxu0 0.0
    %2939 = vmatpush1.msra.mxu0 0.0
    %2940 = vmatprep.subr.mxu0 0.0
    %2941 = vmatpush1.msra.mxu0 0.0
    %2942 = vmatprep.subr.mxu0 0.0
    %2943 = vmatpush1.msra.mxu0 0.0
    %2944 = vmatprep.subr.mxu0 0.0
    %2945 = vmatpush1.msra.mxu0 0.0
    %2946 = vmatprep.subr.mxu0 0.0
    %2947 = vmatpush1.msra.mxu0 0.0
    %2948 = vmatprep.subr.mxu0 0.0
    %2949 = vmatpush1.msra.mxu0 0.0
    %2950 = vmatprep.subr.mxu0 0.0
    %2951 = vmatpush1.msra.mxu0 0.0
    %2952 = vmatprep.subr.mxu0 0.0
    %2953 = vmatpush1.msra.mxu0 0.0
    %2954 = vmatprep.subr.mxu0 0.0
    %2955 = vmatpush1.msra.mxu0 0.0
    %2956 = vmatprep.subr.mxu0 0.0
    %2957 = vmatpush1.msra.mxu0 %v2921
    %2958 = vmatprep.subr.mxu0 0.0
    %2959 = vmatpush2.msra.mxu0 0.0
    %2960 = vmatprep.subr.mxu0 0.0
    %2961 = vmatpush2.msra.mxu0 0.0
    %2962 = vmatprep.subr.mxu0 0.0
    %2963 = vmatpush2.msra.mxu0 0.0
    %2964 = vmatprep.subr.mxu0 0.0
    %2965 = vmatpush2.msra.mxu0 0.0
    %2966 = vmatprep.subr.mxu0 0.0
    %2967 = vmatpush2.msra.mxu0 0.0
    %2968 = vmatprep.subr.mxu0 0.0
    %2969 = vmatpush2.msra.mxu0 0.0
    %2970 = vmatprep.subr.mxu0 0.0
    %2971 = vmatpush2.msra.mxu0 0.0
    %2972 = vmatprep.subr.mxu0 0.0
    %2973 = vmatpush2.msra.mxu0 0.0
    %2974 = vmatprep.subr.mxu0 0.0
    %2975 = vmatpush2.msra.mxu0 0.0
    %2976 = vmatprep.subr.mxu0 0.0
    %2977 = vmatpush2.msra.mxu0 0.0
    %2978 = vmatprep.subr.mxu0 0.0
    %2979 = vmatpush2.msra.mxu0 0.0
    %2980 = vmatprep.subr.mxu0 0.0
    %2981 = vmatpush2.msra.mxu0 0.0
    %2982 = vmatprep.subr.mxu0 0.0
    %2983 = vmatpush2.msra.mxu0 0.0
    %2984 = vmatprep.subr.mxu0 0.0
    %2985 = vmatpush2.msra.mxu0 0.0
    %2986 = vmatprep.subr.mxu0 0.0
    %2987 = vmatpush2.msra.mxu0 0.0
    %2988 = vmatprep.subr.mxu0 0.0
    %2989 = vmatpush2.msra.mxu0 0.0
    %2990 = vmatprep.mubr.f32.mxu0 0.0
    %2991 = vmatmul.mubr.f32.gmra.mxu0 %v2924
    %v2992 = vpop.f32.mrf.mxu0
    %v2993 = vadd.f32 0.0, %v2992
    %v2994 = vpop.f32.mrf.mxu0
    %2995 = vdwg.mxu0
    %2996 = vrot.lane.b32.xlu0 %v434, 56
    %v2997 = vpop.permute.xlu0 %2996
    %v3000 = vsel %vm517, %v2538, 0
    %3002 = vmatprep.subr.mxu0 0.0
    %3003 = vmatpush1.msra.mxu0 0.0
    %3004 = vmatprep.subr.mxu0 0.0
    %3005 = vmatpush1.msra.mxu0 0.0
    %3006 = vmatprep.subr.mxu0 0.0
    %3007 = vmatpush1.msra.mxu0 0.0
    %3008 = vmatprep.subr.mxu0 0.0
    %3009 = vmatpush1.msra.mxu0 0.0
    %3010 = vmatprep.subr.mxu0 0.0
    %3011 = vmatpush1.msra.mxu0 0.0
    %3012 = vmatprep.subr.mxu0 0.0
    %3013 = vmatpush1.msra.mxu0 0.0
    %3014 = vmatprep.subr.mxu0 0.0
    %3015 = vmatpush1.msra.mxu0 0.0
    %3016 = vmatprep.subr.mxu0 0.0
    %3017 = vmatpush1.msra.mxu0 0.0
    %3018 = vmatprep.subr.mxu0 0.0
    %3019 = vmatpush1.msra.mxu0 0.0
    %3020 = vmatprep.subr.mxu0 0.0
    %3021 = vmatpush1.msra.mxu0 0.0
    %3022 = vmatprep.subr.mxu0 0.0
    %3023 = vmatpush1.msra.mxu0 0.0
    %3024 = vmatprep.subr.mxu0 0.0
    %3025 = vmatpush1.msra.mxu0 0.0
    %3026 = vmatprep.subr.mxu0 0.0
    %3027 = vmatpush1.msra.mxu0 0.0
    %3028 = vmatprep.subr.mxu0 0.0
    %3029 = vmatpush1.msra.mxu0 0.0
    %3030 = vmatprep.subr.mxu0 0.0
    %3031 = vmatpush1.msra.mxu0 0.0
    %3032 = vmatprep.subr.mxu0 0.0
    %3033 = vmatpush1.msra.mxu0 %v2997
    %3034 = vmatprep.subr.mxu0 0.0
    %3035 = vmatpush2.msra.mxu0 0.0
    %3036 = vmatprep.subr.mxu0 0.0
    %3037 = vmatpush2.msra.mxu0 0.0
    %3038 = vmatprep.subr.mxu0 0.0
    %3039 = vmatpush2.msra.mxu0 0.0
    %3040 = vmatprep.subr.mxu0 0.0
    %3041 = vmatpush2.msra.mxu0 0.0
    %3042 = vmatprep.subr.mxu0 0.0
    %3043 = vmatpush2.msra.mxu0 0.0
    %3044 = vmatprep.subr.mxu0 0.0
    %3045 = vmatpush2.msra.mxu0 0.0
    %3046 = vmatprep.subr.mxu0 0.0
    %3047 = vmatpush2.msra.mxu0 0.0
    %3048 = vmatprep.subr.mxu0 0.0
    %3049 = vmatpush2.msra.mxu0 0.0
    %3050 = vmatprep.subr.mxu0 0.0
    %3051 = vmatpush2.msra.mxu0 0.0
    %3052 = vmatprep.subr.mxu0 0.0
    %3053 = vmatpush2.msra.mxu0 0.0
    %3054 = vmatprep.subr.mxu0 0.0
    %3055 = vmatpush2.msra.mxu0 0.0
    %3056 = vmatprep.subr.mxu0 0.0
    %3057 = vmatpush2.msra.mxu0 0.0
    %3058 = vmatprep.subr.mxu0 0.0
    %3059 = vmatpush2.msra.mxu0 0.0
    %3060 = vmatprep.subr.mxu0 0.0
    %3061 = vmatpush2.msra.mxu0 0.0
    %3062 = vmatprep.subr.mxu0 0.0
    %3063 = vmatpush2.msra.mxu0 0.0
    %3064 = vmatprep.subr.mxu0 0.0
    %3065 = vmatpush2.msra.mxu0 0.0
    %3066 = vmatprep.mubr.f32.mxu0 0.0
    %3067 = vmatmul.mubr.f32.gmra.mxu0 %v3000
    %v3068 = vpop.f32.mrf.mxu0
    %v3069 = vadd.f32 0.0, %v3068
    %v3070 = vpop.f32.mrf.mxu0
    %3071 = vdwg.mxu0
    %3072 = vrot.lane.b32.xlu0 %v439, 56
    %v3073 = vpop.permute.xlu0 %3072
    %v3076 = vsel %vm517, %v2539, 0
    %3078 = vmatprep.subr.mxu0 0.0
    %3079 = vmatpush1.msra.mxu0 0.0
    %3080 = vmatprep.subr.mxu0 0.0
    %3081 = vmatpush1.msra.mxu0 0.0
    %3082 = vmatprep.subr.mxu0 0.0
    %3083 = vmatpush1.msra.mxu0 0.0
    %3084 = vmatprep.subr.mxu0 0.0
    %3085 = vmatpush1.msra.mxu0 0.0
    %3086 = vmatprep.subr.mxu0 0.0
    %3087 = vmatpush1.msra.mxu0 0.0
    %3088 = vmatprep.subr.mxu0 0.0
    %3089 = vmatpush1.msra.mxu0 0.0
    %3090 = vmatprep.subr.mxu0 0.0
    %3091 = vmatpush1.msra.mxu0 0.0
    %3092 = vmatprep.subr.mxu0 0.0
    %3093 = vmatpush1.msra.mxu0 0.0
    %3094 = vmatprep.subr.mxu0 0.0
    %3095 = vmatpush1.msra.mxu0 0.0
    %3096 = vmatprep.subr.mxu0 0.0
    %3097 = vmatpush1.msra.mxu0 0.0
    %3098 = vmatprep.subr.mxu0 0.0
    %3099 = vmatpush1.msra.mxu0 0.0
    %3100 = vmatprep.subr.mxu0 0.0
    %3101 = vmatpush1.msra.mxu0 0.0
    %3102 = vmatprep.subr.mxu0 0.0
    %3103 = vmatpush1.msra.mxu0 0.0
    %3104 = vmatprep.subr.mxu0 0.0
    %3105 = vmatpush1.msra.mxu0 0.0
    %3106 = vmatprep.subr.mxu0 0.0
    %3107 = vmatpush1.msra.mxu0 0.0
    %3108 = vmatprep.subr.mxu0 0.0
    %3109 = vmatpush1.msra.mxu0 %v3073
    %3110 = vmatprep.subr.mxu0 0.0
    %3111 = vmatpush2.msra.mxu0 0.0
    %3112 = vmatprep.subr.mxu0 0.0
    %3113 = vmatpush2.msra.mxu0 0.0
    %3114 = vmatprep.subr.mxu0 0.0
    %3115 = vmatpush2.msra.mxu0 0.0
    %3116 = vmatprep.subr.mxu0 0.0
    %3117 = vmatpush2.msra.mxu0 0.0
    %3118 = vmatprep.subr.mxu0 0.0
    %3119 = vmatpush2.msra.mxu0 0.0
    %3120 = vmatprep.subr.mxu0 0.0
    %3121 = vmatpush2.msra.mxu0 0.0
    %3122 = vmatprep.subr.mxu0 0.0
    %3123 = vmatpush2.msra.mxu0 0.0
    %3124 = vmatprep.subr.mxu0 0.0
    %3125 = vmatpush2.msra.mxu0 0.0
    %3126 = vmatprep.subr.mxu0 0.0
    %3127 = vmatpush2.msra.mxu0 0.0
    %3128 = vmatprep.subr.mxu0 0.0
    %3129 = vmatpush2.msra.mxu0 0.0
    %3130 = vmatprep.subr.mxu0 0.0
    %3131 = vmatpush2.msra.mxu0 0.0
    %3132 = vmatprep.subr.mxu0 0.0
    %3133 = vmatpush2.msra.mxu0 0.0
    %3134 = vmatprep.subr.mxu0 0.0
    %3135 = vmatpush2.msra.mxu0 0.0
    %3136 = vmatprep.subr.mxu0 0.0
    %3137 = vmatpush2.msra.mxu0 0.0
    %3138 = vmatprep.subr.mxu0 0.0
    %3139 = vmatpush2.msra.mxu0 0.0
    %3140 = vmatprep.subr.mxu0 0.0
    %3141 = vmatpush2.msra.mxu0 0.0
    %3142 = vmatprep.mubr.f32.mxu0 0.0
    %3143 = vmatmul.mubr.f32.gmra.mxu0 %v3076
    %v3144 = vpop.f32.mrf.mxu0
    %v3145 = vadd.f32 0.0, %v3144
    %v3146 = vpop.f32.mrf.mxu0
    %3147 = vdwg.mxu0
    %v3148 = vld [vmem:[%s8 + $0x8] sm:$0xff]
    %v3150 = vsel %vm517, %v2613, 0
    %v3153 = vsel %vm517, %v2689, 0
    %v3156 = vsel %vm517, %v2765, 0
    %v3159 = vsel %vm517, %v2841, 0
    %v3162 = vsel %vm517, %v2917, 0
    %v3165 = vsel %vm517, %v2993, 0
    %v3168 = vsel %vm517, %v3069, 0
    %v3171 = vsel %vm517, %v3145, 0
    %3173 = vmatprep.subr.mxu0 0.0
    %3174 = vmatpush1.msra.mxu0 0.0
    %3175 = vmatprep.subr.mxu0 0.0
    %3176 = vmatpush1.msra.mxu0 0.0
    %3177 = vmatprep.subr.mxu0 0.0
    %3178 = vmatpush1.msra.mxu0 0.0
    %3179 = vmatprep.subr.mxu0 0.0
    %3180 = vmatpush1.msra.mxu0 0.0
    %3181 = vmatprep.subr.mxu0 0.0
    %3182 = vmatpush1.msra.mxu0 0.0
    %3183 = vmatprep.subr.mxu0 0.0
    %3184 = vmatpush1.msra.mxu0 0.0
    %3185 = vmatprep.subr.mxu0 0.0
    %3186 = vmatpush1.msra.mxu0 0.0
    %3187 = vmatprep.subr.mxu0 0.0
    %3188 = vmatpush1.msra.mxu0 0.0
    %3189 = vmatprep.subr.mxu0 0.0
    %3190 = vmatpush1.msra.mxu0 0.0
    %3191 = vmatprep.subr.mxu0 0.0
    %3192 = vmatpush1.msra.mxu0 0.0
    %3193 = vmatprep.subr.mxu0 0.0
    %3194 = vmatpush1.msra.mxu0 0.0
    %3195 = vmatprep.subr.mxu0 0.0
    %3196 = vmatpush1.msra.mxu0 0.0
    %3197 = vmatprep.subr.mxu0 0.0
    %3198 = vmatpush1.msra.mxu0 0.0
    %3199 = vmatprep.subr.mxu0 0.0
    %3200 = vmatpush1.msra.mxu0 0.0
    %3201 = vmatprep.subr.mxu0 0.0
    %3202 = vmatpush1.msra.mxu0 0.0
    %3203 = vmatprep.subr.mxu0 0.0
    %3204 = vmatpush1.msra.mxu0 %v3148
    %3205 = vmatprep.subr.mxu0 0.0
    %3206 = vmatpush2.msra.mxu0 0.0
    %3207 = vmatprep.subr.mxu0 0.0
    %3208 = vmatpush2.msra.mxu0 0.0
    %3209 = vmatprep.subr.mxu0 0.0
    %3210 = vmatpush2.msra.mxu0 0.0
    %3211 = vmatprep.subr.mxu0 0.0
    %3212 = vmatpush2.msra.mxu0 0.0
    %3213 = vmatprep.subr.mxu0 0.0
    %3214 = vmatpush2.msra.mxu0 0.0
    %3215 = vmatprep.subr.mxu0 0.0
    %3216 = vmatpush2.msra.mxu0 0.0
    %3217 = vmatprep.subr.mxu0 0.0
    %3218 = vmatpush2.msra.mxu0 0.0
    %3219 = vmatprep.subr.mxu0 0.0
    %3220 = vmatpush2.msra.mxu0 0.0
    %3221 = vmatprep.subr.mxu0 0.0
    %3222 = vmatpush2.msra.mxu0 0.0
    %3223 = vmatprep.subr.mxu0 0.0
    %3224 = vmatpush2.msra.mxu0 0.0
    %3225 = vmatprep.subr.mxu0 0.0
    %3226 = vmatpush2.msra.mxu0 0.0
    %3227 = vmatprep.subr.mxu0 0.0
    %3228 = vmatpush2.msra.mxu0 0.0
    %3229 = vmatprep.subr.mxu0 0.0
    %3230 = vmatpush2.msra.mxu0 0.0
    %3231 = vmatprep.subr.mxu0 0.0
    %3232 = vmatpush2.msra.mxu0 0.0
    %3233 = vmatprep.subr.mxu0 0.0
    %3234 = vmatpush2.msra.mxu0 0.0
    %3235 = vmatprep.subr.mxu0 0.0
    %3236 = vmatpush2.msra.mxu0 0.0
    %3237 = vmatprep.mubr.f32.mxu0 0.0
    %3238 = vmatmul.mubr.f32.gmra.mxu0 %v3150
    %v3239 = vpop.f32.mrf.mxu0
    %v3240 = vadd.f32 0.0, %v3239
    %v3241 = vpop.f32.mrf.mxu0
    %3242 = vmatprep.mubr.f32.mxu0 0.0
    %3243 = vmatmul.mubr.f32.gmra.mxu0 %v3153
    %v3244 = vpop.f32.mrf.mxu0
    %v3245 = vadd.f32 0.0, %v3244
    %v3246 = vpop.f32.mrf.mxu0
    %3247 = vmatprep.mubr.f32.mxu0 0.0
    %3248 = vmatmul.mubr.f32.gmra.mxu0 %v3156
    %v3249 = vpop.f32.mrf.mxu0
    %v3250 = vadd.f32 0.0, %v3249
    %v3251 = vpop.f32.mrf.mxu0
    %3252 = vmatprep.mubr.f32.mxu0 0.0
    %3253 = vmatmul.mubr.f32.gmra.mxu0 %v3159
    %v3254 = vpop.f32.mrf.mxu0
    %v3255 = vadd.f32 0.0, %v3254
    %v3256 = vpop.f32.mrf.mxu0
    %3257 = vmatprep.mubr.f32.mxu0 0.0
    %3258 = vmatmul.mubr.f32.gmra.mxu0 %v3162
    %v3259 = vpop.f32.mrf.mxu0
    %v3260 = vadd.f32 0.0, %v3259
    %v3261 = vpop.f32.mrf.mxu0
    %3262 = vmatprep.mubr.f32.mxu0 0.0
    %3263 = vmatmul.mubr.f32.gmra.mxu0 %v3165
    %v3264 = vpop.f32.mrf.mxu0
    %v3265 = vadd.f32 0.0, %v3264
    %v3266 = vpop.f32.mrf.mxu0
    %3267 = vmatprep.mubr.f32.mxu0 0.0
    %3268 = vmatmul.mubr.f32.gmra.mxu0 %v3168
    %v3269 = vpop.f32.mrf.mxu0
    %v3270 = vadd.f32 0.0, %v3269
    %v3271 = vpop.f32.mrf.mxu0
    %3272 = vmatprep.mubr.f32.mxu0 0.0
    %3273 = vmatmul.mubr.f32.gmra.mxu0 %v3171
    %v3274 = vpop.f32.mrf.mxu0
    %v3275 = vadd.f32 0.0, %v3274
    %v3276 = vpop.f32.mrf.mxu0
    %3277 = vdwg.mxu0
    %v3279 = vsel %vm517, %v1292, 0
    %v3282 = vsel %vm517, %v1368, 0
    %v3285 = vsel %vm517, %v1444, 0
    %v3288 = vsel %vm517, %v1520, 0
    %v3291 = vsel %vm517, %v1596, 0
    %v3294 = vsel %vm517, %v1672, 0
    %v3297 = vsel %vm517, %v1748, 0
    %v3300 = vsel %vm517, %v1824, 0
    %3302 = vmatprep.subr.mxu0 0.0
    %3303 = vmatpush1.msra.mxu0 0.0
    %3304 = vmatprep.subr.mxu0 0.0
    %3305 = vmatpush1.msra.mxu0 0.0
    %3306 = vmatprep.subr.mxu0 0.0
    %3307 = vmatpush1.msra.mxu0 0.0
    %3308 = vmatprep.subr.mxu0 0.0
    %3309 = vmatpush1.msra.mxu0 0.0
    %3310 = vmatprep.subr.mxu0 0.0
    %3311 = vmatpush1.msra.mxu0 0.0
    %3312 = vmatprep.subr.mxu0 0.0
    %3313 = vmatpush1.msra.mxu0 0.0
    %3314 = vmatprep.subr.mxu0 0.0
    %3315 = vmatpush1.msra.mxu0 0.0
    %3316 = vmatprep.subr.mxu0 0.0
    %3317 = vmatpush1.msra.mxu0 0.0
    %3318 = vmatprep.subr.mxu0 0.0
    %3319 = vmatpush1.msra.mxu0 0.0
    %3320 = vmatprep.subr.mxu0 0.0
    %3321 = vmatpush1.msra.mxu0 0.0
    %3322 = vmatprep.subr.mxu0 0.0
    %3323 = vmatpush1.msra.mxu0 0.0
    %3324 = vmatprep.subr.mxu0 0.0
    %3325 = vmatpush1.msra.mxu0 0.0
    %3326 = vmatprep.subr.mxu0 0.0
    %3327 = vmatpush1.msra.mxu0 0.0
    %3328 = vmatprep.subr.mxu0 0.0
    %3329 = vmatpush1.msra.mxu0 0.0
    %3330 = vmatprep.subr.mxu0 0.0
    %3331 = vmatpush1.msra.mxu0 0.0
    %3332 = vmatprep.subr.mxu0 0.0
    %3333 = vmatpush1.msra.mxu0 %v1827
    %3334 = vmatprep.subr.mxu0 0.0
    %3335 = vmatpush2.msra.mxu0 0.0
    %3336 = vmatprep.subr.mxu0 0.0
    %3337 = vmatpush2.msra.mxu0 0.0
    %3338 = vmatprep.subr.mxu0 0.0
    %3339 = vmatpush2.msra.mxu0 0.0
    %3340 = vmatprep.subr.mxu0 0.0
    %3341 = vmatpush2.msra.mxu0 0.0
    %3342 = vmatprep.subr.mxu0 0.0
    %3343 = vmatpush2.msra.mxu0 0.0
    %3344 = vmatprep.subr.mxu0 0.0
    %3345 = vmatpush2.msra.mxu0 0.0
    %3346 = vmatprep.subr.mxu0 0.0
    %3347 = vmatpush2.msra.mxu0 0.0
    %3348 = vmatprep.subr.mxu0 0.0
    %3349 = vmatpush2.msra.mxu0 0.0
    %3350 = vmatprep.subr.mxu0 0.0
    %3351 = vmatpush2.msra.mxu0 0.0
    %3352 = vmatprep.subr.mxu0 0.0
    %3353 = vmatpush2.msra.mxu0 0.0
    %3354 = vmatprep.subr.mxu0 0.0
    %3355 = vmatpush2.msra.mxu0 0.0
    %3356 = vmatprep.subr.mxu0 0.0
    %3357 = vmatpush2.msra.mxu0 0.0
    %3358 = vmatprep.subr.mxu0 0.0
    %3359 = vmatpush2.msra.mxu0 0.0
    %3360 = vmatprep.subr.mxu0 0.0
    %3361 = vmatpush2.msra.mxu0 0.0
    %3362 = vmatprep.subr.mxu0 0.0
    %3363 = vmatpush2.msra.mxu0 0.0
    %3364 = vmatprep.subr.mxu0 0.0
    %3365 = vmatpush2.msra.mxu0 0.0
    %3366 = vmatprep.mubr.f32.mxu0 0.0
    %3367 = vmatmul.mubr.f32.gmra.mxu0 %v3279
    %v3368 = vpop.f32.mrf.mxu0
    %v3369 = vadd.f32 %v3240, %v3368
    %v3370 = vpop.f32.mrf.mxu0
    %3371 = vmatprep.mubr.f32.mxu0 0.0
    %3372 = vmatmul.mubr.f32.gmra.mxu0 %v3282
    %v3373 = vpop.f32.mrf.mxu0
    %v3374 = vadd.f32 %v3245, %v3373
    %v3375 = vpop.f32.mrf.mxu0
    %3376 = vmatprep.mubr.f32.mxu0 0.0
    %3377 = vmatmul.mubr.f32.gmra.mxu0 %v3285
    %v3378 = vpop.f32.mrf.mxu0
    %v3379 = vadd.f32 %v3250, %v3378
    %v3380 = vpop.f32.mrf.mxu0
    %3381 = vmatprep.mubr.f32.mxu0 0.0
    %3382 = vmatmul.mubr.f32.gmra.mxu0 %v3288
    %v3383 = vpop.f32.mrf.mxu0
    %v3384 = vadd.f32 %v3255, %v3383
    %v3385 = vpop.f32.mrf.mxu0
    %3386 = vmatprep.mubr.f32.mxu0 0.0
    %3387 = vmatmul.mubr.f32.gmra.mxu0 %v3291
    %v3388 = vpop.f32.mrf.mxu0
    %v3389 = vadd.f32 %v3260, %v3388
    %v3390 = vpop.f32.mrf.mxu0
    %3391 = vmatprep.mubr.f32.mxu0 0.0
    %3392 = vmatmul.mubr.f32.gmra.mxu0 %v3294
    %v3393 = vpop.f32.mrf.mxu0
    %v3394 = vadd.f32 %v3265, %v3393
    %v3395 = vpop.f32.mrf.mxu0
    %3396 = vmatprep.mubr.f32.mxu0 0.0
    %3397 = vmatmul.mubr.f32.gmra.mxu0 %v3297
    %v3398 = vpop.f32.mrf.mxu0
    %v3399 = vadd.f32 %v3270, %v3398
    %v3400 = vpop.f32.mrf.mxu0
    %3401 = vmatprep.mubr.f32.mxu0 0.0
    %3402 = vmatmul.mubr.f32.gmra.mxu0 %v3300
    %v3403 = vpop.f32.mrf.mxu0
    %v3404 = vadd.f32 %v3275, %v3403
    %v3405 = vpop.f32.mrf.mxu0
    %3406 = vdwg.mxu0
    %3407 = vrot.lane.b32.xlu0 %v404, 112
    %v3408 = vpop.permute.xlu0 %3407
    %3409 = vrot.lane.b32.xlu0 %v404, 80
    %v3410 = vpop.permute.xlu0 %3409
    %v3411 = vsel %vm517, %v3408, 0
    %v3413 = vsel %vm517, %v3410, 0
    %3415 = vmatprep.subr.mxu0 0.0
    %3416 = vmatpush1.xpose.msra.mxu0 0.0
    %3417 = vmatprep.subr.mxu0 0.0
    %3418 = vmatpush1.xpose.msra.mxu0 0.0
    %3419 = vmatprep.subr.mxu0 0.0
    %3420 = vmatpush1.xpose.msra.mxu0 0.0
    %3421 = vmatprep.subr.mxu0 0.0
    %3422 = vmatpush1.xpose.msra.mxu0 0.0
    %3423 = vmatprep.subr.mxu0 0.0
    %3424 = vmatpush1.xpose.msra.mxu0 0.0
    %3425 = vmatprep.subr.mxu0 0.0
    %3426 = vmatpush1.xpose.msra.mxu0 0.0
    %3427 = vmatprep.subr.mxu0 0.0
    %3428 = vmatpush1.xpose.msra.mxu0 0.0
    %3429 = vmatprep.subr.mxu0 0.0
    %3430 = vmatpush1.xpose.msra.mxu0 0.0
    %3431 = vmatprep.subr.mxu0 0.0
    %3432 = vmatpush1.xpose.msra.mxu0 0.0
    %3433 = vmatprep.subr.mxu0 0.0
    %3434 = vmatpush1.xpose.msra.mxu0 0.0
    %3435 = vmatprep.subr.mxu0 0.0
    %3436 = vmatpush1.xpose.msra.mxu0 0.0
    %3437 = vmatprep.subr.mxu0 0.0
    %3438 = vmatpush1.xpose.msra.mxu0 0.0
    %3439 = vmatprep.subr.mxu0 0.0
    %3440 = vmatpush1.xpose.msra.mxu0 0.0
    %3441 = vmatprep.subr.mxu0 0.0
    %3442 = vmatpush1.xpose.msra.mxu0 0.0
    %3443 = vmatprep.subr.mxu0 0.0
    %3444 = vmatpush1.xpose.msra.mxu0 0.0
    %3445 = vmatprep.subr.mxu0 0.0
    %3446 = vmatpush1.xpose.msra.mxu0 %v3413
    %3447 = vmatprep.subr.mxu0 0.0
    %3448 = vmatpush2.xpose.msra.mxu0 0.0
    %3449 = vmatprep.subr.mxu0 0.0
    %3450 = vmatpush2.xpose.msra.mxu0 0.0
    %3451 = vmatprep.subr.mxu0 0.0
    %3452 = vmatpush2.xpose.msra.mxu0 0.0
    %3453 = vmatprep.subr.mxu0 0.0
    %3454 = vmatpush2.xpose.msra.mxu0 0.0
    %3455 = vmatprep.subr.mxu0 0.0
    %3456 = vmatpush2.xpose.msra.mxu0 0.0
    %3457 = vmatprep.subr.mxu0 0.0
    %3458 = vmatpush2.xpose.msra.mxu0 0.0
    %3459 = vmatprep.subr.mxu0 0.0
    %3460 = vmatpush2.xpose.msra.mxu0 0.0
    %3461 = vmatprep.subr.mxu0 0.0
    %3462 = vmatpush2.xpose.msra.mxu0 0.0
    %3463 = vmatprep.subr.mxu0 0.0
    %3464 = vmatpush2.xpose.msra.mxu0 0.0
    %3465 = vmatprep.subr.mxu0 0.0
    %3466 = vmatpush2.xpose.msra.mxu0 0.0
    %3467 = vmatprep.subr.mxu0 0.0
    %3468 = vmatpush2.xpose.msra.mxu0 0.0
    %3469 = vmatprep.subr.mxu0 0.0
    %3470 = vmatpush2.xpose.msra.mxu0 0.0
    %3471 = vmatprep.subr.mxu0 0.0
    %3472 = vmatpush2.xpose.msra.mxu0 0.0
    %3473 = vmatprep.subr.mxu0 0.0
    %3474 = vmatpush2.xpose.msra.mxu0 0.0
    %3475 = vmatprep.subr.mxu0 0.0
    %3476 = vmatpush2.xpose.msra.mxu0 0.0
    %3477 = vmatprep.subr.mxu0 0.0
    %3478 = vmatpush2.xpose.msra.mxu0 0.0
    %3479 = vmatprep.mubr.f32.mxu0 0.0
    %3480 = vmatmul.mubr.f32.gmra.mxu0 %v3411
    %v3481 = vpop.f32.mrf.mxu0
    %v3482 = vadd.f32 %v477, %v3481
    %v3483 = vpop.f32.mrf.mxu0
    %3484 = vdwg.mxu0
    %3485 = vrot.lane.b32.xlu0 %v409, 112
    %v3486 = vpop.permute.xlu0 %3485
    %3487 = vrot.lane.b32.xlu0 %v409, 80
    %v3488 = vpop.permute.xlu0 %3487
    %v3489 = vsel %vm517, %v3486, 0
    %v3491 = vsel %vm517, %v3488, 0
    %3493 = vmatprep.subr.mxu0 0.0
    %3494 = vmatpush1.xpose.msra.mxu0 0.0
    %3495 = vmatprep.subr.mxu0 0.0
    %3496 = vmatpush1.xpose.msra.mxu0 0.0
    %3497 = vmatprep.subr.mxu0 0.0
    %3498 = vmatpush1.xpose.msra.mxu0 0.0
    %3499 = vmatprep.subr.mxu0 0.0
    %3500 = vmatpush1.xpose.msra.mxu0 0.0
    %3501 = vmatprep.subr.mxu0 0.0
    %3502 = vmatpush1.xpose.msra.mxu0 0.0
    %3503 = vmatprep.subr.mxu0 0.0
    %3504 = vmatpush1.xpose.msra.mxu0 0.0
    %3505 = vmatprep.subr.mxu0 0.0
    %3506 = vmatpush1.xpose.msra.mxu0 0.0
    %3507 = vmatprep.subr.mxu0 0.0
    %3508 = vmatpush1.xpose.msra.mxu0 0.0
    %3509 = vmatprep.subr.mxu0 0.0
    %3510 = vmatpush1.xpose.msra.mxu0 0.0
    %3511 = vmatprep.subr.mxu0 0.0
    %3512 = vmatpush1.xpose.msra.mxu0 0.0
    %3513 = vmatprep.subr.mxu0 0.0
    %3514 = vmatpush1.xpose.msra.mxu0 0.0
    %3515 = vmatprep.subr.mxu0 0.0
    %3516 = vmatpush1.xpose.msra.mxu0 0.0
    %3517 = vmatprep.subr.mxu0 0.0
    %3518 = vmatpush1.xpose.msra.mxu0 0.0
    %3519 = vmatprep.subr.mxu0 0.0
    %3520 = vmatpush1.xpose.msra.mxu0 0.0
    %3521 = vmatprep.subr.mxu0 0.0
    %3522 = vmatpush1.xpose.msra.mxu0 0.0
    %3523 = vmatprep.subr.mxu0 0.0
    %3524 = vmatpush1.xpose.msra.mxu0 %v3491
    %3525 = vmatprep.subr.mxu0 0.0
    %3526 = vmatpush2.xpose.msra.mxu0 0.0
    %3527 = vmatprep.subr.mxu0 0.0
    %3528 = vmatpush2.xpose.msra.mxu0 0.0
    %3529 = vmatprep.subr.mxu0 0.0
    %3530 = vmatpush2.xpose.msra.mxu0 0.0
    %3531 = vmatprep.subr.mxu0 0.0
    %3532 = vmatpush2.xpose.msra.mxu0 0.0
    %3533 = vmatprep.subr.mxu0 0.0
    %3534 = vmatpush2.xpose.msra.mxu0 0.0
    %3535 = vmatprep.subr.mxu0 0.0
    %3536 = vmatpush2.xpose.msra.mxu0 0.0
    %3537 = vmatprep.subr.mxu0 0.0
    %3538 = vmatpush2.xpose.msra.mxu0 0.0
    %3539 = vmatprep.subr.mxu0 0.0
    %3540 = vmatpush2.xpose.msra.mxu0 0.0
    %3541 = vmatprep.subr.mxu0 0.0
    %3542 = vmatpush2.xpose.msra.mxu0 0.0
    %3543 = vmatprep.subr.mxu0 0.0
    %3544 = vmatpush2.xpose.msra.mxu0 0.0
    %3545 = vmatprep.subr.mxu0 0.0
    %3546 = vmatpush2.xpose.msra.mxu0 0.0
    %3547 = vmatprep.subr.mxu0 0.0
    %3548 = vmatpush2.xpose.msra.mxu0 0.0
    %3549 = vmatprep.subr.mxu0 0.0
    %3550 = vmatpush2.xpose.msra.mxu0 0.0
    %3551 = vmatprep.subr.mxu0 0.0
    %3552 = vmatpush2.xpose.msra.mxu0 0.0
    %3553 = vmatprep.subr.mxu0 0.0
    %3554 = vmatpush2.xpose.msra.mxu0 0.0
    %3555 = vmatprep.subr.mxu0 0.0
    %3556 = vmatpush2.xpose.msra.mxu0 0.0
    %3557 = vmatprep.mubr.f32.mxu0 0.0
    %3558 = vmatmul.mubr.f32.gmra.mxu0 %v3489
    %v3559 = vpop.f32.mrf.mxu0
    %v3560 = vadd.f32 %v481, %v3559
    %v3561 = vpop.f32.mrf.mxu0
    %3562 = vdwg.mxu0
    %3563 = vrot.lane.b32.xlu0 %v414, 112
    %v3564 = vpop.permute.xlu0 %3563
    %3565 = vrot.lane.b32.xlu0 %v414, 80
    %v3566 = vpop.permute.xlu0 %3565
    %v3567 = vsel %vm517, %v3564, 0
    %v3569 = vsel %vm517, %v3566, 0
    %3571 = vmatprep.subr.mxu0 0.0
    %3572 = vmatpush1.xpose.msra.mxu0 0.0
    %3573 = vmatprep.subr.mxu0 0.0
    %3574 = vmatpush1.xpose.msra.mxu0 0.0
    %3575 = vmatprep.subr.mxu0 0.0
    %3576 = vmatpush1.xpose.msra.mxu0 0.0
    %3577 = vmatprep.subr.mxu0 0.0
    %3578 = vmatpush1.xpose.msra.mxu0 0.0
    %3579 = vmatprep.subr.mxu0 0.0
    %3580 = vmatpush1.xpose.msra.mxu0 0.0
    %3581 = vmatprep.subr.mxu0 0.0
    %3582 = vmatpush1.xpose.msra.mxu0 0.0
    %3583 = vmatprep.subr.mxu0 0.0
    %3584 = vmatpush1.xpose.msra.mxu0 0.0
    %3585 = vmatprep.subr.mxu0 0.0
    %3586 = vmatpush1.xpose.msra.mxu0 0.0
    %3587 = vmatprep.subr.mxu0 0.0
    %3588 = vmatpush1.xpose.msra.mxu0 0.0
    %3589 = vmatprep.subr.mxu0 0.0
    %3590 = vmatpush1.xpose.msra.mxu0 0.0
    %3591 = vmatprep.subr.mxu0 0.0
    %3592 = vmatpush1.xpose.msra.mxu0 0.0
    %3593 = vmatprep.subr.mxu0 0.0
    %3594 = vmatpush1.xpose.msra.mxu0 0.0
    %3595 = vmatprep.subr.mxu0 0.0
    %3596 = vmatpush1.xpose.msra.mxu0 0.0
    %3597 = vmatprep.subr.mxu0 0.0
    %3598 = vmatpush1.xpose.msra.mxu0 0.0
    %3599 = vmatprep.subr.mxu0 0.0
    %3600 = vmatpush1.xpose.msra.mxu0 0.0
    %3601 = vmatprep.subr.mxu0 0.0
    %3602 = vmatpush1.xpose.msra.mxu0 %v3569
    %3603 = vmatprep.subr.mxu0 0.0
    %3604 = vmatpush2.xpose.msra.mxu0 0.0
    %3605 = vmatprep.subr.mxu0 0.0
    %3606 = vmatpush2.xpose.msra.mxu0 0.0
    %3607 = vmatprep.subr.mxu0 0.0
    %3608 = vmatpush2.xpose.msra.mxu0 0.0
    %3609 = vmatprep.subr.mxu0 0.0
    %3610 = vmatpush2.xpose.msra.mxu0 0.0
    %3611 = vmatprep.subr.mxu0 0.0
    %3612 = vmatpush2.xpose.msra.mxu0 0.0
    %3613 = vmatprep.subr.mxu0 0.0
    %3614 = vmatpush2.xpose.msra.mxu0 0.0
    %3615 = vmatprep.subr.mxu0 0.0
    %3616 = vmatpush2.xpose.msra.mxu0 0.0
    %3617 = vmatprep.subr.mxu0 0.0
    %3618 = vmatpush2.xpose.msra.mxu0 0.0
    %3619 = vmatprep.subr.mxu0 0.0
    %3620 = vmatpush2.xpose.msra.mxu0 0.0
    %3621 = vmatprep.subr.mxu0 0.0
    %3622 = vmatpush2.xpose.msra.mxu0 0.0
    %3623 = vmatprep.subr.mxu0 0.0
    %3624 = vmatpush2.xpose.msra.mxu0 0.0
    %3625 = vmatprep.subr.mxu0 0.0
    %3626 = vmatpush2.xpose.msra.mxu0 0.0
    %3627 = vmatprep.subr.mxu0 0.0
    %3628 = vmatpush2.xpose.msra.mxu0 0.0
    %3629 = vmatprep.subr.mxu0 0.0
    %3630 = vmatpush2.xpose.msra.mxu0 0.0
    %3631 = vmatprep.subr.mxu0 0.0
    %3632 = vmatpush2.xpose.msra.mxu0 0.0
    %3633 = vmatprep.subr.mxu0 0.0
    %3634 = vmatpush2.xpose.msra.mxu0 0.0
    %3635 = vmatprep.mubr.f32.mxu0 0.0
    %3636 = vmatmul.mubr.f32.gmra.mxu0 %v3567
    %v3637 = vpop.f32.mrf.mxu0
    %v3638 = vadd.f32 %v485, %v3637
    %v3639 = vpop.f32.mrf.mxu0
    %3640 = vdwg.mxu0
    %3641 = vrot.lane.b32.xlu0 %v419, 112
    %v3642 = vpop.permute.xlu0 %3641
    %3643 = vrot.lane.b32.xlu0 %v419, 80
    %v3644 = vpop.permute.xlu0 %3643
    %v3645 = vsel %vm517, %v3642, 0
    %v3647 = vsel %vm517, %v3644, 0
    %3649 = vmatprep.subr.mxu0 0.0
    %3650 = vmatpush1.xpose.msra.mxu0 0.0
    %3651 = vmatprep.subr.mxu0 0.0
    %3652 = vmatpush1.xpose.msra.mxu0 0.0
    %3653 = vmatprep.subr.mxu0 0.0
    %3654 = vmatpush1.xpose.msra.mxu0 0.0
    %3655 = vmatprep.subr.mxu0 0.0
    %3656 = vmatpush1.xpose.msra.mxu0 0.0
    %3657 = vmatprep.subr.mxu0 0.0
    %3658 = vmatpush1.xpose.msra.mxu0 0.0
    %3659 = vmatprep.subr.mxu0 0.0
    %3660 = vmatpush1.xpose.msra.mxu0 0.0
    %3661 = vmatprep.subr.mxu0 0.0
    %3662 = vmatpush1.xpose.msra.mxu0 0.0
    %3663 = vmatprep.subr.mxu0 0.0
    %3664 = vmatpush1.xpose.msra.mxu0 0.0
    %3665 = vmatprep.subr.mxu0 0.0
    %3666 = vmatpush1.xpose.msra.mxu0 0.0
    %3667 = vmatprep.subr.mxu0 0.0
    %3668 = vmatpush1.xpose.msra.mxu0 0.0
    %3669 = vmatprep.subr.mxu0 0.0
    %3670 = vmatpush1.xpose.msra.mxu0 0.0
    %3671 = vmatprep.subr.mxu0 0.0
    %3672 = vmatpush1.xpose.msra.mxu0 0.0
    %3673 = vmatprep.subr.mxu0 0.0
    %3674 = vmatpush1.xpose.msra.mxu0 0.0
    %3675 = vmatprep.subr.mxu0 0.0
    %3676 = vmatpush1.xpose.msra.mxu0 0.0
    %3677 = vmatprep.subr.mxu0 0.0
    %3678 = vmatpush1.xpose.msra.mxu0 0.0
    %3679 = vmatprep.subr.mxu0 0.0
    %3680 = vmatpush1.xpose.msra.mxu0 %v3647
    %3681 = vmatprep.subr.mxu0 0.0
    %3682 = vmatpush2.xpose.msra.mxu0 0.0
    %3683 = vmatprep.subr.mxu0 0.0
    %3684 = vmatpush2.xpose.msra.mxu0 0.0
    %3685 = vmatprep.subr.mxu0 0.0
    %3686 = vmatpush2.xpose.msra.mxu0 0.0
    %3687 = vmatprep.subr.mxu0 0.0
    %3688 = vmatpush2.xpose.msra.mxu0 0.0
    %3689 = vmatprep.subr.mxu0 0.0
    %3690 = vmatpush2.xpose.msra.mxu0 0.0
    %3691 = vmatprep.subr.mxu0 0.0
    %3692 = vmatpush2.xpose.msra.mxu0 0.0
    %3693 = vmatprep.subr.mxu0 0.0
    %3694 = vmatpush2.xpose.msra.mxu0 0.0
    %3695 = vmatprep.subr.mxu0 0.0
    %3696 = vmatpush2.xpose.msra.mxu0 0.0
    %3697 = vmatprep.subr.mxu0 0.0
    %3698 = vmatpush2.xpose.msra.mxu0 0.0
    %3699 = vmatprep.subr.mxu0 0.0
    %3700 = vmatpush2.xpose.msra.mxu0 0.0
    %3701 = vmatprep.subr.mxu0 0.0
    %3702 = vmatpush2.xpose.msra.mxu0 0.0
    %3703 = vmatprep.subr.mxu0 0.0
    %3704 = vmatpush2.xpose.msra.mxu0 0.0
    %3705 = vmatprep.subr.mxu0 0.0
    %3706 = vmatpush2.xpose.msra.mxu0 0.0
    %3707 = vmatprep.subr.mxu0 0.0
    %3708 = vmatpush2.xpose.msra.mxu0 0.0
    %3709 = vmatprep.subr.mxu0 0.0
    %3710 = vmatpush2.xpose.msra.mxu0 0.0
    %3711 = vmatprep.subr.mxu0 0.0
    %3712 = vmatpush2.xpose.msra.mxu0 0.0
    %3713 = vmatprep.mubr.f32.mxu0 0.0
    %3714 = vmatmul.mubr.f32.gmra.mxu0 %v3645
    %v3715 = vpop.f32.mrf.mxu0
    %v3716 = vadd.f32 %v489, %v3715
    %v3717 = vpop.f32.mrf.mxu0
    %3718 = vdwg.mxu0
    %3719 = vrot.lane.b32.xlu0 %v424, 112
    %v3720 = vpop.permute.xlu0 %3719
    %3721 = vrot.lane.b32.xlu0 %v424, 80
    %v3722 = vpop.permute.xlu0 %3721
    %v3723 = vsel %vm517, %v3720, 0
    %v3725 = vsel %vm517, %v3722, 0
    %3727 = vmatprep.subr.mxu0 0.0
    %3728 = vmatpush1.xpose.msra.mxu0 0.0
    %3729 = vmatprep.subr.mxu0 0.0
    %3730 = vmatpush1.xpose.msra.mxu0 0.0
    %3731 = vmatprep.subr.mxu0 0.0
    %3732 = vmatpush1.xpose.msra.mxu0 0.0
    %3733 = vmatprep.subr.mxu0 0.0
    %3734 = vmatpush1.xpose.msra.mxu0 0.0
    %3735 = vmatprep.subr.mxu0 0.0
    %3736 = vmatpush1.xpose.msra.mxu0 0.0
    %3737 = vmatprep.subr.mxu0 0.0
    %3738 = vmatpush1.xpose.msra.mxu0 0.0
    %3739 = vmatprep.subr.mxu0 0.0
    %3740 = vmatpush1.xpose.msra.mxu0 0.0
    %3741 = vmatprep.subr.mxu0 0.0
    %3742 = vmatpush1.xpose.msra.mxu0 0.0
    %3743 = vmatprep.subr.mxu0 0.0
    %3744 = vmatpush1.xpose.msra.mxu0 0.0
    %3745 = vmatprep.subr.mxu0 0.0
    %3746 = vmatpush1.xpose.msra.mxu0 0.0
    %3747 = vmatprep.subr.mxu0 0.0
    %3748 = vmatpush1.xpose.msra.mxu0 0.0
    %3749 = vmatprep.subr.mxu0 0.0
    %3750 = vmatpush1.xpose.msra.mxu0 0.0
    %3751 = vmatprep.subr.mxu0 0.0
    %3752 = vmatpush1.xpose.msra.mxu0 0.0
    %3753 = vmatprep.subr.mxu0 0.0
    %3754 = vmatpush1.xpose.msra.mxu0 0.0
    %3755 = vmatprep.subr.mxu0 0.0
    %3756 = vmatpush1.xpose.msra.mxu0 0.0
    %3757 = vmatprep.subr.mxu0 0.0
    %3758 = vmatpush1.xpose.msra.mxu0 %v3725
    %3759 = vmatprep.subr.mxu0 0.0
    %3760 = vmatpush2.xpose.msra.mxu0 0.0
    %3761 = vmatprep.subr.mxu0 0.0
    %3762 = vmatpush2.xpose.msra.mxu0 0.0
    %3763 = vmatprep.subr.mxu0 0.0
    %3764 = vmatpush2.xpose.msra.mxu0 0.0
    %3765 = vmatprep.subr.mxu0 0.0
    %3766 = vmatpush2.xpose.msra.mxu0 0.0
    %3767 = vmatprep.subr.mxu0 0.0
    %3768 = vmatpush2.xpose.msra.mxu0 0.0
    %3769 = vmatprep.subr.mxu0 0.0
    %3770 = vmatpush2.xpose.msra.mxu0 0.0
    %3771 = vmatprep.subr.mxu0 0.0
    %3772 = vmatpush2.xpose.msra.mxu0 0.0
    %3773 = vmatprep.subr.mxu0 0.0
    %3774 = vmatpush2.xpose.msra.mxu0 0.0
    %3775 = vmatprep.subr.mxu0 0.0
    %3776 = vmatpush2.xpose.msra.mxu0 0.0
    %3777 = vmatprep.subr.mxu0 0.0
    %3778 = vmatpush2.xpose.msra.mxu0 0.0
    %3779 = vmatprep.subr.mxu0 0.0
    %3780 = vmatpush2.xpose.msra.mxu0 0.0
    %3781 = vmatprep.subr.mxu0 0.0
    %3782 = vmatpush2.xpose.msra.mxu0 0.0
    %3783 = vmatprep.subr.mxu0 0.0
    %3784 = vmatpush2.xpose.msra.mxu0 0.0
    %3785 = vmatprep.subr.mxu0 0.0
    %3786 = vmatpush2.xpose.msra.mxu0 0.0
    %3787 = vmatprep.subr.mxu0 0.0
    %3788 = vmatpush2.xpose.msra.mxu0 0.0
    %3789 = vmatprep.subr.mxu0 0.0
    %3790 = vmatpush2.xpose.msra.mxu0 0.0
    %3791 = vmatprep.mubr.f32.mxu0 0.0
    %3792 = vmatmul.mubr.f32.gmra.mxu0 %v3723
    %v3793 = vpop.f32.mrf.mxu0
    %v3794 = vadd.f32 %v493, %v3793
    %v3795 = vpop.f32.mrf.mxu0
    %3796 = vdwg.mxu0
    %3797 = vrot.lane.b32.xlu0 %v429, 112
    %v3798 = vpop.permute.xlu0 %3797
    %3799 = vrot.lane.b32.xlu0 %v429, 80
    %v3800 = vpop.permute.xlu0 %3799
    %v3801 = vsel %vm517, %v3798, 0
    %v3803 = vsel %vm517, %v3800, 0
    %3805 = vmatprep.subr.mxu0 0.0
    %3806 = vmatpush1.xpose.msra.mxu0 0.0
    %3807 = vmatprep.subr.mxu0 0.0
    %3808 = vmatpush1.xpose.msra.mxu0 0.0
    %3809 = vmatprep.subr.mxu0 0.0
    %3810 = vmatpush1.xpose.msra.mxu0 0.0
    %3811 = vmatprep.subr.mxu0 0.0
    %3812 = vmatpush1.xpose.msra.mxu0 0.0
    %3813 = vmatprep.subr.mxu0 0.0
    %3814 = vmatpush1.xpose.msra.mxu0 0.0
    %3815 = vmatprep.subr.mxu0 0.0
    %3816 = vmatpush1.xpose.msra.mxu0 0.0
    %3817 = vmatprep.subr.mxu0 0.0
    %3818 = vmatpush1.xpose.msra.mxu0 0.0
    %3819 = vmatprep.subr.mxu0 0.0
    %3820 = vmatpush1.xpose.msra.mxu0 0.0
    %3821 = vmatprep.subr.mxu0 0.0
    %3822 = vmatpush1.xpose.msra.mxu0 0.0
    %3823 = vmatprep.subr.mxu0 0.0
    %3824 = vmatpush1.xpose.msra.mxu0 0.0
    %3825 = vmatprep.subr.mxu0 0.0
    %3826 = vmatpush1.xpose.msra.mxu0 0.0
    %3827 = vmatprep.subr.mxu0 0.0
    %3828 = vmatpush1.xpose.msra.mxu0 0.0
    %3829 = vmatprep.subr.mxu0 0.0
    %3830 = vmatpush1.xpose.msra.mxu0 0.0
    %3831 = vmatprep.subr.mxu0 0.0
    %3832 = vmatpush1.xpose.msra.mxu0 0.0
    %3833 = vmatprep.subr.mxu0 0.0
    %3834 = vmatpush1.xpose.msra.mxu0 0.0
    %3835 = vmatprep.subr.mxu0 0.0
    %3836 = vmatpush1.xpose.msra.mxu0 %v3803
    %3837 = vmatprep.subr.mxu0 0.0
    %3838 = vmatpush2.xpose.msra.mxu0 0.0
    %3839 = vmatprep.subr.mxu0 0.0
    %3840 = vmatpush2.xpose.msra.mxu0 0.0
    %3841 = vmatprep.subr.mxu0 0.0
    %3842 = vmatpush2.xpose.msra.mxu0 0.0
    %3843 = vmatprep.subr.mxu0 0.0
    %3844 = vmatpush2.xpose.msra.mxu0 0.0
    %3845 = vmatprep.subr.mxu0 0.0
    %3846 = vmatpush2.xpose.msra.mxu0 0.0
    %3847 = vmatprep.subr.mxu0 0.0
    %3848 = vmatpush2.xpose.msra.mxu0 0.0
    %3849 = vmatprep.subr.mxu0 0.0
    %3850 = vmatpush2.xpose.msra.mxu0 0.0
    %3851 = vmatprep.subr.mxu0 0.0
    %3852 = vmatpush2.xpose.msra.mxu0 0.0
    %3853 = vmatprep.subr.mxu0 0.0
    %3854 = vmatpush2.xpose.msra.mxu0 0.0
    %3855 = vmatprep.subr.mxu0 0.0
    %3856 = vmatpush2.xpose.msra.mxu0 0.0
    %3857 = vmatprep.subr.mxu0 0.0
    %3858 = vmatpush2.xpose.msra.mxu0 0.0
    %3859 = vmatprep.subr.mxu0 0.0
    %3860 = vmatpush2.xpose.msra.mxu0 0.0
    %3861 = vmatprep.subr.mxu0 0.0
    %3862 = vmatpush2.xpose.msra.mxu0 0.0
    %3863 = vmatprep.subr.mxu0 0.0
    %3864 = vmatpush2.xpose.msra.mxu0 0.0
    %3865 = vmatprep.subr.mxu0 0.0
    %3866 = vmatpush2.xpose.msra.mxu0 0.0
    %3867 = vmatprep.subr.mxu0 0.0
    %3868 = vmatpush2.xpose.msra.mxu0 0.0
    %3869 = vmatprep.mubr.f32.mxu0 0.0
    %3870 = vmatmul.mubr.f32.gmra.mxu0 %v3801
    %v3871 = vpop.f32.mrf.mxu0
    %v3872 = vadd.f32 %v497, %v3871
    %v3873 = vpop.f32.mrf.mxu0
    %3874 = vdwg.mxu0
    %3875 = vrot.lane.b32.xlu0 %v434, 112
    %v3876 = vpop.permute.xlu0 %3875
    %3877 = vrot.lane.b32.xlu0 %v434, 80
    %v3878 = vpop.permute.xlu0 %3877
    %v3879 = vsel %vm517, %v3876, 0
    %v3881 = vsel %vm517, %v3878, 0
    %3883 = vmatprep.subr.mxu0 0.0
    %3884 = vmatpush1.xpose.msra.mxu0 0.0
    %3885 = vmatprep.subr.mxu0 0.0
    %3886 = vmatpush1.xpose.msra.mxu0 0.0
    %3887 = vmatprep.subr.mxu0 0.0
    %3888 = vmatpush1.xpose.msra.mxu0 0.0
    %3889 = vmatprep.subr.mxu0 0.0
    %3890 = vmatpush1.xpose.msra.mxu0 0.0
    %3891 = vmatprep.subr.mxu0 0.0
    %3892 = vmatpush1.xpose.msra.mxu0 0.0
    %3893 = vmatprep.subr.mxu0 0.0
    %3894 = vmatpush1.xpose.msra.mxu0 0.0
    %3895 = vmatprep.subr.mxu0 0.0
    %3896 = vmatpush1.xpose.msra.mxu0 0.0
    %3897 = vmatprep.subr.mxu0 0.0
    %3898 = vmatpush1.xpose.msra.mxu0 0.0
    %3899 = vmatprep.subr.mxu0 0.0
    %3900 = vmatpush1.xpose.msra.mxu0 0.0
    %3901 = vmatprep.subr.mxu0 0.0
    %3902 = vmatpush1.xpose.msra.mxu0 0.0
    %3903 = vmatprep.subr.mxu0 0.0
    %3904 = vmatpush1.xpose.msra.mxu0 0.0
    %3905 = vmatprep.subr.mxu0 0.0
    %3906 = vmatpush1.xpose.msra.mxu0 0.0
    %3907 = vmatprep.subr.mxu0 0.0
    %3908 = vmatpush1.xpose.msra.mxu0 0.0
    %3909 = vmatprep.subr.mxu0 0.0
    %3910 = vmatpush1.xpose.msra.mxu0 0.0
    %3911 = vmatprep.subr.mxu0 0.0
    %3912 = vmatpush1.xpose.msra.mxu0 0.0
    %3913 = vmatprep.subr.mxu0 0.0
    %3914 = vmatpush1.xpose.msra.mxu0 %v3881
    %3915 = vmatprep.subr.mxu0 0.0
    %3916 = vmatpush2.xpose.msra.mxu0 0.0
    %3917 = vmatprep.subr.mxu0 0.0
    %3918 = vmatpush2.xpose.msra.mxu0 0.0
    %3919 = vmatprep.subr.mxu0 0.0
    %3920 = vmatpush2.xpose.msra.mxu0 0.0
    %3921 = vmatprep.subr.mxu0 0.0
    %3922 = vmatpush2.xpose.msra.mxu0 0.0
    %3923 = vmatprep.subr.mxu0 0.0
    %3924 = vmatpush2.xpose.msra.mxu0 0.0
    %3925 = vmatprep.subr.mxu0 0.0
    %3926 = vmatpush2.xpose.msra.mxu0 0.0
    %3927 = vmatprep.subr.mxu0 0.0
    %3928 = vmatpush2.xpose.msra.mxu0 0.0
    %3929 = vmatprep.subr.mxu0 0.0
    %3930 = vmatpush2.xpose.msra.mxu0 0.0
    %3931 = vmatprep.subr.mxu0 0.0
    %3932 = vmatpush2.xpose.msra.mxu0 0.0
    %3933 = vmatprep.subr.mxu0 0.0
    %3934 = vmatpush2.xpose.msra.mxu0 0.0
    %3935 = vmatprep.subr.mxu0 0.0
    %3936 = vmatpush2.xpose.msra.mxu0 0.0
    %3937 = vmatprep.subr.mxu0 0.0
    %3938 = vmatpush2.xpose.msra.mxu0 0.0
    %3939 = vmatprep.subr.mxu0 0.0
    %3940 = vmatpush2.xpose.msra.mxu0 0.0
    %3941 = vmatprep.subr.mxu0 0.0
    %3942 = vmatpush2.xpose.msra.mxu0 0.0
    %3943 = vmatprep.subr.mxu0 0.0
    %3944 = vmatpush2.xpose.msra.mxu0 0.0
    %3945 = vmatprep.subr.mxu0 0.0
    %3946 = vmatpush2.xpose.msra.mxu0 0.0
    %3947 = vmatprep.mubr.f32.mxu0 0.0
    %3948 = vmatmul.mubr.f32.gmra.mxu0 %v3879
    %v3949 = vpop.f32.mrf.mxu0
    %v3950 = vadd.f32 %v501, %v3949
    %v3951 = vpop.f32.mrf.mxu0
    %3952 = vdwg.mxu0
    %3953 = vrot.lane.b32.xlu0 %v439, 112
    %v3954 = vpop.permute.xlu0 %3953
    %3955 = vrot.lane.b32.xlu0 %v439, 80
    %v3956 = vpop.permute.xlu0 %3955
    %v3957 = vsel %vm517, %v3954, 0
    %v3959 = vsel %vm517, %v3956, 0
    %3961 = vmatprep.subr.mxu0 0.0
    %3962 = vmatpush1.xpose.msra.mxu0 0.0
    %3963 = vmatprep.subr.mxu0 0.0
    %3964 = vmatpush1.xpose.msra.mxu0 0.0
    %3965 = vmatprep.subr.mxu0 0.0
    %3966 = vmatpush1.xpose.msra.mxu0 0.0
    %3967 = vmatprep.subr.mxu0 0.0
    %3968 = vmatpush1.xpose.msra.mxu0 0.0
    %3969 = vmatprep.subr.mxu0 0.0
    %3970 = vmatpush1.xpose.msra.mxu0 0.0
    %3971 = vmatprep.subr.mxu0 0.0
    %3972 = vmatpush1.xpose.msra.mxu0 0.0
    %3973 = vmatprep.subr.mxu0 0.0
    %3974 = vmatpush1.xpose.msra.mxu0 0.0
    %3975 = vmatprep.subr.mxu0 0.0
    %3976 = vmatpush1.xpose.msra.mxu0 0.0
    %3977 = vmatprep.subr.mxu0 0.0
    %3978 = vmatpush1.xpose.msra.mxu0 0.0
    %3979 = vmatprep.subr.mxu0 0.0
    %3980 = vmatpush1.xpose.msra.mxu0 0.0
    %3981 = vmatprep.subr.mxu0 0.0
    %3982 = vmatpush1.xpose.msra.mxu0 0.0
    %3983 = vmatprep.subr.mxu0 0.0
    %3984 = vmatpush1.xpose.msra.mxu0 0.0
    %3985 = vmatprep.subr.mxu0 0.0
    %3986 = vmatpush1.xpose.msra.mxu0 0.0
    %3987 = vmatprep.subr.mxu0 0.0
    %3988 = vmatpush1.xpose.msra.mxu0 0.0
    %3989 = vmatprep.subr.mxu0 0.0
    %3990 = vmatpush1.xpose.msra.mxu0 0.0
    %3991 = vmatprep.subr.mxu0 0.0
    %3992 = vmatpush1.xpose.msra.mxu0 %v3959
    %3993 = vmatprep.subr.mxu0 0.0
    %3994 = vmatpush2.xpose.msra.mxu0 0.0
    %3995 = vmatprep.subr.mxu0 0.0
    %3996 = vmatpush2.xpose.msra.mxu0 0.0
    %3997 = vmatprep.subr.mxu0 0.0
    %3998 = vmatpush2.xpose.msra.mxu0 0.0
    %3999 = vmatprep.subr.mxu0 0.0
    %4000 = vmatpush2.xpose.msra.mxu0 0.0
    %4001 = vmatprep.subr.mxu0 0.0
    %4002 = vmatpush2.xpose.msra.mxu0 0.0
    %4003 = vmatprep.subr.mxu0 0.0
    %4004 = vmatpush2.xpose.msra.mxu0 0.0
    %4005 = vmatprep.subr.mxu0 0.0
    %4006 = vmatpush2.xpose.msra.mxu0 0.0
    %4007 = vmatprep.subr.mxu0 0.0
    %4008 = vmatpush2.xpose.msra.mxu0 0.0
    %4009 = vmatprep.subr.mxu0 0.0
    %4010 = vmatpush2.xpose.msra.mxu0 0.0
    %4011 = vmatprep.subr.mxu0 0.0
    %4012 = vmatpush2.xpose.msra.mxu0 0.0
    %4013 = vmatprep.subr.mxu0 0.0
    %4014 = vmatpush2.xpose.msra.mxu0 0.0
    %4015 = vmatprep.subr.mxu0 0.0
    %4016 = vmatpush2.xpose.msra.mxu0 0.0
    %4017 = vmatprep.subr.mxu0 0.0
    %4018 = vmatpush2.xpose.msra.mxu0 0.0
    %4019 = vmatprep.subr.mxu0 0.0
    %4020 = vmatpush2.xpose.msra.mxu0 0.0
    %4021 = vmatprep.subr.mxu0 0.0
    %4022 = vmatpush2.xpose.msra.mxu0 0.0
    %4023 = vmatprep.subr.mxu0 0.0
    %4024 = vmatpush2.xpose.msra.mxu0 0.0
    %4025 = vmatprep.mubr.f32.mxu0 0.0
    %4026 = vmatmul.mubr.f32.gmra.mxu0 %v3957
    %v4027 = vpop.f32.mrf.mxu0
    %v4028 = vadd.f32 %v505, %v4027
    %v4029 = vpop.f32.mrf.mxu0
    %4030 = vdwg.mxu0
    %v4031 = vsel %vm517, %v3482, -inf
    %4032 = vmax.xlane.f32.xlu0 %v4031
    %v4033 = vpop.xlane.xlu0 %4032
    %v4034 = vsel %vm517, %v3560, -inf
    %4035 = vmax.xlane.f32.xlu0 %v4034
    %v4036 = vpop.xlane.xlu0 %4035
    %v4037 = vsel %vm517, %v3638, -inf
    %4038 = vmax.xlane.f32.xlu0 %v4037
    %v4039 = vpop.xlane.xlu0 %4038
    %v4040 = vsel %vm517, %v3716, -inf
    %4041 = vmax.xlane.f32.xlu0 %v4040
    %v4042 = vpop.xlane.xlu0 %4041
    %v4043 = vsel %vm517, %v3794, -inf
    %4044 = vmax.xlane.f32.xlu0 %v4043
    %v4045 = vpop.xlane.xlu0 %4044
    %v4046 = vsel %vm517, %v3872, -inf
    %4047 = vmax.xlane.f32.xlu0 %v4046
    %v4048 = vpop.xlane.xlu0 %4047
    %v4049 = vsel %vm517, %v3950, -inf
    %4050 = vmax.xlane.f32.xlu0 %v4049
    %v4051 = vpop.xlane.xlu0 %4050
    %v4052 = vsel %vm517, %v4028, -inf
    %4053 = vmax.xlane.f32.xlu0 %v4052
    %v4054 = vpop.xlane.xlu0 %4053
    %v4055 = vsub.f32 %v3482, %v4033
    %v4056 = vsub.f32 %v3560, %v4036
    %v4057 = vsub.f32 %v3638, %v4039
    %v4058 = vsub.f32 %v3716, %v4042
    %v4059 = vsub.f32 %v3794, %v4045
    %v4060 = vsub.f32 %v3872, %v4048
    %v4061 = vsub.f32 %v3950, %v4051
    %v4062 = vsub.f32 %v4028, %v4054
    %v4063 = vmul.f32 %v4055, 1.442695
    %v4064 = vpow.pop %v4063
    %v4065 = vmul.f32 %v4056, 1.442695
    %v4066 = vpow.pop %v4065
    %v4067 = vmul.f32 %v4057, 1.442695
    %v4068 = vpow.pop %v4067
    %v4069 = vmul.f32 %v4058, 1.442695
    %v4070 = vpow.pop %v4069
    %v4071 = vmul.f32 %v4059, 1.442695
    %v4072 = vpow.pop %v4071
    %v4073 = vmul.f32 %v4060, 1.442695
    %v4074 = vpow.pop %v4073
    %v4075 = vmul.f32 %v4061, 1.442695
    %v4076 = vpow.pop %v4075
    %v4077 = vmul.f32 %v4062, 1.442695
    %v4078 = vpow.pop %v4077
    %v4079 = vsel %vm517, %v4064, 0.0
    %4080 = vadd.xlane.f32.xlu0 %v4079
    %v4081 = vpop.xlane.xlu0 %4080
    %v4082 = vsel %vm517, %v4066, 0.0
    %4083 = vadd.xlane.f32.xlu0 %v4082
    %v4084 = vpop.xlane.xlu0 %4083
    %v4085 = vsel %vm517, %v4068, 0.0
    %4086 = vadd.xlane.f32.xlu0 %v4085
    %v4087 = vpop.xlane.xlu0 %4086
    %v4088 = vsel %vm517, %v4070, 0.0
    %4089 = vadd.xlane.f32.xlu0 %v4088
    %v4090 = vpop.xlane.xlu0 %4089
    %v4091 = vsel %vm517, %v4072, 0.0
    %4092 = vadd.xlane.f32.xlu0 %v4091
    %v4093 = vpop.xlane.xlu0 %4092
    %v4094 = vsel %vm517, %v4074, 0.0
    %4095 = vadd.xlane.f32.xlu0 %v4094
    %v4096 = vpop.xlane.xlu0 %4095
    %v4097 = vsel %vm517, %v4076, 0.0
    %4098 = vadd.xlane.f32.xlu0 %v4097
    %v4099 = vpop.xlane.xlu0 %4098
    %v4100 = vsel %vm517, %v4078, 0.0
    %4101 = vadd.xlane.f32.xlu0 %v4100
    %v4102 = vpop.xlane.xlu0 %4101
    %v4103 = vrcp.pop %v4081
    %v4104 = vrcp.pop %v4084
    %v4105 = vrcp.pop %v4087
    %v4106 = vrcp.pop %v4090
    %v4107 = vrcp.pop %v4093
    %v4108 = vrcp.pop %v4096
    %v4109 = vrcp.pop %v4099
    %v4110 = vrcp.pop %v4102
    %v4111 = vmul.f32 %v4064, %v4103
    %v4112 = vmul.f32 %v4066, %v4104
    %v4113 = vmul.f32 %v4068, %v4105
    %v4114 = vmul.f32 %v4070, %v4106
    %v4115 = vmul.f32 %v4072, %v4107
    %v4116 = vmul.f32 %v4074, %v4108
    %v4117 = vmul.f32 %v4076, %v4109
    %v4118 = vmul.f32 %v4078, %v4110
    %4119 = vrot.lane.b32.xlu0 %v404, 48
    %v4120 = vpop.permute.xlu0 %4119
    %v4123 = vsel %vm517, %v4111, 0
    %4125 = vmatprep.subr.mxu0 0.0
    %4126 = vmatpush1.msra.mxu0 0.0
    %4127 = vmatprep.subr.mxu0 0.0
    %4128 = vmatpush1.msra.mxu0 0.0
    %4129 = vmatprep.subr.mxu0 0.0
    %4130 = vmatpush1.msra.mxu0 0.0
    %4131 = vmatprep.subr.mxu0 0.0
    %4132 = vmatpush1.msra.mxu0 0.0
    %4133 = vmatprep.subr.mxu0 0.0
    %4134 = vmatpush1.msra.mxu0 0.0
    %4135 = vmatprep.subr.mxu0 0.0
    %4136 = vmatpush1.msra.mxu0 0.0
    %4137 = vmatprep.subr.mxu0 0.0
    %4138 = vmatpush1.msra.mxu0 0.0
    %4139 = vmatprep.subr.mxu0 0.0
    %4140 = vmatpush1.msra.mxu0 0.0
    %4141 = vmatprep.subr.mxu0 0.0
    %4142 = vmatpush1.msra.mxu0 0.0
    %4143 = vmatprep.subr.mxu0 0.0
    %4144 = vmatpush1.msra.mxu0 0.0
    %4145 = vmatprep.subr.mxu0 0.0
    %4146 = vmatpush1.msra.mxu0 0.0
    %4147 = vmatprep.subr.mxu0 0.0
    %4148 = vmatpush1.msra.mxu0 0.0
    %4149 = vmatprep.subr.mxu0 0.0
    %4150 = vmatpush1.msra.mxu0 0.0
    %4151 = vmatprep.subr.mxu0 0.0
    %4152 = vmatpush1.msra.mxu0 0.0
    %4153 = vmatprep.subr.mxu0 0.0
    %4154 = vmatpush1.msra.mxu0 0.0
    %4155 = vmatprep.subr.mxu0 0.0
    %4156 = vmatpush1.msra.mxu0 %v4120
    %4157 = vmatprep.subr.mxu0 0.0
    %4158 = vmatpush2.msra.mxu0 0.0
    %4159 = vmatprep.subr.mxu0 0.0
    %4160 = vmatpush2.msra.mxu0 0.0
    %4161 = vmatprep.subr.mxu0 0.0
    %4162 = vmatpush2.msra.mxu0 0.0
    %4163 = vmatprep.subr.mxu0 0.0
    %4164 = vmatpush2.msra.mxu0 0.0
    %4165 = vmatprep.subr.mxu0 0.0
    %4166 = vmatpush2.msra.mxu0 0.0
    %4167 = vmatprep.subr.mxu0 0.0
    %4168 = vmatpush2.msra.mxu0 0.0
    %4169 = vmatprep.subr.mxu0 0.0
    %4170 = vmatpush2.msra.mxu0 0.0
    %4171 = vmatprep.subr.mxu0 0.0
    %4172 = vmatpush2.msra.mxu0 0.0
    %4173 = vmatprep.subr.mxu0 0.0
    %4174 = vmatpush2.msra.mxu0 0.0
    %4175 = vmatprep.subr.mxu0 0.0
    %4176 = vmatpush2.msra.mxu0 0.0
    %4177 = vmatprep.subr.mxu0 0.0
    %4178 = vmatpush2.msra.mxu0 0.0
    %4179 = vmatprep.subr.mxu0 0.0
    %4180 = vmatpush2.msra.mxu0 0.0
    %4181 = vmatprep.subr.mxu0 0.0
    %4182 = vmatpush2.msra.mxu0 0.0
    %4183 = vmatprep.subr.mxu0 0.0
    %4184 = vmatpush2.msra.mxu0 0.0
    %4185 = vmatprep.subr.mxu0 0.0
    %4186 = vmatpush2.msra.mxu0 0.0
    %4187 = vmatprep.subr.mxu0 0.0
    %4188 = vmatpush2.msra.mxu0 0.0
    %4189 = vmatprep.mubr.f32.mxu0 0.0
    %4190 = vmatmul.mubr.f32.gmra.mxu0 %v4123
    %v4191 = vpop.f32.mrf.mxu0
    %v4192 = vadd.f32 0.0, %v4191
    %v4193 = vpop.f32.mrf.mxu0
    %4194 = vdwg.mxu0
    %4195 = vrot.lane.b32.xlu0 %v409, 48
    %v4196 = vpop.permute.xlu0 %4195
    %v4199 = vsel %vm517, %v4112, 0
    %4201 = vmatprep.subr.mxu0 0.0
    %4202 = vmatpush1.msra.mxu0 0.0
    %4203 = vmatprep.subr.mxu0 0.0
    %4204 = vmatpush1.msra.mxu0 0.0
    %4205 = vmatprep.subr.mxu0 0.0
    %4206 = vmatpush1.msra.mxu0 0.0
    %4207 = vmatprep.subr.mxu0 0.0
    %4208 = vmatpush1.msra.mxu0 0.0
    %4209 = vmatprep.subr.mxu0 0.0
    %4210 = vmatpush1.msra.mxu0 0.0
    %4211 = vmatprep.subr.mxu0 0.0
    %4212 = vmatpush1.msra.mxu0 0.0
    %4213 = vmatprep.subr.mxu0 0.0
    %4214 = vmatpush1.msra.mxu0 0.0
    %4215 = vmatprep.subr.mxu0 0.0
    %4216 = vmatpush1.msra.mxu0 0.0
    %4217 = vmatprep.subr.mxu0 0.0
    %4218 = vmatpush1.msra.mxu0 0.0
    %4219 = vmatprep.subr.mxu0 0.0
    %4220 = vmatpush1.msra.mxu0 0.0
    %4221 = vmatprep.subr.mxu0 0.0
    %4222 = vmatpush1.msra.mxu0 0.0
    %4223 = vmatprep.subr.mxu0 0.0
    %4224 = vmatpush1.msra.mxu0 0.0
    %4225 = vmatprep.subr.mxu0 0.0
    %4226 = vmatpush1.msra.mxu0 0.0
    %4227 = vmatprep.subr.mxu0 0.0
    %4228 = vmatpush1.msra.mxu0 0.0
    %4229 = vmatprep.subr.mxu0 0.0
    %4230 = vmatpush1.msra.mxu0 0.0
    %4231 = vmatprep.subr.mxu0 0.0
    %4232 = vmatpush1.msra.mxu0 %v4196
    %4233 = vmatprep.subr.mxu0 0.0
    %4234 = vmatpush2.msra.mxu0 0.0
    %4235 = vmatprep.subr.mxu0 0.0
    %4236 = vmatpush2.msra.mxu0 0.0
    %4237 = vmatprep.subr.mxu0 0.0
    %4238 = vmatpush2.msra.mxu0 0.0
    %4239 = vmatprep.subr.mxu0 0.0
    %4240 = vmatpush2.msra.mxu0 0.0
    %4241 = vmatprep.subr.mxu0 0.0
    %4242 = vmatpush2.msra.mxu0 0.0
    %4243 = vmatprep.subr.mxu0 0.0
    %4244 = vmatpush2.msra.mxu0 0.0
    %4245 = vmatprep.subr.mxu0 0.0
    %4246 = vmatpush2.msra.mxu0 0.0
    %4247 = vmatprep.subr.mxu0 0.0
    %4248 = vmatpush2.msra.mxu0 0.0
    %4249 = vmatprep.subr.mxu0 0.0
    %4250 = vmatpush2.msra.mxu0 0.0
    %4251 = vmatprep.subr.mxu0 0.0
    %4252 = vmatpush2.msra.mxu0 0.0
    %4253 = vmatprep.subr.mxu0 0.0
    %4254 = vmatpush2.msra.mxu0 0.0
    %4255 = vmatprep.subr.mxu0 0.0
    %4256 = vmatpush2.msra.mxu0 0.0
    %4257 = vmatprep.subr.mxu0 0.0
    %4258 = vmatpush2.msra.mxu0 0.0
    %4259 = vmatprep.subr.mxu0 0.0
    %4260 = vmatpush2.msra.mxu0 0.0
    %4261 = vmatprep.subr.mxu0 0.0
    %4262 = vmatpush2.msra.mxu0 0.0
    %4263 = vmatprep.subr.mxu0 0.0
    %4264 = vmatpush2.msra.mxu0 0.0
    %4265 = vmatprep.mubr.f32.mxu0 0.0
    %4266 = vmatmul.mubr.f32.gmra.mxu0 %v4199
    %v4267 = vpop.f32.mrf.mxu0
    %v4268 = vadd.f32 0.0, %v4267
    %v4269 = vpop.f32.mrf.mxu0
    %4270 = vdwg.mxu0
    %4271 = vrot.lane.b32.xlu0 %v414, 48
    %v4272 = vpop.permute.xlu0 %4271
    %v4275 = vsel %vm517, %v4113, 0
    %4277 = vmatprep.subr.mxu0 0.0
    %4278 = vmatpush1.msra.mxu0 0.0
    %4279 = vmatprep.subr.mxu0 0.0
    %4280 = vmatpush1.msra.mxu0 0.0
    %4281 = vmatprep.subr.mxu0 0.0
    %4282 = vmatpush1.msra.mxu0 0.0
    %4283 = vmatprep.subr.mxu0 0.0
    %4284 = vmatpush1.msra.mxu0 0.0
    %4285 = vmatprep.subr.mxu0 0.0
    %4286 = vmatpush1.msra.mxu0 0.0
    %4287 = vmatprep.subr.mxu0 0.0
    %4288 = vmatpush1.msra.mxu0 0.0
    %4289 = vmatprep.subr.mxu0 0.0
    %4290 = vmatpush1.msra.mxu0 0.0
    %4291 = vmatprep.subr.mxu0 0.0
    %4292 = vmatpush1.msra.mxu0 0.0
    %4293 = vmatprep.subr.mxu0 0.0
    %4294 = vmatpush1.msra.mxu0 0.0
    %4295 = vmatprep.subr.mxu0 0.0
    %4296 = vmatpush1.msra.mxu0 0.0
    %4297 = vmatprep.subr.mxu0 0.0
    %4298 = vmatpush1.msra.mxu0 0.0
    %4299 = vmatprep.subr.mxu0 0.0
    %4300 = vmatpush1.msra.mxu0 0.0
    %4301 = vmatprep.subr.mxu0 0.0
    %4302 = vmatpush1.msra.mxu0 0.0
    %4303 = vmatprep.subr.mxu0 0.0
    %4304 = vmatpush1.msra.mxu0 0.0
    %4305 = vmatprep.subr.mxu0 0.0
    %4306 = vmatpush1.msra.mxu0 0.0
    %4307 = vmatprep.subr.mxu0 0.0
    %4308 = vmatpush1.msra.mxu0 %v4272
    %4309 = vmatprep.subr.mxu0 0.0
    %4310 = vmatpush2.msra.mxu0 0.0
    %4311 = vmatprep.subr.mxu0 0.0
    %4312 = vmatpush2.msra.mxu0 0.0
    %4313 = vmatprep.subr.mxu0 0.0
    %4314 = vmatpush2.msra.mxu0 0.0
    %4315 = vmatprep.subr.mxu0 0.0
    %4316 = vmatpush2.msra.mxu0 0.0
    %4317 = vmatprep.subr.mxu0 0.0
    %4318 = vmatpush2.msra.mxu0 0.0
    %4319 = vmatprep.subr.mxu0 0.0
    %4320 = vmatpush2.msra.mxu0 0.0
    %4321 = vmatprep.subr.mxu0 0.0
    %4322 = vmatpush2.msra.mxu0 0.0
    %4323 = vmatprep.subr.mxu0 0.0
    %4324 = vmatpush2.msra.mxu0 0.0
    %4325 = vmatprep.subr.mxu0 0.0
    %4326 = vmatpush2.msra.mxu0 0.0
    %4327 = vmatprep.subr.mxu0 0.0
    %4328 = vmatpush2.msra.mxu0 0.0
    %4329 = vmatprep.subr.mxu0 0.0
    %4330 = vmatpush2.msra.mxu0 0.0
    %4331 = vmatprep.subr.mxu0 0.0
    %4332 = vmatpush2.msra.mxu0 0.0
    %4333 = vmatprep.subr.mxu0 0.0
    %4334 = vmatpush2.msra.mxu0 0.0
    %4335 = vmatprep.subr.mxu0 0.0
    %4336 = vmatpush2.msra.mxu0 0.0
    %4337 = vmatprep.subr.mxu0 0.0
    %4338 = vmatpush2.msra.mxu0 0.0
    %4339 = vmatprep.subr.mxu0 0.0
    %4340 = vmatpush2.msra.mxu0 0.0
    %4341 = vmatprep.mubr.f32.mxu0 0.0
    %4342 = vmatmul.mubr.f32.gmra.mxu0 %v4275
    %v4343 = vpop.f32.mrf.mxu0
    %v4344 = vadd.f32 0.0, %v4343
    %v4345 = vpop.f32.mrf.mxu0
    %4346 = vdwg.mxu0
    %4347 = vrot.lane.b32.xlu0 %v419, 48
    %v4348 = vpop.permute.xlu0 %4347
    %v4351 = vsel %vm517, %v4114, 0
    %4353 = vmatprep.subr.mxu0 0.0
    %4354 = vmatpush1.msra.mxu0 0.0
    %4355 = vmatprep.subr.mxu0 0.0
    %4356 = vmatpush1.msra.mxu0 0.0
    %4357 = vmatprep.subr.mxu0 0.0
    %4358 = vmatpush1.msra.mxu0 0.0
    %4359 = vmatprep.subr.mxu0 0.0
    %4360 = vmatpush1.msra.mxu0 0.0
    %4361 = vmatprep.subr.mxu0 0.0
    %4362 = vmatpush1.msra.mxu0 0.0
    %4363 = vmatprep.subr.mxu0 0.0
    %4364 = vmatpush1.msra.mxu0 0.0
    %4365 = vmatprep.subr.mxu0 0.0
    %4366 = vmatpush1.msra.mxu0 0.0
    %4367 = vmatprep.subr.mxu0 0.0
    %4368 = vmatpush1.msra.mxu0 0.0
    %4369 = vmatprep.subr.mxu0 0.0
    %4370 = vmatpush1.msra.mxu0 0.0
    %4371 = vmatprep.subr.mxu0 0.0
    %4372 = vmatpush1.msra.mxu0 0.0
    %4373 = vmatprep.subr.mxu0 0.0
    %4374 = vmatpush1.msra.mxu0 0.0
    %4375 = vmatprep.subr.mxu0 0.0
    %4376 = vmatpush1.msra.mxu0 0.0
    %4377 = vmatprep.subr.mxu0 0.0
    %4378 = vmatpush1.msra.mxu0 0.0
    %4379 = vmatprep.subr.mxu0 0.0
    %4380 = vmatpush1.msra.mxu0 0.0
    %4381 = vmatprep.subr.mxu0 0.0
    %4382 = vmatpush1.msra.mxu0 0.0
    %4383 = vmatprep.subr.mxu0 0.0
    %4384 = vmatpush1.msra.mxu0 %v4348
    %4385 = vmatprep.subr.mxu0 0.0
    %4386 = vmatpush2.msra.mxu0 0.0
    %4387 = vmatprep.subr.mxu0 0.0
    %4388 = vmatpush2.msra.mxu0 0.0
    %4389 = vmatprep.subr.mxu0 0.0
    %4390 = vmatpush2.msra.mxu0 0.0
    %4391 = vmatprep.subr.mxu0 0.0
    %4392 = vmatpush2.msra.mxu0 0.0
    %4393 = vmatprep.subr.mxu0 0.0
    %4394 = vmatpush2.msra.mxu0 0.0
    %4395 = vmatprep.subr.mxu0 0.0
    %4396 = vmatpush2.msra.mxu0 0.0
    %4397 = vmatprep.subr.mxu0 0.0
    %4398 = vmatpush2.msra.mxu0 0.0
    %4399 = vmatprep.subr.mxu0 0.0
    %4400 = vmatpush2.msra.mxu0 0.0
    %4401 = vmatprep.subr.mxu0 0.0
    %4402 = vmatpush2.msra.mxu0 0.0
    %4403 = vmatprep.subr.mxu0 0.0
    %4404 = vmatpush2.msra.mxu0 0.0
    %4405 = vmatprep.subr.mxu0 0.0
    %4406 = vmatpush2.msra.mxu0 0.0
    %4407 = vmatprep.subr.mxu0 0.0
    %4408 = vmatpush2.msra.mxu0 0.0
    %4409 = vmatprep.subr.mxu0 0.0
    %4410 = vmatpush2.msra.mxu0 0.0
    %4411 = vmatprep.subr.mxu0 0.0
    %4412 = vmatpush2.msra.mxu0 0.0
    %4413 = vmatprep.subr.mxu0 0.0
    %4414 = vmatpush2.msra.mxu0 0.0
    %4415 = vmatprep.subr.mxu0 0.0
    %4416 = vmatpush2.msra.mxu0 0.0
    %4417 = vmatprep.mubr.f32.mxu0 0.0
    %4418 = vmatmul.mubr.f32.gmra.mxu0 %v4351
    %v4419 = vpop.f32.mrf.mxu0
    %v4420 = vadd.f32 0.0, %v4419
    %v4421 = vpop.f32.mrf.mxu0
    %4422 = vdwg.mxu0
    %4423 = vrot.lane.b32.xlu0 %v424, 48
    %v4424 = vpop.permute.xlu0 %4423
    %v4427 = vsel %vm517, %v4115, 0
    %4429 = vmatprep.subr.mxu0 0.0
    %4430 = vmatpush1.msra.mxu0 0.0
    %4431 = vmatprep.subr.mxu0 0.0
    %4432 = vmatpush1.msra.mxu0 0.0
    %4433 = vmatprep.subr.mxu0 0.0
    %4434 = vmatpush1.msra.mxu0 0.0
    %4435 = vmatprep.subr.mxu0 0.0
    %4436 = vmatpush1.msra.mxu0 0.0
    %4437 = vmatprep.subr.mxu0 0.0
    %4438 = vmatpush1.msra.mxu0 0.0
    %4439 = vmatprep.subr.mxu0 0.0
    %4440 = vmatpush1.msra.mxu0 0.0
    %4441 = vmatprep.subr.mxu0 0.0
    %4442 = vmatpush1.msra.mxu0 0.0
    %4443 = vmatprep.subr.mxu0 0.0
    %4444 = vmatpush1.msra.mxu0 0.0
    %4445 = vmatprep.subr.mxu0 0.0
    %4446 = vmatpush1.msra.mxu0 0.0
    %4447 = vmatprep.subr.mxu0 0.0
    %4448 = vmatpush1.msra.mxu0 0.0
    %4449 = vmatprep.subr.mxu0 0.0
    %4450 = vmatpush1.msra.mxu0 0.0
    %4451 = vmatprep.subr.mxu0 0.0
    %4452 = vmatpush1.msra.mxu0 0.0
    %4453 = vmatprep.subr.mxu0 0.0
    %4454 = vmatpush1.msra.mxu0 0.0
    %4455 = vmatprep.subr.mxu0 0.0
    %4456 = vmatpush1.msra.mxu0 0.0
    %4457 = vmatprep.subr.mxu0 0.0
    %4458 = vmatpush1.msra.mxu0 0.0
    %4459 = vmatprep.subr.mxu0 0.0
    %4460 = vmatpush1.msra.mxu0 %v4424
    %4461 = vmatprep.subr.mxu0 0.0
    %4462 = vmatpush2.msra.mxu0 0.0
    %4463 = vmatprep.subr.mxu0 0.0
    %4464 = vmatpush2.msra.mxu0 0.0
    %4465 = vmatprep.subr.mxu0 0.0
    %4466 = vmatpush2.msra.mxu0 0.0
    %4467 = vmatprep.subr.mxu0 0.0
    %4468 = vmatpush2.msra.mxu0 0.0
    %4469 = vmatprep.subr.mxu0 0.0
    %4470 = vmatpush2.msra.mxu0 0.0
    %4471 = vmatprep.subr.mxu0 0.0
    %4472 = vmatpush2.msra.mxu0 0.0
    %4473 = vmatprep.subr.mxu0 0.0
    %4474 = vmatpush2.msra.mxu0 0.0
    %4475 = vmatprep.subr.mxu0 0.0
    %4476 = vmatpush2.msra.mxu0 0.0
    %4477 = vmatprep.subr.mxu0 0.0
    %4478 = vmatpush2.msra.mxu0 0.0
    %4479 = vmatprep.subr.mxu0 0.0
    %4480 = vmatpush2.msra.mxu0 0.0
    %4481 = vmatprep.subr.mxu0 0.0
    %4482 = vmatpush2.msra.mxu0 0.0
    %4483 = vmatprep.subr.mxu0 0.0
    %4484 = vmatpush2.msra.mxu0 0.0
    %4485 = vmatprep.subr.mxu0 0.0
    %4486 = vmatpush2.msra.mxu0 0.0
    %4487 = vmatprep.subr.mxu0 0.0
    %4488 = vmatpush2.msra.mxu0 0.0
    %4489 = vmatprep.subr.mxu0 0.0
    %4490 = vmatpush2.msra.mxu0 0.0
    %4491 = vmatprep.subr.mxu0 0.0
    %4492 = vmatpush2.msra.mxu0 0.0
    %4493 = vmatprep.mubr.f32.mxu0 0.0
    %4494 = vmatmul.mubr.f32.gmra.mxu0 %v4427
    %v4495 = vpop.f32.mrf.mxu0
    %v4496 = vadd.f32 0.0, %v4495
    %v4497 = vpop.f32.mrf.mxu0
    %4498 = vdwg.mxu0
    %4499 = vrot.lane.b32.xlu0 %v429, 48
    %v4500 = vpop.permute.xlu0 %4499
    %v4503 = vsel %vm517, %v4116, 0
    %4505 = vmatprep.subr.mxu0 0.0
    %4506 = vmatpush1.msra.mxu0 0.0
    %4507 = vmatprep.subr.mxu0 0.0
    %4508 = vmatpush1.msra.mxu0 0.0
    %4509 = vmatprep.subr.mxu0 0.0
    %4510 = vmatpush1.msra.mxu0 0.0
    %4511 = vmatprep.subr.mxu0 0.0
    %4512 = vmatpush1.msra.mxu0 0.0
    %4513 = vmatprep.subr.mxu0 0.0
    %4514 = vmatpush1.msra.mxu0 0.0
    %4515 = vmatprep.subr.mxu0 0.0
    %4516 = vmatpush1.msra.mxu0 0.0
    %4517 = vmatprep.subr.mxu0 0.0
    %4518 = vmatpush1.msra.mxu0 0.0
    %4519 = vmatprep.subr.mxu0 0.0
    %4520 = vmatpush1.msra.mxu0 0.0
    %4521 = vmatprep.subr.mxu0 0.0
    %4522 = vmatpush1.msra.mxu0 0.0
    %4523 = vmatprep.subr.mxu0 0.0
    %4524 = vmatpush1.msra.mxu0 0.0
    %4525 = vmatprep.subr.mxu0 0.0
    %4526 = vmatpush1.msra.mxu0 0.0
    %4527 = vmatprep.subr.mxu0 0.0
    %4528 = vmatpush1.msra.mxu0 0.0
    %4529 = vmatprep.subr.mxu0 0.0
    %4530 = vmatpush1.msra.mxu0 0.0
    %4531 = vmatprep.subr.mxu0 0.0
    %4532 = vmatpush1.msra.mxu0 0.0
    %4533 = vmatprep.subr.mxu0 0.0
    %4534 = vmatpush1.msra.mxu0 0.0
    %4535 = vmatprep.subr.mxu0 0.0
    %4536 = vmatpush1.msra.mxu0 %v4500
    %4537 = vmatprep.subr.mxu0 0.0
    %4538 = vmatpush2.msra.mxu0 0.0
    %4539 = vmatprep.subr.mxu0 0.0
    %4540 = vmatpush2.msra.mxu0 0.0
    %4541 = vmatprep.subr.mxu0 0.0
    %4542 = vmatpush2.msra.mxu0 0.0
    %4543 = vmatprep.subr.mxu0 0.0
    %4544 = vmatpush2.msra.mxu0 0.0
    %4545 = vmatprep.subr.mxu0 0.0
    %4546 = vmatpush2.msra.mxu0 0.0
    %4547 = vmatprep.subr.mxu0 0.0
    %4548 = vmatpush2.msra.mxu0 0.0
    %4549 = vmatprep.subr.mxu0 0.0
    %4550 = vmatpush2.msra.mxu0 0.0
    %4551 = vmatprep.subr.mxu0 0.0
    %4552 = vmatpush2.msra.mxu0 0.0
    %4553 = vmatprep.subr.mxu0 0.0
    %4554 = vmatpush2.msra.mxu0 0.0
    %4555 = vmatprep.subr.mxu0 0.0
    %4556 = vmatpush2.msra.mxu0 0.0
    %4557 = vmatprep.subr.mxu0 0.0
    %4558 = vmatpush2.msra.mxu0 0.0
    %4559 = vmatprep.subr.mxu0 0.0
    %4560 = vmatpush2.msra.mxu0 0.0
    %4561 = vmatprep.subr.mxu0 0.0
    %4562 = vmatpush2.msra.mxu0 0.0
    %4563 = vmatprep.subr.mxu0 0.0
    %4564 = vmatpush2.msra.mxu0 0.0
    %4565 = vmatprep.subr.mxu0 0.0
    %4566 = vmatpush2.msra.mxu0 0.0
    %4567 = vmatprep.subr.mxu0 0.0
    %4568 = vmatpush2.msra.mxu0 0.0
    %4569 = vmatprep.mubr.f32.mxu0 0.0
    %4570 = vmatmul.mubr.f32.gmra.mxu0 %v4503
    %v4571 = vpop.f32.mrf.mxu0
    %v4572 = vadd.f32 0.0, %v4571
    %v4573 = vpop.f32.mrf.mxu0
    %4574 = vdwg.mxu0
    %4575 = vrot.lane.b32.xlu0 %v434, 48
    %v4576 = vpop.permute.xlu0 %4575
    %v4579 = vsel %vm517, %v4117, 0
    %4581 = vmatprep.subr.mxu0 0.0
    %4582 = vmatpush1.msra.mxu0 0.0
    %4583 = vmatprep.subr.mxu0 0.0
    %4584 = vmatpush1.msra.mxu0 0.0
    %4585 = vmatprep.subr.mxu0 0.0
    %4586 = vmatpush1.msra.mxu0 0.0
    %4587 = vmatprep.subr.mxu0 0.0
    %4588 = vmatpush1.msra.mxu0 0.0
    %4589 = vmatprep.subr.mxu0 0.0
    %4590 = vmatpush1.msra.mxu0 0.0
    %4591 = vmatprep.subr.mxu0 0.0
    %4592 = vmatpush1.msra.mxu0 0.0
    %4593 = vmatprep.subr.mxu0 0.0
    %4594 = vmatpush1.msra.mxu0 0.0
    %4595 = vmatprep.subr.mxu0 0.0
    %4596 = vmatpush1.msra.mxu0 0.0
    %4597 = vmatprep.subr.mxu0 0.0
    %4598 = vmatpush1.msra.mxu0 0.0
    %4599 = vmatprep.subr.mxu0 0.0
    %4600 = vmatpush1.msra.mxu0 0.0
    %4601 = vmatprep.subr.mxu0 0.0
    %4602 = vmatpush1.msra.mxu0 0.0
    %4603 = vmatprep.subr.mxu0 0.0
    %4604 = vmatpush1.msra.mxu0 0.0
    %4605 = vmatprep.subr.mxu0 0.0
    %4606 = vmatpush1.msra.mxu0 0.0
    %4607 = vmatprep.subr.mxu0 0.0
    %4608 = vmatpush1.msra.mxu0 0.0
    %4609 = vmatprep.subr.mxu0 0.0
    %4610 = vmatpush1.msra.mxu0 0.0
    %4611 = vmatprep.subr.mxu0 0.0
    %4612 = vmatpush1.msra.mxu0 %v4576
    %4613 = vmatprep.subr.mxu0 0.0
    %4614 = vmatpush2.msra.mxu0 0.0
    %4615 = vmatprep.subr.mxu0 0.0
    %4616 = vmatpush2.msra.mxu0 0.0
    %4617 = vmatprep.subr.mxu0 0.0
    %4618 = vmatpush2.msra.mxu0 0.0
    %4619 = vmatprep.subr.mxu0 0.0
    %4620 = vmatpush2.msra.mxu0 0.0
    %4621 = vmatprep.subr.mxu0 0.0
    %4622 = vmatpush2.msra.mxu0 0.0
    %4623 = vmatprep.subr.mxu0 0.0
    %4624 = vmatpush2.msra.mxu0 0.0
    %4625 = vmatprep.subr.mxu0 0.0
    %4626 = vmatpush2.msra.mxu0 0.0
    %4627 = vmatprep.subr.mxu0 0.0
    %4628 = vmatpush2.msra.mxu0 0.0
    %4629 = vmatprep.subr.mxu0 0.0
    %4630 = vmatpush2.msra.mxu0 0.0
    %4631 = vmatprep.subr.mxu0 0.0
    %4632 = vmatpush2.msra.mxu0 0.0
    %4633 = vmatprep.subr.mxu0 0.0
    %4634 = vmatpush2.msra.mxu0 0.0
    %4635 = vmatprep.subr.mxu0 0.0
    %4636 = vmatpush2.msra.mxu0 0.0
    %4637 = vmatprep.subr.mxu0 0.0
    %4638 = vmatpush2.msra.mxu0 0.0
    %4639 = vmatprep.subr.mxu0 0.0
    %4640 = vmatpush2.msra.mxu0 0.0
    %4641 = vmatprep.subr.mxu0 0.0
    %4642 = vmatpush2.msra.mxu0 0.0
    %4643 = vmatprep.subr.mxu0 0.0
    %4644 = vmatpush2.msra.mxu0 0.0
    %4645 = vmatprep.mubr.f32.mxu0 0.0
    %4646 = vmatmul.mubr.f32.gmra.mxu0 %v4579
    %v4647 = vpop.f32.mrf.mxu0
    %v4648 = vadd.f32 0.0, %v4647
    %v4649 = vpop.f32.mrf.mxu0
    %4650 = vdwg.mxu0
    %4651 = vrot.lane.b32.xlu0 %v439, 48
    %v4652 = vpop.permute.xlu0 %4651
    %v4655 = vsel %vm517, %v4118, 0
    %4657 = vmatprep.subr.mxu0 0.0
    %4658 = vmatpush1.msra.mxu0 0.0
    %4659 = vmatprep.subr.mxu0 0.0
    %4660 = vmatpush1.msra.mxu0 0.0
    %4661 = vmatprep.subr.mxu0 0.0
    %4662 = vmatpush1.msra.mxu0 0.0
    %4663 = vmatprep.subr.mxu0 0.0
    %4664 = vmatpush1.msra.mxu0 0.0
    %4665 = vmatprep.subr.mxu0 0.0
    %4666 = vmatpush1.msra.mxu0 0.0
    %4667 = vmatprep.subr.mxu0 0.0
    %4668 = vmatpush1.msra.mxu0 0.0
    %4669 = vmatprep.subr.mxu0 0.0
    %4670 = vmatpush1.msra.mxu0 0.0
    %4671 = vmatprep.subr.mxu0 0.0
    %4672 = vmatpush1.msra.mxu0 0.0
    %4673 = vmatprep.subr.mxu0 0.0
    %4674 = vmatpush1.msra.mxu0 0.0
    %4675 = vmatprep.subr.mxu0 0.0
    %4676 = vmatpush1.msra.mxu0 0.0
    %4677 = vmatprep.subr.mxu0 0.0
    %4678 = vmatpush1.msra.mxu0 0.0
    %4679 = vmatprep.subr.mxu0 0.0
    %4680 = vmatpush1.msra.mxu0 0.0
    %4681 = vmatprep.subr.mxu0 0.0
    %4682 = vmatpush1.msra.mxu0 0.0
    %4683 = vmatprep.subr.mxu0 0.0
    %4684 = vmatpush1.msra.mxu0 0.0
    %4685 = vmatprep.subr.mxu0 0.0
    %4686 = vmatpush1.msra.mxu0 0.0
    %4687 = vmatprep.subr.mxu0 0.0
    %4688 = vmatpush1.msra.mxu0 %v4652
    %4689 = vmatprep.subr.mxu0 0.0
    %4690 = vmatpush2.msra.mxu0 0.0
    %4691 = vmatprep.subr.mxu0 0.0
    %4692 = vmatpush2.msra.mxu0 0.0
    %4693 = vmatprep.subr.mxu0 0.0
    %4694 = vmatpush2.msra.mxu0 0.0
    %4695 = vmatprep.subr.mxu0 0.0
    %4696 = vmatpush2.msra.mxu0 0.0
    %4697 = vmatprep.subr.mxu0 0.0
    %4698 = vmatpush2.msra.mxu0 0.0
    %4699 = vmatprep.subr.mxu0 0.0
    %4700 = vmatpush2.msra.mxu0 0.0
    %4701 = vmatprep.subr.mxu0 0.0
    %4702 = vmatpush2.msra.mxu0 0.0
    %4703 = vmatprep.subr.mxu0 0.0
    %4704 = vmatpush2.msra.mxu0 0.0
    %4705 = vmatprep.subr.mxu0 0.0
    %4706 = vmatpush2.msra.mxu0 0.0
    %4707 = vmatprep.subr.mxu0 0.0
    %4708 = vmatpush2.msra.mxu0 0.0
    %4709 = vmatprep.subr.mxu0 0.0
    %4710 = vmatpush2.msra.mxu0 0.0
    %4711 = vmatprep.subr.mxu0 0.0
    %4712 = vmatpush2.msra.mxu0 0.0
    %4713 = vmatprep.subr.mxu0 0.0
    %4714 = vmatpush2.msra.mxu0 0.0
    %4715 = vmatprep.subr.mxu0 0.0
    %4716 = vmatpush2.msra.mxu0 0.0
    %4717 = vmatprep.subr.mxu0 0.0
    %4718 = vmatpush2.msra.mxu0 0.0
    %4719 = vmatprep.subr.mxu0 0.0
    %4720 = vmatpush2.msra.mxu0 0.0
    %4721 = vmatprep.mubr.f32.mxu0 0.0
    %4722 = vmatmul.mubr.f32.gmra.mxu0 %v4655
    %v4723 = vpop.f32.mrf.mxu0
    %v4724 = vadd.f32 0.0, %v4723
    %v4725 = vpop.f32.mrf.mxu0
    %4726 = vdwg.mxu0
    %v4727 = vld [vmem:[%s8 + $0x10] sm:$0xff]
    %v4729 = vsel %vm517, %v4192, 0
    %v4732 = vsel %vm517, %v4268, 0
    %v4735 = vsel %vm517, %v4344, 0
    %v4738 = vsel %vm517, %v4420, 0
    %v4741 = vsel %vm517, %v4496, 0
    %v4744 = vsel %vm517, %v4572, 0
    %v4747 = vsel %vm517, %v4648, 0
    %v4750 = vsel %vm517, %v4724, 0
    %4752 = vmatprep.subr.mxu0 0.0
    %4753 = vmatpush1.msra.mxu0 0.0
    %4754 = vmatprep.subr.mxu0 0.0
    %4755 = vmatpush1.msra.mxu0 0.0
    %4756 = vmatprep.subr.mxu0 0.0
    %4757 = vmatpush1.msra.mxu0 0.0
    %4758 = vmatprep.subr.mxu0 0.0
    %4759 = vmatpush1.msra.mxu0 0.0
    %4760 = vmatprep.subr.mxu0 0.0
    %4761 = vmatpush1.msra.mxu0 0.0
    %4762 = vmatprep.subr.mxu0 0.0
    %4763 = vmatpush1.msra.mxu0 0.0
    %4764 = vmatprep.subr.mxu0 0.0
    %4765 = vmatpush1.msra.mxu0 0.0
    %4766 = vmatprep.subr.mxu0 0.0
    %4767 = vmatpush1.msra.mxu0 0.0
    %4768 = vmatprep.subr.mxu0 0.0
    %4769 = vmatpush1.msra.mxu0 0.0
    %4770 = vmatprep.subr.mxu0 0.0
    %4771 = vmatpush1.msra.mxu0 0.0
    %4772 = vmatprep.subr.mxu0 0.0
    %4773 = vmatpush1.msra.mxu0 0.0
    %4774 = vmatprep.subr.mxu0 0.0
    %4775 = vmatpush1.msra.mxu0 0.0
    %4776 = vmatprep.subr.mxu0 0.0
    %4777 = vmatpush1.msra.mxu0 0.0
    %4778 = vmatprep.subr.mxu0 0.0
    %4779 = vmatpush1.msra.mxu0 0.0
    %4780 = vmatprep.subr.mxu0 0.0
    %4781 = vmatpush1.msra.mxu0 0.0
    %4782 = vmatprep.subr.mxu0 0.0
    %4783 = vmatpush1.msra.mxu0 %v4727
    %4784 = vmatprep.subr.mxu0 0.0
    %4785 = vmatpush2.msra.mxu0 0.0
    %4786 = vmatprep.subr.mxu0 0.0
    %4787 = vmatpush2.msra.mxu0 0.0
    %4788 = vmatprep.subr.mxu0 0.0
    %4789 = vmatpush2.msra.mxu0 0.0
    %4790 = vmatprep.subr.mxu0 0.0
    %4791 = vmatpush2.msra.mxu0 0.0
    %4792 = vmatprep.subr.mxu0 0.0
    %4793 = vmatpush2.msra.mxu0 0.0
    %4794 = vmatprep.subr.mxu0 0.0
    %4795 = vmatpush2.msra.mxu0 0.0
    %4796 = vmatprep.subr.mxu0 0.0
    %4797 = vmatpush2.msra.mxu0 0.0
    %4798 = vmatprep.subr.mxu0 0.0
    %4799 = vmatpush2.msra.mxu0 0.0
    %4800 = vmatprep.subr.mxu0 0.0
    %4801 = vmatpush2.msra.mxu0 0.0
    %4802 = vmatprep.subr.mxu0 0.0
    %4803 = vmatpush2.msra.mxu0 0.0
    %4804 = vmatprep.subr.mxu0 0.0
    %4805 = vmatpush2.msra.mxu0 0.0
    %4806 = vmatprep.subr.mxu0 0.0
    %4807 = vmatpush2.msra.mxu0 0.0
    %4808 = vmatprep.subr.mxu0 0.0
    %4809 = vmatpush2.msra.mxu0 0.0
    %4810 = vmatprep.subr.mxu0 0.0
    %4811 = vmatpush2.msra.mxu0 0.0
    %4812 = vmatprep.subr.mxu0 0.0
    %4813 = vmatpush2.msra.mxu0 0.0
    %4814 = vmatprep.subr.mxu0 0.0
    %4815 = vmatpush2.msra.mxu0 0.0
    %4816 = vmatprep.mubr.f32.mxu0 0.0
    %4817 = vmatmul.mubr.f32.gmra.mxu0 %v4729
    %v4818 = vpop.f32.mrf.mxu0
    %v4819 = vadd.f32 0.0, %v4818
    %v4820 = vpop.f32.mrf.mxu0
    %4821 = vmatprep.mubr.f32.mxu0 0.0
    %4822 = vmatmul.mubr.f32.gmra.mxu0 %v4732
    %v4823 = vpop.f32.mrf.mxu0
    %v4824 = vadd.f32 0.0, %v4823
    %v4825 = vpop.f32.mrf.mxu0
    %4826 = vmatprep.mubr.f32.mxu0 0.0
    %4827 = vmatmul.mubr.f32.gmra.mxu0 %v4735
    %v4828 = vpop.f32.mrf.mxu0
    %v4829 = vadd.f32 0.0, %v4828
    %v4830 = vpop.f32.mrf.mxu0
    %4831 = vmatprep.mubr.f32.mxu0 0.0
    %4832 = vmatmul.mubr.f32.gmra.mxu0 %v4738
    %v4833 = vpop.f32.mrf.mxu0
    %v4834 = vadd.f32 0.0, %v4833
    %v4835 = vpop.f32.mrf.mxu0
    %4836 = vmatprep.mubr.f32.mxu0 0.0
    %4837 = vmatmul.mubr.f32.gmra.mxu0 %v4741
    %v4838 = vpop.f32.mrf.mxu0
    %v4839 = vadd.f32 0.0, %v4838
    %v4840 = vpop.f32.mrf.mxu0
    %4841 = vmatprep.mubr.f32.mxu0 0.0
    %4842 = vmatmul.mubr.f32.gmra.mxu0 %v4744
    %v4843 = vpop.f32.mrf.mxu0
    %v4844 = vadd.f32 0.0, %v4843
    %v4845 = vpop.f32.mrf.mxu0
    %4846 = vmatprep.mubr.f32.mxu0 0.0
    %4847 = vmatmul.mubr.f32.gmra.mxu0 %v4747
    %v4848 = vpop.f32.mrf.mxu0
    %v4849 = vadd.f32 0.0, %v4848
    %v4850 = vpop.f32.mrf.mxu0
    %4851 = vmatprep.mubr.f32.mxu0 0.0
    %4852 = vmatmul.mubr.f32.gmra.mxu0 %v4750
    %v4853 = vpop.f32.mrf.mxu0
    %v4854 = vadd.f32 0.0, %v4853
    %v4855 = vpop.f32.mrf.mxu0
    %4856 = vdwg.mxu0
    %v4857 = vadd.f32 %v3369, %v4819
    %v4858 = vadd.f32 %v3374, %v4824
    %v4859 = vadd.f32 %v3379, %v4829
    %v4860 = vadd.f32 %v3384, %v4834
    %v4861 = vadd.f32 %v3389, %v4839
    %v4862 = vadd.f32 %v3394, %v4844
    %v4863 = vadd.f32 %v3399, %v4849
    %v4864 = vadd.f32 %v3404, %v4854
    %4865 = vrot.lane.b32.xlu0 %v404, 104
    %v4866 = vpop.permute.xlu0 %4865
    %4867 = vrot.lane.b32.xlu0 %v404, 72
    %v4868 = vpop.permute.xlu0 %4867
    %v4869 = vsel %vm517, %v4866, 0
    %v4871 = vsel %vm517, %v4868, 0
    %4873 = vmatprep.subr.mxu0 0.0
    %4874 = vmatpush1.xpose.msra.mxu0 0.0
    %4875 = vmatprep.subr.mxu0 0.0
    %4876 = vmatpush1.xpose.msra.mxu0 0.0
    %4877 = vmatprep.subr.mxu0 0.0
    %4878 = vmatpush1.xpose.msra.mxu0 0.0
    %4879 = vmatprep.subr.mxu0 0.0
    %4880 = vmatpush1.xpose.msra.mxu0 0.0
    %4881 = vmatprep.subr.mxu0 0.0
    %4882 = vmatpush1.xpose.msra.mxu0 0.0
    %4883 = vmatprep.subr.mxu0 0.0
    %4884 = vmatpush1.xpose.msra.mxu0 0.0
    %4885 = vmatprep.subr.mxu0 0.0
    %4886 = vmatpush1.xpose.msra.mxu0 0.0
    %4887 = vmatprep.subr.mxu0 0.0
    %4888 = vmatpush1.xpose.msra.mxu0 0.0
    %4889 = vmatprep.subr.mxu0 0.0
    %4890 = vmatpush1.xpose.msra.mxu0 0.0
    %4891 = vmatprep.subr.mxu0 0.0
    %4892 = vmatpush1.xpose.msra.mxu0 0.0
    %4893 = vmatprep.subr.mxu0 0.0
    %4894 = vmatpush1.xpose.msra.mxu0 0.0
    %4895 = vmatprep.subr.mxu0 0.0
    %4896 = vmatpush1.xpose.msra.mxu0 0.0
    %4897 = vmatprep.subr.mxu0 0.0
    %4898 = vmatpush1.xpose.msra.mxu0 0.0
    %4899 = vmatprep.subr.mxu0 0.0
    %4900 = vmatpush1.xpose.msra.mxu0 0.0
    %4901 = vmatprep.subr.mxu0 0.0
    %4902 = vmatpush1.xpose.msra.mxu0 0.0
    %4903 = vmatprep.subr.mxu0 0.0
    %4904 = vmatpush1.xpose.msra.mxu0 %v4871
    %4905 = vmatprep.subr.mxu0 0.0
    %4906 = vmatpush2.xpose.msra.mxu0 0.0
    %4907 = vmatprep.subr.mxu0 0.0
    %4908 = vmatpush2.xpose.msra.mxu0 0.0
    %4909 = vmatprep.subr.mxu0 0.0
    %4910 = vmatpush2.xpose.msra.mxu0 0.0
    %4911 = vmatprep.subr.mxu0 0.0
    %4912 = vmatpush2.xpose.msra.mxu0 0.0
    %4913 = vmatprep.subr.mxu0 0.0
    %4914 = vmatpush2.xpose.msra.mxu0 0.0
    %4915 = vmatprep.subr.mxu0 0.0
    %4916 = vmatpush2.xpose.msra.mxu0 0.0
    %4917 = vmatprep.subr.mxu0 0.0
    %4918 = vmatpush2.xpose.msra.mxu0 0.0
    %4919 = vmatprep.subr.mxu0 0.0
    %4920 = vmatpush2.xpose.msra.mxu0 0.0
    %4921 = vmatprep.subr.mxu0 0.0
    %4922 = vmatpush2.xpose.msra.mxu0 0.0
    %4923 = vmatprep.subr.mxu0 0.0
    %4924 = vmatpush2.xpose.msra.mxu0 0.0
    %4925 = vmatprep.subr.mxu0 0.0
    %4926 = vmatpush2.xpose.msra.mxu0 0.0
    %4927 = vmatprep.subr.mxu0 0.0
    %4928 = vmatpush2.xpose.msra.mxu0 0.0
    %4929 = vmatprep.subr.mxu0 0.0
    %4930 = vmatpush2.xpose.msra.mxu0 0.0
    %4931 = vmatprep.subr.mxu0 0.0
    %4932 = vmatpush2.xpose.msra.mxu0 0.0
    %4933 = vmatprep.subr.mxu0 0.0
    %4934 = vmatpush2.xpose.msra.mxu0 0.0
    %4935 = vmatprep.subr.mxu0 0.0
    %4936 = vmatpush2.xpose.msra.mxu0 0.0
    %4937 = vmatprep.mubr.f32.mxu0 0.0
    %4938 = vmatmul.mubr.f32.gmra.mxu0 %v4869
    %v4939 = vpop.f32.mrf.mxu0
    %v4940 = vadd.f32 %v477, %v4939
    %v4941 = vpop.f32.mrf.mxu0
    %4942 = vdwg.mxu0
    %4943 = vrot.lane.b32.xlu0 %v409, 104
    %v4944 = vpop.permute.xlu0 %4943
    %4945 = vrot.lane.b32.xlu0 %v409, 72
    %v4946 = vpop.permute.xlu0 %4945
    %v4947 = vsel %vm517, %v4944, 0
    %v4949 = vsel %vm517, %v4946, 0
    %4951 = vmatprep.subr.mxu0 0.0
    %4952 = vmatpush1.xpose.msra.mxu0 0.0
    %4953 = vmatprep.subr.mxu0 0.0
    %4954 = vmatpush1.xpose.msra.mxu0 0.0
    %4955 = vmatprep.subr.mxu0 0.0
    %4956 = vmatpush1.xpose.msra.mxu0 0.0
    %4957 = vmatprep.subr.mxu0 0.0
    %4958 = vmatpush1.xpose.msra.mxu0 0.0
    %4959 = vmatprep.subr.mxu0 0.0
    %4960 = vmatpush1.xpose.msra.mxu0 0.0
    %4961 = vmatprep.subr.mxu0 0.0
    %4962 = vmatpush1.xpose.msra.mxu0 0.0
    %4963 = vmatprep.subr.mxu0 0.0
    %4964 = vmatpush1.xpose.msra.mxu0 0.0
    %4965 = vmatprep.subr.mxu0 0.0
    %4966 = vmatpush1.xpose.msra.mxu0 0.0
    %4967 = vmatprep.subr.mxu0 0.0
    %4968 = vmatpush1.xpose.msra.mxu0 0.0
    %4969 = vmatprep.subr.mxu0 0.0
    %4970 = vmatpush1.xpose.msra.mxu0 0.0
    %4971 = vmatprep.subr.mxu0 0.0
    %4972 = vmatpush1.xpose.msra.mxu0 0.0
    %4973 = vmatprep.subr.mxu0 0.0
    %4974 = vmatpush1.xpose.msra.mxu0 0.0
    %4975 = vmatprep.subr.mxu0 0.0
    %4976 = vmatpush1.xpose.msra.mxu0 0.0
    %4977 = vmatprep.subr.mxu0 0.0
    %4978 = vmatpush1.xpose.msra.mxu0 0.0
    %4979 = vmatprep.subr.mxu0 0.0
    %4980 = vmatpush1.xpose.msra.mxu0 0.0
    %4981 = vmatprep.subr.mxu0 0.0
    %4982 = vmatpush1.xpose.msra.mxu0 %v4949
    %4983 = vmatprep.subr.mxu0 0.0
    %4984 = vmatpush2.xpose.msra.mxu0 0.0
    %4985 = vmatprep.subr.mxu0 0.0
    %4986 = vmatpush2.xpose.msra.mxu0 0.0
    %4987 = vmatprep.subr.mxu0 0.0
    %4988 = vmatpush2.xpose.msra.mxu0 0.0
    %4989 = vmatprep.subr.mxu0 0.0
    %4990 = vmatpush2.xpose.msra.mxu0 0.0
    %4991 = vmatprep.subr.mxu0 0.0
    %4992 = vmatpush2.xpose.msra.mxu0 0.0
    %4993 = vmatprep.subr.mxu0 0.0
    %4994 = vmatpush2.xpose.msra.mxu0 0.0
    %4995 = vmatprep.subr.mxu0 0.0
    %4996 = vmatpush2.xpose.msra.mxu0 0.0
    %4997 = vmatprep.subr.mxu0 0.0
    %4998 = vmatpush2.xpose.msra.mxu0 0.0
    %4999 = vmatprep.subr.mxu0 0.0
    %5000 = vmatpush2.xpose.msra.mxu0 0.0
    %5001 = vmatprep.subr.mxu0 0.0
    %5002 = vmatpush2.xpose.msra.mxu0 0.0
    %5003 = vmatprep.subr.mxu0 0.0
    %5004 = vmatpush2.xpose.msra.mxu0 0.0
    %5005 = vmatprep.subr.mxu0 0.0
    %5006 = vmatpush2.xpose.msra.mxu0 0.0
    %5007 = vmatprep.subr.mxu0 0.0
    %5008 = vmatpush2.xpose.msra.mxu0 0.0
    %5009 = vmatprep.subr.mxu0 0.0
    %5010 = vmatpush2.xpose.msra.mxu0 0.0
    %5011 = vmatprep.subr.mxu0 0.0
    %5012 = vmatpush2.xpose.msra.mxu0 0.0
    %5013 = vmatprep.subr.mxu0 0.0
    %5014 = vmatpush2.xpose.msra.mxu0 0.0
    %5015 = vmatprep.mubr.f32.mxu0 0.0
    %5016 = vmatmul.mubr.f32.gmra.mxu0 %v4947
    %v5017 = vpop.f32.mrf.mxu0
    %v5018 = vadd.f32 %v481, %v5017
    %v5019 = vpop.f32.mrf.mxu0
    %5020 = vdwg.mxu0
    %5021 = vrot.lane.b32.xlu0 %v414, 104
    %v5022 = vpop.permute.xlu0 %5021
    %5023 = vrot.lane.b32.xlu0 %v414, 72
    %v5024 = vpop.permute.xlu0 %5023
    %v5025 = vsel %vm517, %v5022, 0
    %v5027 = vsel %vm517, %v5024, 0
    %5029 = vmatprep.subr.mxu0 0.0
    %5030 = vmatpush1.xpose.msra.mxu0 0.0
    %5031 = vmatprep.subr.mxu0 0.0
    %5032 = vmatpush1.xpose.msra.mxu0 0.0
    %5033 = vmatprep.subr.mxu0 0.0
    %5034 = vmatpush1.xpose.msra.mxu0 0.0
    %5035 = vmatprep.subr.mxu0 0.0
    %5036 = vmatpush1.xpose.msra.mxu0 0.0
    %5037 = vmatprep.subr.mxu0 0.0
    %5038 = vmatpush1.xpose.msra.mxu0 0.0
    %5039 = vmatprep.subr.mxu0 0.0
    %5040 = vmatpush1.xpose.msra.mxu0 0.0
    %5041 = vmatprep.subr.mxu0 0.0
    %5042 = vmatpush1.xpose.msra.mxu0 0.0
    %5043 = vmatprep.subr.mxu0 0.0
    %5044 = vmatpush1.xpose.msra.mxu0 0.0
    %5045 = vmatprep.subr.mxu0 0.0
    %5046 = vmatpush1.xpose.msra.mxu0 0.0
    %5047 = vmatprep.subr.mxu0 0.0
    %5048 = vmatpush1.xpose.msra.mxu0 0.0
    %5049 = vmatprep.subr.mxu0 0.0
    %5050 = vmatpush1.xpose.msra.mxu0 0.0
    %5051 = vmatprep.subr.mxu0 0.0
    %5052 = vmatpush1.xpose.msra.mxu0 0.0
    %5053 = vmatprep.subr.mxu0 0.0
    %5054 = vmatpush1.xpose.msra.mxu0 0.0
    %5055 = vmatprep.subr.mxu0 0.0
    %5056 = vmatpush1.xpose.msra.mxu0 0.0
    %5057 = vmatprep.subr.mxu0 0.0
    %5058 = vmatpush1.xpose.msra.mxu0 0.0
    %5059 = vmatprep.subr.mxu0 0.0
    %5060 = vmatpush1.xpose.msra.mxu0 %v5027
    %5061 = vmatprep.subr.mxu0 0.0
    %5062 = vmatpush2.xpose.msra.mxu0 0.0
    %5063 = vmatprep.subr.mxu0 0.0
    %5064 = vmatpush2.xpose.msra.mxu0 0.0
    %5065 = vmatprep.subr.mxu0 0.0
    %5066 = vmatpush2.xpose.msra.mxu0 0.0
    %5067 = vmatprep.subr.mxu0 0.0
    %5068 = vmatpush2.xpose.msra.mxu0 0.0
    %5069 = vmatprep.subr.mxu0 0.0
    %5070 = vmatpush2.xpose.msra.mxu0 0.0
    %5071 = vmatprep.subr.mxu0 0.0
    %5072 = vmatpush2.xpose.msra.mxu0 0.0
    %5073 = vmatprep.subr.mxu0 0.0
    %5074 = vmatpush2.xpose.msra.mxu0 0.0
    %5075 = vmatprep.subr.mxu0 0.0
    %5076 = vmatpush2.xpose.msra.mxu0 0.0
    %5077 = vmatprep.subr.mxu0 0.0
    %5078 = vmatpush2.xpose.msra.mxu0 0.0
    %5079 = vmatprep.subr.mxu0 0.0
    %5080 = vmatpush2.xpose.msra.mxu0 0.0
    %5081 = vmatprep.subr.mxu0 0.0
    %5082 = vmatpush2.xpose.msra.mxu0 0.0
    %5083 = vmatprep.subr.mxu0 0.0
    %5084 = vmatpush2.xpose.msra.mxu0 0.0
    %5085 = vmatprep.subr.mxu0 0.0
    %5086 = vmatpush2.xpose.msra.mxu0 0.0
    %5087 = vmatprep.subr.mxu0 0.0
    %5088 = vmatpush2.xpose.msra.mxu0 0.0
    %5089 = vmatprep.subr.mxu0 0.0
    %5090 = vmatpush2.xpose.msra.mxu0 0.0
    %5091 = vmatprep.subr.mxu0 0.0
    %5092 = vmatpush2.xpose.msra.mxu0 0.0
    %5093 = vmatprep.mubr.f32.mxu0 0.0
    %5094 = vmatmul.mubr.f32.gmra.mxu0 %v5025
    %v5095 = vpop.f32.mrf.mxu0
    %v5096 = vadd.f32 %v485, %v5095
    %v5097 = vpop.f32.mrf.mxu0
    %5098 = vdwg.mxu0
    %5099 = vrot.lane.b32.xlu0 %v419, 104
    %v5100 = vpop.permute.xlu0 %5099
    %5101 = vrot.lane.b32.xlu0 %v419, 72
    %v5102 = vpop.permute.xlu0 %5101
    %v5103 = vsel %vm517, %v5100, 0
    %v5105 = vsel %vm517, %v5102, 0
    %5107 = vmatprep.subr.mxu0 0.0
    %5108 = vmatpush1.xpose.msra.mxu0 0.0
    %5109 = vmatprep.subr.mxu0 0.0
    %5110 = vmatpush1.xpose.msra.mxu0 0.0
    %5111 = vmatprep.subr.mxu0 0.0
    %5112 = vmatpush1.xpose.msra.mxu0 0.0
    %5113 = vmatprep.subr.mxu0 0.0
    %5114 = vmatpush1.xpose.msra.mxu0 0.0
    %5115 = vmatprep.subr.mxu0 0.0
    %5116 = vmatpush1.xpose.msra.mxu0 0.0
    %5117 = vmatprep.subr.mxu0 0.0
    %5118 = vmatpush1.xpose.msra.mxu0 0.0
    %5119 = vmatprep.subr.mxu0 0.0
    %5120 = vmatpush1.xpose.msra.mxu0 0.0
    %5121 = vmatprep.subr.mxu0 0.0
    %5122 = vmatpush1.xpose.msra.mxu0 0.0
    %5123 = vmatprep.subr.mxu0 0.0
    %5124 = vmatpush1.xpose.msra.mxu0 0.0
    %5125 = vmatprep.subr.mxu0 0.0
    %5126 = vmatpush1.xpose.msra.mxu0 0.0
    %5127 = vmatprep.subr.mxu0 0.0
    %5128 = vmatpush1.xpose.msra.mxu0 0.0
    %5129 = vmatprep.subr.mxu0 0.0
    %5130 = vmatpush1.xpose.msra.mxu0 0.0
    %5131 = vmatprep.subr.mxu0 0.0
    %5132 = vmatpush1.xpose.msra.mxu0 0.0
    %5133 = vmatprep.subr.mxu0 0.0
    %5134 = vmatpush1.xpose.msra.mxu0 0.0
    %5135 = vmatprep.subr.mxu0 0.0
    %5136 = vmatpush1.xpose.msra.mxu0 0.0
    %5137 = vmatprep.subr.mxu0 0.0
    %5138 = vmatpush1.xpose.msra.mxu0 %v5105
    %5139 = vmatprep.subr.mxu0 0.0
    %5140 = vmatpush2.xpose.msra.mxu0 0.0
    %5141 = vmatprep.subr.mxu0 0.0
    %5142 = vmatpush2.xpose.msra.mxu0 0.0
    %5143 = vmatprep.subr.mxu0 0.0
    %5144 = vmatpush2.xpose.msra.mxu0 0.0
    %5145 = vmatprep.subr.mxu0 0.0
    %5146 = vmatpush2.xpose.msra.mxu0 0.0
    %5147 = vmatprep.subr.mxu0 0.0
    %5148 = vmatpush2.xpose.msra.mxu0 0.0
    %5149 = vmatprep.subr.mxu0 0.0
    %5150 = vmatpush2.xpose.msra.mxu0 0.0
    %5151 = vmatprep.subr.mxu0 0.0
    %5152 = vmatpush2.xpose.msra.mxu0 0.0
    %5153 = vmatprep.subr.mxu0 0.0
    %5154 = vmatpush2.xpose.msra.mxu0 0.0
    %5155 = vmatprep.subr.mxu0 0.0
    %5156 = vmatpush2.xpose.msra.mxu0 0.0
    %5157 = vmatprep.subr.mxu0 0.0
    %5158 = vmatpush2.xpose.msra.mxu0 0.0
    %5159 = vmatprep.subr.mxu0 0.0
    %5160 = vmatpush2.xpose.msra.mxu0 0.0
    %5161 = vmatprep.subr.mxu0 0.0
    %5162 = vmatpush2.xpose.msra.mxu0 0.0
    %5163 = vmatprep.subr.mxu0 0.0
    %5164 = vmatpush2.xpose.msra.mxu0 0.0
    %5165 = vmatprep.subr.mxu0 0.0
    %5166 = vmatpush2.xpose.msra.mxu0 0.0
    %5167 = vmatprep.subr.mxu0 0.0
    %5168 = vmatpush2.xpose.msra.mxu0 0.0
    %5169 = vmatprep.subr.mxu0 0.0
    %5170 = vmatpush2.xpose.msra.mxu0 0.0
    %5171 = vmatprep.mubr.f32.mxu0 0.0
    %5172 = vmatmul.mubr.f32.gmra.mxu0 %v5103
    %v5173 = vpop.f32.mrf.mxu0
    %v5174 = vadd.f32 %v489, %v5173
    %v5175 = vpop.f32.mrf.mxu0
    %5176 = vdwg.mxu0
    %5177 = vrot.lane.b32.xlu0 %v424, 104
    %v5178 = vpop.permute.xlu0 %5177
    %5179 = vrot.lane.b32.xlu0 %v424, 72
    %v5180 = vpop.permute.xlu0 %5179
    %v5181 = vsel %vm517, %v5178, 0
    %v5183 = vsel %vm517, %v5180, 0
    %5185 = vmatprep.subr.mxu0 0.0
    %5186 = vmatpush1.xpose.msra.mxu0 0.0
    %5187 = vmatprep.subr.mxu0 0.0
    %5188 = vmatpush1.xpose.msra.mxu0 0.0
    %5189 = vmatprep.subr.mxu0 0.0
    %5190 = vmatpush1.xpose.msra.mxu0 0.0
    %5191 = vmatprep.subr.mxu0 0.0
    %5192 = vmatpush1.xpose.msra.mxu0 0.0
    %5193 = vmatprep.subr.mxu0 0.0
    %5194 = vmatpush1.xpose.msra.mxu0 0.0
    %5195 = vmatprep.subr.mxu0 0.0
    %5196 = vmatpush1.xpose.msra.mxu0 0.0
    %5197 = vmatprep.subr.mxu0 0.0
    %5198 = vmatpush1.xpose.msra.mxu0 0.0
    %5199 = vmatprep.subr.mxu0 0.0
    %5200 = vmatpush1.xpose.msra.mxu0 0.0
    %5201 = vmatprep.subr.mxu0 0.0
    %5202 = vmatpush1.xpose.msra.mxu0 0.0
    %5203 = vmatprep.subr.mxu0 0.0
    %5204 = vmatpush1.xpose.msra.mxu0 0.0
    %5205 = vmatprep.subr.mxu0 0.0
    %5206 = vmatpush1.xpose.msra.mxu0 0.0
    %5207 = vmatprep.subr.mxu0 0.0
    %5208 = vmatpush1.xpose.msra.mxu0 0.0
    %5209 = vmatprep.subr.mxu0 0.0
    %5210 = vmatpush1.xpose.msra.mxu0 0.0
    %5211 = vmatprep.subr.mxu0 0.0
    %5212 = vmatpush1.xpose.msra.mxu0 0.0
    %5213 = vmatprep.subr.mxu0 0.0
    %5214 = vmatpush1.xpose.msra.mxu0 0.0
    %5215 = vmatprep.subr.mxu0 0.0
    %5216 = vmatpush1.xpose.msra.mxu0 %v5183
    %5217 = vmatprep.subr.mxu0 0.0
    %5218 = vmatpush2.xpose.msra.mxu0 0.0
    %5219 = vmatprep.subr.mxu0 0.0
    %5220 = vmatpush2.xpose.msra.mxu0 0.0
    %5221 = vmatprep.subr.mxu0 0.0
    %5222 = vmatpush2.xpose.msra.mxu0 0.0
    %5223 = vmatprep.subr.mxu0 0.0
    %5224 = vmatpush2.xpose.msra.mxu0 0.0
    %5225 = vmatprep.subr.mxu0 0.0
    %5226 = vmatpush2.xpose.msra.mxu0 0.0
    %5227 = vmatprep.subr.mxu0 0.0
    %5228 = vmatpush2.xpose.msra.mxu0 0.0
    %5229 = vmatprep.subr.mxu0 0.0
    %5230 = vmatpush2.xpose.msra.mxu0 0.0
    %5231 = vmatprep.subr.mxu0 0.0
    %5232 = vmatpush2.xpose.msra.mxu0 0.0
    %5233 = vmatprep.subr.mxu0 0.0
    %5234 = vmatpush2.xpose.msra.mxu0 0.0
    %5235 = vmatprep.subr.mxu0 0.0
    %5236 = vmatpush2.xpose.msra.mxu0 0.0
    %5237 = vmatprep.subr.mxu0 0.0
    %5238 = vmatpush2.xpose.msra.mxu0 0.0
    %5239 = vmatprep.subr.mxu0 0.0
    %5240 = vmatpush2.xpose.msra.mxu0 0.0
    %5241 = vmatprep.subr.mxu0 0.0
    %5242 = vmatpush2.xpose.msra.mxu0 0.0
    %5243 = vmatprep.subr.mxu0 0.0
    %5244 = vmatpush2.xpose.msra.mxu0 0.0
    %5245 = vmatprep.subr.mxu0 0.0
    %5246 = vmatpush2.xpose.msra.mxu0 0.0
    %5247 = vmatprep.subr.mxu0 0.0
    %5248 = vmatpush2.xpose.msra.mxu0 0.0
    %5249 = vmatprep.mubr.f32.mxu0 0.0
    %5250 = vmatmul.mubr.f32.gmra.mxu0 %v5181
    %v5251 = vpop.f32.mrf.mxu0
    %v5252 = vadd.f32 %v493, %v5251
    %v5253 = vpop.f32.mrf.mxu0
    %5254 = vdwg.mxu0
    %5255 = vrot.lane.b32.xlu0 %v429, 104
    %v5256 = vpop.permute.xlu0 %5255
    %5257 = vrot.lane.b32.xlu0 %v429, 72
    %v5258 = vpop.permute.xlu0 %5257
    %v5259 = vsel %vm517, %v5256, 0
    %v5261 = vsel %vm517, %v5258, 0
    %5263 = vmatprep.subr.mxu0 0.0
    %5264 = vmatpush1.xpose.msra.mxu0 0.0
    %5265 = vmatprep.subr.mxu0 0.0
    %5266 = vmatpush1.xpose.msra.mxu0 0.0
    %5267 = vmatprep.subr.mxu0 0.0
    %5268 = vmatpush1.xpose.msra.mxu0 0.0
    %5269 = vmatprep.subr.mxu0 0.0
    %5270 = vmatpush1.xpose.msra.mxu0 0.0
    %5271 = vmatprep.subr.mxu0 0.0
    %5272 = vmatpush1.xpose.msra.mxu0 0.0
    %5273 = vmatprep.subr.mxu0 0.0
    %5274 = vmatpush1.xpose.msra.mxu0 0.0
    %5275 = vmatprep.subr.mxu0 0.0
    %5276 = vmatpush1.xpose.msra.mxu0 0.0
    %5277 = vmatprep.subr.mxu0 0.0
    %5278 = vmatpush1.xpose.msra.mxu0 0.0
    %5279 = vmatprep.subr.mxu0 0.0
    %5280 = vmatpush1.xpose.msra.mxu0 0.0
    %5281 = vmatprep.subr.mxu0 0.0
    %5282 = vmatpush1.xpose.msra.mxu0 0.0
    %5283 = vmatprep.subr.mxu0 0.0
    %5284 = vmatpush1.xpose.msra.mxu0 0.0
    %5285 = vmatprep.subr.mxu0 0.0
    %5286 = vmatpush1.xpose.msra.mxu0 0.0
    %5287 = vmatprep.subr.mxu0 0.0
    %5288 = vmatpush1.xpose.msra.mxu0 0.0
    %5289 = vmatprep.subr.mxu0 0.0
    %5290 = vmatpush1.xpose.msra.mxu0 0.0
    %5291 = vmatprep.subr.mxu0 0.0
    %5292 = vmatpush1.xpose.msra.mxu0 0.0
    %5293 = vmatprep.subr.mxu0 0.0
    %5294 = vmatpush1.xpose.msra.mxu0 %v5261
    %5295 = vmatprep.subr.mxu0 0.0
    %5296 = vmatpush2.xpose.msra.mxu0 0.0
    %5297 = vmatprep.subr.mxu0 0.0
    %5298 = vmatpush2.xpose.msra.mxu0 0.0
    %5299 = vmatprep.subr.mxu0 0.0
    %5300 = vmatpush2.xpose.msra.mxu0 0.0
    %5301 = vmatprep.subr.mxu0 0.0
    %5302 = vmatpush2.xpose.msra.mxu0 0.0
    %5303 = vmatprep.subr.mxu0 0.0
    %5304 = vmatpush2.xpose.msra.mxu0 0.0
    %5305 = vmatprep.subr.mxu0 0.0
    %5306 = vmatpush2.xpose.msra.mxu0 0.0
    %5307 = vmatprep.subr.mxu0 0.0
    %5308 = vmatpush2.xpose.msra.mxu0 0.0
    %5309 = vmatprep.subr.mxu0 0.0
    %5310 = vmatpush2.xpose.msra.mxu0 0.0
    %5311 = vmatprep.subr.mxu0 0.0
    %5312 = vmatpush2.xpose.msra.mxu0 0.0
    %5313 = vmatprep.subr.mxu0 0.0
    %5314 = vmatpush2.xpose.msra.mxu0 0.0
    %5315 = vmatprep.subr.mxu0 0.0
    %5316 = vmatpush2.xpose.msra.mxu0 0.0
    %5317 = vmatprep.subr.mxu0 0.0
    %5318 = vmatpush2.xpose.msra.mxu0 0.0
    %5319 = vmatprep.subr.mxu0 0.0
    %5320 = vmatpush2.xpose.msra.mxu0 0.0
    %5321 = vmatprep.subr.mxu0 0.0
    %5322 = vmatpush2.xpose.msra.mxu0 0.0
    %5323 = vmatprep.subr.mxu0 0.0
    %5324 = vmatpush2.xpose.msra.mxu0 0.0
    %5325 = vmatprep.subr.mxu0 0.0
    %5326 = vmatpush2.xpose.msra.mxu0 0.0
    %5327 = vmatprep.mubr.f32.mxu0 0.0
    %5328 = vmatmul.mubr.f32.gmra.mxu0 %v5259
    %v5329 = vpop.f32.mrf.mxu0
    %v5330 = vadd.f32 %v497, %v5329
    %v5331 = vpop.f32.mrf.mxu0
    %5332 = vdwg.mxu0
    %5333 = vrot.lane.b32.xlu0 %v434, 104
    %v5334 = vpop.permute.xlu0 %5333
    %5335 = vrot.lane.b32.xlu0 %v434, 72
    %v5336 = vpop.permute.xlu0 %5335
    %v5337 = vsel %vm517, %v5334, 0
    %v5339 = vsel %vm517, %v5336, 0
    %5341 = vmatprep.subr.mxu0 0.0
    %5342 = vmatpush1.xpose.msra.mxu0 0.0
    %5343 = vmatprep.subr.mxu0 0.0
    %5344 = vmatpush1.xpose.msra.mxu0 0.0
    %5345 = vmatprep.subr.mxu0 0.0
    %5346 = vmatpush1.xpose.msra.mxu0 0.0
    %5347 = vmatprep.subr.mxu0 0.0
    %5348 = vmatpush1.xpose.msra.mxu0 0.0
    %5349 = vmatprep.subr.mxu0 0.0
    %5350 = vmatpush1.xpose.msra.mxu0 0.0
    %5351 = vmatprep.subr.mxu0 0.0
    %5352 = vmatpush1.xpose.msra.mxu0 0.0
    %5353 = vmatprep.subr.mxu0 0.0
    %5354 = vmatpush1.xpose.msra.mxu0 0.0
    %5355 = vmatprep.subr.mxu0 0.0
    %5356 = vmatpush1.xpose.msra.mxu0 0.0
    %5357 = vmatprep.subr.mxu0 0.0
    %5358 = vmatpush1.xpose.msra.mxu0 0.0
    %5359 = vmatprep.subr.mxu0 0.0
    %5360 = vmatpush1.xpose.msra.mxu0 0.0
    %5361 = vmatprep.subr.mxu0 0.0
    %5362 = vmatpush1.xpose.msra.mxu0 0.0
    %5363 = vmatprep.subr.mxu0 0.0
    %5364 = vmatpush1.xpose.msra.mxu0 0.0
    %5365 = vmatprep.subr.mxu0 0.0
    %5366 = vmatpush1.xpose.msra.mxu0 0.0
    %5367 = vmatprep.subr.mxu0 0.0
    %5368 = vmatpush1.xpose.msra.mxu0 0.0
    %5369 = vmatprep.subr.mxu0 0.0
    %5370 = vmatpush1.xpose.msra.mxu0 0.0
    %5371 = vmatprep.subr.mxu0 0.0
    %5372 = vmatpush1.xpose.msra.mxu0 %v5339
    %5373 = vmatprep.subr.mxu0 0.0
    %5374 = vmatpush2.xpose.msra.mxu0 0.0
    %5375 = vmatprep.subr.mxu0 0.0
    %5376 = vmatpush2.xpose.msra.mxu0 0.0
    %5377 = vmatprep.subr.mxu0 0.0
    %5378 = vmatpush2.xpose.msra.mxu0 0.0
    %5379 = vmatprep.subr.mxu0 0.0
    %5380 = vmatpush2.xpose.msra.mxu0 0.0
    %5381 = vmatprep.subr.mxu0 0.0
    %5382 = vmatpush2.xpose.msra.mxu0 0.0
    %5383 = vmatprep.subr.mxu0 0.0
    %5384 = vmatpush2.xpose.msra.mxu0 0.0
    %5385 = vmatprep.subr.mxu0 0.0
    %5386 = vmatpush2.xpose.msra.mxu0 0.0
    %5387 = vmatprep.subr.mxu0 0.0
    %5388 = vmatpush2.xpose.msra.mxu0 0.0
    %5389 = vmatprep.subr.mxu0 0.0
    %5390 = vmatpush2.xpose.msra.mxu0 0.0
    %5391 = vmatprep.subr.mxu0 0.0
    %5392 = vmatpush2.xpose.msra.mxu0 0.0
    %5393 = vmatprep.subr.mxu0 0.0
    %5394 = vmatpush2.xpose.msra.mxu0 0.0
    %5395 = vmatprep.subr.mxu0 0.0
    %5396 = vmatpush2.xpose.msra.mxu0 0.0
    %5397 = vmatprep.subr.mxu0 0.0
    %5398 = vmatpush2.xpose.msra.mxu0 0.0
    %5399 = vmatprep.subr.mxu0 0.0
    %5400 = vmatpush2.xpose.msra.mxu0 0.0
    %5401 = vmatprep.subr.mxu0 0.0
    %5402 = vmatpush2.xpose.msra.mxu0 0.0
    %5403 = vmatprep.subr.mxu0 0.0
    %5404 = vmatpush2.xpose.msra.mxu0 0.0
    %5405 = vmatprep.mubr.f32.mxu0 0.0
    %5406 = vmatmul.mubr.f32.gmra.mxu0 %v5337
    %v5407 = vpop.f32.mrf.mxu0
    %v5408 = vadd.f32 %v501, %v5407
    %v5409 = vpop.f32.mrf.mxu0
    %5410 = vdwg.mxu0
    %5411 = vrot.lane.b32.xlu0 %v439, 104
    %v5412 = vpop.permute.xlu0 %5411
    %5413 = vrot.lane.b32.xlu0 %v439, 72
    %v5414 = vpop.permute.xlu0 %5413
    %v5415 = vsel %vm517, %v5412, 0
    %v5417 = vsel %vm517, %v5414, 0
    %5419 = vmatprep.subr.mxu0 0.0
    %5420 = vmatpush1.xpose.msra.mxu0 0.0
    %5421 = vmatprep.subr.mxu0 0.0
    %5422 = vmatpush1.xpose.msra.mxu0 0.0
    %5423 = vmatprep.subr.mxu0 0.0
    %5424 = vmatpush1.xpose.msra.mxu0 0.0
    %5425 = vmatprep.subr.mxu0 0.0
    %5426 = vmatpush1.xpose.msra.mxu0 0.0
    %5427 = vmatprep.subr.mxu0 0.0
    %5428 = vmatpush1.xpose.msra.mxu0 0.0
    %5429 = vmatprep.subr.mxu0 0.0
    %5430 = vmatpush1.xpose.msra.mxu0 0.0
    %5431 = vmatprep.subr.mxu0 0.0
    %5432 = vmatpush1.xpose.msra.mxu0 0.0
    %5433 = vmatprep.subr.mxu0 0.0
    %5434 = vmatpush1.xpose.msra.mxu0 0.0
    %5435 = vmatprep.subr.mxu0 0.0
    %5436 = vmatpush1.xpose.msra.mxu0 0.0
    %5437 = vmatprep.subr.mxu0 0.0
    %5438 = vmatpush1.xpose.msra.mxu0 0.0
    %5439 = vmatprep.subr.mxu0 0.0
    %5440 = vmatpush1.xpose.msra.mxu0 0.0
    %5441 = vmatprep.subr.mxu0 0.0
    %5442 = vmatpush1.xpose.msra.mxu0 0.0
    %5443 = vmatprep.subr.mxu0 0.0
    %5444 = vmatpush1.xpose.msra.mxu0 0.0
    %5445 = vmatprep.subr.mxu0 0.0
    %5446 = vmatpush1.xpose.msra.mxu0 0.0
    %5447 = vmatprep.subr.mxu0 0.0
    %5448 = vmatpush1.xpose.msra.mxu0 0.0
    %5449 = vmatprep.subr.mxu0 0.0
    %5450 = vmatpush1.xpose.msra.mxu0 %v5417
    %5451 = vmatprep.subr.mxu0 0.0
    %5452 = vmatpush2.xpose.msra.mxu0 0.0
    %5453 = vmatprep.subr.mxu0 0.0
    %5454 = vmatpush2.xpose.msra.mxu0 0.0
    %5455 = vmatprep.subr.mxu0 0.0
    %5456 = vmatpush2.xpose.msra.mxu0 0.0
    %5457 = vmatprep.subr.mxu0 0.0
    %5458 = vmatpush2.xpose.msra.mxu0 0.0
    %5459 = vmatprep.subr.mxu0 0.0
    %5460 = vmatpush2.xpose.msra.mxu0 0.0
    %5461 = vmatprep.subr.mxu0 0.0
    %5462 = vmatpush2.xpose.msra.mxu0 0.0
    %5463 = vmatprep.subr.mxu0 0.0
    %5464 = vmatpush2.xpose.msra.mxu0 0.0
    %5465 = vmatprep.subr.mxu0 0.0
    %5466 = vmatpush2.xpose.msra.mxu0 0.0
    %5467 = vmatprep.subr.mxu0 0.0
    %5468 = vmatpush2.xpose.msra.mxu0 0.0
    %5469 = vmatprep.subr.mxu0 0.0
    %5470 = vmatpush2.xpose.msra.mxu0 0.0
    %5471 = vmatprep.subr.mxu0 0.0
    %5472 = vmatpush2.xpose.msra.mxu0 0.0
    %5473 = vmatprep.subr.mxu0 0.0
    %5474 = vmatpush2.xpose.msra.mxu0 0.0
    %5475 = vmatprep.subr.mxu0 0.0
    %5476 = vmatpush2.xpose.msra.mxu0 0.0
    %5477 = vmatprep.subr.mxu0 0.0
    %5478 = vmatpush2.xpose.msra.mxu0 0.0
    %5479 = vmatprep.subr.mxu0 0.0
    %5480 = vmatpush2.xpose.msra.mxu0 0.0
    %5481 = vmatprep.subr.mxu0 0.0
    %5482 = vmatpush2.xpose.msra.mxu0 0.0
    %5483 = vmatprep.mubr.f32.mxu0 0.0
    %5484 = vmatmul.mubr.f32.gmra.mxu0 %v5415
    %v5485 = vpop.f32.mrf.mxu0
    %v5486 = vadd.f32 %v505, %v5485
    %v5487 = vpop.f32.mrf.mxu0
    %5488 = vdwg.mxu0
    %v5489 = vsel %vm517, %v4940, -inf
    %5490 = vmax.xlane.f32.xlu0 %v5489
    %v5491 = vpop.xlane.xlu0 %5490
    %v5492 = vsel %vm517, %v5018, -inf
    %5493 = vmax.xlane.f32.xlu0 %v5492
    %v5494 = vpop.xlane.xlu0 %5493
    %v5495 = vsel %vm517, %v5096, -inf
    %5496 = vmax.xlane.f32.xlu0 %v5495
    %v5497 = vpop.xlane.xlu0 %5496
    %v5498 = vsel %vm517, %v5174, -inf
    %5499 = vmax.xlane.f32.xlu0 %v5498
    %v5500 = vpop.xlane.xlu0 %5499
    %v5501 = vsel %vm517, %v5252, -inf
    %5502 = vmax.xlane.f32.xlu0 %v5501
    %v5503 = vpop.xlane.xlu0 %5502
    %v5504 = vsel %vm517, %v5330, -inf
    %5505 = vmax.xlane.f32.xlu0 %v5504
    %v5506 = vpop.xlane.xlu0 %5505
    %v5507 = vsel %vm517, %v5408, -inf
    %5508 = vmax.xlane.f32.xlu0 %v5507
    %v5509 = vpop.xlane.xlu0 %5508
    %v5510 = vsel %vm517, %v5486, -inf
    %5511 = vmax.xlane.f32.xlu0 %v5510
    %v5512 = vpop.xlane.xlu0 %5511
    %v5513 = vsub.f32 %v4940, %v5491
    %v5514 = vsub.f32 %v5018, %v5494
    %v5515 = vsub.f32 %v5096, %v5497
    %v5516 = vsub.f32 %v5174, %v5500
    %v5517 = vsub.f32 %v5252, %v5503
    %v5518 = vsub.f32 %v5330, %v5506
    %v5519 = vsub.f32 %v5408, %v5509
    %v5520 = vsub.f32 %v5486, %v5512
    %v5521 = vmul.f32 %v5513, 1.442695
    %v5522 = vpow.pop %v5521
    %v5523 = vmul.f32 %v5514, 1.442695
    %v5524 = vpow.pop %v5523
    %v5525 = vmul.f32 %v5515, 1.442695
    %v5526 = vpow.pop %v5525
    %v5527 = vmul.f32 %v5516, 1.442695
    %v5528 = vpow.pop %v5527
    %v5529 = vmul.f32 %v5517, 1.442695
    %v5530 = vpow.pop %v5529
    %v5531 = vmul.f32 %v5518, 1.442695
    %v5532 = vpow.pop %v5531
    %v5533 = vmul.f32 %v5519, 1.442695
    %v5534 = vpow.pop %v5533
    %v5535 = vmul.f32 %v5520, 1.442695
    %v5536 = vpow.pop %v5535
    %v5537 = vsel %vm517, %v5522, 0.0
    %5538 = vadd.xlane.f32.xlu0 %v5537
    %v5539 = vpop.xlane.xlu0 %5538
    %v5540 = vsel %vm517, %v5524, 0.0
    %5541 = vadd.xlane.f32.xlu0 %v5540
    %v5542 = vpop.xlane.xlu0 %5541
    %v5543 = vsel %vm517, %v5526, 0.0
    %5544 = vadd.xlane.f32.xlu0 %v5543
    %v5545 = vpop.xlane.xlu0 %5544
    %v5546 = vsel %vm517, %v5528, 0.0
    %5547 = vadd.xlane.f32.xlu0 %v5546
    %v5548 = vpop.xlane.xlu0 %5547
    %v5549 = vsel %vm517, %v5530, 0.0
    %5550 = vadd.xlane.f32.xlu0 %v5549
    %v5551 = vpop.xlane.xlu0 %5550
    %v5552 = vsel %vm517, %v5532, 0.0
    %5553 = vadd.xlane.f32.xlu0 %v5552
    %v5554 = vpop.xlane.xlu0 %5553
    %v5555 = vsel %vm517, %v5534, 0.0
    %5556 = vadd.xlane.f32.xlu0 %v5555
    %v5557 = vpop.xlane.xlu0 %5556
    %v5558 = vsel %vm517, %v5536, 0.0
    %5559 = vadd.xlane.f32.xlu0 %v5558
    %v5560 = vpop.xlane.xlu0 %5559
    %v5561 = vrcp.pop %v5539
    %v5562 = vrcp.pop %v5542
    %v5563 = vrcp.pop %v5545
    %v5564 = vrcp.pop %v5548
    %v5565 = vrcp.pop %v5551
    %v5566 = vrcp.pop %v5554
    %v5567 = vrcp.pop %v5557
    %v5568 = vrcp.pop %v5560
    %v5569 = vmul.f32 %v5522, %v5561
    %v5570 = vmul.f32 %v5524, %v5562
    %v5571 = vmul.f32 %v5526, %v5563
    %v5572 = vmul.f32 %v5528, %v5564
    %v5573 = vmul.f32 %v5530, %v5565
    %v5574 = vmul.f32 %v5532, %v5566
    %v5575 = vmul.f32 %v5534, %v5567
    %v5576 = vmul.f32 %v5536, %v5568
    %5577 = vrot.lane.b32.xlu0 %v404, 40
    %v5578 = vpop.permute.xlu0 %5577
    %v5581 = vsel %vm517, %v5569, 0
    %5583 = vmatprep.subr.mxu0 0.0
    %5584 = vmatpush1.msra.mxu0 0.0
    %5585 = vmatprep.subr.mxu0 0.0
    %5586 = vmatpush1.msra.mxu0 0.0
    %5587 = vmatprep.subr.mxu0 0.0
    %5588 = vmatpush1.msra.mxu0 0.0
    %5589 = vmatprep.subr.mxu0 0.0
    %5590 = vmatpush1.msra.mxu0 0.0
    %5591 = vmatprep.subr.mxu0 0.0
    %5592 = vmatpush1.msra.mxu0 0.0
    %5593 = vmatprep.subr.mxu0 0.0
    %5594 = vmatpush1.msra.mxu0 0.0
    %5595 = vmatprep.subr.mxu0 0.0
    %5596 = vmatpush1.msra.mxu0 0.0
    %5597 = vmatprep.subr.mxu0 0.0
    %5598 = vmatpush1.msra.mxu0 0.0
    %5599 = vmatprep.subr.mxu0 0.0
    %5600 = vmatpush1.msra.mxu0 0.0
    %5601 = vmatprep.subr.mxu0 0.0
    %5602 = vmatpush1.msra.mxu0 0.0
    %5603 = vmatprep.subr.mxu0 0.0
    %5604 = vmatpush1.msra.mxu0 0.0
    %5605 = vmatprep.subr.mxu0 0.0
    %5606 = vmatpush1.msra.mxu0 0.0
    %5607 = vmatprep.subr.mxu0 0.0
    %5608 = vmatpush1.msra.mxu0 0.0
    %5609 = vmatprep.subr.mxu0 0.0
    %5610 = vmatpush1.msra.mxu0 0.0
    %5611 = vmatprep.subr.mxu0 0.0
    %5612 = vmatpush1.msra.mxu0 0.0
    %5613 = vmatprep.subr.mxu0 0.0
    %5614 = vmatpush1.msra.mxu0 %v5578
    %5615 = vmatprep.subr.mxu0 0.0
    %5616 = vmatpush2.msra.mxu0 0.0
    %5617 = vmatprep.subr.mxu0 0.0
    %5618 = vmatpush2.msra.mxu0 0.0
    %5619 = vmatprep.subr.mxu0 0.0
    %5620 = vmatpush2.msra.mxu0 0.0
    %5621 = vmatprep.subr.mxu0 0.0
    %5622 = vmatpush2.msra.mxu0 0.0
    %5623 = vmatprep.subr.mxu0 0.0
    %5624 = vmatpush2.msra.mxu0 0.0
    %5625 = vmatprep.subr.mxu0 0.0
    %5626 = vmatpush2.msra.mxu0 0.0
    %5627 = vmatprep.subr.mxu0 0.0
    %5628 = vmatpush2.msra.mxu0 0.0
    %5629 = vmatprep.subr.mxu0 0.0
    %5630 = vmatpush2.msra.mxu0 0.0
    %5631 = vmatprep.subr.mxu0 0.0
    %5632 = vmatpush2.msra.mxu0 0.0
    %5633 = vmatprep.subr.mxu0 0.0
    %5634 = vmatpush2.msra.mxu0 0.0
    %5635 = vmatprep.subr.mxu0 0.0
    %5636 = vmatpush2.msra.mxu0 0.0
    %5637 = vmatprep.subr.mxu0 0.0
    %5638 = vmatpush2.msra.mxu0 0.0
    %5639 = vmatprep.subr.mxu0 0.0
    %5640 = vmatpush2.msra.mxu0 0.0
    %5641 = vmatprep.subr.mxu0 0.0
    %5642 = vmatpush2.msra.mxu0 0.0
    %5643 = vmatprep.subr.mxu0 0.0
    %5644 = vmatpush2.msra.mxu0 0.0
    %5645 = vmatprep.subr.mxu0 0.0
    %5646 = vmatpush2.msra.mxu0 0.0
    %5647 = vmatprep.mubr.f32.mxu0 0.0
    %5648 = vmatmul.mubr.f32.gmra.mxu0 %v5581
    %v5649 = vpop.f32.mrf.mxu0
    %v5650 = vadd.f32 0.0, %v5649
    %v5651 = vpop.f32.mrf.mxu0
    %5652 = vdwg.mxu0
    %5653 = vrot.lane.b32.xlu0 %v409, 40
    %v5654 = vpop.permute.xlu0 %5653
    %v5657 = vsel %vm517, %v5570, 0
    %5659 = vmatprep.subr.mxu0 0.0
    %5660 = vmatpush1.msra.mxu0 0.0
    %5661 = vmatprep.subr.mxu0 0.0
    %5662 = vmatpush1.msra.mxu0 0.0
    %5663 = vmatprep.subr.mxu0 0.0
    %5664 = vmatpush1.msra.mxu0 0.0
    %5665 = vmatprep.subr.mxu0 0.0
    %5666 = vmatpush1.msra.mxu0 0.0
    %5667 = vmatprep.subr.mxu0 0.0
    %5668 = vmatpush1.msra.mxu0 0.0
    %5669 = vmatprep.subr.mxu0 0.0
    %5670 = vmatpush1.msra.mxu0 0.0
    %5671 = vmatprep.subr.mxu0 0.0
    %5672 = vmatpush1.msra.mxu0 0.0
    %5673 = vmatprep.subr.mxu0 0.0
    %5674 = vmatpush1.msra.mxu0 0.0
    %5675 = vmatprep.subr.mxu0 0.0
    %5676 = vmatpush1.msra.mxu0 0.0
    %5677 = vmatprep.subr.mxu0 0.0
    %5678 = vmatpush1.msra.mxu0 0.0
    %5679 = vmatprep.subr.mxu0 0.0
    %5680 = vmatpush1.msra.mxu0 0.0
    %5681 = vmatprep.subr.mxu0 0.0
    %5682 = vmatpush1.msra.mxu0 0.0
    %5683 = vmatprep.subr.mxu0 0.0
    %5684 = vmatpush1.msra.mxu0 0.0
    %5685 = vmatprep.subr.mxu0 0.0
    %5686 = vmatpush1.msra.mxu0 0.0
    %5687 = vmatprep.subr.mxu0 0.0
    %5688 = vmatpush1.msra.mxu0 0.0
    %5689 = vmatprep.subr.mxu0 0.0
    %5690 = vmatpush1.msra.mxu0 %v5654
    %5691 = vmatprep.subr.mxu0 0.0
    %5692 = vmatpush2.msra.mxu0 0.0
    %5693 = vmatprep.subr.mxu0 0.0
    %5694 = vmatpush2.msra.mxu0 0.0
    %5695 = vmatprep.subr.mxu0 0.0
    %5696 = vmatpush2.msra.mxu0 0.0
    %5697 = vmatprep.subr.mxu0 0.0
    %5698 = vmatpush2.msra.mxu0 0.0
    %5699 = vmatprep.subr.mxu0 0.0
    %5700 = vmatpush2.msra.mxu0 0.0
    %5701 = vmatprep.subr.mxu0 0.0
    %5702 = vmatpush2.msra.mxu0 0.0
    %5703 = vmatprep.subr.mxu0 0.0
    %5704 = vmatpush2.msra.mxu0 0.0
    %5705 = vmatprep.subr.mxu0 0.0
    %5706 = vmatpush2.msra.mxu0 0.0
    %5707 = vmatprep.subr.mxu0 0.0
    %5708 = vmatpush2.msra.mxu0 0.0
    %5709 = vmatprep.subr.mxu0 0.0
    %5710 = vmatpush2.msra.mxu0 0.0
    %5711 = vmatprep.subr.mxu0 0.0
    %5712 = vmatpush2.msra.mxu0 0.0
    %5713 = vmatprep.subr.mxu0 0.0
    %5714 = vmatpush2.msra.mxu0 0.0
    %5715 = vmatprep.subr.mxu0 0.0
    %5716 = vmatpush2.msra.mxu0 0.0
    %5717 = vmatprep.subr.mxu0 0.0
    %5718 = vmatpush2.msra.mxu0 0.0
    %5719 = vmatprep.subr.mxu0 0.0
    %5720 = vmatpush2.msra.mxu0 0.0
    %5721 = vmatprep.subr.mxu0 0.0
    %5722 = vmatpush2.msra.mxu0 0.0
    %5723 = vmatprep.mubr.f32.mxu0 0.0
    %5724 = vmatmul.mubr.f32.gmra.mxu0 %v5657
    %v5725 = vpop.f32.mrf.mxu0
    %v5726 = vadd.f32 0.0, %v5725
    %v5727 = vpop.f32.mrf.mxu0
    %5728 = vdwg.mxu0
    %5729 = vrot.lane.b32.xlu0 %v414, 40
    %v5730 = vpop.permute.xlu0 %5729
    %v5733 = vsel %vm517, %v5571, 0
    %5735 = vmatprep.subr.mxu0 0.0
    %5736 = vmatpush1.msra.mxu0 0.0
    %5737 = vmatprep.subr.mxu0 0.0
    %5738 = vmatpush1.msra.mxu0 0.0
    %5739 = vmatprep.subr.mxu0 0.0
    %5740 = vmatpush1.msra.mxu0 0.0
    %5741 = vmatprep.subr.mxu0 0.0
    %5742 = vmatpush1.msra.mxu0 0.0
    %5743 = vmatprep.subr.mxu0 0.0
    %5744 = vmatpush1.msra.mxu0 0.0
    %5745 = vmatprep.subr.mxu0 0.0
    %5746 = vmatpush1.msra.mxu0 0.0
    %5747 = vmatprep.subr.mxu0 0.0
    %5748 = vmatpush1.msra.mxu0 0.0
    %5749 = vmatprep.subr.mxu0 0.0
    %5750 = vmatpush1.msra.mxu0 0.0
    %5751 = vmatprep.subr.mxu0 0.0
    %5752 = vmatpush1.msra.mxu0 0.0
    %5753 = vmatprep.subr.mxu0 0.0
    %5754 = vmatpush1.msra.mxu0 0.0
    %5755 = vmatprep.subr.mxu0 0.0
    %5756 = vmatpush1.msra.mxu0 0.0
    %5757 = vmatprep.subr.mxu0 0.0
    %5758 = vmatpush1.msra.mxu0 0.0
    %5759 = vmatprep.subr.mxu0 0.0
    %5760 = vmatpush1.msra.mxu0 0.0
    %5761 = vmatprep.subr.mxu0 0.0
    %5762 = vmatpush1.msra.mxu0 0.0
    %5763 = vmatprep.subr.mxu0 0.0
    %5764 = vmatpush1.msra.mxu0 0.0
    %5765 = vmatprep.subr.mxu0 0.0
    %5766 = vmatpush1.msra.mxu0 %v5730
    %5767 = vmatprep.subr.mxu0 0.0
    %5768 = vmatpush2.msra.mxu0 0.0
    %5769 = vmatprep.subr.mxu0 0.0
    %5770 = vmatpush2.msra.mxu0 0.0
    %5771 = vmatprep.subr.mxu0 0.0
    %5772 = vmatpush2.msra.mxu0 0.0
    %5773 = vmatprep.subr.mxu0 0.0
    %5774 = vmatpush2.msra.mxu0 0.0
    %5775 = vmatprep.subr.mxu0 0.0
    %5776 = vmatpush2.msra.mxu0 0.0
    %5777 = vmatprep.subr.mxu0 0.0
    %5778 = vmatpush2.msra.mxu0 0.0
    %5779 = vmatprep.subr.mxu0 0.0
    %5780 = vmatpush2.msra.mxu0 0.0
    %5781 = vmatprep.subr.mxu0 0.0
    %5782 = vmatpush2.msra.mxu0 0.0
    %5783 = vmatprep.subr.mxu0 0.0
    %5784 = vmatpush2.msra.mxu0 0.0
    %5785 = vmatprep.subr.mxu0 0.0
    %5786 = vmatpush2.msra.mxu0 0.0
    %5787 = vmatprep.subr.mxu0 0.0
    %5788 = vmatpush2.msra.mxu0 0.0
    %5789 = vmatprep.subr.mxu0 0.0
    %5790 = vmatpush2.msra.mxu0 0.0
    %5791 = vmatprep.subr.mxu0 0.0
    %5792 = vmatpush2.msra.mxu0 0.0
    %5793 = vmatprep.subr.mxu0 0.0
    %5794 = vmatpush2.msra.mxu0 0.0
    %5795 = vmatprep.subr.mxu0 0.0
    %5796 = vmatpush2.msra.mxu0 0.0
    %5797 = vmatprep.subr.mxu0 0.0
    %5798 = vmatpush2.msra.mxu0 0.0
    %5799 = vmatprep.mubr.f32.mxu0 0.0
    %5800 = vmatmul.mubr.f32.gmra.mxu0 %v5733
    %v5801 = vpop.f32.mrf.mxu0
    %v5802 = vadd.f32 0.0, %v5801
    %v5803 = vpop.f32.mrf.mxu0
    %5804 = vdwg.mxu0
    %5805 = vrot.lane.b32.xlu0 %v419, 40
    %v5806 = vpop.permute.xlu0 %5805
    %v5809 = vsel %vm517, %v5572, 0
    %5811 = vmatprep.subr.mxu0 0.0
    %5812 = vmatpush1.msra.mxu0 0.0
    %5813 = vmatprep.subr.mxu0 0.0
    %5814 = vmatpush1.msra.mxu0 0.0
    %5815 = vmatprep.subr.mxu0 0.0
    %5816 = vmatpush1.msra.mxu0 0.0
    %5817 = vmatprep.subr.mxu0 0.0
    %5818 = vmatpush1.msra.mxu0 0.0
    %5819 = vmatprep.subr.mxu0 0.0
    %5820 = vmatpush1.msra.mxu0 0.0
    %5821 = vmatprep.subr.mxu0 0.0
    %5822 = vmatpush1.msra.mxu0 0.0
    %5823 = vmatprep.subr.mxu0 0.0
    %5824 = vmatpush1.msra.mxu0 0.0
    %5825 = vmatprep.subr.mxu0 0.0
    %5826 = vmatpush1.msra.mxu0 0.0
    %5827 = vmatprep.subr.mxu0 0.0
    %5828 = vmatpush1.msra.mxu0 0.0
    %5829 = vmatprep.subr.mxu0 0.0
    %5830 = vmatpush1.msra.mxu0 0.0
    %5831 = vmatprep.subr.mxu0 0.0
    %5832 = vmatpush1.msra.mxu0 0.0
    %5833 = vmatprep.subr.mxu0 0.0
    %5834 = vmatpush1.msra.mxu0 0.0
    %5835 = vmatprep.subr.mxu0 0.0
    %5836 = vmatpush1.msra.mxu0 0.0
    %5837 = vmatprep.subr.mxu0 0.0
    %5838 = vmatpush1.msra.mxu0 0.0
    %5839 = vmatprep.subr.mxu0 0.0
    %5840 = vmatpush1.msra.mxu0 0.0
    %5841 = vmatprep.subr.mxu0 0.0
    %5842 = vmatpush1.msra.mxu0 %v5806
    %5843 = vmatprep.subr.mxu0 0.0
    %5844 = vmatpush2.msra.mxu0 0.0
    %5845 = vmatprep.subr.mxu0 0.0
    %5846 = vmatpush2.msra.mxu0 0.0
    %5847 = vmatprep.subr.mxu0 0.0
    %5848 = vmatpush2.msra.mxu0 0.0
    %5849 = vmatprep.subr.mxu0 0.0
    %5850 = vmatpush2.msra.mxu0 0.0
    %5851 = vmatprep.subr.mxu0 0.0
    %5852 = vmatpush2.msra.mxu0 0.0
    %5853 = vmatprep.subr.mxu0 0.0
    %5854 = vmatpush2.msra.mxu0 0.0
    %5855 = vmatprep.subr.mxu0 0.0
    %5856 = vmatpush2.msra.mxu0 0.0
    %5857 = vmatprep.subr.mxu0 0.0
    %5858 = vmatpush2.msra.mxu0 0.0
    %5859 = vmatprep.subr.mxu0 0.0
    %5860 = vmatpush2.msra.mxu0 0.0
    %5861 = vmatprep.subr.mxu0 0.0
    %5862 = vmatpush2.msra.mxu0 0.0
    %5863 = vmatprep.subr.mxu0 0.0
    %5864 = vmatpush2.msra.mxu0 0.0
    %5865 = vmatprep.subr.mxu0 0.0
    %5866 = vmatpush2.msra.mxu0 0.0
    %5867 = vmatprep.subr.mxu0 0.0
    %5868 = vmatpush2.msra.mxu0 0.0
    %5869 = vmatprep.subr.mxu0 0.0
    %5870 = vmatpush2.msra.mxu0 0.0
    %5871 = vmatprep.subr.mxu0 0.0
    %5872 = vmatpush2.msra.mxu0 0.0
    %5873 = vmatprep.subr.mxu0 0.0
    %5874 = vmatpush2.msra.mxu0 0.0
    %5875 = vmatprep.mubr.f32.mxu0 0.0
    %5876 = vmatmul.mubr.f32.gmra.mxu0 %v5809
    %v5877 = vpop.f32.mrf.mxu0
    %v5878 = vadd.f32 0.0, %v5877
    %v5879 = vpop.f32.mrf.mxu0
    %5880 = vdwg.mxu0
    %5881 = vrot.lane.b32.xlu0 %v424, 40
    %v5882 = vpop.permute.xlu0 %5881
    %v5885 = vsel %vm517, %v5573, 0
    %5887 = vmatprep.subr.mxu0 0.0
    %5888 = vmatpush1.msra.mxu0 0.0
    %5889 = vmatprep.subr.mxu0 0.0
    %5890 = vmatpush1.msra.mxu0 0.0
    %5891 = vmatprep.subr.mxu0 0.0
    %5892 = vmatpush1.msra.mxu0 0.0
    %5893 = vmatprep.subr.mxu0 0.0
    %5894 = vmatpush1.msra.mxu0 0.0
    %5895 = vmatprep.subr.mxu0 0.0
    %5896 = vmatpush1.msra.mxu0 0.0
    %5897 = vmatprep.subr.mxu0 0.0
    %5898 = vmatpush1.msra.mxu0 0.0
    %5899 = vmatprep.subr.mxu0 0.0
    %5900 = vmatpush1.msra.mxu0 0.0
    %5901 = vmatprep.subr.mxu0 0.0
    %5902 = vmatpush1.msra.mxu0 0.0
    %5903 = vmatprep.subr.mxu0 0.0
    %5904 = vmatpush1.msra.mxu0 0.0
    %5905 = vmatprep.subr.mxu0 0.0
    %5906 = vmatpush1.msra.mxu0 0.0
    %5907 = vmatprep.subr.mxu0 0.0
    %5908 = vmatpush1.msra.mxu0 0.0
    %5909 = vmatprep.subr.mxu0 0.0
    %5910 = vmatpush1.msra.mxu0 0.0
    %5911 = vmatprep.subr.mxu0 0.0
    %5912 = vmatpush1.msra.mxu0 0.0
    %5913 = vmatprep.subr.mxu0 0.0
    %5914 = vmatpush1.msra.mxu0 0.0
    %5915 = vmatprep.subr.mxu0 0.0
    %5916 = vmatpush1.msra.mxu0 0.0
    %5917 = vmatprep.subr.mxu0 0.0
    %5918 = vmatpush1.msra.mxu0 %v5882
    %5919 = vmatprep.subr.mxu0 0.0
    %5920 = vmatpush2.msra.mxu0 0.0
    %5921 = vmatprep.subr.mxu0 0.0
    %5922 = vmatpush2.msra.mxu0 0.0
    %5923 = vmatprep.subr.mxu0 0.0
    %5924 = vmatpush2.msra.mxu0 0.0
    %5925 = vmatprep.subr.mxu0 0.0
    %5926 = vmatpush2.msra.mxu0 0.0
    %5927 = vmatprep.subr.mxu0 0.0
    %5928 = vmatpush2.msra.mxu0 0.0
    %5929 = vmatprep.subr.mxu0 0.0
    %5930 = vmatpush2.msra.mxu0 0.0
    %5931 = vmatprep.subr.mxu0 0.0
    %5932 = vmatpush2.msra.mxu0 0.0
    %5933 = vmatprep.subr.mxu0 0.0
    %5934 = vmatpush2.msra.mxu0 0.0
    %5935 = vmatprep.subr.mxu0 0.0
    %5936 = vmatpush2.msra.mxu0 0.0
    %5937 = vmatprep.subr.mxu0 0.0
    %5938 = vmatpush2.msra.mxu0 0.0
    %5939 = vmatprep.subr.mxu0 0.0
    %5940 = vmatpush2.msra.mxu0 0.0
    %5941 = vmatprep.subr.mxu0 0.0
    %5942 = vmatpush2.msra.mxu0 0.0
    %5943 = vmatprep.subr.mxu0 0.0
    %5944 = vmatpush2.msra.mxu0 0.0
    %5945 = vmatprep.subr.mxu0 0.0
    %5946 = vmatpush2.msra.mxu0 0.0
    %5947 = vmatprep.subr.mxu0 0.0
    %5948 = vmatpush2.msra.mxu0 0.0
    %5949 = vmatprep.subr.mxu0 0.0
    %5950 = vmatpush2.msra.mxu0 0.0
    %5951 = vmatprep.mubr.f32.mxu0 0.0
    %5952 = vmatmul.mubr.f32.gmra.mxu0 %v5885
    %v5953 = vpop.f32.mrf.mxu0
    %v5954 = vadd.f32 0.0, %v5953
    %v5955 = vpop.f32.mrf.mxu0
    %5956 = vdwg.mxu0
    %5957 = vrot.lane.b32.xlu0 %v429, 40
    %v5958 = vpop.permute.xlu0 %5957
    %v5961 = vsel %vm517, %v5574, 0
    %5963 = vmatprep.subr.mxu0 0.0
    %5964 = vmatpush1.msra.mxu0 0.0
    %5965 = vmatprep.subr.mxu0 0.0
    %5966 = vmatpush1.msra.mxu0 0.0
    %5967 = vmatprep.subr.mxu0 0.0
    %5968 = vmatpush1.msra.mxu0 0.0
    %5969 = vmatprep.subr.mxu0 0.0
    %5970 = vmatpush1.msra.mxu0 0.0
    %5971 = vmatprep.subr.mxu0 0.0
    %5972 = vmatpush1.msra.mxu0 0.0
    %5973 = vmatprep.subr.mxu0 0.0
    %5974 = vmatpush1.msra.mxu0 0.0
    %5975 = vmatprep.subr.mxu0 0.0
    %5976 = vmatpush1.msra.mxu0 0.0
    %5977 = vmatprep.subr.mxu0 0.0
    %5978 = vmatpush1.msra.mxu0 0.0
    %5979 = vmatprep.subr.mxu0 0.0
    %5980 = vmatpush1.msra.mxu0 0.0
    %5981 = vmatprep.subr.mxu0 0.0
    %5982 = vmatpush1.msra.mxu0 0.0
    %5983 = vmatprep.subr.mxu0 0.0
    %5984 = vmatpush1.msra.mxu0 0.0
    %5985 = vmatprep.subr.mxu0 0.0
    %5986 = vmatpush1.msra.mxu0 0.0
    %5987 = vmatprep.subr.mxu0 0.0
    %5988 = vmatpush1.msra.mxu0 0.0
    %5989 = vmatprep.subr.mxu0 0.0
    %5990 = vmatpush1.msra.mxu0 0.0
    %5991 = vmatprep.subr.mxu0 0.0
    %5992 = vmatpush1.msra.mxu0 0.0
    %5993 = vmatprep.subr.mxu0 0.0
    %5994 = vmatpush1.msra.mxu0 %v5958
    %5995 = vmatprep.subr.mxu0 0.0
    %5996 = vmatpush2.msra.mxu0 0.0
    %5997 = vmatprep.subr.mxu0 0.0
    %5998 = vmatpush2.msra.mxu0 0.0
    %5999 = vmatprep.subr.mxu0 0.0
    %6000 = vmatpush2.msra.mxu0 0.0
    %6001 = vmatprep.subr.mxu0 0.0
    %6002 = vmatpush2.msra.mxu0 0.0
    %6003 = vmatprep.subr.mxu0 0.0
    %6004 = vmatpush2.msra.mxu0 0.0
    %6005 = vmatprep.subr.mxu0 0.0
    %6006 = vmatpush2.msra.mxu0 0.0
    %6007 = vmatprep.subr.mxu0 0.0
    %6008 = vmatpush2.msra.mxu0 0.0
    %6009 = vmatprep.subr.mxu0 0.0
    %6010 = vmatpush2.msra.mxu0 0.0
    %6011 = vmatprep.subr.mxu0 0.0
    %6012 = vmatpush2.msra.mxu0 0.0
    %6013 = vmatprep.subr.mxu0 0.0
    %6014 = vmatpush2.msra.mxu0 0.0
    %6015 = vmatprep.subr.mxu0 0.0
    %6016 = vmatpush2.msra.mxu0 0.0
    %6017 = vmatprep.subr.mxu0 0.0
    %6018 = vmatpush2.msra.mxu0 0.0
    %6019 = vmatprep.subr.mxu0 0.0
    %6020 = vmatpush2.msra.mxu0 0.0
    %6021 = vmatprep.subr.mxu0 0.0
    %6022 = vmatpush2.msra.mxu0 0.0
    %6023 = vmatprep.subr.mxu0 0.0
    %6024 = vmatpush2.msra.mxu0 0.0
    %6025 = vmatprep.subr.mxu0 0.0
    %6026 = vmatpush2.msra.mxu0 0.0
    %6027 = vmatprep.mubr.f32.mxu0 0.0
    %6028 = vmatmul.mubr.f32.gmra.mxu0 %v5961
    %v6029 = vpop.f32.mrf.mxu0
    %v6030 = vadd.f32 0.0, %v6029
    %v6031 = vpop.f32.mrf.mxu0
    %6032 = vdwg.mxu0
    %6033 = vrot.lane.b32.xlu0 %v434, 40
    %v6034 = vpop.permute.xlu0 %6033
    %v6037 = vsel %vm517, %v5575, 0
    %6039 = vmatprep.subr.mxu0 0.0
    %6040 = vmatpush1.msra.mxu0 0.0
    %6041 = vmatprep.subr.mxu0 0.0
    %6042 = vmatpush1.msra.mxu0 0.0
    %6043 = vmatprep.subr.mxu0 0.0
    %6044 = vmatpush1.msra.mxu0 0.0
    %6045 = vmatprep.subr.mxu0 0.0
    %6046 = vmatpush1.msra.mxu0 0.0
    %6047 = vmatprep.subr.mxu0 0.0
    %6048 = vmatpush1.msra.mxu0 0.0
    %6049 = vmatprep.subr.mxu0 0.0
    %6050 = vmatpush1.msra.mxu0 0.0
    %6051 = vmatprep.subr.mxu0 0.0
    %6052 = vmatpush1.msra.mxu0 0.0
    %6053 = vmatprep.subr.mxu0 0.0
    %6054 = vmatpush1.msra.mxu0 0.0
    %6055 = vmatprep.subr.mxu0 0.0
    %6056 = vmatpush1.msra.mxu0 0.0
    %6057 = vmatprep.subr.mxu0 0.0
    %6058 = vmatpush1.msra.mxu0 0.0
    %6059 = vmatprep.subr.mxu0 0.0
    %6060 = vmatpush1.msra.mxu0 0.0
    %6061 = vmatprep.subr.mxu0 0.0
    %6062 = vmatpush1.msra.mxu0 0.0
    %6063 = vmatprep.subr.mxu0 0.0
    %6064 = vmatpush1.msra.mxu0 0.0
    %6065 = vmatprep.subr.mxu0 0.0
    %6066 = vmatpush1.msra.mxu0 0.0
    %6067 = vmatprep.subr.mxu0 0.0
    %6068 = vmatpush1.msra.mxu0 0.0
    %6069 = vmatprep.subr.mxu0 0.0
    %6070 = vmatpush1.msra.mxu0 %v6034
    %6071 = vmatprep.subr.mxu0 0.0
    %6072 = vmatpush2.msra.mxu0 0.0
    %6073 = vmatprep.subr.mxu0 0.0
    %6074 = vmatpush2.msra.mxu0 0.0
    %6075 = vmatprep.subr.mxu0 0.0
    %6076 = vmatpush2.msra.mxu0 0.0
    %6077 = vmatprep.subr.mxu0 0.0
    %6078 = vmatpush2.msra.mxu0 0.0
    %6079 = vmatprep.subr.mxu0 0.0
    %6080 = vmatpush2.msra.mxu0 0.0
    %6081 = vmatprep.subr.mxu0 0.0
    %6082 = vmatpush2.msra.mxu0 0.0
    %6083 = vmatprep.subr.mxu0 0.0
    %6084 = vmatpush2.msra.mxu0 0.0
    %6085 = vmatprep.subr.mxu0 0.0
    %6086 = vmatpush2.msra.mxu0 0.0
    %6087 = vmatprep.subr.mxu0 0.0
    %6088 = vmatpush2.msra.mxu0 0.0
    %6089 = vmatprep.subr.mxu0 0.0
    %6090 = vmatpush2.msra.mxu0 0.0
    %6091 = vmatprep.subr.mxu0 0.0
    %6092 = vmatpush2.msra.mxu0 0.0
    %6093 = vmatprep.subr.mxu0 0.0
    %6094 = vmatpush2.msra.mxu0 0.0
    %6095 = vmatprep.subr.mxu0 0.0
    %6096 = vmatpush2.msra.mxu0 0.0
    %6097 = vmatprep.subr.mxu0 0.0
    %6098 = vmatpush2.msra.mxu0 0.0
    %6099 = vmatprep.subr.mxu0 0.0
    %6100 = vmatpush2.msra.mxu0 0.0
    %6101 = vmatprep.subr.mxu0 0.0
    %6102 = vmatpush2.msra.mxu0 0.0
    %6103 = vmatprep.mubr.f32.mxu0 0.0
    %6104 = vmatmul.mubr.f32.gmra.mxu0 %v6037
    %v6105 = vpop.f32.mrf.mxu0
    %v6106 = vadd.f32 0.0, %v6105
    %v6107 = vpop.f32.mrf.mxu0
    %6108 = vdwg.mxu0
    %6109 = vrot.lane.b32.xlu0 %v439, 40
    %v6110 = vpop.permute.xlu0 %6109
    %v6113 = vsel %vm517, %v5576, 0
    %6115 = vmatprep.subr.mxu0 0.0
    %6116 = vmatpush1.msra.mxu0 0.0
    %6117 = vmatprep.subr.mxu0 0.0
    %6118 = vmatpush1.msra.mxu0 0.0
    %6119 = vmatprep.subr.mxu0 0.0
    %6120 = vmatpush1.msra.mxu0 0.0
    %6121 = vmatprep.subr.mxu0 0.0
    %6122 = vmatpush1.msra.mxu0 0.0
    %6123 = vmatprep.subr.mxu0 0.0
    %6124 = vmatpush1.msra.mxu0 0.0
    %6125 = vmatprep.subr.mxu0 0.0
    %6126 = vmatpush1.msra.mxu0 0.0
    %6127 = vmatprep.subr.mxu0 0.0
    %6128 = vmatpush1.msra.mxu0 0.0
    %6129 = vmatprep.subr.mxu0 0.0
    %6130 = vmatpush1.msra.mxu0 0.0
    %6131 = vmatprep.subr.mxu0 0.0
    %6132 = vmatpush1.msra.mxu0 0.0
    %6133 = vmatprep.subr.mxu0 0.0
    %6134 = vmatpush1.msra.mxu0 0.0
    %6135 = vmatprep.subr.mxu0 0.0
    %6136 = vmatpush1.msra.mxu0 0.0
    %6137 = vmatprep.subr.mxu0 0.0
    %6138 = vmatpush1.msra.mxu0 0.0
    %6139 = vmatprep.subr.mxu0 0.0
    %6140 = vmatpush1.msra.mxu0 0.0
    %6141 = vmatprep.subr.mxu0 0.0
    %6142 = vmatpush1.msra.mxu0 0.0
    %6143 = vmatprep.subr.mxu0 0.0
    %6144 = vmatpush1.msra.mxu0 0.0
    %6145 = vmatprep.subr.mxu0 0.0
    %6146 = vmatpush1.msra.mxu0 %v6110
    %6147 = vmatprep.subr.mxu0 0.0
    %6148 = vmatpush2.msra.mxu0 0.0
    %6149 = vmatprep.subr.mxu0 0.0
    %6150 = vmatpush2.msra.mxu0 0.0
    %6151 = vmatprep.subr.mxu0 0.0
    %6152 = vmatpush2.msra.mxu0 0.0
    %6153 = vmatprep.subr.mxu0 0.0
    %6154 = vmatpush2.msra.mxu0 0.0
    %6155 = vmatprep.subr.mxu0 0.0
    %6156 = vmatpush2.msra.mxu0 0.0
    %6157 = vmatprep.subr.mxu0 0.0
    %6158 = vmatpush2.msra.mxu0 0.0
    %6159 = vmatprep.subr.mxu0 0.0
    %6160 = vmatpush2.msra.mxu0 0.0
    %6161 = vmatprep.subr.mxu0 0.0
    %6162 = vmatpush2.msra.mxu0 0.0
    %6163 = vmatprep.subr.mxu0 0.0
    %6164 = vmatpush2.msra.mxu0 0.0
    %6165 = vmatprep.subr.mxu0 0.0
    %6166 = vmatpush2.msra.mxu0 0.0
    %6167 = vmatprep.subr.mxu0 0.0
    %6168 = vmatpush2.msra.mxu0 0.0
    %6169 = vmatprep.subr.mxu0 0.0
    %6170 = vmatpush2.msra.mxu0 0.0
    %6171 = vmatprep.subr.mxu0 0.0
    %6172 = vmatpush2.msra.mxu0 0.0
    %6173 = vmatprep.subr.mxu0 0.0
    %6174 = vmatpush2.msra.mxu0 0.0
    %6175 = vmatprep.subr.mxu0 0.0
    %6176 = vmatpush2.msra.mxu0 0.0
    %6177 = vmatprep.subr.mxu0 0.0
    %6178 = vmatpush2.msra.mxu0 0.0
    %6179 = vmatprep.mubr.f32.mxu0 0.0
    %6180 = vmatmul.mubr.f32.gmra.mxu0 %v6113
    %v6181 = vpop.f32.mrf.mxu0
    %v6182 = vadd.f32 0.0, %v6181
    %v6183 = vpop.f32.mrf.mxu0
    %6184 = vdwg.mxu0
    %v6185 = vld [vmem:[%s8 + $0x18] sm:$0xff]
    %v6187 = vsel %vm517, %v5650, 0
    %v6190 = vsel %vm517, %v5726, 0
    %v6193 = vsel %vm517, %v5802, 0
    %v6196 = vsel %vm517, %v5878, 0
    %v6199 = vsel %vm517, %v5954, 0
    %v6202 = vsel %vm517, %v6030, 0
    %v6205 = vsel %vm517, %v6106, 0
    %v6208 = vsel %vm517, %v6182, 0
    %6210 = vmatprep.subr.mxu0 0.0
    %6211 = vmatpush1.msra.mxu0 0.0
    %6212 = vmatprep.subr.mxu0 0.0
    %6213 = vmatpush1.msra.mxu0 0.0
    %6214 = vmatprep.subr.mxu0 0.0
    %6215 = vmatpush1.msra.mxu0 0.0
    %6216 = vmatprep.subr.mxu0 0.0
    %6217 = vmatpush1.msra.mxu0 0.0
    %6218 = vmatprep.subr.mxu0 0.0
    %6219 = vmatpush1.msra.mxu0 0.0
    %6220 = vmatprep.subr.mxu0 0.0
    %6221 = vmatpush1.msra.mxu0 0.0
    %6222 = vmatprep.subr.mxu0 0.0
    %6223 = vmatpush1.msra.mxu0 0.0
    %6224 = vmatprep.subr.mxu0 0.0
    %6225 = vmatpush1.msra.mxu0 0.0
    %6226 = vmatprep.subr.mxu0 0.0
    %6227 = vmatpush1.msra.mxu0 0.0
    %6228 = vmatprep.subr.mxu0 0.0
    %6229 = vmatpush1.msra.mxu0 0.0
    %6230 = vmatprep.subr.mxu0 0.0
    %6231 = vmatpush1.msra.mxu0 0.0
    %6232 = vmatprep.subr.mxu0 0.0
    %6233 = vmatpush1.msra.mxu0 0.0
    %6234 = vmatprep.subr.mxu0 0.0
    %6235 = vmatpush1.msra.mxu0 0.0
    %6236 = vmatprep.subr.mxu0 0.0
    %6237 = vmatpush1.msra.mxu0 0.0
    %6238 = vmatprep.subr.mxu0 0.0
    %6239 = vmatpush1.msra.mxu0 0.0
    %6240 = vmatprep.subr.mxu0 0.0
    %6241 = vmatpush1.msra.mxu0 %v6185
    %6242 = vmatprep.subr.mxu0 0.0
    %6243 = vmatpush2.msra.mxu0 0.0
    %6244 = vmatprep.subr.mxu0 0.0
    %6245 = vmatpush2.msra.mxu0 0.0
    %6246 = vmatprep.subr.mxu0 0.0
    %6247 = vmatpush2.msra.mxu0 0.0
    %6248 = vmatprep.subr.mxu0 0.0
    %6249 = vmatpush2.msra.mxu0 0.0
    %6250 = vmatprep.subr.mxu0 0.0
    %6251 = vmatpush2.msra.mxu0 0.0
    %6252 = vmatprep.subr.mxu0 0.0
    %6253 = vmatpush2.msra.mxu0 0.0
    %6254 = vmatprep.subr.mxu0 0.0
    %6255 = vmatpush2.msra.mxu0 0.0
    %6256 = vmatprep.subr.mxu0 0.0
    %6257 = vmatpush2.msra.mxu0 0.0
    %6258 = vmatprep.subr.mxu0 0.0
    %6259 = vmatpush2.msra.mxu0 0.0
    %6260 = vmatprep.subr.mxu0 0.0
    %6261 = vmatpush2.msra.mxu0 0.0
    %6262 = vmatprep.subr.mxu0 0.0
    %6263 = vmatpush2.msra.mxu0 0.0
    %6264 = vmatprep.subr.mxu0 0.0
    %6265 = vmatpush2.msra.mxu0 0.0
    %6266 = vmatprep.subr.mxu0 0.0
    %6267 = vmatpush2.msra.mxu0 0.0
    %6268 = vmatprep.subr.mxu0 0.0
    %6269 = vmatpush2.msra.mxu0 0.0
    %6270 = vmatprep.subr.mxu0 0.0
    %6271 = vmatpush2.msra.mxu0 0.0
    %6272 = vmatprep.subr.mxu0 0.0
    %6273 = vmatpush2.msra.mxu0 0.0
    %6274 = vmatprep.mubr.f32.mxu0 0.0
    %6275 = vmatmul.mubr.f32.gmra.mxu0 %v6187
    %v6276 = vpop.f32.mrf.mxu0
    %v6277 = vadd.f32 0.0, %v6276
    %v6278 = vpop.f32.mrf.mxu0
    %6279 = vmatprep.mubr.f32.mxu0 0.0
    %6280 = vmatmul.mubr.f32.gmra.mxu0 %v6190
    %v6281 = vpop.f32.mrf.mxu0
    %v6282 = vadd.f32 0.0, %v6281
    %v6283 = vpop.f32.mrf.mxu0
    %6284 = vmatprep.mubr.f32.mxu0 0.0
    %6285 = vmatmul.mubr.f32.gmra.mxu0 %v6193
    %v6286 = vpop.f32.mrf.mxu0
    %v6287 = vadd.f32 0.0, %v6286
    %v6288 = vpop.f32.mrf.mxu0
    %6289 = vmatprep.mubr.f32.mxu0 0.0
    %6290 = vmatmul.mubr.f32.gmra.mxu0 %v6196
    %v6291 = vpop.f32.mrf.mxu0
    %v6292 = vadd.f32 0.0, %v6291
    %v6293 = vpop.f32.mrf.mxu0
    %6294 = vmatprep.mubr.f32.mxu0 0.0
    %6295 = vmatmul.mubr.f32.gmra.mxu0 %v6199
    %v6296 = vpop.f32.mrf.mxu0
    %v6297 = vadd.f32 0.0, %v6296
    %v6298 = vpop.f32.mrf.mxu0
    %6299 = vmatprep.mubr.f32.mxu0 0.0
    %6300 = vmatmul.mubr.f32.gmra.mxu0 %v6202
    %v6301 = vpop.f32.mrf.mxu0
    %v6302 = vadd.f32 0.0, %v6301
    %v6303 = vpop.f32.mrf.mxu0
    %6304 = vmatprep.mubr.f32.mxu0 0.0
    %6305 = vmatmul.mubr.f32.gmra.mxu0 %v6205
    %v6306 = vpop.f32.mrf.mxu0
    %v6307 = vadd.f32 0.0, %v6306
    %v6308 = vpop.f32.mrf.mxu0
    %6309 = vmatprep.mubr.f32.mxu0 0.0
    %6310 = vmatmul.mubr.f32.gmra.mxu0 %v6208
    %v6311 = vpop.f32.mrf.mxu0
    %v6312 = vadd.f32 0.0, %v6311
    %v6313 = vpop.f32.mrf.mxu0
    %6314 = vdwg.mxu0
    %v6315 = vadd.f32 %v4857, %v6277
    %v6316 = vadd.f32 %v4858, %v6282
    %v6317 = vadd.f32 %v4859, %v6287
    %v6318 = vadd.f32 %v4860, %v6292
    %v6319 = vadd.f32 %v4861, %v6297
    %v6320 = vadd.f32 %v4862, %v6302
    %v6321 = vadd.f32 %v4863, %v6307
    %v6322 = vadd.f32 %v4864, %v6312
    %v6323 = vld [vmem:[%s9] sm:$0x1]
    %v6325 = vlaneseq
    %v6326 = vshrl.u32 %v6325, 7
    %v6327 = vsub.s32 0, %v6326
    %v6328 = vrot.slane %v6323, %v6327
    %v6330 = vadd.f32 %v6315, %v6328
    %v6331 = vadd.f32 %v6316, %v6328
    %v6332 = vadd.f32 %v6317, %v6328
    %v6333 = vadd.f32 %v6318, %v6328
    %v6334 = vadd.f32 %v6319, %v6328
    %v6335 = vadd.f32 %v6320, %v6328
    %v6336 = vadd.f32 %v6321, %v6328
    %v6337 = vadd.f32 %v6322, %v6328
    %v6338 = vadd.f32 %v293, %v6330
    %v6339 = vadd.f32 %v294, %v6331
    %v6340 = vadd.f32 %v295, %v6332
    %v6341 = vadd.f32 %v296, %v6333
    %v6342 = vadd.f32 %v297, %v6334
    %v6343 = vadd.f32 %v298, %v6335
    %v6344 = vadd.f32 %v299, %v6336
    %v6345 = vadd.f32 %v300, %v6337
    %v6346 = vsel %vm312, %v6338, 0.0
    %6347 = vadd.xlane.f32.xlu0 %v6346
    %v6348 = vpop.xlane.xlu0 %6347
    %v6349 = vsel %vm312, %v6339, 0.0
    %6350 = vadd.xlane.f32.xlu0 %v6349
    %v6351 = vpop.xlane.xlu0 %6350
    %v6352 = vsel %vm312, %v6340, 0.0
    %6353 = vadd.xlane.f32.xlu0 %v6352
    %v6354 = vpop.xlane.xlu0 %6353
    %v6355 = vsel %vm312, %v6341, 0.0
    %6356 = vadd.xlane.f32.xlu0 %v6355
    %v6357 = vpop.xlane.xlu0 %6356
    %v6358 = vsel %vm312, %v6342, 0.0
    %6359 = vadd.xlane.f32.xlu0 %v6358
    %v6360 = vpop.xlane.xlu0 %6359
    %v6361 = vsel %vm312, %v6343, 0.0
    %6362 = vadd.xlane.f32.xlu0 %v6361
    %v6363 = vpop.xlane.xlu0 %6362
    %v6364 = vsel %vm312, %v6344, 0.0
    %6365 = vadd.xlane.f32.xlu0 %v6364
    %v6366 = vpop.xlane.xlu0 %6365
    %v6367 = vsel %vm312, %v6345, 0.0
    %6368 = vadd.xlane.f32.xlu0 %v6367
    %v6369 = vpop.xlane.xlu0 %6368
    %v6370 = vrcp.pop 32.0
    %v6371 = vmul.f32 %v6348, %v6370
    %v6372 = vmul.f32 %v6351, %v6370
    %v6373 = vmul.f32 %v6354, %v6370
    %v6374 = vmul.f32 %v6357, %v6370
    %v6375 = vmul.f32 %v6360, %v6370
    %v6376 = vmul.f32 %v6363, %v6370
    %v6377 = vmul.f32 %v6366, %v6370
    %v6378 = vmul.f32 %v6369, %v6370
    %v6379 = vsub.f32 %v6338, %v6371
    %v6380 = vsub.f32 %v6339, %v6372
    %v6381 = vsub.f32 %v6340, %v6373
    %v6382 = vsub.f32 %v6341, %v6374
    %v6383 = vsub.f32 %v6342, %v6375
    %v6384 = vsub.f32 %v6343, %v6376
    %v6385 = vsub.f32 %v6344, %v6377
    %v6386 = vsub.f32 %v6345, %v6378
    %v6387 = vmul.f32 %v6379, %v6379
    %v6388 = vmul.f32 %v6380, %v6380
    %v6389 = vmul.f32 %v6381, %v6381
    %v6390 = vmul.f32 %v6382, %v6382
    %v6391 = vmul.f32 %v6383, %v6383
    %v6392 = vmul.f32 %v6384, %v6384
    %v6393 = vmul.f32 %v6385, %v6385
    %v6394 = vmul.f32 %v6386, %v6386
    %v6395 = vsel %vm312, %v6387, 0.0
    %6396 = vadd.xlane.f32.xlu0 %v6395
    %v6397 = vpop.xlane.xlu0 %6396
    %v6398 = vsel %vm312, %v6388, 0.0
    %6399 = vadd.xlane.f32.xlu0 %v6398
    %v6400 = vpop.xlane.xlu0 %6399
    %v6401 = vsel %vm312, %v6389, 0.0
    %6402 = vadd.xlane.f32.xlu0 %v6401
    %v6403 = vpop.xlane.xlu0 %6402
    %v6404 = vsel %vm312, %v6390, 0.0
    %6405 = vadd.xlane.f32.xlu0 %v6404
    %v6406 = vpop.xlane.xlu0 %6405
    %v6407 = vsel %vm312, %v6391, 0.0
    %6408 = vadd.xlane.f32.xlu0 %v6407
    %v6409 = vpop.xlane.xlu0 %6408
    %v6410 = vsel %vm312, %v6392, 0.0
    %6411 = vadd.xlane.f32.xlu0 %v6410
    %v6412 = vpop.xlane.xlu0 %6411
    %v6413 = vsel %vm312, %v6393, 0.0
    %6414 = vadd.xlane.f32.xlu0 %v6413
    %v6415 = vpop.xlane.xlu0 %6414
    %v6416 = vsel %vm312, %v6394, 0.0
    %6417 = vadd.xlane.f32.xlu0 %v6416
    %v6418 = vpop.xlane.xlu0 %6417
    %v6419 = vmul.f32 %v6397, %v6370
    %v6420 = vmul.f32 %v6400, %v6370
    %v6421 = vmul.f32 %v6403, %v6370
    %v6422 = vmul.f32 %v6406, %v6370
    %v6423 = vmul.f32 %v6409, %v6370
    %v6424 = vmul.f32 %v6412, %v6370
    %v6425 = vmul.f32 %v6415, %v6370
    %v6426 = vmul.f32 %v6418, %v6370
    %v6427 = vadd.f32 %v6419, 1e-05
    %v6428 = vadd.f32 %v6420, 1e-05
    %v6429 = vadd.f32 %v6421, 1e-05
    %v6430 = vadd.f32 %v6422, 1e-05
    %v6431 = vadd.f32 %v6423, 1e-05
    %v6432 = vadd.f32 %v6424, 1e-05
    %v6433 = vadd.f32 %v6425, 1e-05
    %v6434 = vadd.f32 %v6426, 1e-05
    %v6435 = vrsqrt.pop %v6427
    %v6436 = vrsqrt.pop %v6428
    %v6437 = vrsqrt.pop %v6429
    %v6438 = vrsqrt.pop %v6430
    %v6439 = vrsqrt.pop %v6431
    %v6440 = vrsqrt.pop %v6432
    %v6441 = vrsqrt.pop %v6433
    %v6442 = vrsqrt.pop %v6434
    %v6443 = vmul.f32 %v6379, %v6435
    %v6444 = vmul.f32 %v6380, %v6436
    %v6445 = vmul.f32 %v6381, %v6437
    %v6446 = vmul.f32 %v6382, %v6438
    %v6447 = vmul.f32 %v6383, %v6439
    %v6448 = vmul.f32 %v6384, %v6440
    %v6449 = vmul.f32 %v6385, %v6441
    %v6450 = vmul.f32 %v6386, %v6442
    %v6451 = vld [vmem:[%s10] sm:$0x1]
    %v6453 = vlaneseq
    %v6454 = vshrl.u32 %v6453, 7
    %v6455 = vsub.s32 0, %v6454
    %v6456 = vrot.slane %v6451, %v6455
    %v6458 = vmul.f32 %v6443, %v6456
    %v6459 = vmul.f32 %v6444, %v6456
    %v6460 = vmul.f32 %v6445, %v6456
    %v6461 = vmul.f32 %v6446, %v6456
    %v6462 = vmul.f32 %v6447, %v6456
    %v6463 = vmul.f32 %v6448, %v6456
    %v6464 = vmul.f32 %v6449, %v6456
    %v6465 = vmul.f32 %v6450, %v6456
    %v6466 = vld [vmem:[%s11] sm:$0x1]
    %v6468 = vlaneseq
    %v6469 = vshrl.u32 %v6468, 7
    %v6470 = vsub.s32 0, %v6469
    %v6471 = vrot.slane %v6466, %v6470
    %v6473 = vadd.f32 %v6458, %v6471
    %v6474 = vadd.f32 %v6459, %v6471
    %v6475 = vadd.f32 %v6460, %v6471
    %v6476 = vadd.f32 %v6461, %v6471
    %v6477 = vadd.f32 %v6462, %v6471
    %v6478 = vadd.f32 %v6463, %v6471
    %v6479 = vadd.f32 %v6464, %v6471
    %v6480 = vadd.f32 %v6465, %v6471
    %v6481 = vld [vmem:[%s12] sm:$0xff]
    %v6482 = vld [vmem:[%s12 + $0x8] sm:$0xff]
    %v6483 = vld [vmem:[%s12 + $0x10] sm:$0xff]
    %v6484 = vld [vmem:[%s12 + $0x18] sm:$0xff]
    %v6485 = vld [vmem:[%s13] sm:$0x1]
    %v6487 = vlaneseq
    %v6488 = vshrl.u32 %v6487, 7
    %v6489 = vsub.s32 0, %v6488
    %v6490 = vrot.slane %v6485, %v6489
    %v6493 = vsel %vm312, %v6473, 0
    %v6496 = vsel %vm312, %v6474, 0
    %v6499 = vsel %vm312, %v6475, 0
    %v6502 = vsel %vm312, %v6476, 0
    %v6505 = vsel %vm312, %v6477, 0
    %v6508 = vsel %vm312, %v6478, 0
    %v6511 = vsel %vm312, %v6479, 0
    %v6514 = vsel %vm312, %v6480, 0
    %6516 = vmatprep.subr.mxu0 0.0
    %6517 = vmatpush1.msra.mxu0 0.0
    %6518 = vmatprep.subr.mxu0 0.0
    %6519 = vmatpush1.msra.mxu0 0.0
    %6520 = vmatprep.subr.mxu0 0.0
    %6521 = vmatpush1.msra.mxu0 0.0
    %6522 = vmatprep.subr.mxu0 0.0
    %6523 = vmatpush1.msra.mxu0 0.0
    %6524 = vmatprep.subr.mxu0 0.0
    %6525 = vmatpush1.msra.mxu0 0.0
    %6526 = vmatprep.subr.mxu0 0.0
    %6527 = vmatpush1.msra.mxu0 0.0
    %6528 = vmatprep.subr.mxu0 0.0
    %6529 = vmatpush1.msra.mxu0 0.0
    %6530 = vmatprep.subr.mxu0 0.0
    %6531 = vmatpush1.msra.mxu0 0.0
    %6532 = vmatprep.subr.mxu0 0.0
    %6533 = vmatpush1.msra.mxu0 0.0
    %6534 = vmatprep.subr.mxu0 0.0
    %6535 = vmatpush1.msra.mxu0 0.0
    %6536 = vmatprep.subr.mxu0 0.0
    %6537 = vmatpush1.msra.mxu0 0.0
    %6538 = vmatprep.subr.mxu0 0.0
    %6539 = vmatpush1.msra.mxu0 0.0
    %6540 = vmatprep.subr.mxu0 0.0
    %6541 = vmatpush1.msra.mxu0 %v6484
    %6542 = vmatprep.subr.mxu0 0.0
    %6543 = vmatpush1.msra.mxu0 %v6483
    %6544 = vmatprep.subr.mxu0 0.0
    %6545 = vmatpush1.msra.mxu0 %v6482
    %6546 = vmatprep.subr.mxu0 0.0
    %6547 = vmatpush1.msra.mxu0 %v6481
    %6548 = vmatprep.subr.mxu0 0.0
    %6549 = vmatpush2.msra.mxu0 0.0
    %6550 = vmatprep.subr.mxu0 0.0
    %6551 = vmatpush2.msra.mxu0 0.0
    %6552 = vmatprep.subr.mxu0 0.0
    %6553 = vmatpush2.msra.mxu0 0.0
    %6554 = vmatprep.subr.mxu0 0.0
    %6555 = vmatpush2.msra.mxu0 0.0
    %6556 = vmatprep.subr.mxu0 0.0
    %6557 = vmatpush2.msra.mxu0 0.0
    %6558 = vmatprep.subr.mxu0 0.0
    %6559 = vmatpush2.msra.mxu0 0.0
    %6560 = vmatprep.subr.mxu0 0.0
    %6561 = vmatpush2.msra.mxu0 0.0
    %6562 = vmatprep.subr.mxu0 0.0
    %6563 = vmatpush2.msra.mxu0 0.0
    %6564 = vmatprep.subr.mxu0 0.0
    %6565 = vmatpush2.msra.mxu0 0.0
    %6566 = vmatprep.subr.mxu0 0.0
    %6567 = vmatpush2.msra.mxu0 0.0
    %6568 = vmatprep.subr.mxu0 0.0
    %6569 = vmatpush2.msra.mxu0 0.0
    %6570 = vmatprep.subr.mxu0 0.0
    %6571 = vmatpush2.msra.mxu0 0.0
    %6572 = vmatprep.subr.mxu0 0.0
    %6573 = vmatpush2.msra.mxu0 0.0
    %6574 = vmatprep.subr.mxu0 0.0
    %6575 = vmatpush2.msra.mxu0 0.0
    %6576 = vmatprep.subr.mxu0 0.0
    %6577 = vmatpush2.msra.mxu0 0.0
    %6578 = vmatprep.subr.mxu0 0.0
    %6579 = vmatpush2.msra.mxu0 0.0
    %6580 = vmatprep.mubr.f32.mxu0 0.0
    %6581 = vmatmul.mubr.f32.gmra.mxu0 %v6493
    %v6582 = vpop.f32.mrf.mxu0
    %v6583 = vadd.f32 %v6490, %v6582
    %v6584 = vpop.f32.mrf.mxu0
    %6585 = vmatprep.mubr.f32.mxu0 0.0
    %6586 = vmatmul.mubr.f32.gmra.mxu0 %v6496
    %v6587 = vpop.f32.mrf.mxu0
    %v6588 = vadd.f32 %v6490, %v6587
    %v6589 = vpop.f32.mrf.mxu0
    %6590 = vmatprep.mubr.f32.mxu0 0.0
    %6591 = vmatmul.mubr.f32.gmra.mxu0 %v6499
    %v6592 = vpop.f32.mrf.mxu0
    %v6593 = vadd.f32 %v6490, %v6592
    %v6594 = vpop.f32.mrf.mxu0
    %6595 = vmatprep.mubr.f32.mxu0 0.0
    %6596 = vmatmul.mubr.f32.gmra.mxu0 %v6502
    %v6597 = vpop.f32.mrf.mxu0
    %v6598 = vadd.f32 %v6490, %v6597
    %v6599 = vpop.f32.mrf.mxu0
    %6600 = vmatprep.mubr.f32.mxu0 0.0
    %6601 = vmatmul.mubr.f32.gmra.mxu0 %v6505
    %v6602 = vpop.f32.mrf.mxu0
    %v6603 = vadd.f32 %v6490, %v6602
    %v6604 = vpop.f32.mrf.mxu0
    %6605 = vmatprep.mubr.f32.mxu0 0.0
    %6606 = vmatmul.mubr.f32.gmra.mxu0 %v6508
    %v6607 = vpop.f32.mrf.mxu0
    %v6608 = vadd.f32 %v6490, %v6607
    %v6609 = vpop.f32.mrf.mxu0
    %6610 = vmatprep.mubr.f32.mxu0 0.0
    %6611 = vmatmul.mubr.f32.gmra.mxu0 %v6511
    %v6612 = vpop.f32.mrf.mxu0
    %v6613 = vadd.f32 %v6490, %v6612
    %v6614 = vpop.f32.mrf.mxu0
    %6615 = vmatprep.mubr.f32.mxu0 0.0
    %6616 = vmatmul.mubr.f32.gmra.mxu0 %v6514
    %v6617 = vpop.f32.mrf.mxu0
    %v6618 = vadd.f32 %v6490, %v6617
    %v6619 = vpop.f32.mrf.mxu0
    %6620 = vdwg.mxu0
    %v6621 = vmax.f32 %v6583, 0.0
    %v6622 = vmax.f32 %v6588, 0.0
    %v6623 = vmax.f32 %v6593, 0.0
    %v6624 = vmax.f32 %v6598, 0.0
    %v6625 = vmax.f32 %v6603, 0.0
    %v6626 = vmax.f32 %v6608, 0.0
    %v6627 = vmax.f32 %v6613, 0.0
    %v6628 = vmax.f32 %v6618, 0.0
    %v6629 = vld [vmem:[%s14] sm:$0xff]
    %v6630 = vld [vmem:[%s14 + $0x8] sm:$0xff]
    %v6631 = vld [vmem:[%s14 + $0x10] sm:$0xff]
    %v6632 = vld [vmem:[%s14 + $0x18] sm:$0xff]
    %v6633 = vld [vmem:[%s14 + $0x20] sm:$0xff]
    %v6634 = vld [vmem:[%s14 + $0x28] sm:$0xff]
    %v6635 = vld [vmem:[%s14 + $0x30] sm:$0xff]
    %v6636 = vld [vmem:[%s14 + $0x38] sm:$0xff]
    %v6637 = vld [vmem:[%s15] sm:$0x1]
    %v6639 = vlaneseq
    %v6640 = vshrl.u32 %v6639, 7
    %v6641 = vsub.s32 0, %v6640
    %v6642 = vrot.slane %v6637, %v6641
    %vm6644 = vcmask 523264
    %v6646 = vsel %vm6644, %v6621, 0
    %v6649 = vsel %vm6644, %v6622, 0
    %v6652 = vsel %vm6644, %v6623, 0
    %v6655 = vsel %vm6644, %v6624, 0
    %v6658 = vsel %vm6644, %v6625, 0
    %v6661 = vsel %vm6644, %v6626, 0
    %v6664 = vsel %vm6644, %v6627, 0
    %v6667 = vsel %vm6644, %v6628, 0
    %6669 = vmatprep.subr.mxu0 0.0
    %6670 = vmatpush1.msra.mxu0 0.0
    %6671 = vmatprep.subr.mxu0 0.0
    %6672 = vmatpush1.msra.mxu0 0.0
    %6673 = vmatprep.subr.mxu0 0.0
    %6674 = vmatpush1.msra.mxu0 0.0
    %6675 = vmatprep.subr.mxu0 0.0
    %6676 = vmatpush1.msra.mxu0 0.0
    %6677 = vmatprep.subr.mxu0 0.0
    %6678 = vmatpush1.msra.mxu0 0.0
    %6679 = vmatprep.subr.mxu0 0.0
    %6680 = vmatpush1.msra.mxu0 0.0
    %6681 = vmatprep.subr.mxu0 0.0
    %6682 = vmatpush1.msra.mxu0 0.0
    %6683 = vmatprep.subr.mxu0 0.0
    %6684 = vmatpush1.msra.mxu0 0.0
    %6685 = vmatprep.subr.mxu0 0.0
    %6686 = vmatpush1.msra.mxu0 %v6636
    %6687 = vmatprep.subr.mxu0 0.0
    %6688 = vmatpush1.msra.mxu0 %v6635
    %6689 = vmatprep.subr.mxu0 0.0
    %6690 = vmatpush1.msra.mxu0 %v6634
    %6691 = vmatprep.subr.mxu0 0.0
    %6692 = vmatpush1.msra.mxu0 %v6633
    %6693 = vmatprep.subr.mxu0 0.0
    %6694 = vmatpush1.msra.mxu0 %v6632
    %6695 = vmatprep.subr.mxu0 0.0
    %6696 = vmatpush1.msra.mxu0 %v6631
    %6697 = vmatprep.subr.mxu0 0.0
    %6698 = vmatpush1.msra.mxu0 %v6630
    %6699 = vmatprep.subr.mxu0 0.0
    %6700 = vmatpush1.msra.mxu0 %v6629
    %6701 = vmatprep.subr.mxu0 0.0
    %6702 = vmatpush2.msra.mxu0 0.0
    %6703 = vmatprep.subr.mxu0 0.0
    %6704 = vmatpush2.msra.mxu0 0.0
    %6705 = vmatprep.subr.mxu0 0.0
    %6706 = vmatpush2.msra.mxu0 0.0
    %6707 = vmatprep.subr.mxu0 0.0
    %6708 = vmatpush2.msra.mxu0 0.0
    %6709 = vmatprep.subr.mxu0 0.0
    %6710 = vmatpush2.msra.mxu0 0.0
    %6711 = vmatprep.subr.mxu0 0.0
    %6712 = vmatpush2.msra.mxu0 0.0
    %6713 = vmatprep.subr.mxu0 0.0
    %6714 = vmatpush2.msra.mxu0 0.0
    %6715 = vmatprep.subr.mxu0 0.0
    %6716 = vmatpush2.msra.mxu0 0.0
    %6717 = vmatprep.subr.mxu0 0.0
    %6718 = vmatpush2.msra.mxu0 0.0
    %6719 = vmatprep.subr.mxu0 0.0
    %6720 = vmatpush2.msra.mxu0 0.0
    %6721 = vmatprep.subr.mxu0 0.0
    %6722 = vmatpush2.msra.mxu0 0.0
    %6723 = vmatprep.subr.mxu0 0.0
    %6724 = vmatpush2.msra.mxu0 0.0
    %6725 = vmatprep.subr.mxu0 0.0
    %6726 = vmatpush2.msra.mxu0 0.0
    %6727 = vmatprep.subr.mxu0 0.0
    %6728 = vmatpush2.msra.mxu0 0.0
    %6729 = vmatprep.subr.mxu0 0.0
    %6730 = vmatpush2.msra.mxu0 0.0
    %6731 = vmatprep.subr.mxu0 0.0
    %6732 = vmatpush2.msra.mxu0 0.0
    %6733 = vmatprep.mubr.f32.mxu0 0.0
    %6734 = vmatmul.mubr.f32.gmra.mxu0 %v6646
    %v6735 = vpop.f32.mrf.mxu0
    %v6736 = vadd.f32 %v6642, %v6735
    %v6737 = vpop.f32.mrf.mxu0
    %6738 = vmatprep.mubr.f32.mxu0 0.0
    %6739 = vmatmul.mubr.f32.gmra.mxu0 %v6649
    %v6740 = vpop.f32.mrf.mxu0
    %v6741 = vadd.f32 %v6642, %v6740
    %v6742 = vpop.f32.mrf.mxu0
    %6743 = vmatprep.mubr.f32.mxu0 0.0
    %6744 = vmatmul.mubr.f32.gmra.mxu0 %v6652
    %v6745 = vpop.f32.mrf.mxu0
    %v6746 = vadd.f32 %v6642, %v6745
    %v6747 = vpop.f32.mrf.mxu0
    %6748 = vmatprep.mubr.f32.mxu0 0.0
    %6749 = vmatmul.mubr.f32.gmra.mxu0 %v6655
    %v6750 = vpop.f32.mrf.mxu0
    %v6751 = vadd.f32 %v6642, %v6750
    %v6752 = vpop.f32.mrf.mxu0
    %6753 = vmatprep.mubr.f32.mxu0 0.0
    %6754 = vmatmul.mubr.f32.gmra.mxu0 %v6658
    %v6755 = vpop.f32.mrf.mxu0
    %v6756 = vadd.f32 %v6642, %v6755
    %v6757 = vpop.f32.mrf.mxu0
    %6758 = vmatprep.mubr.f32.mxu0 0.0
    %6759 = vmatmul.mubr.f32.gmra.mxu0 %v6661
    %v6760 = vpop.f32.mrf.mxu0
    %v6761 = vadd.f32 %v6642, %v6760
    %v6762 = vpop.f32.mrf.mxu0
    %6763 = vmatprep.mubr.f32.mxu0 0.0
    %6764 = vmatmul.mubr.f32.gmra.mxu0 %v6664
    %v6765 = vpop.f32.mrf.mxu0
    %v6766 = vadd.f32 %v6642, %v6765
    %v6767 = vpop.f32.mrf.mxu0
    %6768 = vmatprep.mubr.f32.mxu0 0.0
    %6769 = vmatmul.mubr.f32.gmra.mxu0 %v6667
    %v6770 = vpop.f32.mrf.mxu0
    %v6771 = vadd.f32 %v6642, %v6770
    %v6772 = vpop.f32.mrf.mxu0
    %6773 = vdwg.mxu0
    %v6774 = vadd.f32 %v6473, %v6736
    %v6775 = vadd.f32 %v6474, %v6741
    %v6776 = vadd.f32 %v6475, %v6746
    %v6777 = vadd.f32 %v6476, %v6751
    %v6778 = vadd.f32 %v6477, %v6756
    %v6779 = vadd.f32 %v6478, %v6761
    %v6780 = vadd.f32 %v6479, %v6766
    %v6781 = vadd.f32 %v6480, %v6771
    %v6782 = vsel %vm312, %v6774, 0.0
    %6783 = vadd.xlane.f32.xlu0 %v6782
    %v6784 = vpop.xlane.xlu0 %6783
    %v6785 = vsel %vm312, %v6775, 0.0
    %6786 = vadd.xlane.f32.xlu0 %v6785
    %v6787 = vpop.xlane.xlu0 %6786
    %v6788 = vsel %vm312, %v6776, 0.0
    %6789 = vadd.xlane.f32.xlu0 %v6788
    %v6790 = vpop.xlane.xlu0 %6789
    %v6791 = vsel %vm312, %v6777, 0.0
    %6792 = vadd.xlane.f32.xlu0 %v6791
    %v6793 = vpop.xlane.xlu0 %6792
    %v6794 = vsel %vm312, %v6778, 0.0
    %6795 = vadd.xlane.f32.xlu0 %v6794
    %v6796 = vpop.xlane.xlu0 %6795
    %v6797 = vsel %vm312, %v6779, 0.0
    %6798 = vadd.xlane.f32.xlu0 %v6797
    %v6799 = vpop.xlane.xlu0 %6798
    %v6800 = vsel %vm312, %v6780, 0.0
    %6801 = vadd.xlane.f32.xlu0 %v6800
    %v6802 = vpop.xlane.xlu0 %6801
    %v6803 = vsel %vm312, %v6781, 0.0
    %6804 = vadd.xlane.f32.xlu0 %v6803
    %v6805 = vpop.xlane.xlu0 %6804
    %v6806 = vmul.f32 %v6784, %v6370
    %v6807 = vmul.f32 %v6787, %v6370
    %v6808 = vmul.f32 %v6790, %v6370
    %v6809 = vmul.f32 %v6793, %v6370
    %v6810 = vmul.f32 %v6796, %v6370
    %v6811 = vmul.f32 %v6799, %v6370
    %v6812 = vmul.f32 %v6802, %v6370
    %v6813 = vmul.f32 %v6805, %v6370
    %v6814 = vsub.f32 %v6774, %v6806
    %v6815 = vsub.f32 %v6775, %v6807
    %v6816 = vsub.f32 %v6776, %v6808
    %v6817 = vsub.f32 %v6777, %v6809
    %v6818 = vsub.f32 %v6778, %v6810
    %v6819 = vsub.f32 %v6779, %v6811
    %v6820 = vsub.f32 %v6780, %v6812
    %v6821 = vsub.f32 %v6781, %v6813
    %v6822 = vmul.f32 %v6814, %v6814
    %v6823 = vmul.f32 %v6815, %v6815
    %v6824 = vmul.f32 %v6816, %v6816
    %v6825 = vmul.f32 %v6817, %v6817
    %v6826 = vmul.f32 %v6818, %v6818
    %v6827 = vmul.f32 %v6819, %v6819
    %v6828 = vmul.f32 %v6820, %v6820
    %v6829 = vmul.f32 %v6821, %v6821
    %v6830 = vsel %vm312, %v6822, 0.0
    %6831 = vadd.xlane.f32.xlu0 %v6830
    %v6832 = vpop.xlane.xlu0 %6831
    %v6833 = vsel %vm312, %v6823, 0.0
    %6834 = vadd.xlane.f32.xlu0 %v6833
    %v6835 = vpop.xlane.xlu0 %6834
    %v6836 = vsel %vm312, %v6824, 0.0
    %6837 = vadd.xlane.f32.xlu0 %v6836
    %v6838 = vpop.xlane.xlu0 %6837
    %v6839 = vsel %vm312, %v6825, 0.0
    %6840 = vadd.xlane.f32.xlu0 %v6839
    %v6841 = vpop.xlane.xlu0 %6840
    %v6842 = vsel %vm312, %v6826, 0.0
    %6843 = vadd.xlane.f32.xlu0 %v6842
    %v6844 = vpop.xlane.xlu0 %6843
    %v6845 = vsel %vm312, %v6827, 0.0
    %6846 = vadd.xlane.f32.xlu0 %v6845
    %v6847 = vpop.xlane.xlu0 %6846
    %v6848 = vsel %vm312, %v6828, 0.0
    %6849 = vadd.xlane.f32.xlu0 %v6848
    %v6850 = vpop.xlane.xlu0 %6849
    %v6851 = vsel %vm312, %v6829, 0.0
    %6852 = vadd.xlane.f32.xlu0 %v6851
    %v6853 = vpop.xlane.xlu0 %6852
    %v6854 = vmul.f32 %v6832, %v6370
    %v6855 = vmul.f32 %v6835, %v6370
    %v6856 = vmul.f32 %v6838, %v6370
    %v6857 = vmul.f32 %v6841, %v6370
    %v6858 = vmul.f32 %v6844, %v6370
    %v6859 = vmul.f32 %v6847, %v6370
    %v6860 = vmul.f32 %v6850, %v6370
    %v6861 = vmul.f32 %v6853, %v6370
    %v6862 = vadd.f32 %v6854, 1e-05
    %v6863 = vadd.f32 %v6855, 1e-05
    %v6864 = vadd.f32 %v6856, 1e-05
    %v6865 = vadd.f32 %v6857, 1e-05
    %v6866 = vadd.f32 %v6858, 1e-05
    %v6867 = vadd.f32 %v6859, 1e-05
    %v6868 = vadd.f32 %v6860, 1e-05
    %v6869 = vadd.f32 %v6861, 1e-05
    %v6870 = vrsqrt.pop %v6862
    %v6871 = vrsqrt.pop %v6863
    %v6872 = vrsqrt.pop %v6864
    %v6873 = vrsqrt.pop %v6865
    %v6874 = vrsqrt.pop %v6866
    %v6875 = vrsqrt.pop %v6867
    %v6876 = vrsqrt.pop %v6868
    %v6877 = vrsqrt.pop %v6869
    %v6878 = vmul.f32 %v6814, %v6870
    %v6879 = vmul.f32 %v6815, %v6871
    %v6880 = vmul.f32 %v6816, %v6872
    %v6881 = vmul.f32 %v6817, %v6873
    %v6882 = vmul.f32 %v6818, %v6874
    %v6883 = vmul.f32 %v6819, %v6875
    %v6884 = vmul.f32 %v6820, %v6876
    %v6885 = vmul.f32 %v6821, %v6877
    %v6886 = vld [vmem:[%s16] sm:$0x1]
    %v6888 = vlaneseq
    %v6889 = vshrl.u32 %v6888, 7
    %v6890 = vsub.s32 0, %v6889
    %v6891 = vrot.slane %v6886, %v6890
    %v6893 = vmul.f32 %v6878, %v6891
    %v6894 = vmul.f32 %v6879, %v6891
    %v6895 = vmul.f32 %v6880, %v6891
    %v6896 = vmul.f32 %v6881, %v6891
    %v6897 = vmul.f32 %v6882, %v6891
    %v6898 = vmul.f32 %v6883, %v6891
    %v6899 = vmul.f32 %v6884, %v6891
    %v6900 = vmul.f32 %v6885, %v6891
    %v6901 = vld [vmem:[%s17] sm:$0x1]
    %v6903 = vlaneseq
    %v6904 = vshrl.u32 %v6903, 7
    %v6905 = vsub.s32 0, %v6904
    %v6906 = vrot.slane %v6901, %v6905
    %v6908 = vadd.f32 %v6893, %v6906
    %v6909 = vadd.f32 %v6894, %v6906
    %v6910 = vadd.f32 %v6895, %v6906
    %v6911 = vadd.f32 %v6896, %v6906
    %v6912 = vadd.f32 %v6897, %v6906
    %v6913 = vadd.f32 %v6898, %v6906
    %v6914 = vadd.f32 %v6899, %v6906
    %v6915 = vadd.f32 %v6900, %v6906
    %v6916 = vld [vmem:[%s18] sm:$0xff]
    %v6917 = vld [vmem:[%s18 + $0x8] sm:$0xff]
    %v6918 = vld [vmem:[%s18 + $0x10] sm:$0xff]
    %v6919 = vld [vmem:[%s18 + $0x18] sm:$0xff]
    %v6920 = vld [vmem:[%s19] sm:$0x1]
    %v6922 = vlaneseq
    %v6923 = vshrl.u32 %v6922, 7
    %v6924 = vsub.s32 0, %v6923
    %v6925 = vrot.slane %v6920, %v6924
    %v6935 = vrot.slane %v6909, 7
    %vm6936 = vcmask 1041409
    %v6937 = vsel %vm6936, %v6935, %v6908
    %v6938 = vrot.slane %v6910, 6
    %vm6939 = vcmask 1042434
    %v6940 = vsel %vm6939, %v6938, %v6937
    %v6941 = vrot.slane %v6911, 5
    %vm6942 = vcmask 1043459
    %v6943 = vsel %vm6942, %v6941, %v6940
    %v6944 = vrot.slane %v6912, 4
    %vm6945 = vcmask 1044484
    %v6946 = vsel %vm6945, %v6944, %v6943
    %v6947 = vrot.slane %v6913, 3
    %vm6948 = vcmask 1045509
    %v6949 = vsel %vm6948, %v6947, %v6946
    %v6950 = vrot.slane %v6914, 2
    %vm6951 = vcmask 1046534
    %v6952 = vsel %vm6951, %v6950, %v6949
    %v6953 = vrot.slane %v6915, 1
    %vm6954 = vcmask 1047559
    %v6955 = vsel %vm6954, %v6953, %v6952
    %v6956 = vsel %vm312, %v6955, 0
    %6958 = vmatprep.subr.mxu0 0.0
    %6959 = vmatpush1.msra.mxu0 0.0
    %6960 = vmatprep.subr.mxu0 0.0
    %6961 = vmatpush1.msra.mxu0 0.0
    %6962 = vmatprep.subr.mxu0 0.0
    %6963 = vmatpush1.msra.mxu0 0.0
    %6964 = vmatprep.subr.mxu0 0.0
    %6965 = vmatpush1.msra.mxu0 0.0
    %6966 = vmatprep.subr.mxu0 0.0
    %6967 = vmatpush1.msra.mxu0 0.0
    %6968 = vmatprep.subr.mxu0 0.0
    %6969 = vmatpush1.msra.mxu0 0.0
    %6970 = vmatprep.subr.mxu0 0.0
    %6971 = vmatpush1.msra.mxu0 0.0
    %6972 = vmatprep.subr.mxu0 0.0
    %6973 = vmatpush1.msra.mxu0 0.0
    %6974 = vmatprep.subr.mxu0 0.0
    %6975 = vmatpush1.msra.mxu0 0.0
    %6976 = vmatprep.subr.mxu0 0.0
    %6977 = vmatpush1.msra.mxu0 0.0
    %6978 = vmatprep.subr.mxu0 0.0
    %6979 = vmatpush1.msra.mxu0 0.0
    %6980 = vmatprep.subr.mxu0 0.0
    %6981 = vmatpush1.msra.mxu0 0.0
    %6982 = vmatprep.subr.mxu0 0.0
    %6983 = vmatpush1.msra.mxu0 %v6919
    %6984 = vmatprep.subr.mxu0 0.0
    %6985 = vmatpush1.msra.mxu0 %v6918
    %6986 = vmatprep.subr.mxu0 0.0
    %6987 = vmatpush1.msra.mxu0 %v6917
    %6988 = vmatprep.subr.mxu0 0.0
    %6989 = vmatpush1.msra.mxu0 %v6916
    %6990 = vmatprep.subr.mxu0 0.0
    %6991 = vmatpush2.msra.mxu0 0.0
    %6992 = vmatprep.subr.mxu0 0.0
    %6993 = vmatpush2.msra.mxu0 0.0
    %6994 = vmatprep.subr.mxu0 0.0
    %6995 = vmatpush2.msra.mxu0 0.0
    %6996 = vmatprep.subr.mxu0 0.0
    %6997 = vmatpush2.msra.mxu0 0.0
    %6998 = vmatprep.subr.mxu0 0.0
    %6999 = vmatpush2.msra.mxu0 0.0
    %7000 = vmatprep.subr.mxu0 0.0
    %7001 = vmatpush2.msra.mxu0 0.0
    %7002 = vmatprep.subr.mxu0 0.0
    %7003 = vmatpush2.msra.mxu0 0.0
    %7004 = vmatprep.subr.mxu0 0.0
    %7005 = vmatpush2.msra.mxu0 0.0
    %7006 = vmatprep.subr.mxu0 0.0
    %7007 = vmatpush2.msra.mxu0 0.0
    %7008 = vmatprep.subr.mxu0 0.0
    %7009 = vmatpush2.msra.mxu0 0.0
    %7010 = vmatprep.subr.mxu0 0.0
    %7011 = vmatpush2.msra.mxu0 0.0
    %7012 = vmatprep.subr.mxu0 0.0
    %7013 = vmatpush2.msra.mxu0 0.0
    %7014 = vmatprep.subr.mxu0 0.0
    %7015 = vmatpush2.msra.mxu0 0.0
    %7016 = vmatprep.subr.mxu0 0.0
    %7017 = vmatpush2.msra.mxu0 0.0
    %7018 = vmatprep.subr.mxu0 0.0
    %7019 = vmatpush2.msra.mxu0 0.0
    %7020 = vmatprep.subr.mxu0 0.0
    %7021 = vmatpush2.msra.mxu0 0.0
    %7022 = vmatprep.mubr.f32.mxu0 0.0
    %7023 = vmatmul.mubr.f32.gmra.mxu0 %v6956
    %v7024 = vpop.f32.mrf.mxu0
    %v7025 = vadd.f32 %v6925, %v7024
    %v7026 = vpop.f32.mrf.mxu0
    %7027 = vdwg.mxu0
    %vm7028 = vcmask 56320
    %7029 = vst.msk [vmem:[#allocation2] sm:$0xff] %vm7028, %v7025
    %7031 = vst.msk [vmem:[#allocation4] sm:$0xff] %vm312, %v6955
    // Predicated region
    $region82: #{tpu_custom_call.1} parent=1 // pred_check
      _
    $region83: #{tpu_custom_call.1} parent=1 // pred_check_branch
      %7033 = sbr.rel (0) target = $region85
    $region84: #{tpu_custom_call.1} parent=1 // pred_region
      %s7035 = ssub.s32 128, 128
      %7036 = vsyncadd [#allocation3], %s7035
      %s7038 = sshll.u32 [#allocation2], 4
      %s7039 = int_to_ptr.vmem [resolvable:$true] %s7038
      %7041 = dma.vmem_to_hbm [thread:$0]  %s7039, 128, %s20, [#allocation3]
    $region85: #{tpu_custom_call.1} parent=1 // pred_fallthru
      _
    // Predicated region
    $region86: #{tpu_custom_call.1} parent=1 // pred_check
      _
    $region87: #{tpu_custom_call.1} parent=1 // pred_check_branch
      %7043 = sbr.rel (0) target = $region89
    $region88: #{tpu_custom_call.1} parent=1 // pred_region
      %s7045 = ssub.s32 128, 128
      %7046 = vsyncadd [#allocation5], %s7045
      %s7048 = sshll.u32 [#allocation4], 4
      %s7049 = int_to_ptr.vmem [resolvable:$true] %s7048
      %7051 = dma.vmem_to_hbm [thread:$0]  %s7049, 128, %s21, [#allocation5]
    $region89: #{tpu_custom_call.1} parent=1 // pred_fallthru
      _
    // Predicated region
    $region90: #{tpu_custom_call.1} parent=1 // pred_check
      _
    $region91: #{tpu_custom_call.1} parent=1 // pred_check_branch
      %7053 = sbr.rel (0) target = $region93
    $region92: #{tpu_custom_call.1} parent=1 // pred_region
      %7054 = dma.done [#allocation3], 128
    $region93: #{tpu_custom_call.1} parent=1 // pred_fallthru
      _
    // Predicated region
    $region94: #{tpu_custom_call.1} parent=1 // pred_check
      _
    $region95: #{tpu_custom_call.1} parent=1 // pred_check_branch
      %7056 = sbr.rel (0) target = $region97
    $region96: #{tpu_custom_call.1} parent=1 // pred_region
      %7057 = dma.done [#allocation5], 128
    $region97: #{tpu_custom_call.1} parent=1 // pred_fallthru
      _
    %7058 = vsyncpa [#allocation3], 1
    %7059 = vsyncpa [#allocation5], 1

</llo_original>
